<compile_context>
chip_gen: v7x
topology: tpu7x:2x2x1
jax: 0.10.0
libtpu: 0.0.40
codegen_flags: <defaults>
</compile_context>

<pallas_src>
import functools
import math

import jax
import jax.numpy as jnp
from jax.experimental import pallas as pl
from jax.experimental.pallas import tpu as pltpu


def _encoder_gru_kernel(emb_ref, mask_ref, wih_ref, whh_ref, bih_ref, bhh_ref,
                        out_ref, hid_ref, x_cur, y_buf, gi_buf):
    """Fused multi-layer bidirectional GRU over a padded batch.

    Length masking reproduces pack_padded_sequence / pad_packed_sequence
    semantics: the hidden state never advances past a sequence's length and
    padded output positions are written as zero. All layers/directions run in
    one kernel invocation with activations kept in VMEM scratch.
    """
    T, B, E = emb_ref.shape
    H = out_ref.shape[2]
    L = hid_ref.shape[0] // 2
    Imax = x_cur.shape[2]

    # Stage the embedded tokens as the layer-0 input (zero the pad columns once).
    if Imax > E:
        x_cur[:, :, E:] = jnp.zeros((T, B, Imax - E), jnp.float32)
    x_cur[:, :, :E] = emb_ref[...]

    for l in range(L):                       # static Python loops: fully unrolled
        for d in range(2):                   # 0 = forward, 1 = backward (in-kernel reversal)
            wih = wih_ref[l, d]              # [Imax, 3H]
            whh = whh_ref[l, d]              # [H, 3H]
            bih = bih_ref[l, d]              # [1, 3H]
            bhh = bhh_ref[l, d]              # [1, 3H]

            # Hoisted input projection: one [T*B, Imax] x [Imax, 3H] matmul per
            # layer/direction instead of T tiny matmuls on the serial path.
            x_flat = x_cur[...].reshape(T * B, Imax)
            gi_all = jnp.dot(x_flat, wih, preferred_element_type=jnp.float32) + bih
            gi_buf[...] = gi_all.reshape(T, B, 3 * H)

            h = jnp.zeros((B, H), jnp.float32)           # hidden=None -> zero init
            for i in range(T):                           # fully unrolled recurrence
                t = i if d == 0 else T - 1 - i           # static time index
                m_t = mask_ref[t]                        # [B, 1]
                gi = gi_buf[t]                           # [B, 3H]
                gh = jnp.dot(h, whh, preferred_element_type=jnp.float32) + bhh
                r = jax.nn.sigmoid(gi[:, 0 * H:1 * H] + gh[:, 0 * H:1 * H])
                z = jax.nn.sigmoid(gi[:, 1 * H:2 * H] + gh[:, 1 * H:2 * H])
                n = jnp.tanh(gi[:, 2 * H:3 * H] + r * gh[:, 2 * H:3 * H])
                h_new = (1.0 - z) * n + z * h
                y_buf[t, :, d * H:(d + 1) * H] = m_t * h_new   # zero at padded slots
                h = m_t * h_new + (1.0 - m_t) * h              # freeze past seq length
            hid_ref[2 * l + d] = h

        # Feed concatenated (fwd, bwd) outputs to the next layer, VMEM-resident.
        if l < L - 1:
            if Imax > 2 * H:
                x_cur[:, :, 2 * H:] = jnp.zeros((T, B, Imax - 2 * H), jnp.float32)
            x_cur[:, :, :2 * H] = y_buf[...]

    # outputs[:, :, :H] + outputs[:, :, H:] of the last layer.
    out_ref[...] = y_buf[:, :, :H] + y_buf[:, :, H:]


def encoder_rnn_forward(packed, input_seq, input_lengths):
    """Equivalent of EncoderRNN.forward(input_seq, input_lengths, hidden=None)."""
    T, B = input_seq.shape
    L, _, H, _ = packed["w_hh"].shape
    Imax = packed["w_ih"].shape[2]

    # Embedding lookup (glue: gather stays in plain JAX).
    embedded = jnp.take(packed["embedding"], input_seq, axis=0).astype(jnp.float32)

    # pack_padded_sequence semantics -> per-timestep validity mask.
    mask = (jnp.arange(T)[:, None] < input_lengths[None, :]).astype(jnp.float32)
    mask = mask[..., None]                                               # [T, B, 1]

    vmem = pl.BlockSpec(memory_space=pltpu.MemorySpace.VMEM)
    outputs, hidden = pl.pallas_call(
        _encoder_gru_kernel,
        out_shape=(jax.ShapeDtypeStruct((T, B, H), jnp.float32),
                   jax.ShapeDtypeStruct((2 * L, B, H), jnp.float32)),
        in_specs=[vmem] * 6,
        out_specs=(vmem, vmem),
        scratch_shapes=[
            pltpu.VMEM((T, B, Imax), jnp.float32),     # current layer input
            pltpu.VMEM((T, B, 2 * H), jnp.float32),    # fwd|bwd outputs of layer
            pltpu.VMEM((T, B, 3 * H), jnp.float32),    # precomputed input gates
        ],
    )(embedded, mask, packed["w_ih"], packed["w_hh"], packed["b_ih"], packed["b_hh"])
    return outputs, hidden


def init_params(key, voc_length, embedding_dim, hidden_size, num_layers):
    """Deterministic init matching the PyTorch module's parameter shapes."""
    keys = jax.random.split(key, 1 + num_layers * 8)
    params = {}
    params["embedding"] = jax.random.normal(
        keys[0], (voc_length, embedding_dim), jnp.float32)               # nn.Embedding
    k = 1.0 / math.sqrt(hidden_size)                                     # nn.GRU init bound

    def u(kk, shape):
        return jax.random.uniform(kk, shape, jnp.float32, -k, k)

    layers = []
    ki = 1
    for l in range(num_layers):
        in_dim = embedding_dim if l == 0 else 2 * hidden_size
        lp = {
            "w_ih_f": u(keys[ki + 0], (3 * hidden_size, in_dim)),
            "w_hh_f": u(keys[ki + 1], (3 * hidden_size, hidden_size)),
            "b_ih_f": u(keys[ki + 2], (3 * hidden_size,)),
            "b_hh_f": u(keys[ki + 3], (3 * hidden_size,)),
            "w_ih_b": u(keys[ki + 4], (3 * hidden_size, in_dim)),
            "w_hh_b": u(keys[ki + 5], (3 * hidden_size, hidden_size)),
            "b_ih_b": u(keys[ki + 6], (3 * hidden_size,)),
            "b_hh_b": u(keys[ki + 7], (3 * hidden_size,)),
        }
        ki += 8
        layers.append(lp)
    params["gru"] = layers
    return params


def pack_encoder_params(params, *, embedding_dim, hidden_size, num_layers):
    """Transpose/stack/zero-pad GRU weights once (outside the jitted forward)."""
    E, H, L = embedding_dim, hidden_size, num_layers
    Imax = max(E, 2 * H)
    w_ih = jnp.zeros((L, 2, Imax, 3 * H), jnp.float32)
    w_hh = jnp.zeros((L, 2, H, 3 * H), jnp.float32)
    b_ih = jnp.zeros((L, 2, 1, 3 * H), jnp.float32)
    b_hh = jnp.zeros((L, 2, 1, 3 * H), jnp.float32)
    for l in range(L):
        lp = params["gru"][l]
        in_dim = E if l == 0 else 2 * H
        for d, s in enumerate(("f", "b")):
            w_ih = w_ih.at[l, d, :in_dim, :].set(lp[f"w_ih_{s}"].T)
            w_hh = w_hh.at[l, d].set(lp[f"w_hh_{s}"].T)
            b_ih = b_ih.at[l, d, 0].set(lp[f"b_ih_{s}"])
            b_hh = b_hh.at[l, d, 0].set(lp[f"b_hh_{s}"])
    return {"embedding": params["embedding"].astype(jnp.float32),
            "w_ih": w_ih, "w_hh": w_hh, "b_ih": b_ih, "b_hh": b_hh}


if __name__ == "__main__":
    # opts: num_layers=2, hidden_size=32, embedding_dim=32, bidirectional=True
    # TODO(synk): inter-layer dropout (opts.dropout) is a no-op at inference; not applied.
    VOC, E, H, L = 50, 32, 32, 2
    T, B = 8, 2

    key = jax.random.PRNGKey(0)
    pkey, dkey = jax.random.split(key)
    params = init_params(pkey, VOC, E, H, L)
    packed = pack_encoder_params(params, embedding_dim=E, hidden_size=H, num_layers=L)

    input_seq = jax.random.randint(dkey, (T, B), 0, VOC, dtype=jnp.int32)   # [T, B]
    # pack_padded_sequence requires descending lengths (mask makes it optional here)
    input_lengths = jnp.array([8, 5], dtype=jnp.int32)

    fwd = jax.jit(functools.partial(encoder_rnn_forward, packed))
    outputs, hidden = fwd(input_seq, input_lengths)
    jax.block_until_ready((outputs, hidden))

    assert outputs.shape == (T, B, H)
    assert hidden.shape == (2 * L, B, H)
    assert bool(jnp.all(jnp.isfinite(outputs))) and bool(jnp.all(jnp.isfinite(hidden)))
    print("KERNEL_OK")
</pallas_src>

<mosaic_0001>
module attributes {stable_mosaic.version = 11 : i64} {
  func.func @_encoder_gru_kernel(%arg0: memref<8x2x32xf32, #tpu.memory_space<vmem>>, %arg1: memref<8x2x1xf32, #tpu.memory_space<vmem>>, %arg2: memref<2x2x64x96xf32, #tpu.memory_space<vmem>>, %arg3: memref<2x2x32x96xf32, #tpu.memory_space<vmem>>, %arg4: memref<2x2x1x96xf32, #tpu.memory_space<vmem>>, %arg5: memref<2x2x1x96xf32, #tpu.memory_space<vmem>>, %arg6: memref<8x2x32xf32, #tpu.memory_space<vmem>>, %arg7: memref<4x2x32xf32, #tpu.memory_space<vmem>>, %arg8: memref<8x2x64xf32, #tpu.memory_space<vmem>>, %arg9: memref<8x2x64xf32, #tpu.memory_space<vmem>>, %arg10: memref<8x2x96xf32, #tpu.memory_space<vmem>>) attributes {dimension_semantics = [], scalar_prefetch = 0 : i64, scratch_operands = 3 : i64, tpu.core_type = #tpu.core_type<tc>} {
    %cst = arith.constant 0.000000e+00 : f32
    %0 = vector.broadcast %cst : f32 to vector<8x2x32xf32>
    %c0 = arith.constant 0 : index
    %c0_0 = arith.constant 0 : index
    %c32 = arith.constant 32 : index
    %1 = vector.load %arg8[%c0, %c0_0, %c32] : memref<8x2x64xf32, #tpu.memory_space<vmem>>, vector<8x2x32xf32>
    tpu.vector_store %arg8[%c0, %c0_0, %c32], %0 {strides = array<i32>} : memref<8x2x64xf32, #tpu.memory_space<vmem>>, vector<8x2x32xf32>,
    %c0_1 = arith.constant 0 : index
    %c0_2 = arith.constant 0 : index
    %c0_3 = arith.constant 0 : index
    %2 = vector.load %arg0[%c0_1, %c0_2, %c0_3] : memref<8x2x32xf32, #tpu.memory_space<vmem>>, vector<8x2x32xf32>
    %c0_4 = arith.constant 0 : index
    %c0_5 = arith.constant 0 : index
    %c0_6 = arith.constant 0 : index
    %3 = vector.load %arg8[%c0_4, %c0_5, %c0_6] : memref<8x2x64xf32, #tpu.memory_space<vmem>>, vector<8x2x32xf32>
    tpu.vector_store %arg8[%c0_4, %c0_5, %c0_6], %2 {strides = array<i32>} : memref<8x2x64xf32, #tpu.memory_space<vmem>>, vector<8x2x32xf32>,
    %c0_7 = arith.constant 0 : index
    %c0_8 = arith.constant 0 : index
    %c0_9 = arith.constant 0 : index
    %c0_10 = arith.constant 0 : index
    %4 = vector.load %arg2[%c0_7, %c0_8, %c0_9, %c0_10] : memref<2x2x64x96xf32, #tpu.memory_space<vmem>>, vector<1x1x64x96xf32>
    %5 = vector.shape_cast %4 : vector<1x1x64x96xf32> to vector<64x96xf32>
    %c0_11 = arith.constant 0 : index
    %c0_12 = arith.constant 0 : index
    %c0_13 = arith.constant 0 : index
    %c0_14 = arith.constant 0 : index
    %6 = vector.load %arg3[%c0_11, %c0_12, %c0_13, %c0_14] : memref<2x2x32x96xf32, #tpu.memory_space<vmem>>, vector<1x1x32x96xf32>
    %7 = vector.shape_cast %6 : vector<1x1x32x96xf32> to vector<32x96xf32>
    %c0_15 = arith.constant 0 : index
    %c0_16 = arith.constant 0 : index
    %c0_17 = arith.constant 0 : index
    %c0_18 = arith.constant 0 : index
    %8 = vector.load %arg4[%c0_15, %c0_16, %c0_17, %c0_18] : memref<2x2x1x96xf32, #tpu.memory_space<vmem>>, vector<1x1x1x96xf32>
    %9 = vector.shape_cast %8 : vector<1x1x1x96xf32> to vector<1x96xf32>
    %c0_19 = arith.constant 0 : index
    %c0_20 = arith.constant 0 : index
    %c0_21 = arith.constant 0 : index
    %c0_22 = arith.constant 0 : index
    %10 = vector.load %arg5[%c0_19, %c0_20, %c0_21, %c0_22] : memref<2x2x1x96xf32, #tpu.memory_space<vmem>>, vector<1x1x1x96xf32>
    %11 = vector.shape_cast %10 : vector<1x1x1x96xf32> to vector<1x96xf32>
    %c0_23 = arith.constant 0 : index
    %c0_24 = arith.constant 0 : index
    %c0_25 = arith.constant 0 : index
    %12 = vector.load %arg8[%c0_23, %c0_24, %c0_25] : memref<8x2x64xf32, #tpu.memory_space<vmem>>, vector<8x2x64xf32>
    %13 = vector.shape_cast %12 : vector<8x2x64xf32> to vector<16x64xf32>
    %cst_26 = arith.constant dense<0.000000e+00> : vector<16x96xf32>
    %14 = tpu.matmul %13, %5, %cst_26 {dimension_numbers = #tpu.dot_dimension_numbers<[1], [0], [0], [1], [0, 0, 1, 1], [], []>} : vector<16x64xf32>, vector<64x96xf32>, vector<16x96xf32> -> vector<16x96xf32>
    %15 = vector.broadcast %9 : vector<1x96xf32> to vector<16x96xf32>
    %16 = arith.addf %14, %15 : vector<16x96xf32>
    %17 = vector.shape_cast %16 : vector<16x96xf32> to vector<8x2x96xf32>
    %c0_27 = arith.constant 0 : index
    %c0_28 = arith.constant 0 : index
    %c0_29 = arith.constant 0 : index
    %18 = vector.load %arg10[%c0_27, %c0_28, %c0_29] : memref<8x2x96xf32, #tpu.memory_space<vmem>>, vector<8x2x96xf32>
    tpu.vector_store %arg10[%c0_27, %c0_28, %c0_29], %17 {strides = array<i32>} : memref<8x2x96xf32, #tpu.memory_space<vmem>>, vector<8x2x96xf32>,
    %cst_30 = arith.constant 0.000000e+00 : f32
    %19 = vector.broadcast %cst_30 : f32 to vector<2x32xf32>
    %c0_31 = arith.constant 0 : index
    %c0_32 = arith.constant 0 : index
    %c0_33 = arith.constant 0 : index
    %20 = vector.load %arg1[%c0_31, %c0_32, %c0_33] : memref<8x2x1xf32, #tpu.memory_space<vmem>>, vector<1x2x1xf32>
    %21 = vector.shape_cast %20 : vector<1x2x1xf32> to vector<2x1xf32>
    %c0_34 = arith.constant 0 : index
    %c0_35 = arith.constant 0 : index
    %c0_36 = arith.constant 0 : index
    %22 = vector.load %arg10[%c0_34, %c0_35, %c0_36] : memref<8x2x96xf32, #tpu.memory_space<vmem>>, vector<1x2x96xf32>
    %23 = vector.shape_cast %22 : vector<1x2x96xf32> to vector<2x96xf32>
    %cst_37 = arith.constant dense<0.000000e+00> : vector<2x96xf32>
    %24 = tpu.matmul %19, %7, %cst_37 {dimension_numbers = #tpu.dot_dimension_numbers<[1], [0], [0], [1], [0, 0, 1, 1], [], []>} : vector<2x32xf32>, vector<32x96xf32>, vector<2x96xf32> -> vector<2x96xf32>
    %25 = vector.broadcast %11 : vector<1x96xf32> to vector<2x96xf32>
    %26 = arith.addf %24, %25 : vector<2x96xf32>
    %27 = vector.extract_strided_slice %23 {offsets = [0, 0], sizes = [2, 32], strides = [1, 1]} : vector<2x96xf32> to vector<2x32xf32>
    %28 = vector.extract_strided_slice %26 {offsets = [0, 0], sizes = [2, 32], strides = [1, 1]} : vector<2x96xf32> to vector<2x32xf32>
    %29 = arith.addf %27, %28 : vector<2x32xf32>
    %30 = arith.negf %29 : vector<2x32xf32>
    %31 = math.exp %30 : vector<2x32xf32>
    %cst_38 = arith.constant 1.000000e+00 : f32
    %32 = vector.broadcast %cst_38 : f32 to vector<2x32xf32>
    %33 = arith.addf %32, %31 : vector<2x32xf32>
    %34 = arith.divf %32, %33 : vector<2x32xf32>
    %35 = vector.extract_strided_slice %23 {offsets = [0, 32], sizes = [2, 32], strides = [1, 1]} : vector<2x96xf32> to vector<2x32xf32>
    %36 = vector.extract_strided_slice %26 {offsets = [0, 32], sizes = [2, 32], strides = [1, 1]} : vector<2x96xf32> to vector<2x32xf32>
    %37 = arith.addf %35, %36 : vector<2x32xf32>
    %38 = arith.negf %37 : vector<2x32xf32>
    %39 = math.exp %38 : vector<2x32xf32>
    %cst_39 = arith.constant 1.000000e+00 : f32
    %40 = vector.broadcast %cst_39 : f32 to vector<2x32xf32>
    %41 = arith.addf %40, %39 : vector<2x32xf32>
    %42 = arith.divf %40, %41 : vector<2x32xf32>
    %43 = vector.extract_strided_slice %23 {offsets = [0, 64], sizes = [2, 32], strides = [1, 1]} : vector<2x96xf32> to vector<2x32xf32>
    %44 = vector.extract_strided_slice %26 {offsets = [0, 64], sizes = [2, 32], strides = [1, 1]} : vector<2x96xf32> to vector<2x32xf32>
    %45 = arith.mulf %34, %44 : vector<2x32xf32>
    %46 = arith.addf %43, %45 : vector<2x32xf32>
    %47 = math.tanh %46 : vector<2x32xf32>
    %cst_40 = arith.constant 1.000000e+00 : f32
    %48 = vector.broadcast %cst_40 : f32 to vector<2x32xf32>
    %49 = arith.subf %48, %42 : vector<2x32xf32>
    %50 = arith.mulf %49, %47 : vector<2x32xf32>
    %51 = arith.mulf %42, %19 : vector<2x32xf32>
    %52 = arith.addf %50, %51 : vector<2x32xf32>
    %53 = vector.broadcast %21 : vector<2x1xf32> to vector<2x32xf32>
    %54 = arith.mulf %53, %52 : vector<2x32xf32>
    %c0_41 = arith.constant 0 : index
    %c0_42 = arith.constant 0 : index
    %c0_43 = arith.constant 0 : index
    %55 = vector.load %arg9[%c0_41, %c0_42, %c0_43] : memref<8x2x64xf32, #tpu.memory_space<vmem>>, vector<1x2x32xf32>
    %56 = vector.shape_cast %55 : vector<1x2x32xf32> to vector<2x32xf32>
    %57 = vector.shape_cast %54 : vector<2x32xf32> to vector<1x2x32xf32>
    tpu.vector_store %arg9[%c0_41, %c0_42, %c0_43], %57 {strides = array<i32>} : memref<8x2x64xf32, #tpu.memory_space<vmem>>, vector<1x2x32xf32>,
    %58 = vector.broadcast %21 : vector<2x1xf32> to vector<2x32xf32>
    %59 = arith.mulf %58, %52 : vector<2x32xf32>
    %cst_44 = arith.constant 1.000000e+00 : f32
    %60 = vector.broadcast %cst_44 : f32 to vector<2x1xf32>
    %61 = arith.subf %60, %21 : vector<2x1xf32>
    %62 = vector.broadcast %61 : vector<2x1xf32> to vector<2x32xf32>
    %63 = arith.mulf %62, %19 : vector<2x32xf32>
    %64 = arith.addf %59, %63 : vector<2x32xf32>
    %c1 = arith.constant 1 : index
    %c0_45 = arith.constant 0 : index
    %c0_46 = arith.constant 0 : index
    %65 = vector.load %arg1[%c1, %c0_45, %c0_46] : memref<8x2x1xf32, #tpu.memory_space<vmem>>, vector<1x2x1xf32>
    %66 = vector.shape_cast %65 : vector<1x2x1xf32> to vector<2x1xf32>
    %c1_47 = arith.constant 1 : index
    %c0_48 = arith.constant 0 : index
    %c0_49 = arith.constant 0 : index
    %67 = vector.load %arg10[%c1_47, %c0_48, %c0_49] : memref<8x2x96xf32, #tpu.memory_space<vmem>>, vector<1x2x96xf32>
    %68 = vector.shape_cast %67 : vector<1x2x96xf32> to vector<2x96xf32>
    %cst_50 = arith.constant dense<0.000000e+00> : vector<2x96xf32>
    %69 = tpu.matmul %64, %7, %cst_50 {dimension_numbers = #tpu.dot_dimension_numbers<[1], [0], [0], [1], [0, 0, 1, 1], [], []>} : vector<2x32xf32>, vector<32x96xf32>, vector<2x96xf32> -> vector<2x96xf32>
    %70 = vector.broadcast %11 : vector<1x96xf32> to vector<2x96xf32>
    %71 = arith.addf %69, %70 : vector<2x96xf32>
    %72 = vector.extract_strided_slice %68 {offsets = [0, 0], sizes = [2, 32], strides = [1, 1]} : vector<2x96xf32> to vector<2x32xf32>
    %73 = vector.extract_strided_slice %71 {offsets = [0, 0], sizes = [2, 32], strides = [1, 1]} : vector<2x96xf32> to vector<2x32xf32>
    %74 = arith.addf %72, %73 : vector<2x32xf32>
    %75 = arith.negf %74 : vector<2x32xf32>
    %76 = math.exp %75 : vector<2x32xf32>
    %cst_51 = arith.constant 1.000000e+00 : f32
    %77 = vector.broadcast %cst_51 : f32 to vector<2x32xf32>
    %78 = arith.addf %77, %76 : vector<2x32xf32>
    %79 = arith.divf %77, %78 : vector<2x32xf32>
    %80 = vector.extract_strided_slice %68 {offsets = [0, 32], sizes = [2, 32], strides = [1, 1]} : vector<2x96xf32> to vector<2x32xf32>
    %81 = vector.extract_strided_slice %71 {offsets = [0, 32], sizes = [2, 32], strides = [1, 1]} : vector<2x96xf32> to vector<2x32xf32>
    %82 = arith.addf %80, %81 : vector<2x32xf32>
    %83 = arith.negf %82 : vector<2x32xf32>
    %84 = math.exp %83 : vector<2x32xf32>
    %cst_52 = arith.constant 1.000000e+00 : f32
    %85 = vector.broadcast %cst_52 : f32 to vector<2x32xf32>
    %86 = arith.addf %85, %84 : vector<2x32xf32>
    %87 = arith.divf %85, %86 : vector<2x32xf32>
    %88 = vector.extract_strided_slice %68 {offsets = [0, 64], sizes = [2, 32], strides = [1, 1]} : vector<2x96xf32> to vector<2x32xf32>
    %89 = vector.extract_strided_slice %71 {offsets = [0, 64], sizes = [2, 32], strides = [1, 1]} : vector<2x96xf32> to vector<2x32xf32>
    %90 = arith.mulf %79, %89 : vector<2x32xf32>
    %91 = arith.addf %88, %90 : vector<2x32xf32>
    %92 = math.tanh %91 : vector<2x32xf32>
    %cst_53 = arith.constant 1.000000e+00 : f32
    %93 = vector.broadcast %cst_53 : f32 to vector<2x32xf32>
    %94 = arith.subf %93, %87 : vector<2x32xf32>
    %95 = arith.mulf %94, %92 : vector<2x32xf32>
    %96 = arith.mulf %87, %64 : vector<2x32xf32>
    %97 = arith.addf %95, %96 : vector<2x32xf32>
    %98 = vector.broadcast %66 : vector<2x1xf32> to vector<2x32xf32>
    %99 = arith.mulf %98, %97 : vector<2x32xf32>
    %c1_54 = arith.constant 1 : index
    %c0_55 = arith.constant 0 : index
    %c0_56 = arith.constant 0 : index
    %100 = vector.load %arg9[%c1_54, %c0_55, %c0_56] : memref<8x2x64xf32, #tpu.memory_space<vmem>>, vector<1x2x32xf32>
    %101 = vector.shape_cast %100 : vector<1x2x32xf32> to vector<2x32xf32>
    %102 = vector.shape_cast %99 : vector<2x32xf32> to vector<1x2x32xf32>
    tpu.vector_store %arg9[%c1_54, %c0_55, %c0_56], %102 {strides = array<i32>} : memref<8x2x64xf32, #tpu.memory_space<vmem>>, vector<1x2x32xf32>,
    %103 = vector.broadcast %66 : vector<2x1xf32> to vector<2x32xf32>
    %104 = arith.mulf %103, %97 : vector<2x32xf32>
    %cst_57 = arith.constant 1.000000e+00 : f32
    %105 = vector.broadcast %cst_57 : f32 to vector<2x1xf32>
    %106 = arith.subf %105, %66 : vector<2x1xf32>
    %107 = vector.broadcast %106 : vector<2x1xf32> to vector<2x32xf32>
    %108 = arith.mulf %107, %64 : vector<2x32xf32>
    %109 = arith.addf %104, %108 : vector<2x32xf32>
    %c2 = arith.constant 2 : index
    %c0_58 = arith.constant 0 : index
    %c0_59 = arith.constant 0 : index
    %110 = vector.load %arg1[%c2, %c0_58, %c0_59] : memref<8x2x1xf32, #tpu.memory_space<vmem>>, vector<1x2x1xf32>
    %111 = vector.shape_cast %110 : vector<1x2x1xf32> to vector<2x1xf32>
    %c2_60 = arith.constant 2 : index
    %c0_61 = arith.constant 0 : index
    %c0_62 = arith.constant 0 : index
    %112 = vector.load %arg10[%c2_60, %c0_61, %c0_62] : memref<8x2x96xf32, #tpu.memory_space<vmem>>, vector<1x2x96xf32>
    %113 = vector.shape_cast %112 : vector<1x2x96xf32> to vector<2x96xf32>
    %cst_63 = arith.constant dense<0.000000e+00> : vector<2x96xf32>
    %114 = tpu.matmul %109, %7, %cst_63 {dimension_numbers = #tpu.dot_dimension_numbers<[1], [0], [0], [1], [0, 0, 1, 1], [], []>} : vector<2x32xf32>, vector<32x96xf32>, vector<2x96xf32> -> vector<2x96xf32>
    %115 = vector.broadcast %11 : vector<1x96xf32> to vector<2x96xf32>
    %116 = arith.addf %114, %115 : vector<2x96xf32>
    %117 = vector.extract_strided_slice %113 {offsets = [0, 0], sizes = [2, 32], strides = [1, 1]} : vector<2x96xf32> to vector<2x32xf32>
    %118 = vector.extract_strided_slice %116 {offsets = [0, 0], sizes = [2, 32], strides = [1, 1]} : vector<2x96xf32> to vector<2x32xf32>
    %119 = arith.addf %117, %118 : vector<2x32xf32>
    %120 = arith.negf %119 : vector<2x32xf32>
    %121 = math.exp %120 : vector<2x32xf32>
    %cst_64 = arith.constant 1.000000e+00 : f32
    %122 = vector.broadcast %cst_64 : f32 to vector<2x32xf32>
    %123 = arith.addf %122, %121 : vector<2x32xf32>
    %124 = arith.divf %122, %123 : vector<2x32xf32>
    %125 = vector.extract_strided_slice %113 {offsets = [0, 32], sizes = [2, 32], strides = [1, 1]} : vector<2x96xf32> to vector<2x32xf32>
    %126 = vector.extract_strided_slice %116 {offsets = [0, 32], sizes = [2, 32], strides = [1, 1]} : vector<2x96xf32> to vector<2x32xf32>
    %127 = arith.addf %125, %126 : vector<2x32xf32>
    %128 = arith.negf %127 : vector<2x32xf32>
    %129 = math.exp %128 : vector<2x32xf32>
    %cst_65 = arith.constant 1.000000e+00 : f32
    %130 = vector.broadcast %cst_65 : f32 to vector<2x32xf32>
    %131 = arith.addf %130, %129 : vector<2x32xf32>
    %132 = arith.divf %130, %131 : vector<2x32xf32>
    %133 = vector.extract_strided_slice %113 {offsets = [0, 64], sizes = [2, 32], strides = [1, 1]} : vector<2x96xf32> to vector<2x32xf32>
    %134 = vector.extract_strided_slice %116 {offsets = [0, 64], sizes = [2, 32], strides = [1, 1]} : vector<2x96xf32> to vector<2x32xf32>
    %135 = arith.mulf %124, %134 : vector<2x32xf32>
    %136 = arith.addf %133, %135 : vector<2x32xf32>
    %137 = math.tanh %136 : vector<2x32xf32>
    %cst_66 = arith.constant 1.000000e+00 : f32
    %138 = vector.broadcast %cst_66 : f32 to vector<2x32xf32>
    %139 = arith.subf %138, %132 : vector<2x32xf32>
    %140 = arith.mulf %139, %137 : vector<2x32xf32>
    %141 = arith.mulf %132, %109 : vector<2x32xf32>
    %142 = arith.addf %140, %141 : vector<2x32xf32>
    %143 = vector.broadcast %111 : vector<2x1xf32> to vector<2x32xf32>
    %144 = arith.mulf %143, %142 : vector<2x32xf32>
    %c2_67 = arith.constant 2 : index
    %c0_68 = arith.constant 0 : index
    %c0_69 = arith.constant 0 : index
    %145 = vector.load %arg9[%c2_67, %c0_68, %c0_69] : memref<8x2x64xf32, #tpu.memory_space<vmem>>, vector<1x2x32xf32>
    %146 = vector.shape_cast %145 : vector<1x2x32xf32> to vector<2x32xf32>
    %147 = vector.shape_cast %144 : vector<2x32xf32> to vector<1x2x32xf32>
    tpu.vector_store %arg9[%c2_67, %c0_68, %c0_69], %147 {strides = array<i32>} : memref<8x2x64xf32, #tpu.memory_space<vmem>>, vector<1x2x32xf32>,
    %148 = vector.broadcast %111 : vector<2x1xf32> to vector<2x32xf32>
    %149 = arith.mulf %148, %142 : vector<2x32xf32>
    %cst_70 = arith.constant 1.000000e+00 : f32
    %150 = vector.broadcast %cst_70 : f32 to vector<2x1xf32>
    %151 = arith.subf %150, %111 : vector<2x1xf32>
    %152 = vector.broadcast %151 : vector<2x1xf32> to vector<2x32xf32>
    %153 = arith.mulf %152, %109 : vector<2x32xf32>
    %154 = arith.addf %149, %153 : vector<2x32xf32>
    %c3 = arith.constant 3 : index
    %c0_71 = arith.constant 0 : index
    %c0_72 = arith.constant 0 : index
    %155 = vector.load %arg1[%c3, %c0_71, %c0_72] : memref<8x2x1xf32, #tpu.memory_space<vmem>>, vector<1x2x1xf32>
    %156 = vector.shape_cast %155 : vector<1x2x1xf32> to vector<2x1xf32>
    %c3_73 = arith.constant 3 : index
    %c0_74 = arith.constant 0 : index
    %c0_75 = arith.constant 0 : index
    %157 = vector.load %arg10[%c3_73, %c0_74, %c0_75] : memref<8x2x96xf32, #tpu.memory_space<vmem>>, vector<1x2x96xf32>
    %158 = vector.shape_cast %157 : vector<1x2x96xf32> to vector<2x96xf32>
    %cst_76 = arith.constant dense<0.000000e+00> : vector<2x96xf32>
    %159 = tpu.matmul %154, %7, %cst_76 {dimension_numbers = #tpu.dot_dimension_numbers<[1], [0], [0], [1], [0, 0, 1, 1], [], []>} : vector<2x32xf32>, vector<32x96xf32>, vector<2x96xf32> -> vector<2x96xf32>
    %160 = vector.broadcast %11 : vector<1x96xf32> to vector<2x96xf32>
    %161 = arith.addf %159, %160 : vector<2x96xf32>
    %162 = vector.extract_strided_slice %158 {offsets = [0, 0], sizes = [2, 32], strides = [1, 1]} : vector<2x96xf32> to vector<2x32xf32>
    %163 = vector.extract_strided_slice %161 {offsets = [0, 0], sizes = [2, 32], strides = [1, 1]} : vector<2x96xf32> to vector<2x32xf32>
    %164 = arith.addf %162, %163 : vector<2x32xf32>
    %165 = arith.negf %164 : vector<2x32xf32>
    %166 = math.exp %165 : vector<2x32xf32>
    %cst_77 = arith.constant 1.000000e+00 : f32
    %167 = vector.broadcast %cst_77 : f32 to vector<2x32xf32>
    %168 = arith.addf %167, %166 : vector<2x32xf32>
    %169 = arith.divf %167, %168 : vector<2x32xf32>
    %170 = vector.extract_strided_slice %158 {offsets = [0, 32], sizes = [2, 32], strides = [1, 1]} : vector<2x96xf32> to vector<2x32xf32>
    %171 = vector.extract_strided_slice %161 {offsets = [0, 32], sizes = [2, 32], strides = [1, 1]} : vector<2x96xf32> to vector<2x32xf32>
    %172 = arith.addf %170, %171 : vector<2x32xf32>
    %173 = arith.negf %172 : vector<2x32xf32>
    %174 = math.exp %173 : vector<2x32xf32>
    %cst_78 = arith.constant 1.000000e+00 : f32
    %175 = vector.broadcast %cst_78 : f32 to vector<2x32xf32>
    %176 = arith.addf %175, %174 : vector<2x32xf32>
    %177 = arith.divf %175, %176 : vector<2x32xf32>
    %178 = vector.extract_strided_slice %158 {offsets = [0, 64], sizes = [2, 32], strides = [1, 1]} : vector<2x96xf32> to vector<2x32xf32>
    %179 = vector.extract_strided_slice %161 {offsets = [0, 64], sizes = [2, 32], strides = [1, 1]} : vector<2x96xf32> to vector<2x32xf32>
    %180 = arith.mulf %169, %179 : vector<2x32xf32>
    %181 = arith.addf %178, %180 : vector<2x32xf32>
    %182 = math.tanh %181 : vector<2x32xf32>
    %cst_79 = arith.constant 1.000000e+00 : f32
    %183 = vector.broadcast %cst_79 : f32 to vector<2x32xf32>
    %184 = arith.subf %183, %177 : vector<2x32xf32>
    %185 = arith.mulf %184, %182 : vector<2x32xf32>
    %186 = arith.mulf %177, %154 : vector<2x32xf32>
    %187 = arith.addf %185, %186 : vector<2x32xf32>
    %188 = vector.broadcast %156 : vector<2x1xf32> to vector<2x32xf32>
    %189 = arith.mulf %188, %187 : vector<2x32xf32>
    %c3_80 = arith.constant 3 : index
    %c0_81 = arith.constant 0 : index
    %c0_82 = arith.constant 0 : index
    %190 = vector.load %arg9[%c3_80, %c0_81, %c0_82] : memref<8x2x64xf32, #tpu.memory_space<vmem>>, vector<1x2x32xf32>
    %191 = vector.shape_cast %190 : vector<1x2x32xf32> to vector<2x32xf32>
    %192 = vector.shape_cast %189 : vector<2x32xf32> to vector<1x2x32xf32>
    tpu.vector_store %arg9[%c3_80, %c0_81, %c0_82], %192 {strides = array<i32>} : memref<8x2x64xf32, #tpu.memory_space<vmem>>, vector<1x2x32xf32>,
    %193 = vector.broadcast %156 : vector<2x1xf32> to vector<2x32xf32>
    %194 = arith.mulf %193, %187 : vector<2x32xf32>
    %cst_83 = arith.constant 1.000000e+00 : f32
    %195 = vector.broadcast %cst_83 : f32 to vector<2x1xf32>
    %196 = arith.subf %195, %156 : vector<2x1xf32>
    %197 = vector.broadcast %196 : vector<2x1xf32> to vector<2x32xf32>
    %198 = arith.mulf %197, %154 : vector<2x32xf32>
    %199 = arith.addf %194, %198 : vector<2x32xf32>
    %c4 = arith.constant 4 : index
    %c0_84 = arith.constant 0 : index
    %c0_85 = arith.constant 0 : index
    %200 = vector.load %arg1[%c4, %c0_84, %c0_85] : memref<8x2x1xf32, #tpu.memory_space<vmem>>, vector<1x2x1xf32>
    %201 = vector.shape_cast %200 : vector<1x2x1xf32> to vector<2x1xf32>
    %c4_86 = arith.constant 4 : index
    %c0_87 = arith.constant 0 : index
    %c0_88 = arith.constant 0 : index
    %202 = vector.load %arg10[%c4_86, %c0_87, %c0_88] : memref<8x2x96xf32, #tpu.memory_space<vmem>>, vector<1x2x96xf32>
    %203 = vector.shape_cast %202 : vector<1x2x96xf32> to vector<2x96xf32>
    %cst_89 = arith.constant dense<0.000000e+00> : vector<2x96xf32>
    %204 = tpu.matmul %199, %7, %cst_89 {dimension_numbers = #tpu.dot_dimension_numbers<[1], [0], [0], [1], [0, 0, 1, 1], [], []>} : vector<2x32xf32>, vector<32x96xf32>, vector<2x96xf32> -> vector<2x96xf32>
    %205 = vector.broadcast %11 : vector<1x96xf32> to vector<2x96xf32>
    %206 = arith.addf %204, %205 : vector<2x96xf32>
    %207 = vector.extract_strided_slice %203 {offsets = [0, 0], sizes = [2, 32], strides = [1, 1]} : vector<2x96xf32> to vector<2x32xf32>
    %208 = vector.extract_strided_slice %206 {offsets = [0, 0], sizes = [2, 32], strides = [1, 1]} : vector<2x96xf32> to vector<2x32xf32>
    %209 = arith.addf %207, %208 : vector<2x32xf32>
    %210 = arith.negf %209 : vector<2x32xf32>
    %211 = math.exp %210 : vector<2x32xf32>
    %cst_90 = arith.constant 1.000000e+00 : f32
    %212 = vector.broadcast %cst_90 : f32 to vector<2x32xf32>
    %213 = arith.addf %212, %211 : vector<2x32xf32>
    %214 = arith.divf %212, %213 : vector<2x32xf32>
    %215 = vector.extract_strided_slice %203 {offsets = [0, 32], sizes = [2, 32], strides = [1, 1]} : vector<2x96xf32> to vector<2x32xf32>
    %216 = vector.extract_strided_slice %206 {offsets = [0, 32], sizes = [2, 32], strides = [1, 1]} : vector<2x96xf32> to vector<2x32xf32>
    %217 = arith.addf %215, %216 : vector<2x32xf32>
    %218 = arith.negf %217 : vector<2x32xf32>
    %219 = math.exp %218 : vector<2x32xf32>
    %cst_91 = arith.constant 1.000000e+00 : f32
    %220 = vector.broadcast %cst_91 : f32 to vector<2x32xf32>
    %221 = arith.addf %220, %219 : vector<2x32xf32>
    %222 = arith.divf %220, %221 : vector<2x32xf32>
    %223 = vector.extract_strided_slice %203 {offsets = [0, 64], sizes = [2, 32], strides = [1, 1]} : vector<2x96xf32> to vector<2x32xf32>
    %224 = vector.extract_strided_slice %206 {offsets = [0, 64], sizes = [2, 32], strides = [1, 1]} : vector<2x96xf32> to vector<2x32xf32>
    %225 = arith.mulf %214, %224 : vector<2x32xf32>
    %226 = arith.addf %223, %225 : vector<2x32xf32>
    %227 = math.tanh %226 : vector<2x32xf32>
    %cst_92 = arith.constant 1.000000e+00 : f32
    %228 = vector.broadcast %cst_92 : f32 to vector<2x32xf32>
    %229 = arith.subf %228, %222 : vector<2x32xf32>
    %230 = arith.mulf %229, %227 : vector<2x32xf32>
    %231 = arith.mulf %222, %199 : vector<2x32xf32>
    %232 = arith.addf %230, %231 : vector<2x32xf32>
    %233 = vector.broadcast %201 : vector<2x1xf32> to vector<2x32xf32>
    %234 = arith.mulf %233, %232 : vector<2x32xf32>
    %c4_93 = arith.constant 4 : index
    %c0_94 = arith.constant 0 : index
    %c0_95 = arith.constant 0 : index
    %235 = vector.load %arg9[%c4_93, %c0_94, %c0_95] : memref<8x2x64xf32, #tpu.memory_space<vmem>>, vector<1x2x32xf32>
    %236 = vector.shape_cast %235 : vector<1x2x32xf32> to vector<2x32xf32>
    %237 = vector.shape_cast %234 : vector<2x32xf32> to vector<1x2x32xf32>
    tpu.vector_store %arg9[%c4_93, %c0_94, %c0_95], %237 {strides = array<i32>} : memref<8x2x64xf32, #tpu.memory_space<vmem>>, vector<1x2x32xf32>,
    %238 = vector.broadcast %201 : vector<2x1xf32> to vector<2x32xf32>
    %239 = arith.mulf %238, %232 : vector<2x32xf32>
    %cst_96 = arith.constant 1.000000e+00 : f32
    %240 = vector.broadcast %cst_96 : f32 to vector<2x1xf32>
    %241 = arith.subf %240, %201 : vector<2x1xf32>
    %242 = vector.broadcast %241 : vector<2x1xf32> to vector<2x32xf32>
    %243 = arith.mulf %242, %199 : vector<2x32xf32>
    %244 = arith.addf %239, %243 : vector<2x32xf32>
    %c5 = arith.constant 5 : index
    %c0_97 = arith.constant 0 : index
    %c0_98 = arith.constant 0 : index
    %245 = vector.load %arg1[%c5, %c0_97, %c0_98] : memref<8x2x1xf32, #tpu.memory_space<vmem>>, vector<1x2x1xf32>
    %246 = vector.shape_cast %245 : vector<1x2x1xf32> to vector<2x1xf32>
    %c5_99 = arith.constant 5 : index
    %c0_100 = arith.constant 0 : index
    %c0_101 = arith.constant 0 : index
    %247 = vector.load %arg10[%c5_99, %c0_100, %c0_101] : memref<8x2x96xf32, #tpu.memory_space<vmem>>, vector<1x2x96xf32>
    %248 = vector.shape_cast %247 : vector<1x2x96xf32> to vector<2x96xf32>
    %cst_102 = arith.constant dense<0.000000e+00> : vector<2x96xf32>
    %249 = tpu.matmul %244, %7, %cst_102 {dimension_numbers = #tpu.dot_dimension_numbers<[1], [0], [0], [1], [0, 0, 1, 1], [], []>} : vector<2x32xf32>, vector<32x96xf32>, vector<2x96xf32> -> vector<2x96xf32>
    %250 = vector.broadcast %11 : vector<1x96xf32> to vector<2x96xf32>
    %251 = arith.addf %249, %250 : vector<2x96xf32>
    %252 = vector.extract_strided_slice %248 {offsets = [0, 0], sizes = [2, 32], strides = [1, 1]} : vector<2x96xf32> to vector<2x32xf32>
    %253 = vector.extract_strided_slice %251 {offsets = [0, 0], sizes = [2, 32], strides = [1, 1]} : vector<2x96xf32> to vector<2x32xf32>
    %254 = arith.addf %252, %253 : vector<2x32xf32>
    %255 = arith.negf %254 : vector<2x32xf32>
    %256 = math.exp %255 : vector<2x32xf32>
    %cst_103 = arith.constant 1.000000e+00 : f32
    %257 = vector.broadcast %cst_103 : f32 to vector<2x32xf32>
    %258 = arith.addf %257, %256 : vector<2x32xf32>
    %259 = arith.divf %257, %258 : vector<2x32xf32>
    %260 = vector.extract_strided_slice %248 {offsets = [0, 32], sizes = [2, 32], strides = [1, 1]} : vector<2x96xf32> to vector<2x32xf32>
    %261 = vector.extract_strided_slice %251 {offsets = [0, 32], sizes = [2, 32], strides = [1, 1]} : vector<2x96xf32> to vector<2x32xf32>
    %262 = arith.addf %260, %261 : vector<2x32xf32>
    %263 = arith.negf %262 : vector<2x32xf32>
    %264 = math.exp %263 : vector<2x32xf32>
    %cst_104 = arith.constant 1.000000e+00 : f32
    %265 = vector.broadcast %cst_104 : f32 to vector<2x32xf32>
    %266 = arith.addf %265, %264 : vector<2x32xf32>
    %267 = arith.divf %265, %266 : vector<2x32xf32>
    %268 = vector.extract_strided_slice %248 {offsets = [0, 64], sizes = [2, 32], strides = [1, 1]} : vector<2x96xf32> to vector<2x32xf32>
    %269 = vector.extract_strided_slice %251 {offsets = [0, 64], sizes = [2, 32], strides = [1, 1]} : vector<2x96xf32> to vector<2x32xf32>
    %270 = arith.mulf %259, %269 : vector<2x32xf32>
    %271 = arith.addf %268, %270 : vector<2x32xf32>
    %272 = math.tanh %271 : vector<2x32xf32>
    %cst_105 = arith.constant 1.000000e+00 : f32
    %273 = vector.broadcast %cst_105 : f32 to vector<2x32xf32>
    %274 = arith.subf %273, %267 : vector<2x32xf32>
    %275 = arith.mulf %274, %272 : vector<2x32xf32>
    %276 = arith.mulf %267, %244 : vector<2x32xf32>
    %277 = arith.addf %275, %276 : vector<2x32xf32>
    %278 = vector.broadcast %246 : vector<2x1xf32> to vector<2x32xf32>
    %279 = arith.mulf %278, %277 : vector<2x32xf32>
    %c5_106 = arith.constant 5 : index
    %c0_107 = arith.constant 0 : index
    %c0_108 = arith.constant 0 : index
    %280 = vector.load %arg9[%c5_106, %c0_107, %c0_108] : memref<8x2x64xf32, #tpu.memory_space<vmem>>, vector<1x2x32xf32>
    %281 = vector.shape_cast %280 : vector<1x2x32xf32> to vector<2x32xf32>
    %282 = vector.shape_cast %279 : vector<2x32xf32> to vector<1x2x32xf32>
    tpu.vector_store %arg9[%c5_106, %c0_107, %c0_108], %282 {strides = array<i32>} : memref<8x2x64xf32, #tpu.memory_space<vmem>>, vector<1x2x32xf32>,
    %283 = vector.broadcast %246 : vector<2x1xf32> to vector<2x32xf32>
    %284 = arith.mulf %283, %277 : vector<2x32xf32>
    %cst_109 = arith.constant 1.000000e+00 : f32
    %285 = vector.broadcast %cst_109 : f32 to vector<2x1xf32>
    %286 = arith.subf %285, %246 : vector<2x1xf32>
    %287 = vector.broadcast %286 : vector<2x1xf32> to vector<2x32xf32>
    %288 = arith.mulf %287, %244 : vector<2x32xf32>
    %289 = arith.addf %284, %288 : vector<2x32xf32>
    %c6 = arith.constant 6 : index
    %c0_110 = arith.constant 0 : index
    %c0_111 = arith.constant 0 : index
    %290 = vector.load %arg1[%c6, %c0_110, %c0_111] : memref<8x2x1xf32, #tpu.memory_space<vmem>>, vector<1x2x1xf32>
    %291 = vector.shape_cast %290 : vector<1x2x1xf32> to vector<2x1xf32>
    %c6_112 = arith.constant 6 : index
    %c0_113 = arith.constant 0 : index
    %c0_114 = arith.constant 0 : index
    %292 = vector.load %arg10[%c6_112, %c0_113, %c0_114] : memref<8x2x96xf32, #tpu.memory_space<vmem>>, vector<1x2x96xf32>
    %293 = vector.shape_cast %292 : vector<1x2x96xf32> to vector<2x96xf32>
    %cst_115 = arith.constant dense<0.000000e+00> : vector<2x96xf32>
    %294 = tpu.matmul %289, %7, %cst_115 {dimension_numbers = #tpu.dot_dimension_numbers<[1], [0], [0], [1], [0, 0, 1, 1], [], []>} : vector<2x32xf32>, vector<32x96xf32>, vector<2x96xf32> -> vector<2x96xf32>
    %295 = vector.broadcast %11 : vector<1x96xf32> to vector<2x96xf32>
    %296 = arith.addf %294, %295 : vector<2x96xf32>
    %297 = vector.extract_strided_slice %293 {offsets = [0, 0], sizes = [2, 32], strides = [1, 1]} : vector<2x96xf32> to vector<2x32xf32>
    %298 = vector.extract_strided_slice %296 {offsets = [0, 0], sizes = [2, 32], strides = [1, 1]} : vector<2x96xf32> to vector<2x32xf32>
    %299 = arith.addf %297, %298 : vector<2x32xf32>
    %300 = arith.negf %299 : vector<2x32xf32>
    %301 = math.exp %300 : vector<2x32xf32>
    %cst_116 = arith.constant 1.000000e+00 : f32
    %302 = vector.broadcast %cst_116 : f32 to vector<2x32xf32>
    %303 = arith.addf %302, %301 : vector<2x32xf32>
    %304 = arith.divf %302, %303 : vector<2x32xf32>
    %305 = vector.extract_strided_slice %293 {offsets = [0, 32], sizes = [2, 32], strides = [1, 1]} : vector<2x96xf32> to vector<2x32xf32>
    %306 = vector.extract_strided_slice %296 {offsets = [0, 32], sizes = [2, 32], strides = [1, 1]} : vector<2x96xf32> to vector<2x32xf32>
    %307 = arith.addf %305, %306 : vector<2x32xf32>
    %308 = arith.negf %307 : vector<2x32xf32>
    %309 = math.exp %308 : vector<2x32xf32>
    %cst_117 = arith.constant 1.000000e+00 : f32
    %310 = vector.broadcast %cst_117 : f32 to vector<2x32xf32>
    %311 = arith.addf %310, %309 : vector<2x32xf32>
    %312 = arith.divf %310, %311 : vector<2x32xf32>
    %313 = vector.extract_strided_slice %293 {offsets = [0, 64], sizes = [2, 32], strides = [1, 1]} : vector<2x96xf32> to vector<2x32xf32>
    %314 = vector.extract_strided_slice %296 {offsets = [0, 64], sizes = [2, 32], strides = [1, 1]} : vector<2x96xf32> to vector<2x32xf32>
    %315 = arith.mulf %304, %314 : vector<2x32xf32>
    %316 = arith.addf %313, %315 : vector<2x32xf32>
    %317 = math.tanh %316 : vector<2x32xf32>
    %cst_118 = arith.constant 1.000000e+00 : f32
    %318 = vector.broadcast %cst_118 : f32 to vector<2x32xf32>
    %319 = arith.subf %318, %312 : vector<2x32xf32>
    %320 = arith.mulf %319, %317 : vector<2x32xf32>
    %321 = arith.mulf %312, %289 : vector<2x32xf32>
    %322 = arith.addf %320, %321 : vector<2x32xf32>
    %323 = vector.broadcast %291 : vector<2x1xf32> to vector<2x32xf32>
    %324 = arith.mulf %323, %322 : vector<2x32xf32>
    %c6_119 = arith.constant 6 : index
    %c0_120 = arith.constant 0 : index
    %c0_121 = arith.constant 0 : index
    %325 = vector.load %arg9[%c6_119, %c0_120, %c0_121] : memref<8x2x64xf32, #tpu.memory_space<vmem>>, vector<1x2x32xf32>
    %326 = vector.shape_cast %325 : vector<1x2x32xf32> to vector<2x32xf32>
    %327 = vector.shape_cast %324 : vector<2x32xf32> to vector<1x2x32xf32>
    tpu.vector_store %arg9[%c6_119, %c0_120, %c0_121], %327 {strides = array<i32>} : memref<8x2x64xf32, #tpu.memory_space<vmem>>, vector<1x2x32xf32>,
    %328 = vector.broadcast %291 : vector<2x1xf32> to vector<2x32xf32>
    %329 = arith.mulf %328, %322 : vector<2x32xf32>
    %cst_122 = arith.constant 1.000000e+00 : f32
    %330 = vector.broadcast %cst_122 : f32 to vector<2x1xf32>
    %331 = arith.subf %330, %291 : vector<2x1xf32>
    %332 = vector.broadcast %331 : vector<2x1xf32> to vector<2x32xf32>
    %333 = arith.mulf %332, %289 : vector<2x32xf32>
    %334 = arith.addf %329, %333 : vector<2x32xf32>
    %c7 = arith.constant 7 : index
    %c0_123 = arith.constant 0 : index
    %c0_124 = arith.constant 0 : index
    %335 = vector.load %arg1[%c7, %c0_123, %c0_124] : memref<8x2x1xf32, #tpu.memory_space<vmem>>, vector<1x2x1xf32>
    %336 = vector.shape_cast %335 : vector<1x2x1xf32> to vector<2x1xf32>
    %c7_125 = arith.constant 7 : index
    %c0_126 = arith.constant 0 : index
    %c0_127 = arith.constant 0 : index
    %337 = vector.load %arg10[%c7_125, %c0_126, %c0_127] : memref<8x2x96xf32, #tpu.memory_space<vmem>>, vector<1x2x96xf32>
    %338 = vector.shape_cast %337 : vector<1x2x96xf32> to vector<2x96xf32>
    %cst_128 = arith.constant dense<0.000000e+00> : vector<2x96xf32>
    %339 = tpu.matmul %334, %7, %cst_128 {dimension_numbers = #tpu.dot_dimension_numbers<[1], [0], [0], [1], [0, 0, 1, 1], [], []>} : vector<2x32xf32>, vector<32x96xf32>, vector<2x96xf32> -> vector<2x96xf32>
    %340 = vector.broadcast %11 : vector<1x96xf32> to vector<2x96xf32>
    %341 = arith.addf %339, %340 : vector<2x96xf32>
    %342 = vector.extract_strided_slice %338 {offsets = [0, 0], sizes = [2, 32], strides = [1, 1]} : vector<2x96xf32> to vector<2x32xf32>
    %343 = vector.extract_strided_slice %341 {offsets = [0, 0], sizes = [2, 32], strides = [1, 1]} : vector<2x96xf32> to vector<2x32xf32>
    %344 = arith.addf %342, %343 : vector<2x32xf32>
    %345 = arith.negf %344 : vector<2x32xf32>
    %346 = math.exp %345 : vector<2x32xf32>
    %cst_129 = arith.constant 1.000000e+00 : f32
    %347 = vector.broadcast %cst_129 : f32 to vector<2x32xf32>
    %348 = arith.addf %347, %346 : vector<2x32xf32>
    %349 = arith.divf %347, %348 : vector<2x32xf32>
    %350 = vector.extract_strided_slice %338 {offsets = [0, 32], sizes = [2, 32], strides = [1, 1]} : vector<2x96xf32> to vector<2x32xf32>
    %351 = vector.extract_strided_slice %341 {offsets = [0, 32], sizes = [2, 32], strides = [1, 1]} : vector<2x96xf32> to vector<2x32xf32>
    %352 = arith.addf %350, %351 : vector<2x32xf32>
    %353 = arith.negf %352 : vector<2x32xf32>
    %354 = math.exp %353 : vector<2x32xf32>
    %cst_130 = arith.constant 1.000000e+00 : f32
    %355 = vector.broadcast %cst_130 : f32 to vector<2x32xf32>
    %356 = arith.addf %355, %354 : vector<2x32xf32>
    %357 = arith.divf %355, %356 : vector<2x32xf32>
    %358 = vector.extract_strided_slice %338 {offsets = [0, 64], sizes = [2, 32], strides = [1, 1]} : vector<2x96xf32> to vector<2x32xf32>
    %359 = vector.extract_strided_slice %341 {offsets = [0, 64], sizes = [2, 32], strides = [1, 1]} : vector<2x96xf32> to vector<2x32xf32>
    %360 = arith.mulf %349, %359 : vector<2x32xf32>
    %361 = arith.addf %358, %360 : vector<2x32xf32>
    %362 = math.tanh %361 : vector<2x32xf32>
    %cst_131 = arith.constant 1.000000e+00 : f32
    %363 = vector.broadcast %cst_131 : f32 to vector<2x32xf32>
    %364 = arith.subf %363, %357 : vector<2x32xf32>
    %365 = arith.mulf %364, %362 : vector<2x32xf32>
    %366 = arith.mulf %357, %334 : vector<2x32xf32>
    %367 = arith.addf %365, %366 : vector<2x32xf32>
    %368 = vector.broadcast %336 : vector<2x1xf32> to vector<2x32xf32>
    %369 = arith.mulf %368, %367 : vector<2x32xf32>
    %c7_132 = arith.constant 7 : index
    %c0_133 = arith.constant 0 : index
    %c0_134 = arith.constant 0 : index
    %370 = vector.load %arg9[%c7_132, %c0_133, %c0_134] : memref<8x2x64xf32, #tpu.memory_space<vmem>>, vector<1x2x32xf32>
    %371 = vector.shape_cast %370 : vector<1x2x32xf32> to vector<2x32xf32>
    %372 = vector.shape_cast %369 : vector<2x32xf32> to vector<1x2x32xf32>
    tpu.vector_store %arg9[%c7_132, %c0_133, %c0_134], %372 {strides = array<i32>} : memref<8x2x64xf32, #tpu.memory_space<vmem>>, vector<1x2x32xf32>,
    %373 = vector.broadcast %336 : vector<2x1xf32> to vector<2x32xf32>
    %374 = arith.mulf %373, %367 : vector<2x32xf32>
    %cst_135 = arith.constant 1.000000e+00 : f32
    %375 = vector.broadcast %cst_135 : f32 to vector<2x1xf32>
    %376 = arith.subf %375, %336 : vector<2x1xf32>
    %377 = vector.broadcast %376 : vector<2x1xf32> to vector<2x32xf32>
    %378 = arith.mulf %377, %334 : vector<2x32xf32>
    %379 = arith.addf %374, %378 : vector<2x32xf32>
    %c0_136 = arith.constant 0 : index
    %c0_137 = arith.constant 0 : index
    %c0_138 = arith.constant 0 : index
    %380 = vector.load %arg7[%c0_136, %c0_137, %c0_138] : memref<4x2x32xf32, #tpu.memory_space<vmem>>, vector<1x2x32xf32>
    %381 = vector.shape_cast %380 : vector<1x2x32xf32> to vector<2x32xf32>
    %382 = vector.shape_cast %379 : vector<2x32xf32> to vector<1x2x32xf32>
    tpu.vector_store %arg7[%c0_136, %c0_137, %c0_138], %382 {strides = array<i32>} : memref<4x2x32xf32, #tpu.memory_space<vmem>>, vector<1x2x32xf32>,
    %c0_139 = arith.constant 0 : index
    %c1_140 = arith.constant 1 : index
    %c0_141 = arith.constant 0 : index
    %c0_142 = arith.constant 0 : index
    %383 = vector.load %arg2[%c0_139, %c1_140, %c0_141, %c0_142] : memref<2x2x64x96xf32, #tpu.memory_space<vmem>>, vector<1x1x64x96xf32>
    %384 = vector.shape_cast %383 : vector<1x1x64x96xf32> to vector<64x96xf32>
    %c0_143 = arith.constant 0 : index
    %c1_144 = arith.constant 1 : index
    %c0_145 = arith.constant 0 : index
    %c0_146 = arith.constant 0 : index
    %385 = vector.load %arg3[%c0_143, %c1_144, %c0_145, %c0_146] : memref<2x2x32x96xf32, #tpu.memory_space<vmem>>, vector<1x1x32x96xf32>
    %386 = vector.shape_cast %385 : vector<1x1x32x96xf32> to vector<32x96xf32>
    %c0_147 = arith.constant 0 : index
    %c1_148 = arith.constant 1 : index
    %c0_149 = arith.constant 0 : index
    %c0_150 = arith.constant 0 : index
    %387 = vector.load %arg4[%c0_147, %c1_148, %c0_149, %c0_150] : memref<2x2x1x96xf32, #tpu.memory_space<vmem>>, vector<1x1x1x96xf32>
    %388 = vector.shape_cast %387 : vector<1x1x1x96xf32> to vector<1x96xf32>
    %c0_151 = arith.constant 0 : index
    %c1_152 = arith.constant 1 : index
    %c0_153 = arith.constant 0 : index
    %c0_154 = arith.constant 0 : index
    %389 = vector.load %arg5[%c0_151, %c1_152, %c0_153, %c0_154] : memref<2x2x1x96xf32, #tpu.memory_space<vmem>>, vector<1x1x1x96xf32>
    %390 = vector.shape_cast %389 : vector<1x1x1x96xf32> to vector<1x96xf32>
    %c0_155 = arith.constant 0 : index
    %c0_156 = arith.constant 0 : index
    %c0_157 = arith.constant 0 : index
    %391 = vector.load %arg8[%c0_155, %c0_156, %c0_157] : memref<8x2x64xf32, #tpu.memory_space<vmem>>, vector<8x2x64xf32>
    %392 = vector.shape_cast %391 : vector<8x2x64xf32> to vector<16x64xf32>
    %cst_158 = arith.constant dense<0.000000e+00> : vector<16x96xf32>
    %393 = tpu.matmul %392, %384, %cst_158 {dimension_numbers = #tpu.dot_dimension_numbers<[1], [0], [0], [1], [0, 0, 1, 1], [], []>} : vector<16x64xf32>, vector<64x96xf32>, vector<16x96xf32> -> vector<16x96xf32>
    %394 = vector.broadcast %388 : vector<1x96xf32> to vector<16x96xf32>
    %395 = arith.addf %393, %394 : vector<16x96xf32>
    %396 = vector.shape_cast %395 : vector<16x96xf32> to vector<8x2x96xf32>
    %c0_159 = arith.constant 0 : index
    %c0_160 = arith.constant 0 : index
    %c0_161 = arith.constant 0 : index
    %397 = vector.load %arg10[%c0_159, %c0_160, %c0_161] : memref<8x2x96xf32, #tpu.memory_space<vmem>>, vector<8x2x96xf32>
    tpu.vector_store %arg10[%c0_159, %c0_160, %c0_161], %396 {strides = array<i32>} : memref<8x2x96xf32, #tpu.memory_space<vmem>>, vector<8x2x96xf32>,
    %cst_162 = arith.constant 0.000000e+00 : f32
    %398 = vector.broadcast %cst_162 : f32 to vector<2x32xf32>
    %c7_163 = arith.constant 7 : index
    %c0_164 = arith.constant 0 : index
    %c0_165 = arith.constant 0 : index
    %399 = vector.load %arg1[%c7_163, %c0_164, %c0_165] : memref<8x2x1xf32, #tpu.memory_space<vmem>>, vector<1x2x1xf32>
    %400 = vector.shape_cast %399 : vector<1x2x1xf32> to vector<2x1xf32>
    %c7_166 = arith.constant 7 : index
    %c0_167 = arith.constant 0 : index
    %c0_168 = arith.constant 0 : index
    %401 = vector.load %arg10[%c7_166, %c0_167, %c0_168] : memref<8x2x96xf32, #tpu.memory_space<vmem>>, vector<1x2x96xf32>
    %402 = vector.shape_cast %401 : vector<1x2x96xf32> to vector<2x96xf32>
    %cst_169 = arith.constant dense<0.000000e+00> : vector<2x96xf32>
    %403 = tpu.matmul %398, %386, %cst_169 {dimension_numbers = #tpu.dot_dimension_numbers<[1], [0], [0], [1], [0, 0, 1, 1], [], []>} : vector<2x32xf32>, vector<32x96xf32>, vector<2x96xf32> -> vector<2x96xf32>
    %404 = vector.broadcast %390 : vector<1x96xf32> to vector<2x96xf32>
    %405 = arith.addf %403, %404 : vector<2x96xf32>
    %406 = vector.extract_strided_slice %402 {offsets = [0, 0], sizes = [2, 32], strides = [1, 1]} : vector<2x96xf32> to vector<2x32xf32>
    %407 = vector.extract_strided_slice %405 {offsets = [0, 0], sizes = [2, 32], strides = [1, 1]} : vector<2x96xf32> to vector<2x32xf32>
    %408 = arith.addf %406, %407 : vector<2x32xf32>
    %409 = arith.negf %408 : vector<2x32xf32>
    %410 = math.exp %409 : vector<2x32xf32>
    %cst_170 = arith.constant 1.000000e+00 : f32
    %411 = vector.broadcast %cst_170 : f32 to vector<2x32xf32>
    %412 = arith.addf %411, %410 : vector<2x32xf32>
    %413 = arith.divf %411, %412 : vector<2x32xf32>
    %414 = vector.extract_strided_slice %402 {offsets = [0, 32], sizes = [2, 32], strides = [1, 1]} : vector<2x96xf32> to vector<2x32xf32>
    %415 = vector.extract_strided_slice %405 {offsets = [0, 32], sizes = [2, 32], strides = [1, 1]} : vector<2x96xf32> to vector<2x32xf32>
    %416 = arith.addf %414, %415 : vector<2x32xf32>
    %417 = arith.negf %416 : vector<2x32xf32>
    %418 = math.exp %417 : vector<2x32xf32>
    %cst_171 = arith.constant 1.000000e+00 : f32
    %419 = vector.broadcast %cst_171 : f32 to vector<2x32xf32>
    %420 = arith.addf %419, %418 : vector<2x32xf32>
    %421 = arith.divf %419, %420 : vector<2x32xf32>
    %422 = vector.extract_strided_slice %402 {offsets = [0, 64], sizes = [2, 32], strides = [1, 1]} : vector<2x96xf32> to vector<2x32xf32>
    %423 = vector.extract_strided_slice %405 {offsets = [0, 64], sizes = [2, 32], strides = [1, 1]} : vector<2x96xf32> to vector<2x32xf32>
    %424 = arith.mulf %413, %423 : vector<2x32xf32>
    %425 = arith.addf %422, %424 : vector<2x32xf32>
    %426 = math.tanh %425 : vector<2x32xf32>
    %cst_172 = arith.constant 1.000000e+00 : f32
    %427 = vector.broadcast %cst_172 : f32 to vector<2x32xf32>
    %428 = arith.subf %427, %421 : vector<2x32xf32>
    %429 = arith.mulf %428, %426 : vector<2x32xf32>
    %430 = arith.mulf %421, %398 : vector<2x32xf32>
    %431 = arith.addf %429, %430 : vector<2x32xf32>
    %432 = vector.broadcast %400 : vector<2x1xf32> to vector<2x32xf32>
    %433 = arith.mulf %432, %431 : vector<2x32xf32>
    %c7_173 = arith.constant 7 : index
    %c0_174 = arith.constant 0 : index
    %c32_175 = arith.constant 32 : index
    %434 = vector.load %arg9[%c7_173, %c0_174, %c32_175] : memref<8x2x64xf32, #tpu.memory_space<vmem>>, vector<1x2x32xf32>
    %435 = vector.shape_cast %434 : vector<1x2x32xf32> to vector<2x32xf32>
    %436 = vector.shape_cast %433 : vector<2x32xf32> to vector<1x2x32xf32>
    tpu.vector_store %arg9[%c7_173, %c0_174, %c32_175], %436 {strides = array<i32>} : memref<8x2x64xf32, #tpu.memory_space<vmem>>, vector<1x2x32xf32>,
    %437 = vector.broadcast %400 : vector<2x1xf32> to vector<2x32xf32>
    %438 = arith.mulf %437, %431 : vector<2x32xf32>
    %cst_176 = arith.constant 1.000000e+00 : f32
    %439 = vector.broadcast %cst_176 : f32 to vector<2x1xf32>
    %440 = arith.subf %439, %400 : vector<2x1xf32>
    %441 = vector.broadcast %440 : vector<2x1xf32> to vector<2x32xf32>
    %442 = arith.mulf %441, %398 : vector<2x32xf32>
    %443 = arith.addf %438, %442 : vector<2x32xf32>
    %c6_177 = arith.constant 6 : index
    %c0_178 = arith.constant 0 : index
    %c0_179 = arith.constant 0 : index
    %444 = vector.load %arg1[%c6_177, %c0_178, %c0_179] : memref<8x2x1xf32, #tpu.memory_space<vmem>>, vector<1x2x1xf32>
    %445 = vector.shape_cast %444 : vector<1x2x1xf32> to vector<2x1xf32>
    %c6_180 = arith.constant 6 : index
    %c0_181 = arith.constant 0 : index
    %c0_182 = arith.constant 0 : index
    %446 = vector.load %arg10[%c6_180, %c0_181, %c0_182] : memref<8x2x96xf32, #tpu.memory_space<vmem>>, vector<1x2x96xf32>
    %447 = vector.shape_cast %446 : vector<1x2x96xf32> to vector<2x96xf32>
    %cst_183 = arith.constant dense<0.000000e+00> : vector<2x96xf32>
    %448 = tpu.matmul %443, %386, %cst_183 {dimension_numbers = #tpu.dot_dimension_numbers<[1], [0], [0], [1], [0, 0, 1, 1], [], []>} : vector<2x32xf32>, vector<32x96xf32>, vector<2x96xf32> -> vector<2x96xf32>
    %449 = vector.broadcast %390 : vector<1x96xf32> to vector<2x96xf32>
    %450 = arith.addf %448, %449 : vector<2x96xf32>
    %451 = vector.extract_strided_slice %447 {offsets = [0, 0], sizes = [2, 32], strides = [1, 1]} : vector<2x96xf32> to vector<2x32xf32>
    %452 = vector.extract_strided_slice %450 {offsets = [0, 0], sizes = [2, 32], strides = [1, 1]} : vector<2x96xf32> to vector<2x32xf32>
    %453 = arith.addf %451, %452 : vector<2x32xf32>
    %454 = arith.negf %453 : vector<2x32xf32>
    %455 = math.exp %454 : vector<2x32xf32>
    %cst_184 = arith.constant 1.000000e+00 : f32
    %456 = vector.broadcast %cst_184 : f32 to vector<2x32xf32>
    %457 = arith.addf %456, %455 : vector<2x32xf32>
    %458 = arith.divf %456, %457 : vector<2x32xf32>
    %459 = vector.extract_strided_slice %447 {offsets = [0, 32], sizes = [2, 32], strides = [1, 1]} : vector<2x96xf32> to vector<2x32xf32>
    %460 = vector.extract_strided_slice %450 {offsets = [0, 32], sizes = [2, 32], strides = [1, 1]} : vector<2x96xf32> to vector<2x32xf32>
    %461 = arith.addf %459, %460 : vector<2x32xf32>
    %462 = arith.negf %461 : vector<2x32xf32>
    %463 = math.exp %462 : vector<2x32xf32>
    %cst_185 = arith.constant 1.000000e+00 : f32
    %464 = vector.broadcast %cst_185 : f32 to vector<2x32xf32>
    %465 = arith.addf %464, %463 : vector<2x32xf32>
    %466 = arith.divf %464, %465 : vector<2x32xf32>
    %467 = vector.extract_strided_slice %447 {offsets = [0, 64], sizes = [2, 32], strides = [1, 1]} : vector<2x96xf32> to vector<2x32xf32>
    %468 = vector.extract_strided_slice %450 {offsets = [0, 64], sizes = [2, 32], strides = [1, 1]} : vector<2x96xf32> to vector<2x32xf32>
    %469 = arith.mulf %458, %468 : vector<2x32xf32>
    %470 = arith.addf %467, %469 : vector<2x32xf32>
    %471 = math.tanh %470 : vector<2x32xf32>
    %cst_186 = arith.constant 1.000000e+00 : f32
    %472 = vector.broadcast %cst_186 : f32 to vector<2x32xf32>
    %473 = arith.subf %472, %466 : vector<2x32xf32>
    %474 = arith.mulf %473, %471 : vector<2x32xf32>
    %475 = arith.mulf %466, %443 : vector<2x32xf32>
    %476 = arith.addf %474, %475 : vector<2x32xf32>
    %477 = vector.broadcast %445 : vector<2x1xf32> to vector<2x32xf32>
    %478 = arith.mulf %477, %476 : vector<2x32xf32>
    %c6_187 = arith.constant 6 : index
    %c0_188 = arith.constant 0 : index
    %c32_189 = arith.constant 32 : index
    %479 = vector.load %arg9[%c6_187, %c0_188, %c32_189] : memref<8x2x64xf32, #tpu.memory_space<vmem>>, vector<1x2x32xf32>
    %480 = vector.shape_cast %479 : vector<1x2x32xf32> to vector<2x32xf32>
    %481 = vector.shape_cast %478 : vector<2x32xf32> to vector<1x2x32xf32>
    tpu.vector_store %arg9[%c6_187, %c0_188, %c32_189], %481 {strides = array<i32>} : memref<8x2x64xf32, #tpu.memory_space<vmem>>, vector<1x2x32xf32>,
    %482 = vector.broadcast %445 : vector<2x1xf32> to vector<2x32xf32>
    %483 = arith.mulf %482, %476 : vector<2x32xf32>
    %cst_190 = arith.constant 1.000000e+00 : f32
    %484 = vector.broadcast %cst_190 : f32 to vector<2x1xf32>
    %485 = arith.subf %484, %445 : vector<2x1xf32>
    %486 = vector.broadcast %485 : vector<2x1xf32> to vector<2x32xf32>
    %487 = arith.mulf %486, %443 : vector<2x32xf32>
    %488 = arith.addf %483, %487 : vector<2x32xf32>
    %c5_191 = arith.constant 5 : index
    %c0_192 = arith.constant 0 : index
    %c0_193 = arith.constant 0 : index
    %489 = vector.load %arg1[%c5_191, %c0_192, %c0_193] : memref<8x2x1xf32, #tpu.memory_space<vmem>>, vector<1x2x1xf32>
    %490 = vector.shape_cast %489 : vector<1x2x1xf32> to vector<2x1xf32>
    %c5_194 = arith.constant 5 : index
    %c0_195 = arith.constant 0 : index
    %c0_196 = arith.constant 0 : index
    %491 = vector.load %arg10[%c5_194, %c0_195, %c0_196] : memref<8x2x96xf32, #tpu.memory_space<vmem>>, vector<1x2x96xf32>
    %492 = vector.shape_cast %491 : vector<1x2x96xf32> to vector<2x96xf32>
    %cst_197 = arith.constant dense<0.000000e+00> : vector<2x96xf32>
    %493 = tpu.matmul %488, %386, %cst_197 {dimension_numbers = #tpu.dot_dimension_numbers<[1], [0], [0], [1], [0, 0, 1, 1], [], []>} : vector<2x32xf32>, vector<32x96xf32>, vector<2x96xf32> -> vector<2x96xf32>
    %494 = vector.broadcast %390 : vector<1x96xf32> to vector<2x96xf32>
    %495 = arith.addf %493, %494 : vector<2x96xf32>
    %496 = vector.extract_strided_slice %492 {offsets = [0, 0], sizes = [2, 32], strides = [1, 1]} : vector<2x96xf32> to vector<2x32xf32>
    %497 = vector.extract_strided_slice %495 {offsets = [0, 0], sizes = [2, 32], strides = [1, 1]} : vector<2x96xf32> to vector<2x32xf32>
    %498 = arith.addf %496, %497 : vector<2x32xf32>
    %499 = arith.negf %498 : vector<2x32xf32>
    %500 = math.exp %499 : vector<2x32xf32>
    %cst_198 = arith.constant 1.000000e+00 : f32
    %501 = vector.broadcast %cst_198 : f32 to vector<2x32xf32>
    %502 = arith.addf %501, %500 : vector<2x32xf32>
    %503 = arith.divf %501, %502 : vector<2x32xf32>
    %504 = vector.extract_strided_slice %492 {offsets = [0, 32], sizes = [2, 32], strides = [1, 1]} : vector<2x96xf32> to vector<2x32xf32>
    %505 = vector.extract_strided_slice %495 {offsets = [0, 32], sizes = [2, 32], strides = [1, 1]} : vector<2x96xf32> to vector<2x32xf32>
    %506 = arith.addf %504, %505 : vector<2x32xf32>
    %507 = arith.negf %506 : vector<2x32xf32>
    %508 = math.exp %507 : vector<2x32xf32>
    %cst_199 = arith.constant 1.000000e+00 : f32
    %509 = vector.broadcast %cst_199 : f32 to vector<2x32xf32>
    %510 = arith.addf %509, %508 : vector<2x32xf32>
    %511 = arith.divf %509, %510 : vector<2x32xf32>
    %512 = vector.extract_strided_slice %492 {offsets = [0, 64], sizes = [2, 32], strides = [1, 1]} : vector<2x96xf32> to vector<2x32xf32>
    %513 = vector.extract_strided_slice %495 {offsets = [0, 64], sizes = [2, 32], strides = [1, 1]} : vector<2x96xf32> to vector<2x32xf32>
    %514 = arith.mulf %503, %513 : vector<2x32xf32>
    %515 = arith.addf %512, %514 : vector<2x32xf32>
    %516 = math.tanh %515 : vector<2x32xf32>
    %cst_200 = arith.constant 1.000000e+00 : f32
    %517 = vector.broadcast %cst_200 : f32 to vector<2x32xf32>
    %518 = arith.subf %517, %511 : vector<2x32xf32>
    %519 = arith.mulf %518, %516 : vector<2x32xf32>
    %520 = arith.mulf %511, %488 : vector<2x32xf32>
    %521 = arith.addf %519, %520 : vector<2x32xf32>
    %522 = vector.broadcast %490 : vector<2x1xf32> to vector<2x32xf32>
    %523 = arith.mulf %522, %521 : vector<2x32xf32>
    %c5_201 = arith.constant 5 : index
    %c0_202 = arith.constant 0 : index
    %c32_203 = arith.constant 32 : index
    %524 = vector.load %arg9[%c5_201, %c0_202, %c32_203] : memref<8x2x64xf32, #tpu.memory_space<vmem>>, vector<1x2x32xf32>
    %525 = vector.shape_cast %524 : vector<1x2x32xf32> to vector<2x32xf32>
    %526 = vector.shape_cast %523 : vector<2x32xf32> to vector<1x2x32xf32>
    tpu.vector_store %arg9[%c5_201, %c0_202, %c32_203], %526 {strides = array<i32>} : memref<8x2x64xf32, #tpu.memory_space<vmem>>, vector<1x2x32xf32>,
    %527 = vector.broadcast %490 : vector<2x1xf32> to vector<2x32xf32>
    %528 = arith.mulf %527, %521 : vector<2x32xf32>
    %cst_204 = arith.constant 1.000000e+00 : f32
    %529 = vector.broadcast %cst_204 : f32 to vector<2x1xf32>
    %530 = arith.subf %529, %490 : vector<2x1xf32>
    %531 = vector.broadcast %530 : vector<2x1xf32> to vector<2x32xf32>
    %532 = arith.mulf %531, %488 : vector<2x32xf32>
    %533 = arith.addf %528, %532 : vector<2x32xf32>
    %c4_205 = arith.constant 4 : index
    %c0_206 = arith.constant 0 : index
    %c0_207 = arith.constant 0 : index
    %534 = vector.load %arg1[%c4_205, %c0_206, %c0_207] : memref<8x2x1xf32, #tpu.memory_space<vmem>>, vector<1x2x1xf32>
    %535 = vector.shape_cast %534 : vector<1x2x1xf32> to vector<2x1xf32>
    %c4_208 = arith.constant 4 : index
    %c0_209 = arith.constant 0 : index
    %c0_210 = arith.constant 0 : index
    %536 = vector.load %arg10[%c4_208, %c0_209, %c0_210] : memref<8x2x96xf32, #tpu.memory_space<vmem>>, vector<1x2x96xf32>
    %537 = vector.shape_cast %536 : vector<1x2x96xf32> to vector<2x96xf32>
    %cst_211 = arith.constant dense<0.000000e+00> : vector<2x96xf32>
    %538 = tpu.matmul %533, %386, %cst_211 {dimension_numbers = #tpu.dot_dimension_numbers<[1], [0], [0], [1], [0, 0, 1, 1], [], []>} : vector<2x32xf32>, vector<32x96xf32>, vector<2x96xf32> -> vector<2x96xf32>
    %539 = vector.broadcast %390 : vector<1x96xf32> to vector<2x96xf32>
    %540 = arith.addf %538, %539 : vector<2x96xf32>
    %541 = vector.extract_strided_slice %537 {offsets = [0, 0], sizes = [2, 32], strides = [1, 1]} : vector<2x96xf32> to vector<2x32xf32>
    %542 = vector.extract_strided_slice %540 {offsets = [0, 0], sizes = [2, 32], strides = [1, 1]} : vector<2x96xf32> to vector<2x32xf32>
    %543 = arith.addf %541, %542 : vector<2x32xf32>
    %544 = arith.negf %543 : vector<2x32xf32>
    %545 = math.exp %544 : vector<2x32xf32>
    %cst_212 = arith.constant 1.000000e+00 : f32
    %546 = vector.broadcast %cst_212 : f32 to vector<2x32xf32>
    %547 = arith.addf %546, %545 : vector<2x32xf32>
    %548 = arith.divf %546, %547 : vector<2x32xf32>
    %549 = vector.extract_strided_slice %537 {offsets = [0, 32], sizes = [2, 32], strides = [1, 1]} : vector<2x96xf32> to vector<2x32xf32>
    %550 = vector.extract_strided_slice %540 {offsets = [0, 32], sizes = [2, 32], strides = [1, 1]} : vector<2x96xf32> to vector<2x32xf32>
    %551 = arith.addf %549, %550 : vector<2x32xf32>
    %552 = arith.negf %551 : vector<2x32xf32>
    %553 = math.exp %552 : vector<2x32xf32>
    %cst_213 = arith.constant 1.000000e+00 : f32
    %554 = vector.broadcast %cst_213 : f32 to vector<2x32xf32>
    %555 = arith.addf %554, %553 : vector<2x32xf32>
    %556 = arith.divf %554, %555 : vector<2x32xf32>
    %557 = vector.extract_strided_slice %537 {offsets = [0, 64], sizes = [2, 32], strides = [1, 1]} : vector<2x96xf32> to vector<2x32xf32>
    %558 = vector.extract_strided_slice %540 {offsets = [0, 64], sizes = [2, 32], strides = [1, 1]} : vector<2x96xf32> to vector<2x32xf32>
    %559 = arith.mulf %548, %558 : vector<2x32xf32>
    %560 = arith.addf %557, %559 : vector<2x32xf32>
    %561 = math.tanh %560 : vector<2x32xf32>
    %cst_214 = arith.constant 1.000000e+00 : f32
    %562 = vector.broadcast %cst_214 : f32 to vector<2x32xf32>
    %563 = arith.subf %562, %556 : vector<2x32xf32>
    %564 = arith.mulf %563, %561 : vector<2x32xf32>
    %565 = arith.mulf %556, %533 : vector<2x32xf32>
    %566 = arith.addf %564, %565 : vector<2x32xf32>
    %567 = vector.broadcast %535 : vector<2x1xf32> to vector<2x32xf32>
    %568 = arith.mulf %567, %566 : vector<2x32xf32>
    %c4_215 = arith.constant 4 : index
    %c0_216 = arith.constant 0 : index
    %c32_217 = arith.constant 32 : index
    %569 = vector.load %arg9[%c4_215, %c0_216, %c32_217] : memref<8x2x64xf32, #tpu.memory_space<vmem>>, vector<1x2x32xf32>
    %570 = vector.shape_cast %569 : vector<1x2x32xf32> to vector<2x32xf32>
    %571 = vector.shape_cast %568 : vector<2x32xf32> to vector<1x2x32xf32>
    tpu.vector_store %arg9[%c4_215, %c0_216, %c32_217], %571 {strides = array<i32>} : memref<8x2x64xf32, #tpu.memory_space<vmem>>, vector<1x2x32xf32>,
    %572 = vector.broadcast %535 : vector<2x1xf32> to vector<2x32xf32>
    %573 = arith.mulf %572, %566 : vector<2x32xf32>
    %cst_218 = arith.constant 1.000000e+00 : f32
    %574 = vector.broadcast %cst_218 : f32 to vector<2x1xf32>
    %575 = arith.subf %574, %535 : vector<2x1xf32>
    %576 = vector.broadcast %575 : vector<2x1xf32> to vector<2x32xf32>
    %577 = arith.mulf %576, %533 : vector<2x32xf32>
    %578 = arith.addf %573, %577 : vector<2x32xf32>
    %c3_219 = arith.constant 3 : index
    %c0_220 = arith.constant 0 : index
    %c0_221 = arith.constant 0 : index
    %579 = vector.load %arg1[%c3_219, %c0_220, %c0_221] : memref<8x2x1xf32, #tpu.memory_space<vmem>>, vector<1x2x1xf32>
    %580 = vector.shape_cast %579 : vector<1x2x1xf32> to vector<2x1xf32>
    %c3_222 = arith.constant 3 : index
    %c0_223 = arith.constant 0 : index
    %c0_224 = arith.constant 0 : index
    %581 = vector.load %arg10[%c3_222, %c0_223, %c0_224] : memref<8x2x96xf32, #tpu.memory_space<vmem>>, vector<1x2x96xf32>
    %582 = vector.shape_cast %581 : vector<1x2x96xf32> to vector<2x96xf32>
    %cst_225 = arith.constant dense<0.000000e+00> : vector<2x96xf32>
    %583 = tpu.matmul %578, %386, %cst_225 {dimension_numbers = #tpu.dot_dimension_numbers<[1], [0], [0], [1], [0, 0, 1, 1], [], []>} : vector<2x32xf32>, vector<32x96xf32>, vector<2x96xf32> -> vector<2x96xf32>
    %584 = vector.broadcast %390 : vector<1x96xf32> to vector<2x96xf32>
    %585 = arith.addf %583, %584 : vector<2x96xf32>
    %586 = vector.extract_strided_slice %582 {offsets = [0, 0], sizes = [2, 32], strides = [1, 1]} : vector<2x96xf32> to vector<2x32xf32>
    %587 = vector.extract_strided_slice %585 {offsets = [0, 0], sizes = [2, 32], strides = [1, 1]} : vector<2x96xf32> to vector<2x32xf32>
    %588 = arith.addf %586, %587 : vector<2x32xf32>
    %589 = arith.negf %588 : vector<2x32xf32>
    %590 = math.exp %589 : vector<2x32xf32>
    %cst_226 = arith.constant 1.000000e+00 : f32
    %591 = vector.broadcast %cst_226 : f32 to vector<2x32xf32>
    %592 = arith.addf %591, %590 : vector<2x32xf32>
    %593 = arith.divf %591, %592 : vector<2x32xf32>
    %594 = vector.extract_strided_slice %582 {offsets = [0, 32], sizes = [2, 32], strides = [1, 1]} : vector<2x96xf32> to vector<2x32xf32>
    %595 = vector.extract_strided_slice %585 {offsets = [0, 32], sizes = [2, 32], strides = [1, 1]} : vector<2x96xf32> to vector<2x32xf32>
    %596 = arith.addf %594, %595 : vector<2x32xf32>
    %597 = arith.negf %596 : vector<2x32xf32>
    %598 = math.exp %597 : vector<2x32xf32>
    %cst_227 = arith.constant 1.000000e+00 : f32
    %599 = vector.broadcast %cst_227 : f32 to vector<2x32xf32>
    %600 = arith.addf %599, %598 : vector<2x32xf32>
    %601 = arith.divf %599, %600 : vector<2x32xf32>
    %602 = vector.extract_strided_slice %582 {offsets = [0, 64], sizes = [2, 32], strides = [1, 1]} : vector<2x96xf32> to vector<2x32xf32>
    %603 = vector.extract_strided_slice %585 {offsets = [0, 64], sizes = [2, 32], strides = [1, 1]} : vector<2x96xf32> to vector<2x32xf32>
    %604 = arith.mulf %593, %603 : vector<2x32xf32>
    %605 = arith.addf %602, %604 : vector<2x32xf32>
    %606 = math.tanh %605 : vector<2x32xf32>
    %cst_228 = arith.constant 1.000000e+00 : f32
    %607 = vector.broadcast %cst_228 : f32 to vector<2x32xf32>
    %608 = arith.subf %607, %601 : vector<2x32xf32>
    %609 = arith.mulf %608, %606 : vector<2x32xf32>
    %610 = arith.mulf %601, %578 : vector<2x32xf32>
    %611 = arith.addf %609, %610 : vector<2x32xf32>
    %612 = vector.broadcast %580 : vector<2x1xf32> to vector<2x32xf32>
    %613 = arith.mulf %612, %611 : vector<2x32xf32>
    %c3_229 = arith.constant 3 : index
    %c0_230 = arith.constant 0 : index
    %c32_231 = arith.constant 32 : index
    %614 = vector.load %arg9[%c3_229, %c0_230, %c32_231] : memref<8x2x64xf32, #tpu.memory_space<vmem>>, vector<1x2x32xf32>
    %615 = vector.shape_cast %614 : vector<1x2x32xf32> to vector<2x32xf32>
    %616 = vector.shape_cast %613 : vector<2x32xf32> to vector<1x2x32xf32>
    tpu.vector_store %arg9[%c3_229, %c0_230, %c32_231], %616 {strides = array<i32>} : memref<8x2x64xf32, #tpu.memory_space<vmem>>, vector<1x2x32xf32>,
    %617 = vector.broadcast %580 : vector<2x1xf32> to vector<2x32xf32>
    %618 = arith.mulf %617, %611 : vector<2x32xf32>
    %cst_232 = arith.constant 1.000000e+00 : f32
    %619 = vector.broadcast %cst_232 : f32 to vector<2x1xf32>
    %620 = arith.subf %619, %580 : vector<2x1xf32>
    %621 = vector.broadcast %620 : vector<2x1xf32> to vector<2x32xf32>
    %622 = arith.mulf %621, %578 : vector<2x32xf32>
    %623 = arith.addf %618, %622 : vector<2x32xf32>
    %c2_233 = arith.constant 2 : index
    %c0_234 = arith.constant 0 : index
    %c0_235 = arith.constant 0 : index
    %624 = vector.load %arg1[%c2_233, %c0_234, %c0_235] : memref<8x2x1xf32, #tpu.memory_space<vmem>>, vector<1x2x1xf32>
    %625 = vector.shape_cast %624 : vector<1x2x1xf32> to vector<2x1xf32>
    %c2_236 = arith.constant 2 : index
    %c0_237 = arith.constant 0 : index
    %c0_238 = arith.constant 0 : index
    %626 = vector.load %arg10[%c2_236, %c0_237, %c0_238] : memref<8x2x96xf32, #tpu.memory_space<vmem>>, vector<1x2x96xf32>
    %627 = vector.shape_cast %626 : vector<1x2x96xf32> to vector<2x96xf32>
    %cst_239 = arith.constant dense<0.000000e+00> : vector<2x96xf32>
    %628 = tpu.matmul %623, %386, %cst_239 {dimension_numbers = #tpu.dot_dimension_numbers<[1], [0], [0], [1], [0, 0, 1, 1], [], []>} : vector<2x32xf32>, vector<32x96xf32>, vector<2x96xf32> -> vector<2x96xf32>
    %629 = vector.broadcast %390 : vector<1x96xf32> to vector<2x96xf32>
    %630 = arith.addf %628, %629 : vector<2x96xf32>
    %631 = vector.extract_strided_slice %627 {offsets = [0, 0], sizes = [2, 32], strides = [1, 1]} : vector<2x96xf32> to vector<2x32xf32>
    %632 = vector.extract_strided_slice %630 {offsets = [0, 0], sizes = [2, 32], strides = [1, 1]} : vector<2x96xf32> to vector<2x32xf32>
    %633 = arith.addf %631, %632 : vector<2x32xf32>
    %634 = arith.negf %633 : vector<2x32xf32>
    %635 = math.exp %634 : vector<2x32xf32>
    %cst_240 = arith.constant 1.000000e+00 : f32
    %636 = vector.broadcast %cst_240 : f32 to vector<2x32xf32>
    %637 = arith.addf %636, %635 : vector<2x32xf32>
    %638 = arith.divf %636, %637 : vector<2x32xf32>
    %639 = vector.extract_strided_slice %627 {offsets = [0, 32], sizes = [2, 32], strides = [1, 1]} : vector<2x96xf32> to vector<2x32xf32>
    %640 = vector.extract_strided_slice %630 {offsets = [0, 32], sizes = [2, 32], strides = [1, 1]} : vector<2x96xf32> to vector<2x32xf32>
    %641 = arith.addf %639, %640 : vector<2x32xf32>
    %642 = arith.negf %641 : vector<2x32xf32>
    %643 = math.exp %642 : vector<2x32xf32>
    %cst_241 = arith.constant 1.000000e+00 : f32
    %644 = vector.broadcast %cst_241 : f32 to vector<2x32xf32>
    %645 = arith.addf %644, %643 : vector<2x32xf32>
    %646 = arith.divf %644, %645 : vector<2x32xf32>
    %647 = vector.extract_strided_slice %627 {offsets = [0, 64], sizes = [2, 32], strides = [1, 1]} : vector<2x96xf32> to vector<2x32xf32>
    %648 = vector.extract_strided_slice %630 {offsets = [0, 64], sizes = [2, 32], strides = [1, 1]} : vector<2x96xf32> to vector<2x32xf32>
    %649 = arith.mulf %638, %648 : vector<2x32xf32>
    %650 = arith.addf %647, %649 : vector<2x32xf32>
    %651 = math.tanh %650 : vector<2x32xf32>
    %cst_242 = arith.constant 1.000000e+00 : f32
    %652 = vector.broadcast %cst_242 : f32 to vector<2x32xf32>
    %653 = arith.subf %652, %646 : vector<2x32xf32>
    %654 = arith.mulf %653, %651 : vector<2x32xf32>
    %655 = arith.mulf %646, %623 : vector<2x32xf32>
    %656 = arith.addf %654, %655 : vector<2x32xf32>
    %657 = vector.broadcast %625 : vector<2x1xf32> to vector<2x32xf32>
    %658 = arith.mulf %657, %656 : vector<2x32xf32>
    %c2_243 = arith.constant 2 : index
    %c0_244 = arith.constant 0 : index
    %c32_245 = arith.constant 32 : index
    %659 = vector.load %arg9[%c2_243, %c0_244, %c32_245] : memref<8x2x64xf32, #tpu.memory_space<vmem>>, vector<1x2x32xf32>
    %660 = vector.shape_cast %659 : vector<1x2x32xf32> to vector<2x32xf32>
    %661 = vector.shape_cast %658 : vector<2x32xf32> to vector<1x2x32xf32>
    tpu.vector_store %arg9[%c2_243, %c0_244, %c32_245], %661 {strides = array<i32>} : memref<8x2x64xf32, #tpu.memory_space<vmem>>, vector<1x2x32xf32>,
    %662 = vector.broadcast %625 : vector<2x1xf32> to vector<2x32xf32>
    %663 = arith.mulf %662, %656 : vector<2x32xf32>
    %cst_246 = arith.constant 1.000000e+00 : f32
    %664 = vector.broadcast %cst_246 : f32 to vector<2x1xf32>
    %665 = arith.subf %664, %625 : vector<2x1xf32>
    %666 = vector.broadcast %665 : vector<2x1xf32> to vector<2x32xf32>
    %667 = arith.mulf %666, %623 : vector<2x32xf32>
    %668 = arith.addf %663, %667 : vector<2x32xf32>
    %c1_247 = arith.constant 1 : index
    %c0_248 = arith.constant 0 : index
    %c0_249 = arith.constant 0 : index
    %669 = vector.load %arg1[%c1_247, %c0_248, %c0_249] : memref<8x2x1xf32, #tpu.memory_space<vmem>>, vector<1x2x1xf32>
    %670 = vector.shape_cast %669 : vector<1x2x1xf32> to vector<2x1xf32>
    %c1_250 = arith.constant 1 : index
    %c0_251 = arith.constant 0 : index
    %c0_252 = arith.constant 0 : index
    %671 = vector.load %arg10[%c1_250, %c0_251, %c0_252] : memref<8x2x96xf32, #tpu.memory_space<vmem>>, vector<1x2x96xf32>
    %672 = vector.shape_cast %671 : vector<1x2x96xf32> to vector<2x96xf32>
    %cst_253 = arith.constant dense<0.000000e+00> : vector<2x96xf32>
    %673 = tpu.matmul %668, %386, %cst_253 {dimension_numbers = #tpu.dot_dimension_numbers<[1], [0], [0], [1], [0, 0, 1, 1], [], []>} : vector<2x32xf32>, vector<32x96xf32>, vector<2x96xf32> -> vector<2x96xf32>
    %674 = vector.broadcast %390 : vector<1x96xf32> to vector<2x96xf32>
    %675 = arith.addf %673, %674 : vector<2x96xf32>
    %676 = vector.extract_strided_slice %672 {offsets = [0, 0], sizes = [2, 32], strides = [1, 1]} : vector<2x96xf32> to vector<2x32xf32>
    %677 = vector.extract_strided_slice %675 {offsets = [0, 0], sizes = [2, 32], strides = [1, 1]} : vector<2x96xf32> to vector<2x32xf32>
    %678 = arith.addf %676, %677 : vector<2x32xf32>
    %679 = arith.negf %678 : vector<2x32xf32>
    %680 = math.exp %679 : vector<2x32xf32>
    %cst_254 = arith.constant 1.000000e+00 : f32
    %681 = vector.broadcast %cst_254 : f32 to vector<2x32xf32>
    %682 = arith.addf %681, %680 : vector<2x32xf32>
    %683 = arith.divf %681, %682 : vector<2x32xf32>
    %684 = vector.extract_strided_slice %672 {offsets = [0, 32], sizes = [2, 32], strides = [1, 1]} : vector<2x96xf32> to vector<2x32xf32>
    %685 = vector.extract_strided_slice %675 {offsets = [0, 32], sizes = [2, 32], strides = [1, 1]} : vector<2x96xf32> to vector<2x32xf32>
    %686 = arith.addf %684, %685 : vector<2x32xf32>
    %687 = arith.negf %686 : vector<2x32xf32>
    %688 = math.exp %687 : vector<2x32xf32>
    %cst_255 = arith.constant 1.000000e+00 : f32
    %689 = vector.broadcast %cst_255 : f32 to vector<2x32xf32>
    %690 = arith.addf %689, %688 : vector<2x32xf32>
    %691 = arith.divf %689, %690 : vector<2x32xf32>
    %692 = vector.extract_strided_slice %672 {offsets = [0, 64], sizes = [2, 32], strides = [1, 1]} : vector<2x96xf32> to vector<2x32xf32>
    %693 = vector.extract_strided_slice %675 {offsets = [0, 64], sizes = [2, 32], strides = [1, 1]} : vector<2x96xf32> to vector<2x32xf32>
    %694 = arith.mulf %683, %693 : vector<2x32xf32>
    %695 = arith.addf %692, %694 : vector<2x32xf32>
    %696 = math.tanh %695 : vector<2x32xf32>
    %cst_256 = arith.constant 1.000000e+00 : f32
    %697 = vector.broadcast %cst_256 : f32 to vector<2x32xf32>
    %698 = arith.subf %697, %691 : vector<2x32xf32>
    %699 = arith.mulf %698, %696 : vector<2x32xf32>
    %700 = arith.mulf %691, %668 : vector<2x32xf32>
    %701 = arith.addf %699, %700 : vector<2x32xf32>
    %702 = vector.broadcast %670 : vector<2x1xf32> to vector<2x32xf32>
    %703 = arith.mulf %702, %701 : vector<2x32xf32>
    %c1_257 = arith.constant 1 : index
    %c0_258 = arith.constant 0 : index
    %c32_259 = arith.constant 32 : index
    %704 = vector.load %arg9[%c1_257, %c0_258, %c32_259] : memref<8x2x64xf32, #tpu.memory_space<vmem>>, vector<1x2x32xf32>
    %705 = vector.shape_cast %704 : vector<1x2x32xf32> to vector<2x32xf32>
    %706 = vector.shape_cast %703 : vector<2x32xf32> to vector<1x2x32xf32>
    tpu.vector_store %arg9[%c1_257, %c0_258, %c32_259], %706 {strides = array<i32>} : memref<8x2x64xf32, #tpu.memory_space<vmem>>, vector<1x2x32xf32>,
    %707 = vector.broadcast %670 : vector<2x1xf32> to vector<2x32xf32>
    %708 = arith.mulf %707, %701 : vector<2x32xf32>
    %cst_260 = arith.constant 1.000000e+00 : f32
    %709 = vector.broadcast %cst_260 : f32 to vector<2x1xf32>
    %710 = arith.subf %709, %670 : vector<2x1xf32>
    %711 = vector.broadcast %710 : vector<2x1xf32> to vector<2x32xf32>
    %712 = arith.mulf %711, %668 : vector<2x32xf32>
    %713 = arith.addf %708, %712 : vector<2x32xf32>
    %c0_261 = arith.constant 0 : index
    %c0_262 = arith.constant 0 : index
    %c0_263 = arith.constant 0 : index
    %714 = vector.load %arg1[%c0_261, %c0_262, %c0_263] : memref<8x2x1xf32, #tpu.memory_space<vmem>>, vector<1x2x1xf32>
    %715 = vector.shape_cast %714 : vector<1x2x1xf32> to vector<2x1xf32>
    %c0_264 = arith.constant 0 : index
    %c0_265 = arith.constant 0 : index
    %c0_266 = arith.constant 0 : index
    %716 = vector.load %arg10[%c0_264, %c0_265, %c0_266] : memref<8x2x96xf32, #tpu.memory_space<vmem>>, vector<1x2x96xf32>
    %717 = vector.shape_cast %716 : vector<1x2x96xf32> to vector<2x96xf32>
    %cst_267 = arith.constant dense<0.000000e+00> : vector<2x96xf32>
    %718 = tpu.matmul %713, %386, %cst_267 {dimension_numbers = #tpu.dot_dimension_numbers<[1], [0], [0], [1], [0, 0, 1, 1], [], []>} : vector<2x32xf32>, vector<32x96xf32>, vector<2x96xf32> -> vector<2x96xf32>
    %719 = vector.broadcast %390 : vector<1x96xf32> to vector<2x96xf32>
    %720 = arith.addf %718, %719 : vector<2x96xf32>
    %721 = vector.extract_strided_slice %717 {offsets = [0, 0], sizes = [2, 32], strides = [1, 1]} : vector<2x96xf32> to vector<2x32xf32>
    %722 = vector.extract_strided_slice %720 {offsets = [0, 0], sizes = [2, 32], strides = [1, 1]} : vector<2x96xf32> to vector<2x32xf32>
    %723 = arith.addf %721, %722 : vector<2x32xf32>
    %724 = arith.negf %723 : vector<2x32xf32>
    %725 = math.exp %724 : vector<2x32xf32>
    %cst_268 = arith.constant 1.000000e+00 : f32
    %726 = vector.broadcast %cst_268 : f32 to vector<2x32xf32>
    %727 = arith.addf %726, %725 : vector<2x32xf32>
    %728 = arith.divf %726, %727 : vector<2x32xf32>
    %729 = vector.extract_strided_slice %717 {offsets = [0, 32], sizes = [2, 32], strides = [1, 1]} : vector<2x96xf32> to vector<2x32xf32>
    %730 = vector.extract_strided_slice %720 {offsets = [0, 32], sizes = [2, 32], strides = [1, 1]} : vector<2x96xf32> to vector<2x32xf32>
    %731 = arith.addf %729, %730 : vector<2x32xf32>
    %732 = arith.negf %731 : vector<2x32xf32>
    %733 = math.exp %732 : vector<2x32xf32>
    %cst_269 = arith.constant 1.000000e+00 : f32
    %734 = vector.broadcast %cst_269 : f32 to vector<2x32xf32>
    %735 = arith.addf %734, %733 : vector<2x32xf32>
    %736 = arith.divf %734, %735 : vector<2x32xf32>
    %737 = vector.extract_strided_slice %717 {offsets = [0, 64], sizes = [2, 32], strides = [1, 1]} : vector<2x96xf32> to vector<2x32xf32>
    %738 = vector.extract_strided_slice %720 {offsets = [0, 64], sizes = [2, 32], strides = [1, 1]} : vector<2x96xf32> to vector<2x32xf32>
    %739 = arith.mulf %728, %738 : vector<2x32xf32>
    %740 = arith.addf %737, %739 : vector<2x32xf32>
    %741 = math.tanh %740 : vector<2x32xf32>
    %cst_270 = arith.constant 1.000000e+00 : f32
    %742 = vector.broadcast %cst_270 : f32 to vector<2x32xf32>
    %743 = arith.subf %742, %736 : vector<2x32xf32>
    %744 = arith.mulf %743, %741 : vector<2x32xf32>
    %745 = arith.mulf %736, %713 : vector<2x32xf32>
    %746 = arith.addf %744, %745 : vector<2x32xf32>
    %747 = vector.broadcast %715 : vector<2x1xf32> to vector<2x32xf32>
    %748 = arith.mulf %747, %746 : vector<2x32xf32>
    %c0_271 = arith.constant 0 : index
    %c0_272 = arith.constant 0 : index
    %c32_273 = arith.constant 32 : index
    %749 = vector.load %arg9[%c0_271, %c0_272, %c32_273] : memref<8x2x64xf32, #tpu.memory_space<vmem>>, vector<1x2x32xf32>
    %750 = vector.shape_cast %749 : vector<1x2x32xf32> to vector<2x32xf32>
    %751 = vector.shape_cast %748 : vector<2x32xf32> to vector<1x2x32xf32>
    tpu.vector_store %arg9[%c0_271, %c0_272, %c32_273], %751 {strides = array<i32>} : memref<8x2x64xf32, #tpu.memory_space<vmem>>, vector<1x2x32xf32>,
    %752 = vector.broadcast %715 : vector<2x1xf32> to vector<2x32xf32>
    %753 = arith.mulf %752, %746 : vector<2x32xf32>
    %cst_274 = arith.constant 1.000000e+00 : f32
    %754 = vector.broadcast %cst_274 : f32 to vector<2x1xf32>
    %755 = arith.subf %754, %715 : vector<2x1xf32>
    %756 = vector.broadcast %755 : vector<2x1xf32> to vector<2x32xf32>
    %757 = arith.mulf %756, %713 : vector<2x32xf32>
    %758 = arith.addf %753, %757 : vector<2x32xf32>
    %c1_275 = arith.constant 1 : index
    %c0_276 = arith.constant 0 : index
    %c0_277 = arith.constant 0 : index
    %759 = vector.load %arg7[%c1_275, %c0_276, %c0_277] : memref<4x2x32xf32, #tpu.memory_space<vmem>>, vector<1x2x32xf32>
    %760 = vector.shape_cast %759 : vector<1x2x32xf32> to vector<2x32xf32>
    %761 = vector.shape_cast %758 : vector<2x32xf32> to vector<1x2x32xf32>
    tpu.vector_store %arg7[%c1_275, %c0_276, %c0_277], %761 {strides = array<i32>} : memref<4x2x32xf32, #tpu.memory_space<vmem>>, vector<1x2x32xf32>,
    %c0_278 = arith.constant 0 : index
    %c0_279 = arith.constant 0 : index
    %c0_280 = arith.constant 0 : index
    %762 = vector.load %arg9[%c0_278, %c0_279, %c0_280] : memref<8x2x64xf32, #tpu.memory_space<vmem>>, vector<8x2x64xf32>
    %c0_281 = arith.constant 0 : index
    %c0_282 = arith.constant 0 : index
    %c0_283 = arith.constant 0 : index
    %763 = vector.load %arg8[%c0_281, %c0_282, %c0_283] : memref<8x2x64xf32, #tpu.memory_space<vmem>>, vector<8x2x64xf32>
    tpu.vector_store %arg8[%c0_281, %c0_282, %c0_283], %762 {strides = array<i32>} : memref<8x2x64xf32, #tpu.memory_space<vmem>>, vector<8x2x64xf32>,
    %c1_284 = arith.constant 1 : index
    %c0_285 = arith.constant 0 : index
    %c0_286 = arith.constant 0 : index
    %c0_287 = arith.constant 0 : index
    %764 = vector.load %arg2[%c1_284, %c0_285, %c0_286, %c0_287] : memref<2x2x64x96xf32, #tpu.memory_space<vmem>>, vector<1x1x64x96xf32>
    %765 = vector.shape_cast %764 : vector<1x1x64x96xf32> to vector<64x96xf32>
    %c1_288 = arith.constant 1 : index
    %c0_289 = arith.constant 0 : index
    %c0_290 = arith.constant 0 : index
    %c0_291 = arith.constant 0 : index
    %766 = vector.load %arg3[%c1_288, %c0_289, %c0_290, %c0_291] : memref<2x2x32x96xf32, #tpu.memory_space<vmem>>, vector<1x1x32x96xf32>
    %767 = vector.shape_cast %766 : vector<1x1x32x96xf32> to vector<32x96xf32>
    %c1_292 = arith.constant 1 : index
    %c0_293 = arith.constant 0 : index
    %c0_294 = arith.constant 0 : index
    %c0_295 = arith.constant 0 : index
    %768 = vector.load %arg4[%c1_292, %c0_293, %c0_294, %c0_295] : memref<2x2x1x96xf32, #tpu.memory_space<vmem>>, vector<1x1x1x96xf32>
    %769 = vector.shape_cast %768 : vector<1x1x1x96xf32> to vector<1x96xf32>
    %c1_296 = arith.constant 1 : index
    %c0_297 = arith.constant 0 : index
    %c0_298 = arith.constant 0 : index
    %c0_299 = arith.constant 0 : index
    %770 = vector.load %arg5[%c1_296, %c0_297, %c0_298, %c0_299] : memref<2x2x1x96xf32, #tpu.memory_space<vmem>>, vector<1x1x1x96xf32>
    %771 = vector.shape_cast %770 : vector<1x1x1x96xf32> to vector<1x96xf32>
    %c0_300 = arith.constant 0 : index
    %c0_301 = arith.constant 0 : index
    %c0_302 = arith.constant 0 : index
    %772 = vector.load %arg8[%c0_300, %c0_301, %c0_302] : memref<8x2x64xf32, #tpu.memory_space<vmem>>, vector<8x2x64xf32>
    %773 = vector.shape_cast %772 : vector<8x2x64xf32> to vector<16x64xf32>
    %cst_303 = arith.constant dense<0.000000e+00> : vector<16x96xf32>
    %774 = tpu.matmul %773, %765, %cst_303 {dimension_numbers = #tpu.dot_dimension_numbers<[1], [0], [0], [1], [0, 0, 1, 1], [], []>} : vector<16x64xf32>, vector<64x96xf32>, vector<16x96xf32> -> vector<16x96xf32>
    %775 = vector.broadcast %769 : vector<1x96xf32> to vector<16x96xf32>
    %776 = arith.addf %774, %775 : vector<16x96xf32>
    %777 = vector.shape_cast %776 : vector<16x96xf32> to vector<8x2x96xf32>
    %c0_304 = arith.constant 0 : index
    %c0_305 = arith.constant 0 : index
    %c0_306 = arith.constant 0 : index
    %778 = vector.load %arg10[%c0_304, %c0_305, %c0_306] : memref<8x2x96xf32, #tpu.memory_space<vmem>>, vector<8x2x96xf32>
    tpu.vector_store %arg10[%c0_304, %c0_305, %c0_306], %777 {strides = array<i32>} : memref<8x2x96xf32, #tpu.memory_space<vmem>>, vector<8x2x96xf32>,
    %cst_307 = arith.constant 0.000000e+00 : f32
    %779 = vector.broadcast %cst_307 : f32 to vector<2x32xf32>
    %c0_308 = arith.constant 0 : index
    %c0_309 = arith.constant 0 : index
    %c0_310 = arith.constant 0 : index
    %780 = vector.load %arg1[%c0_308, %c0_309, %c0_310] : memref<8x2x1xf32, #tpu.memory_space<vmem>>, vector<1x2x1xf32>
    %781 = vector.shape_cast %780 : vector<1x2x1xf32> to vector<2x1xf32>
    %c0_311 = arith.constant 0 : index
    %c0_312 = arith.constant 0 : index
    %c0_313 = arith.constant 0 : index
    %782 = vector.load %arg10[%c0_311, %c0_312, %c0_313] : memref<8x2x96xf32, #tpu.memory_space<vmem>>, vector<1x2x96xf32>
    %783 = vector.shape_cast %782 : vector<1x2x96xf32> to vector<2x96xf32>
    %cst_314 = arith.constant dense<0.000000e+00> : vector<2x96xf32>
    %784 = tpu.matmul %779, %767, %cst_314 {dimension_numbers = #tpu.dot_dimension_numbers<[1], [0], [0], [1], [0, 0, 1, 1], [], []>} : vector<2x32xf32>, vector<32x96xf32>, vector<2x96xf32> -> vector<2x96xf32>
    %785 = vector.broadcast %771 : vector<1x96xf32> to vector<2x96xf32>
    %786 = arith.addf %784, %785 : vector<2x96xf32>
    %787 = vector.extract_strided_slice %783 {offsets = [0, 0], sizes = [2, 32], strides = [1, 1]} : vector<2x96xf32> to vector<2x32xf32>
    %788 = vector.extract_strided_slice %786 {offsets = [0, 0], sizes = [2, 32], strides = [1, 1]} : vector<2x96xf32> to vector<2x32xf32>
    %789 = arith.addf %787, %788 : vector<2x32xf32>
    %790 = arith.negf %789 : vector<2x32xf32>
    %791 = math.exp %790 : vector<2x32xf32>
    %cst_315 = arith.constant 1.000000e+00 : f32
    %792 = vector.broadcast %cst_315 : f32 to vector<2x32xf32>
    %793 = arith.addf %792, %791 : vector<2x32xf32>
    %794 = arith.divf %792, %793 : vector<2x32xf32>
    %795 = vector.extract_strided_slice %783 {offsets = [0, 32], sizes = [2, 32], strides = [1, 1]} : vector<2x96xf32> to vector<2x32xf32>
    %796 = vector.extract_strided_slice %786 {offsets = [0, 32], sizes = [2, 32], strides = [1, 1]} : vector<2x96xf32> to vector<2x32xf32>
    %797 = arith.addf %795, %796 : vector<2x32xf32>
    %798 = arith.negf %797 : vector<2x32xf32>
    %799 = math.exp %798 : vector<2x32xf32>
    %cst_316 = arith.constant 1.000000e+00 : f32
    %800 = vector.broadcast %cst_316 : f32 to vector<2x32xf32>
    %801 = arith.addf %800, %799 : vector<2x32xf32>
    %802 = arith.divf %800, %801 : vector<2x32xf32>
    %803 = vector.extract_strided_slice %783 {offsets = [0, 64], sizes = [2, 32], strides = [1, 1]} : vector<2x96xf32> to vector<2x32xf32>
    %804 = vector.extract_strided_slice %786 {offsets = [0, 64], sizes = [2, 32], strides = [1, 1]} : vector<2x96xf32> to vector<2x32xf32>
    %805 = arith.mulf %794, %804 : vector<2x32xf32>
    %806 = arith.addf %803, %805 : vector<2x32xf32>
    %807 = math.tanh %806 : vector<2x32xf32>
    %cst_317 = arith.constant 1.000000e+00 : f32
    %808 = vector.broadcast %cst_317 : f32 to vector<2x32xf32>
    %809 = arith.subf %808, %802 : vector<2x32xf32>
    %810 = arith.mulf %809, %807 : vector<2x32xf32>
    %811 = arith.mulf %802, %779 : vector<2x32xf32>
    %812 = arith.addf %810, %811 : vector<2x32xf32>
    %813 = vector.broadcast %781 : vector<2x1xf32> to vector<2x32xf32>
    %814 = arith.mulf %813, %812 : vector<2x32xf32>
    %c0_318 = arith.constant 0 : index
    %c0_319 = arith.constant 0 : index
    %c0_320 = arith.constant 0 : index
    %815 = vector.load %arg9[%c0_318, %c0_319, %c0_320] : memref<8x2x64xf32, #tpu.memory_space<vmem>>, vector<1x2x32xf32>
    %816 = vector.shape_cast %815 : vector<1x2x32xf32> to vector<2x32xf32>
    %817 = vector.shape_cast %814 : vector<2x32xf32> to vector<1x2x32xf32>
    tpu.vector_store %arg9[%c0_318, %c0_319, %c0_320], %817 {strides = array<i32>} : memref<8x2x64xf32, #tpu.memory_space<vmem>>, vector<1x2x32xf32>,
    %818 = vector.broadcast %781 : vector<2x1xf32> to vector<2x32xf32>
    %819 = arith.mulf %818, %812 : vector<2x32xf32>
    %cst_321 = arith.constant 1.000000e+00 : f32
    %820 = vector.broadcast %cst_321 : f32 to vector<2x1xf32>
    %821 = arith.subf %820, %781 : vector<2x1xf32>
    %822 = vector.broadcast %821 : vector<2x1xf32> to vector<2x32xf32>
    %823 = arith.mulf %822, %779 : vector<2x32xf32>
    %824 = arith.addf %819, %823 : vector<2x32xf32>
    %c1_322 = arith.constant 1 : index
    %c0_323 = arith.constant 0 : index
    %c0_324 = arith.constant 0 : index
    %825 = vector.load %arg1[%c1_322, %c0_323, %c0_324] : memref<8x2x1xf32, #tpu.memory_space<vmem>>, vector<1x2x1xf32>
    %826 = vector.shape_cast %825 : vector<1x2x1xf32> to vector<2x1xf32>
    %c1_325 = arith.constant 1 : index
    %c0_326 = arith.constant 0 : index
    %c0_327 = arith.constant 0 : index
    %827 = vector.load %arg10[%c1_325, %c0_326, %c0_327] : memref<8x2x96xf32, #tpu.memory_space<vmem>>, vector<1x2x96xf32>
    %828 = vector.shape_cast %827 : vector<1x2x96xf32> to vector<2x96xf32>
    %cst_328 = arith.constant dense<0.000000e+00> : vector<2x96xf32>
    %829 = tpu.matmul %824, %767, %cst_328 {dimension_numbers = #tpu.dot_dimension_numbers<[1], [0], [0], [1], [0, 0, 1, 1], [], []>} : vector<2x32xf32>, vector<32x96xf32>, vector<2x96xf32> -> vector<2x96xf32>
    %830 = vector.broadcast %771 : vector<1x96xf32> to vector<2x96xf32>
    %831 = arith.addf %829, %830 : vector<2x96xf32>
    %832 = vector.extract_strided_slice %828 {offsets = [0, 0], sizes = [2, 32], strides = [1, 1]} : vector<2x96xf32> to vector<2x32xf32>
    %833 = vector.extract_strided_slice %831 {offsets = [0, 0], sizes = [2, 32], strides = [1, 1]} : vector<2x96xf32> to vector<2x32xf32>
    %834 = arith.addf %832, %833 : vector<2x32xf32>
    %835 = arith.negf %834 : vector<2x32xf32>
    %836 = math.exp %835 : vector<2x32xf32>
    %cst_329 = arith.constant 1.000000e+00 : f32
    %837 = vector.broadcast %cst_329 : f32 to vector<2x32xf32>
    %838 = arith.addf %837, %836 : vector<2x32xf32>
    %839 = arith.divf %837, %838 : vector<2x32xf32>
    %840 = vector.extract_strided_slice %828 {offsets = [0, 32], sizes = [2, 32], strides = [1, 1]} : vector<2x96xf32> to vector<2x32xf32>
    %841 = vector.extract_strided_slice %831 {offsets = [0, 32], sizes = [2, 32], strides = [1, 1]} : vector<2x96xf32> to vector<2x32xf32>
    %842 = arith.addf %840, %841 : vector<2x32xf32>
    %843 = arith.negf %842 : vector<2x32xf32>
    %844 = math.exp %843 : vector<2x32xf32>
    %cst_330 = arith.constant 1.000000e+00 : f32
    %845 = vector.broadcast %cst_330 : f32 to vector<2x32xf32>
    %846 = arith.addf %845, %844 : vector<2x32xf32>
    %847 = arith.divf %845, %846 : vector<2x32xf32>
    %848 = vector.extract_strided_slice %828 {offsets = [0, 64], sizes = [2, 32], strides = [1, 1]} : vector<2x96xf32> to vector<2x32xf32>
    %849 = vector.extract_strided_slice %831 {offsets = [0, 64], sizes = [2, 32], strides = [1, 1]} : vector<2x96xf32> to vector<2x32xf32>
    %850 = arith.mulf %839, %849 : vector<2x32xf32>
    %851 = arith.addf %848, %850 : vector<2x32xf32>
    %852 = math.tanh %851 : vector<2x32xf32>
    %cst_331 = arith.constant 1.000000e+00 : f32
    %853 = vector.broadcast %cst_331 : f32 to vector<2x32xf32>
    %854 = arith.subf %853, %847 : vector<2x32xf32>
    %855 = arith.mulf %854, %852 : vector<2x32xf32>
    %856 = arith.mulf %847, %824 : vector<2x32xf32>
    %857 = arith.addf %855, %856 : vector<2x32xf32>
    %858 = vector.broadcast %826 : vector<2x1xf32> to vector<2x32xf32>
    %859 = arith.mulf %858, %857 : vector<2x32xf32>
    %c1_332 = arith.constant 1 : index
    %c0_333 = arith.constant 0 : index
    %c0_334 = arith.constant 0 : index
    %860 = vector.load %arg9[%c1_332, %c0_333, %c0_334] : memref<8x2x64xf32, #tpu.memory_space<vmem>>, vector<1x2x32xf32>
    %861 = vector.shape_cast %860 : vector<1x2x32xf32> to vector<2x32xf32>
    %862 = vector.shape_cast %859 : vector<2x32xf32> to vector<1x2x32xf32>
    tpu.vector_store %arg9[%c1_332, %c0_333, %c0_334], %862 {strides = array<i32>} : memref<8x2x64xf32, #tpu.memory_space<vmem>>, vector<1x2x32xf32>,
    %863 = vector.broadcast %826 : vector<2x1xf32> to vector<2x32xf32>
    %864 = arith.mulf %863, %857 : vector<2x32xf32>
    %cst_335 = arith.constant 1.000000e+00 : f32
    %865 = vector.broadcast %cst_335 : f32 to vector<2x1xf32>
    %866 = arith.subf %865, %826 : vector<2x1xf32>
    %867 = vector.broadcast %866 : vector<2x1xf32> to vector<2x32xf32>
    %868 = arith.mulf %867, %824 : vector<2x32xf32>
    %869 = arith.addf %864, %868 : vector<2x32xf32>
    %c2_336 = arith.constant 2 : index
    %c0_337 = arith.constant 0 : index
    %c0_338 = arith.constant 0 : index
    %870 = vector.load %arg1[%c2_336, %c0_337, %c0_338] : memref<8x2x1xf32, #tpu.memory_space<vmem>>, vector<1x2x1xf32>
    %871 = vector.shape_cast %870 : vector<1x2x1xf32> to vector<2x1xf32>
    %c2_339 = arith.constant 2 : index
    %c0_340 = arith.constant 0 : index
    %c0_341 = arith.constant 0 : index
    %872 = vector.load %arg10[%c2_339, %c0_340, %c0_341] : memref<8x2x96xf32, #tpu.memory_space<vmem>>, vector<1x2x96xf32>
    %873 = vector.shape_cast %872 : vector<1x2x96xf32> to vector<2x96xf32>
    %cst_342 = arith.constant dense<0.000000e+00> : vector<2x96xf32>
    %874 = tpu.matmul %869, %767, %cst_342 {dimension_numbers = #tpu.dot_dimension_numbers<[1], [0], [0], [1], [0, 0, 1, 1], [], []>} : vector<2x32xf32>, vector<32x96xf32>, vector<2x96xf32> -> vector<2x96xf32>
    %875 = vector.broadcast %771 : vector<1x96xf32> to vector<2x96xf32>
    %876 = arith.addf %874, %875 : vector<2x96xf32>
    %877 = vector.extract_strided_slice %873 {offsets = [0, 0], sizes = [2, 32], strides = [1, 1]} : vector<2x96xf32> to vector<2x32xf32>
    %878 = vector.extract_strided_slice %876 {offsets = [0, 0], sizes = [2, 32], strides = [1, 1]} : vector<2x96xf32> to vector<2x32xf32>
    %879 = arith.addf %877, %878 : vector<2x32xf32>
    %880 = arith.negf %879 : vector<2x32xf32>
    %881 = math.exp %880 : vector<2x32xf32>
    %cst_343 = arith.constant 1.000000e+00 : f32
    %882 = vector.broadcast %cst_343 : f32 to vector<2x32xf32>
    %883 = arith.addf %882, %881 : vector<2x32xf32>
    %884 = arith.divf %882, %883 : vector<2x32xf32>
    %885 = vector.extract_strided_slice %873 {offsets = [0, 32], sizes = [2, 32], strides = [1, 1]} : vector<2x96xf32> to vector<2x32xf32>
    %886 = vector.extract_strided_slice %876 {offsets = [0, 32], sizes = [2, 32], strides = [1, 1]} : vector<2x96xf32> to vector<2x32xf32>
    %887 = arith.addf %885, %886 : vector<2x32xf32>
    %888 = arith.negf %887 : vector<2x32xf32>
    %889 = math.exp %888 : vector<2x32xf32>
    %cst_344 = arith.constant 1.000000e+00 : f32
    %890 = vector.broadcast %cst_344 : f32 to vector<2x32xf32>
    %891 = arith.addf %890, %889 : vector<2x32xf32>
    %892 = arith.divf %890, %891 : vector<2x32xf32>
    %893 = vector.extract_strided_slice %873 {offsets = [0, 64], sizes = [2, 32], strides = [1, 1]} : vector<2x96xf32> to vector<2x32xf32>
    %894 = vector.extract_strided_slice %876 {offsets = [0, 64], sizes = [2, 32], strides = [1, 1]} : vector<2x96xf32> to vector<2x32xf32>
    %895 = arith.mulf %884, %894 : vector<2x32xf32>
    %896 = arith.addf %893, %895 : vector<2x32xf32>
    %897 = math.tanh %896 : vector<2x32xf32>
    %cst_345 = arith.constant 1.000000e+00 : f32
    %898 = vector.broadcast %cst_345 : f32 to vector<2x32xf32>
    %899 = arith.subf %898, %892 : vector<2x32xf32>
    %900 = arith.mulf %899, %897 : vector<2x32xf32>
    %901 = arith.mulf %892, %869 : vector<2x32xf32>
    %902 = arith.addf %900, %901 : vector<2x32xf32>
    %903 = vector.broadcast %871 : vector<2x1xf32> to vector<2x32xf32>
    %904 = arith.mulf %903, %902 : vector<2x32xf32>
    %c2_346 = arith.constant 2 : index
    %c0_347 = arith.constant 0 : index
    %c0_348 = arith.constant 0 : index
    %905 = vector.load %arg9[%c2_346, %c0_347, %c0_348] : memref<8x2x64xf32, #tpu.memory_space<vmem>>, vector<1x2x32xf32>
    %906 = vector.shape_cast %905 : vector<1x2x32xf32> to vector<2x32xf32>
    %907 = vector.shape_cast %904 : vector<2x32xf32> to vector<1x2x32xf32>
    tpu.vector_store %arg9[%c2_346, %c0_347, %c0_348], %907 {strides = array<i32>} : memref<8x2x64xf32, #tpu.memory_space<vmem>>, vector<1x2x32xf32>,
    %908 = vector.broadcast %871 : vector<2x1xf32> to vector<2x32xf32>
    %909 = arith.mulf %908, %902 : vector<2x32xf32>
    %cst_349 = arith.constant 1.000000e+00 : f32
    %910 = vector.broadcast %cst_349 : f32 to vector<2x1xf32>
    %911 = arith.subf %910, %871 : vector<2x1xf32>
    %912 = vector.broadcast %911 : vector<2x1xf32> to vector<2x32xf32>
    %913 = arith.mulf %912, %869 : vector<2x32xf32>
    %914 = arith.addf %909, %913 : vector<2x32xf32>
    %c3_350 = arith.constant 3 : index
    %c0_351 = arith.constant 0 : index
    %c0_352 = arith.constant 0 : index
    %915 = vector.load %arg1[%c3_350, %c0_351, %c0_352] : memref<8x2x1xf32, #tpu.memory_space<vmem>>, vector<1x2x1xf32>
    %916 = vector.shape_cast %915 : vector<1x2x1xf32> to vector<2x1xf32>
    %c3_353 = arith.constant 3 : index
    %c0_354 = arith.constant 0 : index
    %c0_355 = arith.constant 0 : index
    %917 = vector.load %arg10[%c3_353, %c0_354, %c0_355] : memref<8x2x96xf32, #tpu.memory_space<vmem>>, vector<1x2x96xf32>
    %918 = vector.shape_cast %917 : vector<1x2x96xf32> to vector<2x96xf32>
    %cst_356 = arith.constant dense<0.000000e+00> : vector<2x96xf32>
    %919 = tpu.matmul %914, %767, %cst_356 {dimension_numbers = #tpu.dot_dimension_numbers<[1], [0], [0], [1], [0, 0, 1, 1], [], []>} : vector<2x32xf32>, vector<32x96xf32>, vector<2x96xf32> -> vector<2x96xf32>
    %920 = vector.broadcast %771 : vector<1x96xf32> to vector<2x96xf32>
    %921 = arith.addf %919, %920 : vector<2x96xf32>
    %922 = vector.extract_strided_slice %918 {offsets = [0, 0], sizes = [2, 32], strides = [1, 1]} : vector<2x96xf32> to vector<2x32xf32>
    %923 = vector.extract_strided_slice %921 {offsets = [0, 0], sizes = [2, 32], strides = [1, 1]} : vector<2x96xf32> to vector<2x32xf32>
    %924 = arith.addf %922, %923 : vector<2x32xf32>
    %925 = arith.negf %924 : vector<2x32xf32>
    %926 = math.exp %925 : vector<2x32xf32>
    %cst_357 = arith.constant 1.000000e+00 : f32
    %927 = vector.broadcast %cst_357 : f32 to vector<2x32xf32>
    %928 = arith.addf %927, %926 : vector<2x32xf32>
    %929 = arith.divf %927, %928 : vector<2x32xf32>
    %930 = vector.extract_strided_slice %918 {offsets = [0, 32], sizes = [2, 32], strides = [1, 1]} : vector<2x96xf32> to vector<2x32xf32>
    %931 = vector.extract_strided_slice %921 {offsets = [0, 32], sizes = [2, 32], strides = [1, 1]} : vector<2x96xf32> to vector<2x32xf32>
    %932 = arith.addf %930, %931 : vector<2x32xf32>
    %933 = arith.negf %932 : vector<2x32xf32>
    %934 = math.exp %933 : vector<2x32xf32>
    %cst_358 = arith.constant 1.000000e+00 : f32
    %935 = vector.broadcast %cst_358 : f32 to vector<2x32xf32>
    %936 = arith.addf %935, %934 : vector<2x32xf32>
    %937 = arith.divf %935, %936 : vector<2x32xf32>
    %938 = vector.extract_strided_slice %918 {offsets = [0, 64], sizes = [2, 32], strides = [1, 1]} : vector<2x96xf32> to vector<2x32xf32>
    %939 = vector.extract_strided_slice %921 {offsets = [0, 64], sizes = [2, 32], strides = [1, 1]} : vector<2x96xf32> to vector<2x32xf32>
    %940 = arith.mulf %929, %939 : vector<2x32xf32>
    %941 = arith.addf %938, %940 : vector<2x32xf32>
    %942 = math.tanh %941 : vector<2x32xf32>
    %cst_359 = arith.constant 1.000000e+00 : f32
    %943 = vector.broadcast %cst_359 : f32 to vector<2x32xf32>
    %944 = arith.subf %943, %937 : vector<2x32xf32>
    %945 = arith.mulf %944, %942 : vector<2x32xf32>
    %946 = arith.mulf %937, %914 : vector<2x32xf32>
    %947 = arith.addf %945, %946 : vector<2x32xf32>
    %948 = vector.broadcast %916 : vector<2x1xf32> to vector<2x32xf32>
    %949 = arith.mulf %948, %947 : vector<2x32xf32>
    %c3_360 = arith.constant 3 : index
    %c0_361 = arith.constant 0 : index
    %c0_362 = arith.constant 0 : index
    %950 = vector.load %arg9[%c3_360, %c0_361, %c0_362] : memref<8x2x64xf32, #tpu.memory_space<vmem>>, vector<1x2x32xf32>
    %951 = vector.shape_cast %950 : vector<1x2x32xf32> to vector<2x32xf32>
    %952 = vector.shape_cast %949 : vector<2x32xf32> to vector<1x2x32xf32>
    tpu.vector_store %arg9[%c3_360, %c0_361, %c0_362], %952 {strides = array<i32>} : memref<8x2x64xf32, #tpu.memory_space<vmem>>, vector<1x2x32xf32>,
    %953 = vector.broadcast %916 : vector<2x1xf32> to vector<2x32xf32>
    %954 = arith.mulf %953, %947 : vector<2x32xf32>
    %cst_363 = arith.constant 1.000000e+00 : f32
    %955 = vector.broadcast %cst_363 : f32 to vector<2x1xf32>
    %956 = arith.subf %955, %916 : vector<2x1xf32>
    %957 = vector.broadcast %956 : vector<2x1xf32> to vector<2x32xf32>
    %958 = arith.mulf %957, %914 : vector<2x32xf32>
    %959 = arith.addf %954, %958 : vector<2x32xf32>
    %c4_364 = arith.constant 4 : index
    %c0_365 = arith.constant 0 : index
    %c0_366 = arith.constant 0 : index
    %960 = vector.load %arg1[%c4_364, %c0_365, %c0_366] : memref<8x2x1xf32, #tpu.memory_space<vmem>>, vector<1x2x1xf32>
    %961 = vector.shape_cast %960 : vector<1x2x1xf32> to vector<2x1xf32>
    %c4_367 = arith.constant 4 : index
    %c0_368 = arith.constant 0 : index
    %c0_369 = arith.constant 0 : index
    %962 = vector.load %arg10[%c4_367, %c0_368, %c0_369] : memref<8x2x96xf32, #tpu.memory_space<vmem>>, vector<1x2x96xf32>
    %963 = vector.shape_cast %962 : vector<1x2x96xf32> to vector<2x96xf32>
    %cst_370 = arith.constant dense<0.000000e+00> : vector<2x96xf32>
    %964 = tpu.matmul %959, %767, %cst_370 {dimension_numbers = #tpu.dot_dimension_numbers<[1], [0], [0], [1], [0, 0, 1, 1], [], []>} : vector<2x32xf32>, vector<32x96xf32>, vector<2x96xf32> -> vector<2x96xf32>
    %965 = vector.broadcast %771 : vector<1x96xf32> to vector<2x96xf32>
    %966 = arith.addf %964, %965 : vector<2x96xf32>
    %967 = vector.extract_strided_slice %963 {offsets = [0, 0], sizes = [2, 32], strides = [1, 1]} : vector<2x96xf32> to vector<2x32xf32>
    %968 = vector.extract_strided_slice %966 {offsets = [0, 0], sizes = [2, 32], strides = [1, 1]} : vector<2x96xf32> to vector<2x32xf32>
    %969 = arith.addf %967, %968 : vector<2x32xf32>
    %970 = arith.negf %969 : vector<2x32xf32>
    %971 = math.exp %970 : vector<2x32xf32>
    %cst_371 = arith.constant 1.000000e+00 : f32
    %972 = vector.broadcast %cst_371 : f32 to vector<2x32xf32>
    %973 = arith.addf %972, %971 : vector<2x32xf32>
    %974 = arith.divf %972, %973 : vector<2x32xf32>
    %975 = vector.extract_strided_slice %963 {offsets = [0, 32], sizes = [2, 32], strides = [1, 1]} : vector<2x96xf32> to vector<2x32xf32>
    %976 = vector.extract_strided_slice %966 {offsets = [0, 32], sizes = [2, 32], strides = [1, 1]} : vector<2x96xf32> to vector<2x32xf32>
    %977 = arith.addf %975, %976 : vector<2x32xf32>
    %978 = arith.negf %977 : vector<2x32xf32>
    %979 = math.exp %978 : vector<2x32xf32>
    %cst_372 = arith.constant 1.000000e+00 : f32
    %980 = vector.broadcast %cst_372 : f32 to vector<2x32xf32>
    %981 = arith.addf %980, %979 : vector<2x32xf32>
    %982 = arith.divf %980, %981 : vector<2x32xf32>
    %983 = vector.extract_strided_slice %963 {offsets = [0, 64], sizes = [2, 32], strides = [1, 1]} : vector<2x96xf32> to vector<2x32xf32>
    %984 = vector.extract_strided_slice %966 {offsets = [0, 64], sizes = [2, 32], strides = [1, 1]} : vector<2x96xf32> to vector<2x32xf32>
    %985 = arith.mulf %974, %984 : vector<2x32xf32>
    %986 = arith.addf %983, %985 : vector<2x32xf32>
    %987 = math.tanh %986 : vector<2x32xf32>
    %cst_373 = arith.constant 1.000000e+00 : f32
    %988 = vector.broadcast %cst_373 : f32 to vector<2x32xf32>
    %989 = arith.subf %988, %982 : vector<2x32xf32>
    %990 = arith.mulf %989, %987 : vector<2x32xf32>
    %991 = arith.mulf %982, %959 : vector<2x32xf32>
    %992 = arith.addf %990, %991 : vector<2x32xf32>
    %993 = vector.broadcast %961 : vector<2x1xf32> to vector<2x32xf32>
    %994 = arith.mulf %993, %992 : vector<2x32xf32>
    %c4_374 = arith.constant 4 : index
    %c0_375 = arith.constant 0 : index
    %c0_376 = arith.constant 0 : index
    %995 = vector.load %arg9[%c4_374, %c0_375, %c0_376] : memref<8x2x64xf32, #tpu.memory_space<vmem>>, vector<1x2x32xf32>
    %996 = vector.shape_cast %995 : vector<1x2x32xf32> to vector<2x32xf32>
    %997 = vector.shape_cast %994 : vector<2x32xf32> to vector<1x2x32xf32>
    tpu.vector_store %arg9[%c4_374, %c0_375, %c0_376], %997 {strides = array<i32>} : memref<8x2x64xf32, #tpu.memory_space<vmem>>, vector<1x2x32xf32>,
    %998 = vector.broadcast %961 : vector<2x1xf32> to vector<2x32xf32>
    %999 = arith.mulf %998, %992 : vector<2x32xf32>
    %cst_377 = arith.constant 1.000000e+00 : f32
    %1000 = vector.broadcast %cst_377 : f32 to vector<2x1xf32>
    %1001 = arith.subf %1000, %961 : vector<2x1xf32>
    %1002 = vector.broadcast %1001 : vector<2x1xf32> to vector<2x32xf32>
    %1003 = arith.mulf %1002, %959 : vector<2x32xf32>
    %1004 = arith.addf %999, %1003 : vector<2x32xf32>
    %c5_378 = arith.constant 5 : index
    %c0_379 = arith.constant 0 : index
    %c0_380 = arith.constant 0 : index
    %1005 = vector.load %arg1[%c5_378, %c0_379, %c0_380] : memref<8x2x1xf32, #tpu.memory_space<vmem>>, vector<1x2x1xf32>
    %1006 = vector.shape_cast %1005 : vector<1x2x1xf32> to vector<2x1xf32>
    %c5_381 = arith.constant 5 : index
    %c0_382 = arith.constant 0 : index
    %c0_383 = arith.constant 0 : index
    %1007 = vector.load %arg10[%c5_381, %c0_382, %c0_383] : memref<8x2x96xf32, #tpu.memory_space<vmem>>, vector<1x2x96xf32>
    %1008 = vector.shape_cast %1007 : vector<1x2x96xf32> to vector<2x96xf32>
    %cst_384 = arith.constant dense<0.000000e+00> : vector<2x96xf32>
    %1009 = tpu.matmul %1004, %767, %cst_384 {dimension_numbers = #tpu.dot_dimension_numbers<[1], [0], [0], [1], [0, 0, 1, 1], [], []>} : vector<2x32xf32>, vector<32x96xf32>, vector<2x96xf32> -> vector<2x96xf32>
    %1010 = vector.broadcast %771 : vector<1x96xf32> to vector<2x96xf32>
    %1011 = arith.addf %1009, %1010 : vector<2x96xf32>
    %1012 = vector.extract_strided_slice %1008 {offsets = [0, 0], sizes = [2, 32], strides = [1, 1]} : vector<2x96xf32> to vector<2x32xf32>
    %1013 = vector.extract_strided_slice %1011 {offsets = [0, 0], sizes = [2, 32], strides = [1, 1]} : vector<2x96xf32> to vector<2x32xf32>
    %1014 = arith.addf %1012, %1013 : vector<2x32xf32>
    %1015 = arith.negf %1014 : vector<2x32xf32>
    %1016 = math.exp %1015 : vector<2x32xf32>
    %cst_385 = arith.constant 1.000000e+00 : f32
    %1017 = vector.broadcast %cst_385 : f32 to vector<2x32xf32>
    %1018 = arith.addf %1017, %1016 : vector<2x32xf32>
    %1019 = arith.divf %1017, %1018 : vector<2x32xf32>
    %1020 = vector.extract_strided_slice %1008 {offsets = [0, 32], sizes = [2, 32], strides = [1, 1]} : vector<2x96xf32> to vector<2x32xf32>
    %1021 = vector.extract_strided_slice %1011 {offsets = [0, 32], sizes = [2, 32], strides = [1, 1]} : vector<2x96xf32> to vector<2x32xf32>
    %1022 = arith.addf %1020, %1021 : vector<2x32xf32>
    %1023 = arith.negf %1022 : vector<2x32xf32>
    %1024 = math.exp %1023 : vector<2x32xf32>
    %cst_386 = arith.constant 1.000000e+00 : f32
    %1025 = vector.broadcast %cst_386 : f32 to vector<2x32xf32>
    %1026 = arith.addf %1025, %1024 : vector<2x32xf32>
    %1027 = arith.divf %1025, %1026 : vector<2x32xf32>
    %1028 = vector.extract_strided_slice %1008 {offsets = [0, 64], sizes = [2, 32], strides = [1, 1]} : vector<2x96xf32> to vector<2x32xf32>
    %1029 = vector.extract_strided_slice %1011 {offsets = [0, 64], sizes = [2, 32], strides = [1, 1]} : vector<2x96xf32> to vector<2x32xf32>
    %1030 = arith.mulf %1019, %1029 : vector<2x32xf32>
    %1031 = arith.addf %1028, %1030 : vector<2x32xf32>
    %1032 = math.tanh %1031 : vector<2x32xf32>
    %cst_387 = arith.constant 1.000000e+00 : f32
    %1033 = vector.broadcast %cst_387 : f32 to vector<2x32xf32>
    %1034 = arith.subf %1033, %1027 : vector<2x32xf32>
    %1035 = arith.mulf %1034, %1032 : vector<2x32xf32>
    %1036 = arith.mulf %1027, %1004 : vector<2x32xf32>
    %1037 = arith.addf %1035, %1036 : vector<2x32xf32>
    %1038 = vector.broadcast %1006 : vector<2x1xf32> to vector<2x32xf32>
    %1039 = arith.mulf %1038, %1037 : vector<2x32xf32>
    %c5_388 = arith.constant 5 : index
    %c0_389 = arith.constant 0 : index
    %c0_390 = arith.constant 0 : index
    %1040 = vector.load %arg9[%c5_388, %c0_389, %c0_390] : memref<8x2x64xf32, #tpu.memory_space<vmem>>, vector<1x2x32xf32>
    %1041 = vector.shape_cast %1040 : vector<1x2x32xf32> to vector<2x32xf32>
    %1042 = vector.shape_cast %1039 : vector<2x32xf32> to vector<1x2x32xf32>
    tpu.vector_store %arg9[%c5_388, %c0_389, %c0_390], %1042 {strides = array<i32>} : memref<8x2x64xf32, #tpu.memory_space<vmem>>, vector<1x2x32xf32>,
    %1043 = vector.broadcast %1006 : vector<2x1xf32> to vector<2x32xf32>
    %1044 = arith.mulf %1043, %1037 : vector<2x32xf32>
    %cst_391 = arith.constant 1.000000e+00 : f32
    %1045 = vector.broadcast %cst_391 : f32 to vector<2x1xf32>
    %1046 = arith.subf %1045, %1006 : vector<2x1xf32>
    %1047 = vector.broadcast %1046 : vector<2x1xf32> to vector<2x32xf32>
    %1048 = arith.mulf %1047, %1004 : vector<2x32xf32>
    %1049 = arith.addf %1044, %1048 : vector<2x32xf32>
    %c6_392 = arith.constant 6 : index
    %c0_393 = arith.constant 0 : index
    %c0_394 = arith.constant 0 : index
    %1050 = vector.load %arg1[%c6_392, %c0_393, %c0_394] : memref<8x2x1xf32, #tpu.memory_space<vmem>>, vector<1x2x1xf32>
    %1051 = vector.shape_cast %1050 : vector<1x2x1xf32> to vector<2x1xf32>
    %c6_395 = arith.constant 6 : index
    %c0_396 = arith.constant 0 : index
    %c0_397 = arith.constant 0 : index
    %1052 = vector.load %arg10[%c6_395, %c0_396, %c0_397] : memref<8x2x96xf32, #tpu.memory_space<vmem>>, vector<1x2x96xf32>
    %1053 = vector.shape_cast %1052 : vector<1x2x96xf32> to vector<2x96xf32>
    %cst_398 = arith.constant dense<0.000000e+00> : vector<2x96xf32>
    %1054 = tpu.matmul %1049, %767, %cst_398 {dimension_numbers = #tpu.dot_dimension_numbers<[1], [0], [0], [1], [0, 0, 1, 1], [], []>} : vector<2x32xf32>, vector<32x96xf32>, vector<2x96xf32> -> vector<2x96xf32>
    %1055 = vector.broadcast %771 : vector<1x96xf32> to vector<2x96xf32>
    %1056 = arith.addf %1054, %1055 : vector<2x96xf32>
    %1057 = vector.extract_strided_slice %1053 {offsets = [0, 0], sizes = [2, 32], strides = [1, 1]} : vector<2x96xf32> to vector<2x32xf32>
    %1058 = vector.extract_strided_slice %1056 {offsets = [0, 0], sizes = [2, 32], strides = [1, 1]} : vector<2x96xf32> to vector<2x32xf32>
    %1059 = arith.addf %1057, %1058 : vector<2x32xf32>
    %1060 = arith.negf %1059 : vector<2x32xf32>
    %1061 = math.exp %1060 : vector<2x32xf32>
    %cst_399 = arith.constant 1.000000e+00 : f32
    %1062 = vector.broadcast %cst_399 : f32 to vector<2x32xf32>
    %1063 = arith.addf %1062, %1061 : vector<2x32xf32>
    %1064 = arith.divf %1062, %1063 : vector<2x32xf32>
    %1065 = vector.extract_strided_slice %1053 {offsets = [0, 32], sizes = [2, 32], strides = [1, 1]} : vector<2x96xf32> to vector<2x32xf32>
    %1066 = vector.extract_strided_slice %1056 {offsets = [0, 32], sizes = [2, 32], strides = [1, 1]} : vector<2x96xf32> to vector<2x32xf32>
    %1067 = arith.addf %1065, %1066 : vector<2x32xf32>
    %1068 = arith.negf %1067 : vector<2x32xf32>
    %1069 = math.exp %1068 : vector<2x32xf32>
    %cst_400 = arith.constant 1.000000e+00 : f32
    %1070 = vector.broadcast %cst_400 : f32 to vector<2x32xf32>
    %1071 = arith.addf %1070, %1069 : vector<2x32xf32>
    %1072 = arith.divf %1070, %1071 : vector<2x32xf32>
    %1073 = vector.extract_strided_slice %1053 {offsets = [0, 64], sizes = [2, 32], strides = [1, 1]} : vector<2x96xf32> to vector<2x32xf32>
    %1074 = vector.extract_strided_slice %1056 {offsets = [0, 64], sizes = [2, 32], strides = [1, 1]} : vector<2x96xf32> to vector<2x32xf32>
    %1075 = arith.mulf %1064, %1074 : vector<2x32xf32>
    %1076 = arith.addf %1073, %1075 : vector<2x32xf32>
    %1077 = math.tanh %1076 : vector<2x32xf32>
    %cst_401 = arith.constant 1.000000e+00 : f32
    %1078 = vector.broadcast %cst_401 : f32 to vector<2x32xf32>
    %1079 = arith.subf %1078, %1072 : vector<2x32xf32>
    %1080 = arith.mulf %1079, %1077 : vector<2x32xf32>
    %1081 = arith.mulf %1072, %1049 : vector<2x32xf32>
    %1082 = arith.addf %1080, %1081 : vector<2x32xf32>
    %1083 = vector.broadcast %1051 : vector<2x1xf32> to vector<2x32xf32>
    %1084 = arith.mulf %1083, %1082 : vector<2x32xf32>
    %c6_402 = arith.constant 6 : index
    %c0_403 = arith.constant 0 : index
    %c0_404 = arith.constant 0 : index
    %1085 = vector.load %arg9[%c6_402, %c0_403, %c0_404] : memref<8x2x64xf32, #tpu.memory_space<vmem>>, vector<1x2x32xf32>
    %1086 = vector.shape_cast %1085 : vector<1x2x32xf32> to vector<2x32xf32>
    %1087 = vector.shape_cast %1084 : vector<2x32xf32> to vector<1x2x32xf32>
    tpu.vector_store %arg9[%c6_402, %c0_403, %c0_404], %1087 {strides = array<i32>} : memref<8x2x64xf32, #tpu.memory_space<vmem>>, vector<1x2x32xf32>,
    %1088 = vector.broadcast %1051 : vector<2x1xf32> to vector<2x32xf32>
    %1089 = arith.mulf %1088, %1082 : vector<2x32xf32>
    %cst_405 = arith.constant 1.000000e+00 : f32
    %1090 = vector.broadcast %cst_405 : f32 to vector<2x1xf32>
    %1091 = arith.subf %1090, %1051 : vector<2x1xf32>
    %1092 = vector.broadcast %1091 : vector<2x1xf32> to vector<2x32xf32>
    %1093 = arith.mulf %1092, %1049 : vector<2x32xf32>
    %1094 = arith.addf %1089, %1093 : vector<2x32xf32>
    %c7_406 = arith.constant 7 : index
    %c0_407 = arith.constant 0 : index
    %c0_408 = arith.constant 0 : index
    %1095 = vector.load %arg1[%c7_406, %c0_407, %c0_408] : memref<8x2x1xf32, #tpu.memory_space<vmem>>, vector<1x2x1xf32>
    %1096 = vector.shape_cast %1095 : vector<1x2x1xf32> to vector<2x1xf32>
    %c7_409 = arith.constant 7 : index
    %c0_410 = arith.constant 0 : index
    %c0_411 = arith.constant 0 : index
    %1097 = vector.load %arg10[%c7_409, %c0_410, %c0_411] : memref<8x2x96xf32, #tpu.memory_space<vmem>>, vector<1x2x96xf32>
    %1098 = vector.shape_cast %1097 : vector<1x2x96xf32> to vector<2x96xf32>
    %cst_412 = arith.constant dense<0.000000e+00> : vector<2x96xf32>
    %1099 = tpu.matmul %1094, %767, %cst_412 {dimension_numbers = #tpu.dot_dimension_numbers<[1], [0], [0], [1], [0, 0, 1, 1], [], []>} : vector<2x32xf32>, vector<32x96xf32>, vector<2x96xf32> -> vector<2x96xf32>
    %1100 = vector.broadcast %771 : vector<1x96xf32> to vector<2x96xf32>
    %1101 = arith.addf %1099, %1100 : vector<2x96xf32>
    %1102 = vector.extract_strided_slice %1098 {offsets = [0, 0], sizes = [2, 32], strides = [1, 1]} : vector<2x96xf32> to vector<2x32xf32>
    %1103 = vector.extract_strided_slice %1101 {offsets = [0, 0], sizes = [2, 32], strides = [1, 1]} : vector<2x96xf32> to vector<2x32xf32>
    %1104 = arith.addf %1102, %1103 : vector<2x32xf32>
    %1105 = arith.negf %1104 : vector<2x32xf32>
    %1106 = math.exp %1105 : vector<2x32xf32>
    %cst_413 = arith.constant 1.000000e+00 : f32
    %1107 = vector.broadcast %cst_413 : f32 to vector<2x32xf32>
    %1108 = arith.addf %1107, %1106 : vector<2x32xf32>
    %1109 = arith.divf %1107, %1108 : vector<2x32xf32>
    %1110 = vector.extract_strided_slice %1098 {offsets = [0, 32], sizes = [2, 32], strides = [1, 1]} : vector<2x96xf32> to vector<2x32xf32>
    %1111 = vector.extract_strided_slice %1101 {offsets = [0, 32], sizes = [2, 32], strides = [1, 1]} : vector<2x96xf32> to vector<2x32xf32>
    %1112 = arith.addf %1110, %1111 : vector<2x32xf32>
    %1113 = arith.negf %1112 : vector<2x32xf32>
    %1114 = math.exp %1113 : vector<2x32xf32>
    %cst_414 = arith.constant 1.000000e+00 : f32
    %1115 = vector.broadcast %cst_414 : f32 to vector<2x32xf32>
    %1116 = arith.addf %1115, %1114 : vector<2x32xf32>
    %1117 = arith.divf %1115, %1116 : vector<2x32xf32>
    %1118 = vector.extract_strided_slice %1098 {offsets = [0, 64], sizes = [2, 32], strides = [1, 1]} : vector<2x96xf32> to vector<2x32xf32>
    %1119 = vector.extract_strided_slice %1101 {offsets = [0, 64], sizes = [2, 32], strides = [1, 1]} : vector<2x96xf32> to vector<2x32xf32>
    %1120 = arith.mulf %1109, %1119 : vector<2x32xf32>
    %1121 = arith.addf %1118, %1120 : vector<2x32xf32>
    %1122 = math.tanh %1121 : vector<2x32xf32>
    %cst_415 = arith.constant 1.000000e+00 : f32
    %1123 = vector.broadcast %cst_415 : f32 to vector<2x32xf32>
    %1124 = arith.subf %1123, %1117 : vector<2x32xf32>
    %1125 = arith.mulf %1124, %1122 : vector<2x32xf32>
    %1126 = arith.mulf %1117, %1094 : vector<2x32xf32>
    %1127 = arith.addf %1125, %1126 : vector<2x32xf32>
    %1128 = vector.broadcast %1096 : vector<2x1xf32> to vector<2x32xf32>
    %1129 = arith.mulf %1128, %1127 : vector<2x32xf32>
    %c7_416 = arith.constant 7 : index
    %c0_417 = arith.constant 0 : index
    %c0_418 = arith.constant 0 : index
    %1130 = vector.load %arg9[%c7_416, %c0_417, %c0_418] : memref<8x2x64xf32, #tpu.memory_space<vmem>>, vector<1x2x32xf32>
    %1131 = vector.shape_cast %1130 : vector<1x2x32xf32> to vector<2x32xf32>
    %1132 = vector.shape_cast %1129 : vector<2x32xf32> to vector<1x2x32xf32>
    tpu.vector_store %arg9[%c7_416, %c0_417, %c0_418], %1132 {strides = array<i32>} : memref<8x2x64xf32, #tpu.memory_space<vmem>>, vector<1x2x32xf32>,
    %1133 = vector.broadcast %1096 : vector<2x1xf32> to vector<2x32xf32>
    %1134 = arith.mulf %1133, %1127 : vector<2x32xf32>
    %cst_419 = arith.constant 1.000000e+00 : f32
    %1135 = vector.broadcast %cst_419 : f32 to vector<2x1xf32>
    %1136 = arith.subf %1135, %1096 : vector<2x1xf32>
    %1137 = vector.broadcast %1136 : vector<2x1xf32> to vector<2x32xf32>
    %1138 = arith.mulf %1137, %1094 : vector<2x32xf32>
    %1139 = arith.addf %1134, %1138 : vector<2x32xf32>
    %c2_420 = arith.constant 2 : index
    %c0_421 = arith.constant 0 : index
    %c0_422 = arith.constant 0 : index
    %1140 = vector.load %arg7[%c2_420, %c0_421, %c0_422] : memref<4x2x32xf32, #tpu.memory_space<vmem>>, vector<1x2x32xf32>
    %1141 = vector.shape_cast %1140 : vector<1x2x32xf32> to vector<2x32xf32>
    %1142 = vector.shape_cast %1139 : vector<2x32xf32> to vector<1x2x32xf32>
    tpu.vector_store %arg7[%c2_420, %c0_421, %c0_422], %1142 {strides = array<i32>} : memref<4x2x32xf32, #tpu.memory_space<vmem>>, vector<1x2x32xf32>,
    %c1_423 = arith.constant 1 : index
    %c1_424 = arith.constant 1 : index
    %c0_425 = arith.constant 0 : index
    %c0_426 = arith.constant 0 : index
    %1143 = vector.load %arg2[%c1_423, %c1_424, %c0_425, %c0_426] : memref<2x2x64x96xf32, #tpu.memory_space<vmem>>, vector<1x1x64x96xf32>
    %1144 = vector.shape_cast %1143 : vector<1x1x64x96xf32> to vector<64x96xf32>
    %c1_427 = arith.constant 1 : index
    %c1_428 = arith.constant 1 : index
    %c0_429 = arith.constant 0 : index
    %c0_430 = arith.constant 0 : index
    %1145 = vector.load %arg3[%c1_427, %c1_428, %c0_429, %c0_430] : memref<2x2x32x96xf32, #tpu.memory_space<vmem>>, vector<1x1x32x96xf32>
    %1146 = vector.shape_cast %1145 : vector<1x1x32x96xf32> to vector<32x96xf32>
    %c1_431 = arith.constant 1 : index
    %c1_432 = arith.constant 1 : index
    %c0_433 = arith.constant 0 : index
    %c0_434 = arith.constant 0 : index
    %1147 = vector.load %arg4[%c1_431, %c1_432, %c0_433, %c0_434] : memref<2x2x1x96xf32, #tpu.memory_space<vmem>>, vector<1x1x1x96xf32>
    %1148 = vector.shape_cast %1147 : vector<1x1x1x96xf32> to vector<1x96xf32>
    %c1_435 = arith.constant 1 : index
    %c1_436 = arith.constant 1 : index
    %c0_437 = arith.constant 0 : index
    %c0_438 = arith.constant 0 : index
    %1149 = vector.load %arg5[%c1_435, %c1_436, %c0_437, %c0_438] : memref<2x2x1x96xf32, #tpu.memory_space<vmem>>, vector<1x1x1x96xf32>
    %1150 = vector.shape_cast %1149 : vector<1x1x1x96xf32> to vector<1x96xf32>
    %c0_439 = arith.constant 0 : index
    %c0_440 = arith.constant 0 : index
    %c0_441 = arith.constant 0 : index
    %1151 = vector.load %arg8[%c0_439, %c0_440, %c0_441] : memref<8x2x64xf32, #tpu.memory_space<vmem>>, vector<8x2x64xf32>
    %1152 = vector.shape_cast %1151 : vector<8x2x64xf32> to vector<16x64xf32>
    %cst_442 = arith.constant dense<0.000000e+00> : vector<16x96xf32>
    %1153 = tpu.matmul %1152, %1144, %cst_442 {dimension_numbers = #tpu.dot_dimension_numbers<[1], [0], [0], [1], [0, 0, 1, 1], [], []>} : vector<16x64xf32>, vector<64x96xf32>, vector<16x96xf32> -> vector<16x96xf32>
    %1154 = vector.broadcast %1148 : vector<1x96xf32> to vector<16x96xf32>
    %1155 = arith.addf %1153, %1154 : vector<16x96xf32>
    %1156 = vector.shape_cast %1155 : vector<16x96xf32> to vector<8x2x96xf32>
    %c0_443 = arith.constant 0 : index
    %c0_444 = arith.constant 0 : index
    %c0_445 = arith.constant 0 : index
    %1157 = vector.load %arg10[%c0_443, %c0_444, %c0_445] : memref<8x2x96xf32, #tpu.memory_space<vmem>>, vector<8x2x96xf32>
    tpu.vector_store %arg10[%c0_443, %c0_444, %c0_445], %1156 {strides = array<i32>} : memref<8x2x96xf32, #tpu.memory_space<vmem>>, vector<8x2x96xf32>,
    %cst_446 = arith.constant 0.000000e+00 : f32
    %1158 = vector.broadcast %cst_446 : f32 to vector<2x32xf32>
    %c7_447 = arith.constant 7 : index
    %c0_448 = arith.constant 0 : index
    %c0_449 = arith.constant 0 : index
    %1159 = vector.load %arg1[%c7_447, %c0_448, %c0_449] : memref<8x2x1xf32, #tpu.memory_space<vmem>>, vector<1x2x1xf32>
    %1160 = vector.shape_cast %1159 : vector<1x2x1xf32> to vector<2x1xf32>
    %c7_450 = arith.constant 7 : index
    %c0_451 = arith.constant 0 : index
    %c0_452 = arith.constant 0 : index
    %1161 = vector.load %arg10[%c7_450, %c0_451, %c0_452] : memref<8x2x96xf32, #tpu.memory_space<vmem>>, vector<1x2x96xf32>
    %1162 = vector.shape_cast %1161 : vector<1x2x96xf32> to vector<2x96xf32>
    %cst_453 = arith.constant dense<0.000000e+00> : vector<2x96xf32>
    %1163 = tpu.matmul %1158, %1146, %cst_453 {dimension_numbers = #tpu.dot_dimension_numbers<[1], [0], [0], [1], [0, 0, 1, 1], [], []>} : vector<2x32xf32>, vector<32x96xf32>, vector<2x96xf32> -> vector<2x96xf32>
    %1164 = vector.broadcast %1150 : vector<1x96xf32> to vector<2x96xf32>
    %1165 = arith.addf %1163, %1164 : vector<2x96xf32>
    %1166 = vector.extract_strided_slice %1162 {offsets = [0, 0], sizes = [2, 32], strides = [1, 1]} : vector<2x96xf32> to vector<2x32xf32>
    %1167 = vector.extract_strided_slice %1165 {offsets = [0, 0], sizes = [2, 32], strides = [1, 1]} : vector<2x96xf32> to vector<2x32xf32>
    %1168 = arith.addf %1166, %1167 : vector<2x32xf32>
    %1169 = arith.negf %1168 : vector<2x32xf32>
    %1170 = math.exp %1169 : vector<2x32xf32>
    %cst_454 = arith.constant 1.000000e+00 : f32
    %1171 = vector.broadcast %cst_454 : f32 to vector<2x32xf32>
    %1172 = arith.addf %1171, %1170 : vector<2x32xf32>
    %1173 = arith.divf %1171, %1172 : vector<2x32xf32>
    %1174 = vector.extract_strided_slice %1162 {offsets = [0, 32], sizes = [2, 32], strides = [1, 1]} : vector<2x96xf32> to vector<2x32xf32>
    %1175 = vector.extract_strided_slice %1165 {offsets = [0, 32], sizes = [2, 32], strides = [1, 1]} : vector<2x96xf32> to vector<2x32xf32>
    %1176 = arith.addf %1174, %1175 : vector<2x32xf32>
    %1177 = arith.negf %1176 : vector<2x32xf32>
    %1178 = math.exp %1177 : vector<2x32xf32>
    %cst_455 = arith.constant 1.000000e+00 : f32
    %1179 = vector.broadcast %cst_455 : f32 to vector<2x32xf32>
    %1180 = arith.addf %1179, %1178 : vector<2x32xf32>
    %1181 = arith.divf %1179, %1180 : vector<2x32xf32>
    %1182 = vector.extract_strided_slice %1162 {offsets = [0, 64], sizes = [2, 32], strides = [1, 1]} : vector<2x96xf32> to vector<2x32xf32>
    %1183 = vector.extract_strided_slice %1165 {offsets = [0, 64], sizes = [2, 32], strides = [1, 1]} : vector<2x96xf32> to vector<2x32xf32>
    %1184 = arith.mulf %1173, %1183 : vector<2x32xf32>
    %1185 = arith.addf %1182, %1184 : vector<2x32xf32>
    %1186 = math.tanh %1185 : vector<2x32xf32>
    %cst_456 = arith.constant 1.000000e+00 : f32
    %1187 = vector.broadcast %cst_456 : f32 to vector<2x32xf32>
    %1188 = arith.subf %1187, %1181 : vector<2x32xf32>
    %1189 = arith.mulf %1188, %1186 : vector<2x32xf32>
    %1190 = arith.mulf %1181, %1158 : vector<2x32xf32>
    %1191 = arith.addf %1189, %1190 : vector<2x32xf32>
    %1192 = vector.broadcast %1160 : vector<2x1xf32> to vector<2x32xf32>
    %1193 = arith.mulf %1192, %1191 : vector<2x32xf32>
    %c7_457 = arith.constant 7 : index
    %c0_458 = arith.constant 0 : index
    %c32_459 = arith.constant 32 : index
    %1194 = vector.load %arg9[%c7_457, %c0_458, %c32_459] : memref<8x2x64xf32, #tpu.memory_space<vmem>>, vector<1x2x32xf32>
    %1195 = vector.shape_cast %1194 : vector<1x2x32xf32> to vector<2x32xf32>
    %1196 = vector.shape_cast %1193 : vector<2x32xf32> to vector<1x2x32xf32>
    tpu.vector_store %arg9[%c7_457, %c0_458, %c32_459], %1196 {strides = array<i32>} : memref<8x2x64xf32, #tpu.memory_space<vmem>>, vector<1x2x32xf32>,
    %1197 = vector.broadcast %1160 : vector<2x1xf32> to vector<2x32xf32>
    %1198 = arith.mulf %1197, %1191 : vector<2x32xf32>
    %cst_460 = arith.constant 1.000000e+00 : f32
    %1199 = vector.broadcast %cst_460 : f32 to vector<2x1xf32>
    %1200 = arith.subf %1199, %1160 : vector<2x1xf32>
    %1201 = vector.broadcast %1200 : vector<2x1xf32> to vector<2x32xf32>
    %1202 = arith.mulf %1201, %1158 : vector<2x32xf32>
    %1203 = arith.addf %1198, %1202 : vector<2x32xf32>
    %c6_461 = arith.constant 6 : index
    %c0_462 = arith.constant 0 : index
    %c0_463 = arith.constant 0 : index
    %1204 = vector.load %arg1[%c6_461, %c0_462, %c0_463] : memref<8x2x1xf32, #tpu.memory_space<vmem>>, vector<1x2x1xf32>
    %1205 = vector.shape_cast %1204 : vector<1x2x1xf32> to vector<2x1xf32>
    %c6_464 = arith.constant 6 : index
    %c0_465 = arith.constant 0 : index
    %c0_466 = arith.constant 0 : index
    %1206 = vector.load %arg10[%c6_464, %c0_465, %c0_466] : memref<8x2x96xf32, #tpu.memory_space<vmem>>, vector<1x2x96xf32>
    %1207 = vector.shape_cast %1206 : vector<1x2x96xf32> to vector<2x96xf32>
    %cst_467 = arith.constant dense<0.000000e+00> : vector<2x96xf32>
    %1208 = tpu.matmul %1203, %1146, %cst_467 {dimension_numbers = #tpu.dot_dimension_numbers<[1], [0], [0], [1], [0, 0, 1, 1], [], []>} : vector<2x32xf32>, vector<32x96xf32>, vector<2x96xf32> -> vector<2x96xf32>
    %1209 = vector.broadcast %1150 : vector<1x96xf32> to vector<2x96xf32>
    %1210 = arith.addf %1208, %1209 : vector<2x96xf32>
    %1211 = vector.extract_strided_slice %1207 {offsets = [0, 0], sizes = [2, 32], strides = [1, 1]} : vector<2x96xf32> to vector<2x32xf32>
    %1212 = vector.extract_strided_slice %1210 {offsets = [0, 0], sizes = [2, 32], strides = [1, 1]} : vector<2x96xf32> to vector<2x32xf32>
    %1213 = arith.addf %1211, %1212 : vector<2x32xf32>
    %1214 = arith.negf %1213 : vector<2x32xf32>
    %1215 = math.exp %1214 : vector<2x32xf32>
    %cst_468 = arith.constant 1.000000e+00 : f32
    %1216 = vector.broadcast %cst_468 : f32 to vector<2x32xf32>
    %1217 = arith.addf %1216, %1215 : vector<2x32xf32>
    %1218 = arith.divf %1216, %1217 : vector<2x32xf32>
    %1219 = vector.extract_strided_slice %1207 {offsets = [0, 32], sizes = [2, 32], strides = [1, 1]} : vector<2x96xf32> to vector<2x32xf32>
    %1220 = vector.extract_strided_slice %1210 {offsets = [0, 32], sizes = [2, 32], strides = [1, 1]} : vector<2x96xf32> to vector<2x32xf32>
    %1221 = arith.addf %1219, %1220 : vector<2x32xf32>
    %1222 = arith.negf %1221 : vector<2x32xf32>
    %1223 = math.exp %1222 : vector<2x32xf32>
    %cst_469 = arith.constant 1.000000e+00 : f32
    %1224 = vector.broadcast %cst_469 : f32 to vector<2x32xf32>
    %1225 = arith.addf %1224, %1223 : vector<2x32xf32>
    %1226 = arith.divf %1224, %1225 : vector<2x32xf32>
    %1227 = vector.extract_strided_slice %1207 {offsets = [0, 64], sizes = [2, 32], strides = [1, 1]} : vector<2x96xf32> to vector<2x32xf32>
    %1228 = vector.extract_strided_slice %1210 {offsets = [0, 64], sizes = [2, 32], strides = [1, 1]} : vector<2x96xf32> to vector<2x32xf32>
    %1229 = arith.mulf %1218, %1228 : vector<2x32xf32>
    %1230 = arith.addf %1227, %1229 : vector<2x32xf32>
    %1231 = math.tanh %1230 : vector<2x32xf32>
    %cst_470 = arith.constant 1.000000e+00 : f32
    %1232 = vector.broadcast %cst_470 : f32 to vector<2x32xf32>
    %1233 = arith.subf %1232, %1226 : vector<2x32xf32>
    %1234 = arith.mulf %1233, %1231 : vector<2x32xf32>
    %1235 = arith.mulf %1226, %1203 : vector<2x32xf32>
    %1236 = arith.addf %1234, %1235 : vector<2x32xf32>
    %1237 = vector.broadcast %1205 : vector<2x1xf32> to vector<2x32xf32>
    %1238 = arith.mulf %1237, %1236 : vector<2x32xf32>
    %c6_471 = arith.constant 6 : index
    %c0_472 = arith.constant 0 : index
    %c32_473 = arith.constant 32 : index
    %1239 = vector.load %arg9[%c6_471, %c0_472, %c32_473] : memref<8x2x64xf32, #tpu.memory_space<vmem>>, vector<1x2x32xf32>
    %1240 = vector.shape_cast %1239 : vector<1x2x32xf32> to vector<2x32xf32>
    %1241 = vector.shape_cast %1238 : vector<2x32xf32> to vector<1x2x32xf32>
    tpu.vector_store %arg9[%c6_471, %c0_472, %c32_473], %1241 {strides = array<i32>} : memref<8x2x64xf32, #tpu.memory_space<vmem>>, vector<1x2x32xf32>,
    %1242 = vector.broadcast %1205 : vector<2x1xf32> to vector<2x32xf32>
    %1243 = arith.mulf %1242, %1236 : vector<2x32xf32>
    %cst_474 = arith.constant 1.000000e+00 : f32
    %1244 = vector.broadcast %cst_474 : f32 to vector<2x1xf32>
    %1245 = arith.subf %1244, %1205 : vector<2x1xf32>
    %1246 = vector.broadcast %1245 : vector<2x1xf32> to vector<2x32xf32>
    %1247 = arith.mulf %1246, %1203 : vector<2x32xf32>
    %1248 = arith.addf %1243, %1247 : vector<2x32xf32>
    %c5_475 = arith.constant 5 : index
    %c0_476 = arith.constant 0 : index
    %c0_477 = arith.constant 0 : index
    %1249 = vector.load %arg1[%c5_475, %c0_476, %c0_477] : memref<8x2x1xf32, #tpu.memory_space<vmem>>, vector<1x2x1xf32>
    %1250 = vector.shape_cast %1249 : vector<1x2x1xf32> to vector<2x1xf32>
    %c5_478 = arith.constant 5 : index
    %c0_479 = arith.constant 0 : index
    %c0_480 = arith.constant 0 : index
    %1251 = vector.load %arg10[%c5_478, %c0_479, %c0_480] : memref<8x2x96xf32, #tpu.memory_space<vmem>>, vector<1x2x96xf32>
    %1252 = vector.shape_cast %1251 : vector<1x2x96xf32> to vector<2x96xf32>
    %cst_481 = arith.constant dense<0.000000e+00> : vector<2x96xf32>
    %1253 = tpu.matmul %1248, %1146, %cst_481 {dimension_numbers = #tpu.dot_dimension_numbers<[1], [0], [0], [1], [0, 0, 1, 1], [], []>} : vector<2x32xf32>, vector<32x96xf32>, vector<2x96xf32> -> vector<2x96xf32>
    %1254 = vector.broadcast %1150 : vector<1x96xf32> to vector<2x96xf32>
    %1255 = arith.addf %1253, %1254 : vector<2x96xf32>
    %1256 = vector.extract_strided_slice %1252 {offsets = [0, 0], sizes = [2, 32], strides = [1, 1]} : vector<2x96xf32> to vector<2x32xf32>
    %1257 = vector.extract_strided_slice %1255 {offsets = [0, 0], sizes = [2, 32], strides = [1, 1]} : vector<2x96xf32> to vector<2x32xf32>
    %1258 = arith.addf %1256, %1257 : vector<2x32xf32>
    %1259 = arith.negf %1258 : vector<2x32xf32>
    %1260 = math.exp %1259 : vector<2x32xf32>
    %cst_482 = arith.constant 1.000000e+00 : f32
    %1261 = vector.broadcast %cst_482 : f32 to vector<2x32xf32>
    %1262 = arith.addf %1261, %1260 : vector<2x32xf32>
    %1263 = arith.divf %1261, %1262 : vector<2x32xf32>
    %1264 = vector.extract_strided_slice %1252 {offsets = [0, 32], sizes = [2, 32], strides = [1, 1]} : vector<2x96xf32> to vector<2x32xf32>
    %1265 = vector.extract_strided_slice %1255 {offsets = [0, 32], sizes = [2, 32], strides = [1, 1]} : vector<2x96xf32> to vector<2x32xf32>
    %1266 = arith.addf %1264, %1265 : vector<2x32xf32>
    %1267 = arith.negf %1266 : vector<2x32xf32>
    %1268 = math.exp %1267 : vector<2x32xf32>
    %cst_483 = arith.constant 1.000000e+00 : f32
    %1269 = vector.broadcast %cst_483 : f32 to vector<2x32xf32>
    %1270 = arith.addf %1269, %1268 : vector<2x32xf32>
    %1271 = arith.divf %1269, %1270 : vector<2x32xf32>
    %1272 = vector.extract_strided_slice %1252 {offsets = [0, 64], sizes = [2, 32], strides = [1, 1]} : vector<2x96xf32> to vector<2x32xf32>
    %1273 = vector.extract_strided_slice %1255 {offsets = [0, 64], sizes = [2, 32], strides = [1, 1]} : vector<2x96xf32> to vector<2x32xf32>
    %1274 = arith.mulf %1263, %1273 : vector<2x32xf32>
    %1275 = arith.addf %1272, %1274 : vector<2x32xf32>
    %1276 = math.tanh %1275 : vector<2x32xf32>
    %cst_484 = arith.constant 1.000000e+00 : f32
    %1277 = vector.broadcast %cst_484 : f32 to vector<2x32xf32>
    %1278 = arith.subf %1277, %1271 : vector<2x32xf32>
    %1279 = arith.mulf %1278, %1276 : vector<2x32xf32>
    %1280 = arith.mulf %1271, %1248 : vector<2x32xf32>
    %1281 = arith.addf %1279, %1280 : vector<2x32xf32>
    %1282 = vector.broadcast %1250 : vector<2x1xf32> to vector<2x32xf32>
    %1283 = arith.mulf %1282, %1281 : vector<2x32xf32>
    %c5_485 = arith.constant 5 : index
    %c0_486 = arith.constant 0 : index
    %c32_487 = arith.constant 32 : index
    %1284 = vector.load %arg9[%c5_485, %c0_486, %c32_487] : memref<8x2x64xf32, #tpu.memory_space<vmem>>, vector<1x2x32xf32>
    %1285 = vector.shape_cast %1284 : vector<1x2x32xf32> to vector<2x32xf32>
    %1286 = vector.shape_cast %1283 : vector<2x32xf32> to vector<1x2x32xf32>
    tpu.vector_store %arg9[%c5_485, %c0_486, %c32_487], %1286 {strides = array<i32>} : memref<8x2x64xf32, #tpu.memory_space<vmem>>, vector<1x2x32xf32>,
    %1287 = vector.broadcast %1250 : vector<2x1xf32> to vector<2x32xf32>
    %1288 = arith.mulf %1287, %1281 : vector<2x32xf32>
    %cst_488 = arith.constant 1.000000e+00 : f32
    %1289 = vector.broadcast %cst_488 : f32 to vector<2x1xf32>
    %1290 = arith.subf %1289, %1250 : vector<2x1xf32>
    %1291 = vector.broadcast %1290 : vector<2x1xf32> to vector<2x32xf32>
    %1292 = arith.mulf %1291, %1248 : vector<2x32xf32>
    %1293 = arith.addf %1288, %1292 : vector<2x32xf32>
    %c4_489 = arith.constant 4 : index
    %c0_490 = arith.constant 0 : index
    %c0_491 = arith.constant 0 : index
    %1294 = vector.load %arg1[%c4_489, %c0_490, %c0_491] : memref<8x2x1xf32, #tpu.memory_space<vmem>>, vector<1x2x1xf32>
    %1295 = vector.shape_cast %1294 : vector<1x2x1xf32> to vector<2x1xf32>
    %c4_492 = arith.constant 4 : index
    %c0_493 = arith.constant 0 : index
    %c0_494 = arith.constant 0 : index
    %1296 = vector.load %arg10[%c4_492, %c0_493, %c0_494] : memref<8x2x96xf32, #tpu.memory_space<vmem>>, vector<1x2x96xf32>
    %1297 = vector.shape_cast %1296 : vector<1x2x96xf32> to vector<2x96xf32>
    %cst_495 = arith.constant dense<0.000000e+00> : vector<2x96xf32>
    %1298 = tpu.matmul %1293, %1146, %cst_495 {dimension_numbers = #tpu.dot_dimension_numbers<[1], [0], [0], [1], [0, 0, 1, 1], [], []>} : vector<2x32xf32>, vector<32x96xf32>, vector<2x96xf32> -> vector<2x96xf32>
    %1299 = vector.broadcast %1150 : vector<1x96xf32> to vector<2x96xf32>
    %1300 = arith.addf %1298, %1299 : vector<2x96xf32>
    %1301 = vector.extract_strided_slice %1297 {offsets = [0, 0], sizes = [2, 32], strides = [1, 1]} : vector<2x96xf32> to vector<2x32xf32>
    %1302 = vector.extract_strided_slice %1300 {offsets = [0, 0], sizes = [2, 32], strides = [1, 1]} : vector<2x96xf32> to vector<2x32xf32>
    %1303 = arith.addf %1301, %1302 : vector<2x32xf32>
    %1304 = arith.negf %1303 : vector<2x32xf32>
    %1305 = math.exp %1304 : vector<2x32xf32>
    %cst_496 = arith.constant 1.000000e+00 : f32
    %1306 = vector.broadcast %cst_496 : f32 to vector<2x32xf32>
    %1307 = arith.addf %1306, %1305 : vector<2x32xf32>
    %1308 = arith.divf %1306, %1307 : vector<2x32xf32>
    %1309 = vector.extract_strided_slice %1297 {offsets = [0, 32], sizes = [2, 32], strides = [1, 1]} : vector<2x96xf32> to vector<2x32xf32>
    %1310 = vector.extract_strided_slice %1300 {offsets = [0, 32], sizes = [2, 32], strides = [1, 1]} : vector<2x96xf32> to vector<2x32xf32>
    %1311 = arith.addf %1309, %1310 : vector<2x32xf32>
    %1312 = arith.negf %1311 : vector<2x32xf32>
    %1313 = math.exp %1312 : vector<2x32xf32>
    %cst_497 = arith.constant 1.000000e+00 : f32
    %1314 = vector.broadcast %cst_497 : f32 to vector<2x32xf32>
    %1315 = arith.addf %1314, %1313 : vector<2x32xf32>
    %1316 = arith.divf %1314, %1315 : vector<2x32xf32>
    %1317 = vector.extract_strided_slice %1297 {offsets = [0, 64], sizes = [2, 32], strides = [1, 1]} : vector<2x96xf32> to vector<2x32xf32>
    %1318 = vector.extract_strided_slice %1300 {offsets = [0, 64], sizes = [2, 32], strides = [1, 1]} : vector<2x96xf32> to vector<2x32xf32>
    %1319 = arith.mulf %1308, %1318 : vector<2x32xf32>
    %1320 = arith.addf %1317, %1319 : vector<2x32xf32>
    %1321 = math.tanh %1320 : vector<2x32xf32>
    %cst_498 = arith.constant 1.000000e+00 : f32
    %1322 = vector.broadcast %cst_498 : f32 to vector<2x32xf32>
    %1323 = arith.subf %1322, %1316 : vector<2x32xf32>
    %1324 = arith.mulf %1323, %1321 : vector<2x32xf32>
    %1325 = arith.mulf %1316, %1293 : vector<2x32xf32>
    %1326 = arith.addf %1324, %1325 : vector<2x32xf32>
    %1327 = vector.broadcast %1295 : vector<2x1xf32> to vector<2x32xf32>
    %1328 = arith.mulf %1327, %1326 : vector<2x32xf32>
    %c4_499 = arith.constant 4 : index
    %c0_500 = arith.constant 0 : index
    %c32_501 = arith.constant 32 : index
    %1329 = vector.load %arg9[%c4_499, %c0_500, %c32_501] : memref<8x2x64xf32, #tpu.memory_space<vmem>>, vector<1x2x32xf32>
    %1330 = vector.shape_cast %1329 : vector<1x2x32xf32> to vector<2x32xf32>
    %1331 = vector.shape_cast %1328 : vector<2x32xf32> to vector<1x2x32xf32>
    tpu.vector_store %arg9[%c4_499, %c0_500, %c32_501], %1331 {strides = array<i32>} : memref<8x2x64xf32, #tpu.memory_space<vmem>>, vector<1x2x32xf32>,
    %1332 = vector.broadcast %1295 : vector<2x1xf32> to vector<2x32xf32>
    %1333 = arith.mulf %1332, %1326 : vector<2x32xf32>
    %cst_502 = arith.constant 1.000000e+00 : f32
    %1334 = vector.broadcast %cst_502 : f32 to vector<2x1xf32>
    %1335 = arith.subf %1334, %1295 : vector<2x1xf32>
    %1336 = vector.broadcast %1335 : vector<2x1xf32> to vector<2x32xf32>
    %1337 = arith.mulf %1336, %1293 : vector<2x32xf32>
    %1338 = arith.addf %1333, %1337 : vector<2x32xf32>
    %c3_503 = arith.constant 3 : index
    %c0_504 = arith.constant 0 : index
    %c0_505 = arith.constant 0 : index
    %1339 = vector.load %arg1[%c3_503, %c0_504, %c0_505] : memref<8x2x1xf32, #tpu.memory_space<vmem>>, vector<1x2x1xf32>
    %1340 = vector.shape_cast %1339 : vector<1x2x1xf32> to vector<2x1xf32>
    %c3_506 = arith.constant 3 : index
    %c0_507 = arith.constant 0 : index
    %c0_508 = arith.constant 0 : index
    %1341 = vector.load %arg10[%c3_506, %c0_507, %c0_508] : memref<8x2x96xf32, #tpu.memory_space<vmem>>, vector<1x2x96xf32>
    %1342 = vector.shape_cast %1341 : vector<1x2x96xf32> to vector<2x96xf32>
    %cst_509 = arith.constant dense<0.000000e+00> : vector<2x96xf32>
    %1343 = tpu.matmul %1338, %1146, %cst_509 {dimension_numbers = #tpu.dot_dimension_numbers<[1], [0], [0], [1], [0, 0, 1, 1], [], []>} : vector<2x32xf32>, vector<32x96xf32>, vector<2x96xf32> -> vector<2x96xf32>
    %1344 = vector.broadcast %1150 : vector<1x96xf32> to vector<2x96xf32>
    %1345 = arith.addf %1343, %1344 : vector<2x96xf32>
    %1346 = vector.extract_strided_slice %1342 {offsets = [0, 0], sizes = [2, 32], strides = [1, 1]} : vector<2x96xf32> to vector<2x32xf32>
    %1347 = vector.extract_strided_slice %1345 {offsets = [0, 0], sizes = [2, 32], strides = [1, 1]} : vector<2x96xf32> to vector<2x32xf32>
    %1348 = arith.addf %1346, %1347 : vector<2x32xf32>
    %1349 = arith.negf %1348 : vector<2x32xf32>
    %1350 = math.exp %1349 : vector<2x32xf32>
    %cst_510 = arith.constant 1.000000e+00 : f32
    %1351 = vector.broadcast %cst_510 : f32 to vector<2x32xf32>
    %1352 = arith.addf %1351, %1350 : vector<2x32xf32>
    %1353 = arith.divf %1351, %1352 : vector<2x32xf32>
    %1354 = vector.extract_strided_slice %1342 {offsets = [0, 32], sizes = [2, 32], strides = [1, 1]} : vector<2x96xf32> to vector<2x32xf32>
    %1355 = vector.extract_strided_slice %1345 {offsets = [0, 32], sizes = [2, 32], strides = [1, 1]} : vector<2x96xf32> to vector<2x32xf32>
    %1356 = arith.addf %1354, %1355 : vector<2x32xf32>
    %1357 = arith.negf %1356 : vector<2x32xf32>
    %1358 = math.exp %1357 : vector<2x32xf32>
    %cst_511 = arith.constant 1.000000e+00 : f32
    %1359 = vector.broadcast %cst_511 : f32 to vector<2x32xf32>
    %1360 = arith.addf %1359, %1358 : vector<2x32xf32>
    %1361 = arith.divf %1359, %1360 : vector<2x32xf32>
    %1362 = vector.extract_strided_slice %1342 {offsets = [0, 64], sizes = [2, 32], strides = [1, 1]} : vector<2x96xf32> to vector<2x32xf32>
    %1363 = vector.extract_strided_slice %1345 {offsets = [0, 64], sizes = [2, 32], strides = [1, 1]} : vector<2x96xf32> to vector<2x32xf32>
    %1364 = arith.mulf %1353, %1363 : vector<2x32xf32>
    %1365 = arith.addf %1362, %1364 : vector<2x32xf32>
    %1366 = math.tanh %1365 : vector<2x32xf32>
    %cst_512 = arith.constant 1.000000e+00 : f32
    %1367 = vector.broadcast %cst_512 : f32 to vector<2x32xf32>
    %1368 = arith.subf %1367, %1361 : vector<2x32xf32>
    %1369 = arith.mulf %1368, %1366 : vector<2x32xf32>
    %1370 = arith.mulf %1361, %1338 : vector<2x32xf32>
    %1371 = arith.addf %1369, %1370 : vector<2x32xf32>
    %1372 = vector.broadcast %1340 : vector<2x1xf32> to vector<2x32xf32>
    %1373 = arith.mulf %1372, %1371 : vector<2x32xf32>
    %c3_513 = arith.constant 3 : index
    %c0_514 = arith.constant 0 : index
    %c32_515 = arith.constant 32 : index
    %1374 = vector.load %arg9[%c3_513, %c0_514, %c32_515] : memref<8x2x64xf32, #tpu.memory_space<vmem>>, vector<1x2x32xf32>
    %1375 = vector.shape_cast %1374 : vector<1x2x32xf32> to vector<2x32xf32>
    %1376 = vector.shape_cast %1373 : vector<2x32xf32> to vector<1x2x32xf32>
    tpu.vector_store %arg9[%c3_513, %c0_514, %c32_515], %1376 {strides = array<i32>} : memref<8x2x64xf32, #tpu.memory_space<vmem>>, vector<1x2x32xf32>,
    %1377 = vector.broadcast %1340 : vector<2x1xf32> to vector<2x32xf32>
    %1378 = arith.mulf %1377, %1371 : vector<2x32xf32>
    %cst_516 = arith.constant 1.000000e+00 : f32
    %1379 = vector.broadcast %cst_516 : f32 to vector<2x1xf32>
    %1380 = arith.subf %1379, %1340 : vector<2x1xf32>
    %1381 = vector.broadcast %1380 : vector<2x1xf32> to vector<2x32xf32>
    %1382 = arith.mulf %1381, %1338 : vector<2x32xf32>
    %1383 = arith.addf %1378, %1382 : vector<2x32xf32>
    %c2_517 = arith.constant 2 : index
    %c0_518 = arith.constant 0 : index
    %c0_519 = arith.constant 0 : index
    %1384 = vector.load %arg1[%c2_517, %c0_518, %c0_519] : memref<8x2x1xf32, #tpu.memory_space<vmem>>, vector<1x2x1xf32>
    %1385 = vector.shape_cast %1384 : vector<1x2x1xf32> to vector<2x1xf32>
    %c2_520 = arith.constant 2 : index
    %c0_521 = arith.constant 0 : index
    %c0_522 = arith.constant 0 : index
    %1386 = vector.load %arg10[%c2_520, %c0_521, %c0_522] : memref<8x2x96xf32, #tpu.memory_space<vmem>>, vector<1x2x96xf32>
    %1387 = vector.shape_cast %1386 : vector<1x2x96xf32> to vector<2x96xf32>
    %cst_523 = arith.constant dense<0.000000e+00> : vector<2x96xf32>
    %1388 = tpu.matmul %1383, %1146, %cst_523 {dimension_numbers = #tpu.dot_dimension_numbers<[1], [0], [0], [1], [0, 0, 1, 1], [], []>} : vector<2x32xf32>, vector<32x96xf32>, vector<2x96xf32> -> vector<2x96xf32>
    %1389 = vector.broadcast %1150 : vector<1x96xf32> to vector<2x96xf32>
    %1390 = arith.addf %1388, %1389 : vector<2x96xf32>
    %1391 = vector.extract_strided_slice %1387 {offsets = [0, 0], sizes = [2, 32], strides = [1, 1]} : vector<2x96xf32> to vector<2x32xf32>
    %1392 = vector.extract_strided_slice %1390 {offsets = [0, 0], sizes = [2, 32], strides = [1, 1]} : vector<2x96xf32> to vector<2x32xf32>
    %1393 = arith.addf %1391, %1392 : vector<2x32xf32>
    %1394 = arith.negf %1393 : vector<2x32xf32>
    %1395 = math.exp %1394 : vector<2x32xf32>
    %cst_524 = arith.constant 1.000000e+00 : f32
    %1396 = vector.broadcast %cst_524 : f32 to vector<2x32xf32>
    %1397 = arith.addf %1396, %1395 : vector<2x32xf32>
    %1398 = arith.divf %1396, %1397 : vector<2x32xf32>
    %1399 = vector.extract_strided_slice %1387 {offsets = [0, 32], sizes = [2, 32], strides = [1, 1]} : vector<2x96xf32> to vector<2x32xf32>
    %1400 = vector.extract_strided_slice %1390 {offsets = [0, 32], sizes = [2, 32], strides = [1, 1]} : vector<2x96xf32> to vector<2x32xf32>
    %1401 = arith.addf %1399, %1400 : vector<2x32xf32>
    %1402 = arith.negf %1401 : vector<2x32xf32>
    %1403 = math.exp %1402 : vector<2x32xf32>
    %cst_525 = arith.constant 1.000000e+00 : f32
    %1404 = vector.broadcast %cst_525 : f32 to vector<2x32xf32>
    %1405 = arith.addf %1404, %1403 : vector<2x32xf32>
    %1406 = arith.divf %1404, %1405 : vector<2x32xf32>
    %1407 = vector.extract_strided_slice %1387 {offsets = [0, 64], sizes = [2, 32], strides = [1, 1]} : vector<2x96xf32> to vector<2x32xf32>
    %1408 = vector.extract_strided_slice %1390 {offsets = [0, 64], sizes = [2, 32], strides = [1, 1]} : vector<2x96xf32> to vector<2x32xf32>
    %1409 = arith.mulf %1398, %1408 : vector<2x32xf32>
    %1410 = arith.addf %1407, %1409 : vector<2x32xf32>
    %1411 = math.tanh %1410 : vector<2x32xf32>
    %cst_526 = arith.constant 1.000000e+00 : f32
    %1412 = vector.broadcast %cst_526 : f32 to vector<2x32xf32>
    %1413 = arith.subf %1412, %1406 : vector<2x32xf32>
    %1414 = arith.mulf %1413, %1411 : vector<2x32xf32>
    %1415 = arith.mulf %1406, %1383 : vector<2x32xf32>
    %1416 = arith.addf %1414, %1415 : vector<2x32xf32>
    %1417 = vector.broadcast %1385 : vector<2x1xf32> to vector<2x32xf32>
    %1418 = arith.mulf %1417, %1416 : vector<2x32xf32>
    %c2_527 = arith.constant 2 : index
    %c0_528 = arith.constant 0 : index
    %c32_529 = arith.constant 32 : index
    %1419 = vector.load %arg9[%c2_527, %c0_528, %c32_529] : memref<8x2x64xf32, #tpu.memory_space<vmem>>, vector<1x2x32xf32>
    %1420 = vector.shape_cast %1419 : vector<1x2x32xf32> to vector<2x32xf32>
    %1421 = vector.shape_cast %1418 : vector<2x32xf32> to vector<1x2x32xf32>
    tpu.vector_store %arg9[%c2_527, %c0_528, %c32_529], %1421 {strides = array<i32>} : memref<8x2x64xf32, #tpu.memory_space<vmem>>, vector<1x2x32xf32>,
    %1422 = vector.broadcast %1385 : vector<2x1xf32> to vector<2x32xf32>
    %1423 = arith.mulf %1422, %1416 : vector<2x32xf32>
    %cst_530 = arith.constant 1.000000e+00 : f32
    %1424 = vector.broadcast %cst_530 : f32 to vector<2x1xf32>
    %1425 = arith.subf %1424, %1385 : vector<2x1xf32>
    %1426 = vector.broadcast %1425 : vector<2x1xf32> to vector<2x32xf32>
    %1427 = arith.mulf %1426, %1383 : vector<2x32xf32>
    %1428 = arith.addf %1423, %1427 : vector<2x32xf32>
    %c1_531 = arith.constant 1 : index
    %c0_532 = arith.constant 0 : index
    %c0_533 = arith.constant 0 : index
    %1429 = vector.load %arg1[%c1_531, %c0_532, %c0_533] : memref<8x2x1xf32, #tpu.memory_space<vmem>>, vector<1x2x1xf32>
    %1430 = vector.shape_cast %1429 : vector<1x2x1xf32> to vector<2x1xf32>
    %c1_534 = arith.constant 1 : index
    %c0_535 = arith.constant 0 : index
    %c0_536 = arith.constant 0 : index
    %1431 = vector.load %arg10[%c1_534, %c0_535, %c0_536] : memref<8x2x96xf32, #tpu.memory_space<vmem>>, vector<1x2x96xf32>
    %1432 = vector.shape_cast %1431 : vector<1x2x96xf32> to vector<2x96xf32>
    %cst_537 = arith.constant dense<0.000000e+00> : vector<2x96xf32>
    %1433 = tpu.matmul %1428, %1146, %cst_537 {dimension_numbers = #tpu.dot_dimension_numbers<[1], [0], [0], [1], [0, 0, 1, 1], [], []>} : vector<2x32xf32>, vector<32x96xf32>, vector<2x96xf32> -> vector<2x96xf32>
    %1434 = vector.broadcast %1150 : vector<1x96xf32> to vector<2x96xf32>
    %1435 = arith.addf %1433, %1434 : vector<2x96xf32>
    %1436 = vector.extract_strided_slice %1432 {offsets = [0, 0], sizes = [2, 32], strides = [1, 1]} : vector<2x96xf32> to vector<2x32xf32>
    %1437 = vector.extract_strided_slice %1435 {offsets = [0, 0], sizes = [2, 32], strides = [1, 1]} : vector<2x96xf32> to vector<2x32xf32>
    %1438 = arith.addf %1436, %1437 : vector<2x32xf32>
    %1439 = arith.negf %1438 : vector<2x32xf32>
    %1440 = math.exp %1439 : vector<2x32xf32>
    %cst_538 = arith.constant 1.000000e+00 : f32
    %1441 = vector.broadcast %cst_538 : f32 to vector<2x32xf32>
    %1442 = arith.addf %1441, %1440 : vector<2x32xf32>
    %1443 = arith.divf %1441, %1442 : vector<2x32xf32>
    %1444 = vector.extract_strided_slice %1432 {offsets = [0, 32], sizes = [2, 32], strides = [1, 1]} : vector<2x96xf32> to vector<2x32xf32>
    %1445 = vector.extract_strided_slice %1435 {offsets = [0, 32], sizes = [2, 32], strides = [1, 1]} : vector<2x96xf32> to vector<2x32xf32>
    %1446 = arith.addf %1444, %1445 : vector<2x32xf32>
    %1447 = arith.negf %1446 : vector<2x32xf32>
    %1448 = math.exp %1447 : vector<2x32xf32>
    %cst_539 = arith.constant 1.000000e+00 : f32
    %1449 = vector.broadcast %cst_539 : f32 to vector<2x32xf32>
    %1450 = arith.addf %1449, %1448 : vector<2x32xf32>
    %1451 = arith.divf %1449, %1450 : vector<2x32xf32>
    %1452 = vector.extract_strided_slice %1432 {offsets = [0, 64], sizes = [2, 32], strides = [1, 1]} : vector<2x96xf32> to vector<2x32xf32>
    %1453 = vector.extract_strided_slice %1435 {offsets = [0, 64], sizes = [2, 32], strides = [1, 1]} : vector<2x96xf32> to vector<2x32xf32>
    %1454 = arith.mulf %1443, %1453 : vector<2x32xf32>
    %1455 = arith.addf %1452, %1454 : vector<2x32xf32>
    %1456 = math.tanh %1455 : vector<2x32xf32>
    %cst_540 = arith.constant 1.000000e+00 : f32
    %1457 = vector.broadcast %cst_540 : f32 to vector<2x32xf32>
    %1458 = arith.subf %1457, %1451 : vector<2x32xf32>
    %1459 = arith.mulf %1458, %1456 : vector<2x32xf32>
    %1460 = arith.mulf %1451, %1428 : vector<2x32xf32>
    %1461 = arith.addf %1459, %1460 : vector<2x32xf32>
    %1462 = vector.broadcast %1430 : vector<2x1xf32> to vector<2x32xf32>
    %1463 = arith.mulf %1462, %1461 : vector<2x32xf32>
    %c1_541 = arith.constant 1 : index
    %c0_542 = arith.constant 0 : index
    %c32_543 = arith.constant 32 : index
    %1464 = vector.load %arg9[%c1_541, %c0_542, %c32_543] : memref<8x2x64xf32, #tpu.memory_space<vmem>>, vector<1x2x32xf32>
    %1465 = vector.shape_cast %1464 : vector<1x2x32xf32> to vector<2x32xf32>
    %1466 = vector.shape_cast %1463 : vector<2x32xf32> to vector<1x2x32xf32>
    tpu.vector_store %arg9[%c1_541, %c0_542, %c32_543], %1466 {strides = array<i32>} : memref<8x2x64xf32, #tpu.memory_space<vmem>>, vector<1x2x32xf32>,
    %1467 = vector.broadcast %1430 : vector<2x1xf32> to vector<2x32xf32>
    %1468 = arith.mulf %1467, %1461 : vector<2x32xf32>
    %cst_544 = arith.constant 1.000000e+00 : f32
    %1469 = vector.broadcast %cst_544 : f32 to vector<2x1xf32>
    %1470 = arith.subf %1469, %1430 : vector<2x1xf32>
    %1471 = vector.broadcast %1470 : vector<2x1xf32> to vector<2x32xf32>
    %1472 = arith.mulf %1471, %1428 : vector<2x32xf32>
    %1473 = arith.addf %1468, %1472 : vector<2x32xf32>
    %c0_545 = arith.constant 0 : index
    %c0_546 = arith.constant 0 : index
    %c0_547 = arith.constant 0 : index
    %1474 = vector.load %arg1[%c0_545, %c0_546, %c0_547] : memref<8x2x1xf32, #tpu.memory_space<vmem>>, vector<1x2x1xf32>
    %1475 = vector.shape_cast %1474 : vector<1x2x1xf32> to vector<2x1xf32>
    %c0_548 = arith.constant 0 : index
    %c0_549 = arith.constant 0 : index
    %c0_550 = arith.constant 0 : index
    %1476 = vector.load %arg10[%c0_548, %c0_549, %c0_550] : memref<8x2x96xf32, #tpu.memory_space<vmem>>, vector<1x2x96xf32>
    %1477 = vector.shape_cast %1476 : vector<1x2x96xf32> to vector<2x96xf32>
    %cst_551 = arith.constant dense<0.000000e+00> : vector<2x96xf32>
    %1478 = tpu.matmul %1473, %1146, %cst_551 {dimension_numbers = #tpu.dot_dimension_numbers<[1], [0], [0], [1], [0, 0, 1, 1], [], []>} : vector<2x32xf32>, vector<32x96xf32>, vector<2x96xf32> -> vector<2x96xf32>
    %1479 = vector.broadcast %1150 : vector<1x96xf32> to vector<2x96xf32>
    %1480 = arith.addf %1478, %1479 : vector<2x96xf32>
    %1481 = vector.extract_strided_slice %1477 {offsets = [0, 0], sizes = [2, 32], strides = [1, 1]} : vector<2x96xf32> to vector<2x32xf32>
    %1482 = vector.extract_strided_slice %1480 {offsets = [0, 0], sizes = [2, 32], strides = [1, 1]} : vector<2x96xf32> to vector<2x32xf32>
    %1483 = arith.addf %1481, %1482 : vector<2x32xf32>
    %1484 = arith.negf %1483 : vector<2x32xf32>
    %1485 = math.exp %1484 : vector<2x32xf32>
    %cst_552 = arith.constant 1.000000e+00 : f32
    %1486 = vector.broadcast %cst_552 : f32 to vector<2x32xf32>
    %1487 = arith.addf %1486, %1485 : vector<2x32xf32>
    %1488 = arith.divf %1486, %1487 : vector<2x32xf32>
    %1489 = vector.extract_strided_slice %1477 {offsets = [0, 32], sizes = [2, 32], strides = [1, 1]} : vector<2x96xf32> to vector<2x32xf32>
    %1490 = vector.extract_strided_slice %1480 {offsets = [0, 32], sizes = [2, 32], strides = [1, 1]} : vector<2x96xf32> to vector<2x32xf32>
    %1491 = arith.addf %1489, %1490 : vector<2x32xf32>
    %1492 = arith.negf %1491 : vector<2x32xf32>
    %1493 = math.exp %1492 : vector<2x32xf32>
    %cst_553 = arith.constant 1.000000e+00 : f32
    %1494 = vector.broadcast %cst_553 : f32 to vector<2x32xf32>
    %1495 = arith.addf %1494, %1493 : vector<2x32xf32>
    %1496 = arith.divf %1494, %1495 : vector<2x32xf32>
    %1497 = vector.extract_strided_slice %1477 {offsets = [0, 64], sizes = [2, 32], strides = [1, 1]} : vector<2x96xf32> to vector<2x32xf32>
    %1498 = vector.extract_strided_slice %1480 {offsets = [0, 64], sizes = [2, 32], strides = [1, 1]} : vector<2x96xf32> to vector<2x32xf32>
    %1499 = arith.mulf %1488, %1498 : vector<2x32xf32>
    %1500 = arith.addf %1497, %1499 : vector<2x32xf32>
    %1501 = math.tanh %1500 : vector<2x32xf32>
    %cst_554 = arith.constant 1.000000e+00 : f32
    %1502 = vector.broadcast %cst_554 : f32 to vector<2x32xf32>
    %1503 = arith.subf %1502, %1496 : vector<2x32xf32>
    %1504 = arith.mulf %1503, %1501 : vector<2x32xf32>
    %1505 = arith.mulf %1496, %1473 : vector<2x32xf32>
    %1506 = arith.addf %1504, %1505 : vector<2x32xf32>
    %1507 = vector.broadcast %1475 : vector<2x1xf32> to vector<2x32xf32>
    %1508 = arith.mulf %1507, %1506 : vector<2x32xf32>
    %c0_555 = arith.constant 0 : index
    %c0_556 = arith.constant 0 : index
    %c32_557 = arith.constant 32 : index
    %1509 = vector.load %arg9[%c0_555, %c0_556, %c32_557] : memref<8x2x64xf32, #tpu.memory_space<vmem>>, vector<1x2x32xf32>
    %1510 = vector.shape_cast %1509 : vector<1x2x32xf32> to vector<2x32xf32>
    %1511 = vector.shape_cast %1508 : vector<2x32xf32> to vector<1x2x32xf32>
    tpu.vector_store %arg9[%c0_555, %c0_556, %c32_557], %1511 {strides = array<i32>} : memref<8x2x64xf32, #tpu.memory_space<vmem>>, vector<1x2x32xf32>,
    %1512 = vector.broadcast %1475 : vector<2x1xf32> to vector<2x32xf32>
    %1513 = arith.mulf %1512, %1506 : vector<2x32xf32>
    %cst_558 = arith.constant 1.000000e+00 : f32
    %1514 = vector.broadcast %cst_558 : f32 to vector<2x1xf32>
    %1515 = arith.subf %1514, %1475 : vector<2x1xf32>
    %1516 = vector.broadcast %1515 : vector<2x1xf32> to vector<2x32xf32>
    %1517 = arith.mulf %1516, %1473 : vector<2x32xf32>
    %1518 = arith.addf %1513, %1517 : vector<2x32xf32>
    %c3_559 = arith.constant 3 : index
    %c0_560 = arith.constant 0 : index
    %c0_561 = arith.constant 0 : index
    %1519 = vector.load %arg7[%c3_559, %c0_560, %c0_561] : memref<4x2x32xf32, #tpu.memory_space<vmem>>, vector<1x2x32xf32>
    %1520 = vector.shape_cast %1519 : vector<1x2x32xf32> to vector<2x32xf32>
    %1521 = vector.shape_cast %1518 : vector<2x32xf32> to vector<1x2x32xf32>
    tpu.vector_store %arg7[%c3_559, %c0_560, %c0_561], %1521 {strides = array<i32>} : memref<4x2x32xf32, #tpu.memory_space<vmem>>, vector<1x2x32xf32>,
    %c0_562 = arith.constant 0 : index
    %c0_563 = arith.constant 0 : index
    %c0_564 = arith.constant 0 : index
    %1522 = vector.load %arg9[%c0_562, %c0_563, %c0_564] : memref<8x2x64xf32, #tpu.memory_space<vmem>>, vector<8x2x32xf32>
    %c0_565 = arith.constant 0 : index
    %c0_566 = arith.constant 0 : index
    %c32_567 = arith.constant 32 : index
    %1523 = vector.load %arg9[%c0_565, %c0_566, %c32_567] : memref<8x2x64xf32, #tpu.memory_space<vmem>>, vector<8x2x32xf32>
    %1524 = arith.addf %1522, %1523 : vector<8x2x32xf32>
    %c0_568 = arith.constant 0 : index
    %c0_569 = arith.constant 0 : index
    %c0_570 = arith.constant 0 : index
    %1525 = vector.load %arg6[%c0_568, %c0_569, %c0_570] : memref<8x2x32xf32, #tpu.memory_space<vmem>>, vector<8x2x32xf32>
    tpu.vector_store %arg6[%c0_568, %c0_569, %c0_570], %1524 {strides = array<i32>} : memref<8x2x32xf32, #tpu.memory_space<vmem>>, vector<8x2x32xf32>,
    return
  }
}

</mosaic_0001>

<llo_original>
// kernel: encoder_rnn_forward.1
$region0: #{encoder_rnn_forward.1}
  #allocation0 [shape = 'u32[]', space=smem, size = 0x4, offset = 0x4, fixed_abs, tag = 'smem constant byte address 0x4 - core index']
  #allocation1 [shape = 'u32[144,128]{1,0:T(1,128)}', space=vmem, size = 0x12000, scoped, tag = 'internal scratch']
  #allocation2 [shape = 'f32[8,2,64]{2,1,0:T(2,128)}', space=vmem, size = 0x2000, scoped, tag = 'scratch operand']
  #allocation3 [shape = 'f32[8,2,64]{2,1,0:T(2,128)}', space=vmem, size = 0x2000, scoped, tag = 'scratch operand']
  #allocation4 [shape = 'f32[8,2,96]{2,1,0:T(2,128)}', space=vmem, size = 0x2000, scoped, tag = 'scratch operand']
  %s0 = inlined_call_operand.vmem [shape: f32[8,2,32], index: 0, kind: input, shape index: {}]
  %s1 = inlined_call_operand.vmem [shape: f32[8,2,1], index: 1, kind: input, shape index: {}]
  %s2 = inlined_call_operand.hbm [shape: f32[2,2,64,96], index: 2, kind: input, shape index: {}]
  %s3 = inlined_call_operand.vmem [shape: f32[2,2,32,96], index: 3, kind: input, shape index: {}]
  %s4 = inlined_call_operand.vmem [shape: f32[2,2,1,96], index: 4, kind: input, shape index: {}]
  %s5 = inlined_call_operand.vmem [shape: f32[2,2,1,96], index: 5, kind: input, shape index: {}]
  %s6 = inlined_call_operand.hbm [shape: f32[8,2,32], index: 6, kind: output, shape index: {0}]
  %s7 = inlined_call_operand.hbm [shape: f32[4,2,32], index: 7, kind: output, shape index: {1}]
  %8 = xla_tuple %s6, %s7
  %s9 = sld [smem:[#allocation0]]
  $region46: #{encoder_rnn_forward.1} parent=0
    _
  %s11 = ssub.s32 1, %s9
  %s12 = scalar_select 0, %s11, %s9
  $region1: #{encoder_rnn_forward.1} parent=0
    #allocation5 [shape = 'u8[131072]{0}', space=vmem, size = 0x20000, scoped, tag = 'input window, operand 2, single buffered']
    #allocation6 [shape = 's32[1]{0}', space=sflag, size = 0x4, scoped, tag = 'scoped memory for encoder_rnn_forward.1']
    #allocation7 [shape = 's32[1]{0}', space=sflag, size = 0x4, scoped, tag = 'scoped memory for encoder_rnn_forward.1']
    #allocation8 [shape = 'u8[8192]{0}', space=vmem, size = 0x2000, scoped, tag = 'output window, operand 0, single buffered']
    #allocation9 [shape = 'u8[4096]{0}', space=vmem, size = 0x1000, scoped, tag = 'output window, operand 1, single buffered']
    #allocation10 [shape = 's32[1]{0}', space=sflag, size = 0x4, scoped, tag = 'scoped memory for encoder_rnn_forward.1']
    %13 = vsyncpa [#allocation6], 0
    %14 = vsyncpa [#allocation7], 0
    %15 = vsyncpa [#allocation10], 0
    // Predicated region
    $region2: #{encoder_rnn_forward.1} parent=1 // pred_check
      _
    $region3: #{encoder_rnn_forward.1} parent=1 // pred_check_branch
      %17 = sbr.rel (0) target = $region5
    $region4: #{encoder_rnn_forward.1} parent=1 // pred_region
      _
    $region5: #{encoder_rnn_forward.1} parent=1 // pred_fallthru
      _
    // Predicated region
    $region6: #{encoder_rnn_forward.1} parent=1 // pred_check
      _
    $region7: #{encoder_rnn_forward.1} parent=1 // pred_check_branch
      %19 = sbr.rel (0) target = $region9
    $region8: #{encoder_rnn_forward.1} parent=1 // pred_region
      _
    $region9: #{encoder_rnn_forward.1} parent=1 // pred_fallthru
      _
    // Predicated region
    $region10: #{encoder_rnn_forward.1} parent=1 // pred_check
      _
    $region11: #{encoder_rnn_forward.1} parent=1 // pred_check_branch
      %21 = sbr.rel (0) target = $region13
    $region12: #{encoder_rnn_forward.1} parent=1 // pred_region
      %s23 = ssub.s32 4096, 4096
      %24 = vsyncadd [#allocation6], %s23
      %s25 = sshll.u32 [#allocation5], 4
      %s26 = int_to_ptr.vmem [resolvable:$true] %s25
      %31 = dma.hbm_to_vmem [thread:$0]  %s2, 4096, %s26, [#allocation6], 128, 128, 8
    $region13: #{encoder_rnn_forward.1} parent=1 // pred_fallthru
      _
    // Predicated region
    $region14: #{encoder_rnn_forward.1} parent=1 // pred_check
      _
    $region15: #{encoder_rnn_forward.1} parent=1 // pred_check_branch
      %33 = sbr.rel (0) target = $region17
    $region16: #{encoder_rnn_forward.1} parent=1 // pred_region
      _
    $region17: #{encoder_rnn_forward.1} parent=1 // pred_fallthru
      _
    // Predicated region
    $region18: #{encoder_rnn_forward.1} parent=1 // pred_check
      _
    $region19: #{encoder_rnn_forward.1} parent=1 // pred_check_branch
      %35 = sbr.rel (0) target = $region21
    $region20: #{encoder_rnn_forward.1} parent=1 // pred_region
      _
    $region21: #{encoder_rnn_forward.1} parent=1 // pred_fallthru
      _
    // Predicated region
    $region22: #{encoder_rnn_forward.1} parent=1 // pred_check
      _
    $region23: #{encoder_rnn_forward.1} parent=1 // pred_check_branch
      %37 = sbr.rel (0) target = $region25
    $region24: #{encoder_rnn_forward.1} parent=1 // pred_region
      _
    $region25: #{encoder_rnn_forward.1} parent=1 // pred_fallthru
      _
    // Predicated region
    $region26: #{encoder_rnn_forward.1} parent=1 // pred_check
      _
    $region27: #{encoder_rnn_forward.1} parent=1 // pred_check_branch
      %39 = sbr.rel (0) target = $region29
    $region28: #{encoder_rnn_forward.1} parent=1 // pred_region
      %40 = dma.done [#allocation6], 4096
    $region29: #{encoder_rnn_forward.1} parent=1 // pred_fallthru
      _
    %vm41 = vcmask 517376
    %42 = vst.msk [vmem:[#allocation2] sm:$0x3] %vm41, 0.0
    %43 = vst.msk [vmem:[#allocation2 + $0x2] sm:$0x3] %vm41, 0.0
    %44 = vst.msk [vmem:[#allocation2 + $0x4] sm:$0x3] %vm41, 0.0
    %45 = vst.msk [vmem:[#allocation2 + $0x6] sm:$0x3] %vm41, 0.0
    %46 = vst.msk [vmem:[#allocation2 + $0x8] sm:$0x3] %vm41, 0.0
    %47 = vst.msk [vmem:[#allocation2 + $0xa] sm:$0x3] %vm41, 0.0
    %48 = vst.msk [vmem:[#allocation2 + $0xc] sm:$0x3] %vm41, 0.0
    %49 = vst.msk [vmem:[#allocation2 + $0xe] sm:$0x3] %vm41, 0.0
    %v50 = vld [vmem:[%s0] sm:$0x3]
    %v51 = vld [vmem:[%s0 + $0x2] sm:$0x3]
    %v52 = vld [vmem:[%s0 + $0x4] sm:$0x3]
    %v53 = vld [vmem:[%s0 + $0x6] sm:$0x3]
    %v54 = vld [vmem:[%s0 + $0x8] sm:$0x3]
    %v55 = vld [vmem:[%s0 + $0xa] sm:$0x3]
    %v56 = vld [vmem:[%s0 + $0xc] sm:$0x3]
    %v57 = vld [vmem:[%s0 + $0xe] sm:$0x3]
    %vm58 = vcmask 254976
    %59 = vst.msk [vmem:[#allocation2] sm:$0x3] %vm58, %v50
    %60 = vst.msk [vmem:[#allocation2 + $0x2] sm:$0x3] %vm58, %v51
    %61 = vst.msk [vmem:[#allocation2 + $0x4] sm:$0x3] %vm58, %v52
    %62 = vst.msk [vmem:[#allocation2 + $0x6] sm:$0x3] %vm58, %v53
    %63 = vst.msk [vmem:[#allocation2 + $0x8] sm:$0x3] %vm58, %v54
    %64 = vst.msk [vmem:[#allocation2 + $0xa] sm:$0x3] %vm58, %v55
    %65 = vst.msk [vmem:[#allocation2 + $0xc] sm:$0x3] %vm58, %v56
    %66 = vst.msk [vmem:[#allocation2 + $0xe] sm:$0x3] %vm58, %v57
    %v67 = vld [vmem:[#allocation5] sm:$0xff]
    %v68 = vld [vmem:[#allocation5 + $0x8] sm:$0xff]
    %v69 = vld [vmem:[#allocation5 + $0x10] sm:$0xff]
    %v70 = vld [vmem:[#allocation5 + $0x18] sm:$0xff]
    %v71 = vld [vmem:[#allocation5 + $0x20] sm:$0xff]
    %v72 = vld [vmem:[#allocation5 + $0x28] sm:$0xff]
    %v73 = vld [vmem:[#allocation5 + $0x30] sm:$0xff]
    %v74 = vld [vmem:[#allocation5 + $0x38] sm:$0xff]
    %v75 = vld [vmem:[%s3] sm:$0xff]
    %v76 = vld [vmem:[%s3 + $0x8] sm:$0xff]
    %v77 = vld [vmem:[%s3 + $0x10] sm:$0xff]
    %v78 = vld [vmem:[%s3 + $0x18] sm:$0xff]
    %v79 = vld [vmem:[%s4] sm:$0x1]
    %v80 = vld [vmem:[%s5] sm:$0x1]
    %v81 = vld [vmem:[#allocation2] sm:$0x3]
    %v82 = vld [vmem:[#allocation2 + $0x2] sm:$0x3]
    %v83 = vld [vmem:[#allocation2 + $0x4] sm:$0x3]
    %v84 = vld [vmem:[#allocation2 + $0x6] sm:$0x3]
    %v85 = vld [vmem:[#allocation2 + $0x8] sm:$0x3]
    %v86 = vld [vmem:[#allocation2 + $0xa] sm:$0x3]
    %v87 = vld [vmem:[#allocation2 + $0xc] sm:$0x3]
    %v88 = vld [vmem:[#allocation2 + $0xe] sm:$0x3]
    %v90 = vlaneseq
    %v91 = vshrl.u32 %v90, 7
    %v92 = vsub.s32 0, %v91
    %v93 = vrot.slane %v79, %v92
    %v103 = vcombine.low %v81, %v82
    %v104 = vcombine.low %v83, %v84
    %v106 = vunpack.c.l.s4 1983009808
    %v107 = vunpack.c.0.s8 %v106
    %v108 = vlaneseq
    %v109 = vshrl.u32 %v108, 7
    %v110 = vsub.s32 %v107, %v109
    %v111 = vrot.slane %v103, %v110
    %v113 = vunpack.c.l.s4 1983009808
    %v114 = vunpack.c.0.s8 %v113
    %v115 = vlaneseq
    %v116 = vshrl.u32 %v115, 7
    %v117 = vsub.s32 %v114, %v116
    %v118 = vrot.slane %v104, %v117
    %v119 = vcombine.low %v111, %v118
    %v120 = vcombine.low %v85, %v86
    %v121 = vcombine.low %v87, %v88
    %v123 = vunpack.c.l.s4 1983009808
    %v124 = vunpack.c.0.s8 %v123
    %v125 = vlaneseq
    %v126 = vshrl.u32 %v125, 7
    %v127 = vsub.s32 %v124, %v126
    %v128 = vrot.slane %v120, %v127
    %v130 = vunpack.c.l.s4 1983009808
    %v131 = vunpack.c.0.s8 %v130
    %v132 = vlaneseq
    %v133 = vshrl.u32 %v132, 7
    %v134 = vsub.s32 %v131, %v133
    %v135 = vrot.slane %v121, %v134
    %v136 = vcombine.low %v128, %v135
    %vm137 = vcmask 523264
    %v138 = vsel %vm137, %v119, 0
    %v140 = vsel %vm137, %v136, 0
    %142 = vmatprep.subr.mxu0 0.0
    %143 = vmatpush1.msra.mxu0 %v67
    %144 = vmatprep.subr.mxu0 0.0
    %145 = vmatpush1.msra.mxu0 %v68
    %146 = vmatprep.subr.mxu0 0.0
    %147 = vmatpush1.msra.mxu0 %v69
    %148 = vmatprep.subr.mxu0 0.0
    %149 = vmatpush1.msra.mxu0 %v70
    %150 = vmatprep.subr.mxu0 0.0
    %151 = vmatpush1.msra.mxu0 %v71
    %152 = vmatprep.subr.mxu0 0.0
    %153 = vmatpush1.msra.mxu0 %v72
    %154 = vmatprep.subr.mxu0 0.0
    %155 = vmatpush1.msra.mxu0 %v73
    %156 = vmatprep.subr.mxu0 0.0
    %157 = vmatpush1.msra.mxu0 %v74
    %158 = vmatprep.subr.mxu0 0.0
    %159 = vmatpush1.msra.mxu0 0.0
    %160 = vmatprep.subr.mxu0 0.0
    %161 = vmatpush1.msra.mxu0 0.0
    %162 = vmatprep.subr.mxu0 0.0
    %163 = vmatpush1.msra.mxu0 0.0
    %164 = vmatprep.subr.mxu0 0.0
    %165 = vmatpush1.msra.mxu0 0.0
    %166 = vmatprep.subr.mxu0 0.0
    %167 = vmatpush1.msra.mxu0 0.0
    %168 = vmatprep.subr.mxu0 0.0
    %169 = vmatpush1.msra.mxu0 0.0
    %170 = vmatprep.subr.mxu0 0.0
    %171 = vmatpush1.msra.mxu0 0.0
    %172 = vmatprep.subr.mxu0 0.0
    %173 = vmatpush1.msra.mxu0 0.0
    %174 = vmatprep.subr.mxu0 0.0
    %175 = vmatpush1.msra.mxu0 0.0
    %176 = vmatprep.subr.mxu0 0.0
    %177 = vmatpush1.msra.mxu0 0.0
    %178 = vmatprep.subr.mxu0 0.0
    %179 = vmatpush1.msra.mxu0 0.0
    %180 = vmatprep.subr.mxu0 0.0
    %181 = vmatpush1.msra.mxu0 0.0
    %182 = vmatprep.subr.mxu0 0.0
    %183 = vmatpush1.msra.mxu0 0.0
    %184 = vmatprep.subr.mxu0 0.0
    %185 = vmatpush1.msra.mxu0 0.0
    %186 = vmatprep.subr.mxu0 0.0
    %187 = vmatpush1.msra.mxu0 0.0
    %188 = vmatprep.subr.mxu0 0.0
    %189 = vmatpush1.msra.mxu0 0.0
    %190 = vmatprep.subr.mxu0 0.0
    %191 = vmatpush1.msra.mxu0 0.0
    %192 = vmatprep.subr.mxu0 0.0
    %193 = vmatpush1.msra.mxu0 0.0
    %194 = vmatprep.subr.mxu0 0.0
    %195 = vmatpush1.msra.mxu0 0.0
    %196 = vmatprep.subr.mxu0 0.0
    %197 = vmatpush1.msra.mxu0 0.0
    %198 = vmatprep.subr.mxu0 0.0
    %199 = vmatpush1.msra.mxu0 0.0
    %200 = vmatprep.subr.mxu0 0.0
    %201 = vmatpush1.msra.mxu0 0.0
    %202 = vmatprep.subr.mxu0 0.0
    %203 = vmatpush1.msra.mxu0 0.0
    %204 = vmatprep.subr.mxu0 0.0
    %205 = vmatpush1.msra.mxu0 0.0
    %206 = vmatprep.mubr.f32.mxu0 0.0
    %207 = vmatmul.mubr.f32.gmra.mrb[0].mxu0 %v138
    %v208 = vpop.f32.mrb[0].mxu0
    %v209 = vadd.f32 %v93, %v208
    %v210 = vpop.f32.mrb[0].mxu0
    %211 = vmatprep.mubr.f32.mxu0 0.0
    %212 = vmatmul.mubr.f32.gmra.mrb[0].mxu0 %v140
    %v213 = vpop.f32.mrb[0].mxu0
    %v214 = vadd.f32 %v93, %v213
    %v215 = vpop.f32.mrb[0].mxu0
    %216 = vdwg.mxu0
    %v219 = vcombine.high %v209, %v209
    %v221 = vunpack.c.l.s4 1983009808
    %v222 = vunpack.c.0.s8 %v221
    %v223 = vlaneseq
    %v224 = vshrl.u32 %v223, 7
    %v225 = vsub.s32 %v222, %v224
    %v226 = vrot.slane %v209, %v225
    %v228 = vunpack.c.l.s4 1983009808
    %v229 = vunpack.c.0.s8 %v228
    %v230 = vlaneseq
    %v231 = vshrl.u32 %v230, 7
    %v232 = vsub.s32 %v229, %v231
    %v233 = vrot.slane %v219, %v232
    %v234 = vcombine.high %v226, %v226
    %v235 = vcombine.high %v233, %v233
    %v236 = vcombine.high %v214, %v214
    %v238 = vunpack.c.l.s4 1983009808
    %v239 = vunpack.c.0.s8 %v238
    %v240 = vlaneseq
    %v241 = vshrl.u32 %v240, 7
    %v242 = vsub.s32 %v239, %v241
    %v243 = vrot.slane %v214, %v242
    %v245 = vunpack.c.l.s4 1983009808
    %v246 = vunpack.c.0.s8 %v245
    %v247 = vlaneseq
    %v248 = vshrl.u32 %v247, 7
    %v249 = vsub.s32 %v246, %v248
    %v250 = vrot.slane %v236, %v249
    %v251 = vcombine.high %v243, %v243
    %v252 = vcombine.high %v250, %v250
    %vm261 = vcmask 779264
    %262 = vst.msk [vmem:[#allocation4] sm:$0x3] %vm261, %v226
    %263 = vst.msk [vmem:[#allocation4 + $0x2] sm:$0x3] %vm261, %v234
    %264 = vst.msk [vmem:[#allocation4 + $0x4] sm:$0x3] %vm261, %v233
    %265 = vst.msk [vmem:[#allocation4 + $0x6] sm:$0x3] %vm261, %v235
    %266 = vst.msk [vmem:[#allocation4 + $0x8] sm:$0x3] %vm261, %v243
    %267 = vst.msk [vmem:[#allocation4 + $0xa] sm:$0x3] %vm261, %v251
    %268 = vst.msk [vmem:[#allocation4 + $0xc] sm:$0x3] %vm261, %v250
    %269 = vst.msk [vmem:[#allocation4 + $0xe] sm:$0x3] %vm261, %v252
    %v270 = vld [vmem:[%s1] sm:$0x3]
    %v271 = vld [vmem:[#allocation4] sm:$0x3]
    %v273 = vlaneseq
    %v274 = vshrl.u32 %v273, 7
    %v275 = vsub.s32 0, %v274
    %v276 = vrot.slane %v80, %v275
    %vm278 = vcmask 261120
    %v280 = vsel %vm278, 0.0, 0
    %282 = vmatprep.subr.mxu0 0.0
    %283 = vmatpush1.msra.mxu0 %v75
    %284 = vmatprep.subr.mxu0 0.0
    %285 = vmatpush1.msra.mxu0 %v76
    %286 = vmatprep.subr.mxu0 0.0
    %287 = vmatpush1.msra.mxu0 %v77
    %288 = vmatprep.subr.mxu0 0.0
    %289 = vmatpush1.msra.mxu0 %v78
    %290 = vmatprep.subr.mxu0 0.0
    %291 = vmatpush1.msra.mxu0 0.0
    %292 = vmatprep.subr.mxu0 0.0
    %293 = vmatpush1.msra.mxu0 0.0
    %294 = vmatprep.subr.mxu0 0.0
    %295 = vmatpush1.msra.mxu0 0.0
    %296 = vmatprep.subr.mxu0 0.0
    %297 = vmatpush1.msra.mxu0 0.0
    %298 = vmatprep.subr.mxu0 0.0
    %299 = vmatpush1.msra.mxu0 0.0
    %300 = vmatprep.subr.mxu0 0.0
    %301 = vmatpush1.msra.mxu0 0.0
    %302 = vmatprep.subr.mxu0 0.0
    %303 = vmatpush1.msra.mxu0 0.0
    %304 = vmatprep.subr.mxu0 0.0
    %305 = vmatpush1.msra.mxu0 0.0
    %306 = vmatprep.subr.mxu0 0.0
    %307 = vmatpush1.msra.mxu0 0.0
    %308 = vmatprep.subr.mxu0 0.0
    %309 = vmatpush1.msra.mxu0 0.0
    %310 = vmatprep.subr.mxu0 0.0
    %311 = vmatpush1.msra.mxu0 0.0
    %312 = vmatprep.subr.mxu0 0.0
    %313 = vmatpush1.msra.mxu0 0.0
    %314 = vmatprep.subr.mxu0 0.0
    %315 = vmatpush1.msra.mxu0 0.0
    %316 = vmatprep.subr.mxu0 0.0
    %317 = vmatpush1.msra.mxu0 0.0
    %318 = vmatprep.subr.mxu0 0.0
    %319 = vmatpush1.msra.mxu0 0.0
    %320 = vmatprep.subr.mxu0 0.0
    %321 = vmatpush1.msra.mxu0 0.0
    %322 = vmatprep.subr.mxu0 0.0
    %323 = vmatpush1.msra.mxu0 0.0
    %324 = vmatprep.subr.mxu0 0.0
    %325 = vmatpush1.msra.mxu0 0.0
    %326 = vmatprep.subr.mxu0 0.0
    %327 = vmatpush1.msra.mxu0 0.0
    %328 = vmatprep.subr.mxu0 0.0
    %329 = vmatpush1.msra.mxu0 0.0
    %330 = vmatprep.subr.mxu0 0.0
    %331 = vmatpush1.msra.mxu0 0.0
    %332 = vmatprep.subr.mxu0 0.0
    %333 = vmatpush1.msra.mxu0 0.0
    %334 = vmatprep.subr.mxu0 0.0
    %335 = vmatpush1.msra.mxu0 0.0
    %336 = vmatprep.subr.mxu0 0.0
    %337 = vmatpush1.msra.mxu0 0.0
    %338 = vmatprep.subr.mxu0 0.0
    %339 = vmatpush1.msra.mxu0 0.0
    %340 = vmatprep.subr.mxu0 0.0
    %341 = vmatpush1.msra.mxu0 0.0
    %342 = vmatprep.subr.mxu0 0.0
    %343 = vmatpush1.msra.mxu0 0.0
    %344 = vmatprep.subr.mxu0 0.0
    %345 = vmatpush1.msra.mxu0 0.0
    %346 = vmatprep.mubr.f32.mxu0 0.0
    %347 = vmatmul.mubr.f32.gmra.mrb[0].mxu0 %v280
    %v348 = vpop.f32.mrb[0].mxu0
    %v349 = vadd.f32 %v276, %v348
    %v350 = vpop.f32.mrb[0].mxu0
    %351 = vdwg.mxu0
    %v352 = vadd.f32 %v271, %v349
    %v353 = vxor.u32 %v352, 2147483648
    %v354 = vmul.f32 %v353, 1.442695
    %v355 = vpow.pop %v354
    %v356 = vadd.f32 %v355, 1.0
    %v357 = vrcp.pop %v356
    %v358 = vmul.f32 1.0, %v357
    %360 = vrot.lane.b32.xlu0 %v349, 64
    %v361 = vpop.permute.xlu0 %360
    %v363 = vmul.f32 %v358, %v361
    %365 = vrot.lane.b32.xlu0 %v363, 64
    %v366 = vpop.permute.xlu0 %365
    %v368 = vadd.f32 %v271, %v366
    %v369 = vtanh.pop %v368
    %v370 = vsub.f32 1.0, %v358
    %372 = vrot.lane.b32.xlu0 %v369, 96
    %v373 = vpop.permute.xlu0 %372
    %v375 = vmul.f32 %v370, %v373
    %v376 = vmul.f32 %v358, 0.0
    %v377 = vadd.f32 %v375, %v376
    %379 = vset.pattern.permute.xlu0 0
    %380 = vperm.xlu0 %379, %v270
    %v381 = vpop.permute.xlu0 %380
    %v383 = vmul.f32 %v381, %v377
    %385 = vrot.lane.b32.xlu0 %v383, 96
    %v386 = vpop.permute.xlu0 %385
    %388 = vst.msk [vmem:[#allocation3] sm:$0x3] %vm58, %v386
    %v389 = vsub.f32 1.0, %v270
    %391 = vset.pattern.permute.xlu0 0
    %392 = vperm.xlu0 %391, %v389
    %v393 = vpop.permute.xlu0 %392
    %v395 = vmul.f32 %v393, 0.0
    %v396 = vadd.f32 %v383, %v395
    %s397 = scalar_lea.vmem %s1, 2
    %v398 = vld [vmem:[%s397] sm:$0x3]
    %s399 = scalar_lea.vmem [#allocation4], 2
    %v400 = vld [vmem:[%s399] sm:$0x3]
    %402 = vrot.lane.b32.xlu0 %v396, 96
    %v403 = vpop.permute.xlu0 %402
    %v404 = vsel %vm278, %v403, 0
    %406 = vmatprep.subr.mxu0 0.0
    %407 = vmatpush1.msra.mxu0 %v75
    %408 = vmatprep.subr.mxu0 0.0
    %409 = vmatpush1.msra.mxu0 %v76
    %410 = vmatprep.subr.mxu0 0.0
    %411 = vmatpush1.msra.mxu0 %v77
    %412 = vmatprep.subr.mxu0 0.0
    %413 = vmatpush1.msra.mxu0 %v78
    %414 = vmatprep.subr.mxu0 0.0
    %415 = vmatpush1.msra.mxu0 0.0
    %416 = vmatprep.subr.mxu0 0.0
    %417 = vmatpush1.msra.mxu0 0.0
    %418 = vmatprep.subr.mxu0 0.0
    %419 = vmatpush1.msra.mxu0 0.0
    %420 = vmatprep.subr.mxu0 0.0
    %421 = vmatpush1.msra.mxu0 0.0
    %422 = vmatprep.subr.mxu0 0.0
    %423 = vmatpush1.msra.mxu0 0.0
    %424 = vmatprep.subr.mxu0 0.0
    %425 = vmatpush1.msra.mxu0 0.0
    %426 = vmatprep.subr.mxu0 0.0
    %427 = vmatpush1.msra.mxu0 0.0
    %428 = vmatprep.subr.mxu0 0.0
    %429 = vmatpush1.msra.mxu0 0.0
    %430 = vmatprep.subr.mxu0 0.0
    %431 = vmatpush1.msra.mxu0 0.0
    %432 = vmatprep.subr.mxu0 0.0
    %433 = vmatpush1.msra.mxu0 0.0
    %434 = vmatprep.subr.mxu0 0.0
    %435 = vmatpush1.msra.mxu0 0.0
    %436 = vmatprep.subr.mxu0 0.0
    %437 = vmatpush1.msra.mxu0 0.0
    %438 = vmatprep.subr.mxu0 0.0
    %439 = vmatpush1.msra.mxu0 0.0
    %440 = vmatprep.subr.mxu0 0.0
    %441 = vmatpush1.msra.mxu0 0.0
    %442 = vmatprep.subr.mxu0 0.0
    %443 = vmatpush1.msra.mxu0 0.0
    %444 = vmatprep.subr.mxu0 0.0
    %445 = vmatpush1.msra.mxu0 0.0
    %446 = vmatprep.subr.mxu0 0.0
    %447 = vmatpush1.msra.mxu0 0.0
    %448 = vmatprep.subr.mxu0 0.0
    %449 = vmatpush1.msra.mxu0 0.0
    %450 = vmatprep.subr.mxu0 0.0
    %451 = vmatpush1.msra.mxu0 0.0
    %452 = vmatprep.subr.mxu0 0.0
    %453 = vmatpush1.msra.mxu0 0.0
    %454 = vmatprep.subr.mxu0 0.0
    %455 = vmatpush1.msra.mxu0 0.0
    %456 = vmatprep.subr.mxu0 0.0
    %457 = vmatpush1.msra.mxu0 0.0
    %458 = vmatprep.subr.mxu0 0.0
    %459 = vmatpush1.msra.mxu0 0.0
    %460 = vmatprep.subr.mxu0 0.0
    %461 = vmatpush1.msra.mxu0 0.0
    %462 = vmatprep.subr.mxu0 0.0
    %463 = vmatpush1.msra.mxu0 0.0
    %464 = vmatprep.subr.mxu0 0.0
    %465 = vmatpush1.msra.mxu0 0.0
    %466 = vmatprep.subr.mxu0 0.0
    %467 = vmatpush1.msra.mxu0 0.0
    %468 = vmatprep.subr.mxu0 0.0
    %469 = vmatpush1.msra.mxu0 0.0
    %470 = vmatprep.mubr.f32.mxu0 0.0
    %471 = vmatmul.mubr.f32.gmra.mrb[0].mxu0 %v404
    %v472 = vpop.f32.mrb[0].mxu0
    %v473 = vadd.f32 %v276, %v472
    %v474 = vpop.f32.mrb[0].mxu0
    %475 = vdwg.mxu0
    %v476 = vadd.f32 %v400, %v473
    %v477 = vxor.u32 %v476, 2147483648
    %v478 = vmul.f32 %v477, 1.442695
    %v479 = vpow.pop %v478
    %v480 = vadd.f32 %v479, 1.0
    %v481 = vrcp.pop %v480
    %v482 = vmul.f32 1.0, %v481
    %484 = vrot.lane.b32.xlu0 %v473, 64
    %v485 = vpop.permute.xlu0 %484
    %v487 = vmul.f32 %v482, %v485
    %489 = vrot.lane.b32.xlu0 %v487, 64
    %v490 = vpop.permute.xlu0 %489
    %v492 = vadd.f32 %v400, %v490
    %v493 = vtanh.pop %v492
    %v494 = vsub.f32 1.0, %v482
    %496 = vrot.lane.b32.xlu0 %v493, 96
    %v497 = vpop.permute.xlu0 %496
    %v499 = vmul.f32 %v494, %v497
    %v500 = vmul.f32 %v482, %v396
    %v501 = vadd.f32 %v499, %v500
    %503 = vset.pattern.permute.xlu0 0
    %504 = vperm.xlu0 %503, %v398
    %v505 = vpop.permute.xlu0 %504
    %v507 = vmul.f32 %v505, %v501
    %509 = vrot.lane.b32.xlu0 %v507, 96
    %v510 = vpop.permute.xlu0 %509
    %s512 = scalar_lea.vmem [#allocation3], 2
    %513 = vst.msk [vmem:[%s512] sm:$0x3] %vm58, %v510
    %v514 = vsub.f32 1.0, %v398
    %516 = vset.pattern.permute.xlu0 0
    %517 = vperm.xlu0 %516, %v514
    %v518 = vpop.permute.xlu0 %517
    %v520 = vmul.f32 %v518, %v396
    %v521 = vadd.f32 %v507, %v520
    %s522 = scalar_lea.vmem %s1, 4
    %v523 = vld [vmem:[%s522] sm:$0x3]
    %s524 = scalar_lea.vmem [#allocation4], 4
    %v525 = vld [vmem:[%s524] sm:$0x3]
    %527 = vrot.lane.b32.xlu0 %v521, 96
    %v528 = vpop.permute.xlu0 %527
    %v529 = vsel %vm278, %v528, 0
    %531 = vmatprep.subr.mxu0 0.0
    %532 = vmatpush1.msra.mxu0 %v75
    %533 = vmatprep.subr.mxu0 0.0
    %534 = vmatpush1.msra.mxu0 %v76
    %535 = vmatprep.subr.mxu0 0.0
    %536 = vmatpush1.msra.mxu0 %v77
    %537 = vmatprep.subr.mxu0 0.0
    %538 = vmatpush1.msra.mxu0 %v78
    %539 = vmatprep.subr.mxu0 0.0
    %540 = vmatpush1.msra.mxu0 0.0
    %541 = vmatprep.subr.mxu0 0.0
    %542 = vmatpush1.msra.mxu0 0.0
    %543 = vmatprep.subr.mxu0 0.0
    %544 = vmatpush1.msra.mxu0 0.0
    %545 = vmatprep.subr.mxu0 0.0
    %546 = vmatpush1.msra.mxu0 0.0
    %547 = vmatprep.subr.mxu0 0.0
    %548 = vmatpush1.msra.mxu0 0.0
    %549 = vmatprep.subr.mxu0 0.0
    %550 = vmatpush1.msra.mxu0 0.0
    %551 = vmatprep.subr.mxu0 0.0
    %552 = vmatpush1.msra.mxu0 0.0
    %553 = vmatprep.subr.mxu0 0.0
    %554 = vmatpush1.msra.mxu0 0.0
    %555 = vmatprep.subr.mxu0 0.0
    %556 = vmatpush1.msra.mxu0 0.0
    %557 = vmatprep.subr.mxu0 0.0
    %558 = vmatpush1.msra.mxu0 0.0
    %559 = vmatprep.subr.mxu0 0.0
    %560 = vmatpush1.msra.mxu0 0.0
    %561 = vmatprep.subr.mxu0 0.0
    %562 = vmatpush1.msra.mxu0 0.0
    %563 = vmatprep.subr.mxu0 0.0
    %564 = vmatpush1.msra.mxu0 0.0
    %565 = vmatprep.subr.mxu0 0.0
    %566 = vmatpush1.msra.mxu0 0.0
    %567 = vmatprep.subr.mxu0 0.0
    %568 = vmatpush1.msra.mxu0 0.0
    %569 = vmatprep.subr.mxu0 0.0
    %570 = vmatpush1.msra.mxu0 0.0
    %571 = vmatprep.subr.mxu0 0.0
    %572 = vmatpush1.msra.mxu0 0.0
    %573 = vmatprep.subr.mxu0 0.0
    %574 = vmatpush1.msra.mxu0 0.0
    %575 = vmatprep.subr.mxu0 0.0
    %576 = vmatpush1.msra.mxu0 0.0
    %577 = vmatprep.subr.mxu0 0.0
    %578 = vmatpush1.msra.mxu0 0.0
    %579 = vmatprep.subr.mxu0 0.0
    %580 = vmatpush1.msra.mxu0 0.0
    %581 = vmatprep.subr.mxu0 0.0
    %582 = vmatpush1.msra.mxu0 0.0
    %583 = vmatprep.subr.mxu0 0.0
    %584 = vmatpush1.msra.mxu0 0.0
    %585 = vmatprep.subr.mxu0 0.0
    %586 = vmatpush1.msra.mxu0 0.0
    %587 = vmatprep.subr.mxu0 0.0
    %588 = vmatpush1.msra.mxu0 0.0
    %589 = vmatprep.subr.mxu0 0.0
    %590 = vmatpush1.msra.mxu0 0.0
    %591 = vmatprep.subr.mxu0 0.0
    %592 = vmatpush1.msra.mxu0 0.0
    %593 = vmatprep.subr.mxu0 0.0
    %594 = vmatpush1.msra.mxu0 0.0
    %595 = vmatprep.mubr.f32.mxu0 0.0
    %596 = vmatmul.mubr.f32.gmra.mrb[0].mxu0 %v529
    %v597 = vpop.f32.mrb[0].mxu0
    %v598 = vadd.f32 %v276, %v597
    %v599 = vpop.f32.mrb[0].mxu0
    %600 = vdwg.mxu0
    %v601 = vadd.f32 %v525, %v598
    %v602 = vxor.u32 %v601, 2147483648
    %v603 = vmul.f32 %v602, 1.442695
    %v604 = vpow.pop %v603
    %v605 = vadd.f32 %v604, 1.0
    %v606 = vrcp.pop %v605
    %v607 = vmul.f32 1.0, %v606
    %609 = vrot.lane.b32.xlu0 %v598, 64
    %v610 = vpop.permute.xlu0 %609
    %v612 = vmul.f32 %v607, %v610
    %614 = vrot.lane.b32.xlu0 %v612, 64
    %v615 = vpop.permute.xlu0 %614
    %v617 = vadd.f32 %v525, %v615
    %v618 = vtanh.pop %v617
    %v619 = vsub.f32 1.0, %v607
    %621 = vrot.lane.b32.xlu0 %v618, 96
    %v622 = vpop.permute.xlu0 %621
    %v624 = vmul.f32 %v619, %v622
    %v625 = vmul.f32 %v607, %v521
    %v626 = vadd.f32 %v624, %v625
    %628 = vset.pattern.permute.xlu0 0
    %629 = vperm.xlu0 %628, %v523
    %v630 = vpop.permute.xlu0 %629
    %v632 = vmul.f32 %v630, %v626
    %634 = vrot.lane.b32.xlu0 %v632, 96
    %v635 = vpop.permute.xlu0 %634
    %s637 = scalar_lea.vmem [#allocation3], 4
    %638 = vst.msk [vmem:[%s637] sm:$0x3] %vm58, %v635
    %v639 = vsub.f32 1.0, %v523
    %641 = vset.pattern.permute.xlu0 0
    %642 = vperm.xlu0 %641, %v639
    %v643 = vpop.permute.xlu0 %642
    %v645 = vmul.f32 %v643, %v521
    %v646 = vadd.f32 %v632, %v645
    %s647 = scalar_lea.vmem %s1, 6
    %v648 = vld [vmem:[%s647] sm:$0x3]
    %s649 = scalar_lea.vmem [#allocation4], 6
    %v650 = vld [vmem:[%s649] sm:$0x3]
    %652 = vrot.lane.b32.xlu0 %v646, 96
    %v653 = vpop.permute.xlu0 %652
    %v654 = vsel %vm278, %v653, 0
    %656 = vmatprep.subr.mxu0 0.0
    %657 = vmatpush1.msra.mxu0 %v75
    %658 = vmatprep.subr.mxu0 0.0
    %659 = vmatpush1.msra.mxu0 %v76
    %660 = vmatprep.subr.mxu0 0.0
    %661 = vmatpush1.msra.mxu0 %v77
    %662 = vmatprep.subr.mxu0 0.0
    %663 = vmatpush1.msra.mxu0 %v78
    %664 = vmatprep.subr.mxu0 0.0
    %665 = vmatpush1.msra.mxu0 0.0
    %666 = vmatprep.subr.mxu0 0.0
    %667 = vmatpush1.msra.mxu0 0.0
    %668 = vmatprep.subr.mxu0 0.0
    %669 = vmatpush1.msra.mxu0 0.0
    %670 = vmatprep.subr.mxu0 0.0
    %671 = vmatpush1.msra.mxu0 0.0
    %672 = vmatprep.subr.mxu0 0.0
    %673 = vmatpush1.msra.mxu0 0.0
    %674 = vmatprep.subr.mxu0 0.0
    %675 = vmatpush1.msra.mxu0 0.0
    %676 = vmatprep.subr.mxu0 0.0
    %677 = vmatpush1.msra.mxu0 0.0
    %678 = vmatprep.subr.mxu0 0.0
    %679 = vmatpush1.msra.mxu0 0.0
    %680 = vmatprep.subr.mxu0 0.0
    %681 = vmatpush1.msra.mxu0 0.0
    %682 = vmatprep.subr.mxu0 0.0
    %683 = vmatpush1.msra.mxu0 0.0
    %684 = vmatprep.subr.mxu0 0.0
    %685 = vmatpush1.msra.mxu0 0.0
    %686 = vmatprep.subr.mxu0 0.0
    %687 = vmatpush1.msra.mxu0 0.0
    %688 = vmatprep.subr.mxu0 0.0
    %689 = vmatpush1.msra.mxu0 0.0
    %690 = vmatprep.subr.mxu0 0.0
    %691 = vmatpush1.msra.mxu0 0.0
    %692 = vmatprep.subr.mxu0 0.0
    %693 = vmatpush1.msra.mxu0 0.0
    %694 = vmatprep.subr.mxu0 0.0
    %695 = vmatpush1.msra.mxu0 0.0
    %696 = vmatprep.subr.mxu0 0.0
    %697 = vmatpush1.msra.mxu0 0.0
    %698 = vmatprep.subr.mxu0 0.0
    %699 = vmatpush1.msra.mxu0 0.0
    %700 = vmatprep.subr.mxu0 0.0
    %701 = vmatpush1.msra.mxu0 0.0
    %702 = vmatprep.subr.mxu0 0.0
    %703 = vmatpush1.msra.mxu0 0.0
    %704 = vmatprep.subr.mxu0 0.0
    %705 = vmatpush1.msra.mxu0 0.0
    %706 = vmatprep.subr.mxu0 0.0
    %707 = vmatpush1.msra.mxu0 0.0
    %708 = vmatprep.subr.mxu0 0.0
    %709 = vmatpush1.msra.mxu0 0.0
    %710 = vmatprep.subr.mxu0 0.0
    %711 = vmatpush1.msra.mxu0 0.0
    %712 = vmatprep.subr.mxu0 0.0
    %713 = vmatpush1.msra.mxu0 0.0
    %714 = vmatprep.subr.mxu0 0.0
    %715 = vmatpush1.msra.mxu0 0.0
    %716 = vmatprep.subr.mxu0 0.0
    %717 = vmatpush1.msra.mxu0 0.0
    %718 = vmatprep.subr.mxu0 0.0
    %719 = vmatpush1.msra.mxu0 0.0
    %720 = vmatprep.mubr.f32.mxu0 0.0
    %721 = vmatmul.mubr.f32.gmra.mrb[0].mxu0 %v654
    %v722 = vpop.f32.mrb[0].mxu0
    %v723 = vadd.f32 %v276, %v722
    %v724 = vpop.f32.mrb[0].mxu0
    %725 = vdwg.mxu0
    %v726 = vadd.f32 %v650, %v723
    %v727 = vxor.u32 %v726, 2147483648
    %v728 = vmul.f32 %v727, 1.442695
    %v729 = vpow.pop %v728
    %v730 = vadd.f32 %v729, 1.0
    %v731 = vrcp.pop %v730
    %v732 = vmul.f32 1.0, %v731
    %734 = vrot.lane.b32.xlu0 %v723, 64
    %v735 = vpop.permute.xlu0 %734
    %v737 = vmul.f32 %v732, %v735
    %739 = vrot.lane.b32.xlu0 %v737, 64
    %v740 = vpop.permute.xlu0 %739
    %v742 = vadd.f32 %v650, %v740
    %v743 = vtanh.pop %v742
    %v744 = vsub.f32 1.0, %v732
    %746 = vrot.lane.b32.xlu0 %v743, 96
    %v747 = vpop.permute.xlu0 %746
    %v749 = vmul.f32 %v744, %v747
    %v750 = vmul.f32 %v732, %v646
    %v751 = vadd.f32 %v749, %v750
    %753 = vset.pattern.permute.xlu0 0
    %754 = vperm.xlu0 %753, %v648
    %v755 = vpop.permute.xlu0 %754
    %v757 = vmul.f32 %v755, %v751
    %759 = vrot.lane.b32.xlu0 %v757, 96
    %v760 = vpop.permute.xlu0 %759
    %s762 = scalar_lea.vmem [#allocation3], 6
    %763 = vst.msk [vmem:[%s762] sm:$0x3] %vm58, %v760
    %v764 = vsub.f32 1.0, %v648
    %766 = vset.pattern.permute.xlu0 0
    %767 = vperm.xlu0 %766, %v764
    %v768 = vpop.permute.xlu0 %767
    %v770 = vmul.f32 %v768, %v646
    %v771 = vadd.f32 %v757, %v770
    %s772 = scalar_lea.vmem %s1, 8
    %v773 = vld [vmem:[%s772] sm:$0x3]
    %s774 = scalar_lea.vmem [#allocation4], 8
    %v775 = vld [vmem:[%s774] sm:$0x3]
    %777 = vrot.lane.b32.xlu0 %v771, 96
    %v778 = vpop.permute.xlu0 %777
    %v779 = vsel %vm278, %v778, 0
    %781 = vmatprep.subr.mxu0 0.0
    %782 = vmatpush1.msra.mxu0 %v75
    %783 = vmatprep.subr.mxu0 0.0
    %784 = vmatpush1.msra.mxu0 %v76
    %785 = vmatprep.subr.mxu0 0.0
    %786 = vmatpush1.msra.mxu0 %v77
    %787 = vmatprep.subr.mxu0 0.0
    %788 = vmatpush1.msra.mxu0 %v78
    %789 = vmatprep.subr.mxu0 0.0
    %790 = vmatpush1.msra.mxu0 0.0
    %791 = vmatprep.subr.mxu0 0.0
    %792 = vmatpush1.msra.mxu0 0.0
    %793 = vmatprep.subr.mxu0 0.0
    %794 = vmatpush1.msra.mxu0 0.0
    %795 = vmatprep.subr.mxu0 0.0
    %796 = vmatpush1.msra.mxu0 0.0
    %797 = vmatprep.subr.mxu0 0.0
    %798 = vmatpush1.msra.mxu0 0.0
    %799 = vmatprep.subr.mxu0 0.0
    %800 = vmatpush1.msra.mxu0 0.0
    %801 = vmatprep.subr.mxu0 0.0
    %802 = vmatpush1.msra.mxu0 0.0
    %803 = vmatprep.subr.mxu0 0.0
    %804 = vmatpush1.msra.mxu0 0.0
    %805 = vmatprep.subr.mxu0 0.0
    %806 = vmatpush1.msra.mxu0 0.0
    %807 = vmatprep.subr.mxu0 0.0
    %808 = vmatpush1.msra.mxu0 0.0
    %809 = vmatprep.subr.mxu0 0.0
    %810 = vmatpush1.msra.mxu0 0.0
    %811 = vmatprep.subr.mxu0 0.0
    %812 = vmatpush1.msra.mxu0 0.0
    %813 = vmatprep.subr.mxu0 0.0
    %814 = vmatpush1.msra.mxu0 0.0
    %815 = vmatprep.subr.mxu0 0.0
    %816 = vmatpush1.msra.mxu0 0.0
    %817 = vmatprep.subr.mxu0 0.0
    %818 = vmatpush1.msra.mxu0 0.0
    %819 = vmatprep.subr.mxu0 0.0
    %820 = vmatpush1.msra.mxu0 0.0
    %821 = vmatprep.subr.mxu0 0.0
    %822 = vmatpush1.msra.mxu0 0.0
    %823 = vmatprep.subr.mxu0 0.0
    %824 = vmatpush1.msra.mxu0 0.0
    %825 = vmatprep.subr.mxu0 0.0
    %826 = vmatpush1.msra.mxu0 0.0
    %827 = vmatprep.subr.mxu0 0.0
    %828 = vmatpush1.msra.mxu0 0.0
    %829 = vmatprep.subr.mxu0 0.0
    %830 = vmatpush1.msra.mxu0 0.0
    %831 = vmatprep.subr.mxu0 0.0
    %832 = vmatpush1.msra.mxu0 0.0
    %833 = vmatprep.subr.mxu0 0.0
    %834 = vmatpush1.msra.mxu0 0.0
    %835 = vmatprep.subr.mxu0 0.0
    %836 = vmatpush1.msra.mxu0 0.0
    %837 = vmatprep.subr.mxu0 0.0
    %838 = vmatpush1.msra.mxu0 0.0
    %839 = vmatprep.subr.mxu0 0.0
    %840 = vmatpush1.msra.mxu0 0.0
    %841 = vmatprep.subr.mxu0 0.0
    %842 = vmatpush1.msra.mxu0 0.0
    %843 = vmatprep.subr.mxu0 0.0
    %844 = vmatpush1.msra.mxu0 0.0
    %845 = vmatprep.mubr.f32.mxu0 0.0
    %846 = vmatmul.mubr.f32.gmra.mrb[0].mxu0 %v779
    %v847 = vpop.f32.mrb[0].mxu0
    %v848 = vadd.f32 %v276, %v847
    %v849 = vpop.f32.mrb[0].mxu0
    %850 = vdwg.mxu0
    %v851 = vadd.f32 %v775, %v848
    %v852 = vxor.u32 %v851, 2147483648
    %v853 = vmul.f32 %v852, 1.442695
    %v854 = vpow.pop %v853
    %v855 = vadd.f32 %v854, 1.0
    %v856 = vrcp.pop %v855
    %v857 = vmul.f32 1.0, %v856
    %859 = vrot.lane.b32.xlu0 %v848, 64
    %v860 = vpop.permute.xlu0 %859
    %v862 = vmul.f32 %v857, %v860
    %864 = vrot.lane.b32.xlu0 %v862, 64
    %v865 = vpop.permute.xlu0 %864
    %v867 = vadd.f32 %v775, %v865
    %v868 = vtanh.pop %v867
    %v869 = vsub.f32 1.0, %v857
    %871 = vrot.lane.b32.xlu0 %v868, 96
    %v872 = vpop.permute.xlu0 %871
    %v874 = vmul.f32 %v869, %v872
    %v875 = vmul.f32 %v857, %v771
    %v876 = vadd.f32 %v874, %v875
    %878 = vset.pattern.permute.xlu0 0
    %879 = vperm.xlu0 %878, %v773
    %v880 = vpop.permute.xlu0 %879
    %v882 = vmul.f32 %v880, %v876
    %884 = vrot.lane.b32.xlu0 %v882, 96
    %v885 = vpop.permute.xlu0 %884
    %s887 = scalar_lea.vmem [#allocation3], 8
    %888 = vst.msk [vmem:[%s887] sm:$0x3] %vm58, %v885
    %v889 = vsub.f32 1.0, %v773
    %891 = vset.pattern.permute.xlu0 0
    %892 = vperm.xlu0 %891, %v889
    %v893 = vpop.permute.xlu0 %892
    %v895 = vmul.f32 %v893, %v771
    %v896 = vadd.f32 %v882, %v895
    %s897 = scalar_lea.vmem %s1, 10
    %v898 = vld [vmem:[%s897] sm:$0x3]
    %s899 = scalar_lea.vmem [#allocation4], 10
    %v900 = vld [vmem:[%s899] sm:$0x3]
    %902 = vrot.lane.b32.xlu0 %v896, 96
    %v903 = vpop.permute.xlu0 %902
    %v904 = vsel %vm278, %v903, 0
    %906 = vmatprep.subr.mxu0 0.0
    %907 = vmatpush1.msra.mxu0 %v75
    %908 = vmatprep.subr.mxu0 0.0
    %909 = vmatpush1.msra.mxu0 %v76
    %910 = vmatprep.subr.mxu0 0.0
    %911 = vmatpush1.msra.mxu0 %v77
    %912 = vmatprep.subr.mxu0 0.0
    %913 = vmatpush1.msra.mxu0 %v78
    %914 = vmatprep.subr.mxu0 0.0
    %915 = vmatpush1.msra.mxu0 0.0
    %916 = vmatprep.subr.mxu0 0.0
    %917 = vmatpush1.msra.mxu0 0.0
    %918 = vmatprep.subr.mxu0 0.0
    %919 = vmatpush1.msra.mxu0 0.0
    %920 = vmatprep.subr.mxu0 0.0
    %921 = vmatpush1.msra.mxu0 0.0
    %922 = vmatprep.subr.mxu0 0.0
    %923 = vmatpush1.msra.mxu0 0.0
    %924 = vmatprep.subr.mxu0 0.0
    %925 = vmatpush1.msra.mxu0 0.0
    %926 = vmatprep.subr.mxu0 0.0
    %927 = vmatpush1.msra.mxu0 0.0
    %928 = vmatprep.subr.mxu0 0.0
    %929 = vmatpush1.msra.mxu0 0.0
    %930 = vmatprep.subr.mxu0 0.0
    %931 = vmatpush1.msra.mxu0 0.0
    %932 = vmatprep.subr.mxu0 0.0
    %933 = vmatpush1.msra.mxu0 0.0
    %934 = vmatprep.subr.mxu0 0.0
    %935 = vmatpush1.msra.mxu0 0.0
    %936 = vmatprep.subr.mxu0 0.0
    %937 = vmatpush1.msra.mxu0 0.0
    %938 = vmatprep.subr.mxu0 0.0
    %939 = vmatpush1.msra.mxu0 0.0
    %940 = vmatprep.subr.mxu0 0.0
    %941 = vmatpush1.msra.mxu0 0.0
    %942 = vmatprep.subr.mxu0 0.0
    %943 = vmatpush1.msra.mxu0 0.0
    %944 = vmatprep.subr.mxu0 0.0
    %945 = vmatpush1.msra.mxu0 0.0
    %946 = vmatprep.subr.mxu0 0.0
    %947 = vmatpush1.msra.mxu0 0.0
    %948 = vmatprep.subr.mxu0 0.0
    %949 = vmatpush1.msra.mxu0 0.0
    %950 = vmatprep.subr.mxu0 0.0
    %951 = vmatpush1.msra.mxu0 0.0
    %952 = vmatprep.subr.mxu0 0.0
    %953 = vmatpush1.msra.mxu0 0.0
    %954 = vmatprep.subr.mxu0 0.0
    %955 = vmatpush1.msra.mxu0 0.0
    %956 = vmatprep.subr.mxu0 0.0
    %957 = vmatpush1.msra.mxu0 0.0
    %958 = vmatprep.subr.mxu0 0.0
    %959 = vmatpush1.msra.mxu0 0.0
    %960 = vmatprep.subr.mxu0 0.0
    %961 = vmatpush1.msra.mxu0 0.0
    %962 = vmatprep.subr.mxu0 0.0
    %963 = vmatpush1.msra.mxu0 0.0
    %964 = vmatprep.subr.mxu0 0.0
    %965 = vmatpush1.msra.mxu0 0.0
    %966 = vmatprep.subr.mxu0 0.0
    %967 = vmatpush1.msra.mxu0 0.0
    %968 = vmatprep.subr.mxu0 0.0
    %969 = vmatpush1.msra.mxu0 0.0
    %970 = vmatprep.mubr.f32.mxu0 0.0
    %971 = vmatmul.mubr.f32.gmra.mrb[0].mxu0 %v904
    %v972 = vpop.f32.mrb[0].mxu0
    %v973 = vadd.f32 %v276, %v972
    %v974 = vpop.f32.mrb[0].mxu0
    %975 = vdwg.mxu0
    %v976 = vadd.f32 %v900, %v973
    %v977 = vxor.u32 %v976, 2147483648
    %v978 = vmul.f32 %v977, 1.442695
    %v979 = vpow.pop %v978
    %v980 = vadd.f32 %v979, 1.0
    %v981 = vrcp.pop %v980
    %v982 = vmul.f32 1.0, %v981
    %984 = vrot.lane.b32.xlu0 %v973, 64
    %v985 = vpop.permute.xlu0 %984
    %v987 = vmul.f32 %v982, %v985
    %989 = vrot.lane.b32.xlu0 %v987, 64
    %v990 = vpop.permute.xlu0 %989
    %v992 = vadd.f32 %v900, %v990
    %v993 = vtanh.pop %v992
    %v994 = vsub.f32 1.0, %v982
    %996 = vrot.lane.b32.xlu0 %v993, 96
    %v997 = vpop.permute.xlu0 %996
    %v999 = vmul.f32 %v994, %v997
    %v1000 = vmul.f32 %v982, %v896
    %v1001 = vadd.f32 %v999, %v1000
    %1003 = vset.pattern.permute.xlu0 0
    %1004 = vperm.xlu0 %1003, %v898
    %v1005 = vpop.permute.xlu0 %1004
    %v1007 = vmul.f32 %v1005, %v1001
    %1009 = vrot.lane.b32.xlu0 %v1007, 96
    %v1010 = vpop.permute.xlu0 %1009
    %s1012 = scalar_lea.vmem [#allocation3], 10
    %1013 = vst.msk [vmem:[%s1012] sm:$0x3] %vm58, %v1010
    %v1014 = vsub.f32 1.0, %v898
    %1016 = vset.pattern.permute.xlu0 0
    %1017 = vperm.xlu0 %1016, %v1014
    %v1018 = vpop.permute.xlu0 %1017
    %v1020 = vmul.f32 %v1018, %v896
    %v1021 = vadd.f32 %v1007, %v1020
    %s1022 = scalar_lea.vmem %s1, 12
    %v1023 = vld [vmem:[%s1022] sm:$0x3]
    %s1024 = scalar_lea.vmem [#allocation4], 12
    %v1025 = vld [vmem:[%s1024] sm:$0x3]
    %1027 = vrot.lane.b32.xlu0 %v1021, 96
    %v1028 = vpop.permute.xlu0 %1027
    %v1029 = vsel %vm278, %v1028, 0
    %1031 = vmatprep.subr.mxu0 0.0
    %1032 = vmatpush1.msra.mxu0 %v75
    %1033 = vmatprep.subr.mxu0 0.0
    %1034 = vmatpush1.msra.mxu0 %v76
    %1035 = vmatprep.subr.mxu0 0.0
    %1036 = vmatpush1.msra.mxu0 %v77
    %1037 = vmatprep.subr.mxu0 0.0
    %1038 = vmatpush1.msra.mxu0 %v78
    %1039 = vmatprep.subr.mxu0 0.0
    %1040 = vmatpush1.msra.mxu0 0.0
    %1041 = vmatprep.subr.mxu0 0.0
    %1042 = vmatpush1.msra.mxu0 0.0
    %1043 = vmatprep.subr.mxu0 0.0
    %1044 = vmatpush1.msra.mxu0 0.0
    %1045 = vmatprep.subr.mxu0 0.0
    %1046 = vmatpush1.msra.mxu0 0.0
    %1047 = vmatprep.subr.mxu0 0.0
    %1048 = vmatpush1.msra.mxu0 0.0
    %1049 = vmatprep.subr.mxu0 0.0
    %1050 = vmatpush1.msra.mxu0 0.0
    %1051 = vmatprep.subr.mxu0 0.0
    %1052 = vmatpush1.msra.mxu0 0.0
    %1053 = vmatprep.subr.mxu0 0.0
    %1054 = vmatpush1.msra.mxu0 0.0
    %1055 = vmatprep.subr.mxu0 0.0
    %1056 = vmatpush1.msra.mxu0 0.0
    %1057 = vmatprep.subr.mxu0 0.0
    %1058 = vmatpush1.msra.mxu0 0.0
    %1059 = vmatprep.subr.mxu0 0.0
    %1060 = vmatpush1.msra.mxu0 0.0
    %1061 = vmatprep.subr.mxu0 0.0
    %1062 = vmatpush1.msra.mxu0 0.0
    %1063 = vmatprep.subr.mxu0 0.0
    %1064 = vmatpush1.msra.mxu0 0.0
    %1065 = vmatprep.subr.mxu0 0.0
    %1066 = vmatpush1.msra.mxu0 0.0
    %1067 = vmatprep.subr.mxu0 0.0
    %1068 = vmatpush1.msra.mxu0 0.0
    %1069 = vmatprep.subr.mxu0 0.0
    %1070 = vmatpush1.msra.mxu0 0.0
    %1071 = vmatprep.subr.mxu0 0.0
    %1072 = vmatpush1.msra.mxu0 0.0
    %1073 = vmatprep.subr.mxu0 0.0
    %1074 = vmatpush1.msra.mxu0 0.0
    %1075 = vmatprep.subr.mxu0 0.0
    %1076 = vmatpush1.msra.mxu0 0.0
    %1077 = vmatprep.subr.mxu0 0.0
    %1078 = vmatpush1.msra.mxu0 0.0
    %1079 = vmatprep.subr.mxu0 0.0
    %1080 = vmatpush1.msra.mxu0 0.0
    %1081 = vmatprep.subr.mxu0 0.0
    %1082 = vmatpush1.msra.mxu0 0.0
    %1083 = vmatprep.subr.mxu0 0.0
    %1084 = vmatpush1.msra.mxu0 0.0
    %1085 = vmatprep.subr.mxu0 0.0
    %1086 = vmatpush1.msra.mxu0 0.0
    %1087 = vmatprep.subr.mxu0 0.0
    %1088 = vmatpush1.msra.mxu0 0.0
    %1089 = vmatprep.subr.mxu0 0.0
    %1090 = vmatpush1.msra.mxu0 0.0
    %1091 = vmatprep.subr.mxu0 0.0
    %1092 = vmatpush1.msra.mxu0 0.0
    %1093 = vmatprep.subr.mxu0 0.0
    %1094 = vmatpush1.msra.mxu0 0.0
    %1095 = vmatprep.mubr.f32.mxu0 0.0
    %1096 = vmatmul.mubr.f32.gmra.mrb[0].mxu0 %v1029
    %v1097 = vpop.f32.mrb[0].mxu0
    %v1098 = vadd.f32 %v276, %v1097
    %v1099 = vpop.f32.mrb[0].mxu0
    %1100 = vdwg.mxu0
    %v1101 = vadd.f32 %v1025, %v1098
    %v1102 = vxor.u32 %v1101, 2147483648
    %v1103 = vmul.f32 %v1102, 1.442695
    %v1104 = vpow.pop %v1103
    %v1105 = vadd.f32 %v1104, 1.0
    %v1106 = vrcp.pop %v1105
    %v1107 = vmul.f32 1.0, %v1106
    %1109 = vrot.lane.b32.xlu0 %v1098, 64
    %v1110 = vpop.permute.xlu0 %1109
    %v1112 = vmul.f32 %v1107, %v1110
    %1114 = vrot.lane.b32.xlu0 %v1112, 64
    %v1115 = vpop.permute.xlu0 %1114
    %v1117 = vadd.f32 %v1025, %v1115
    %v1118 = vtanh.pop %v1117
    %v1119 = vsub.f32 1.0, %v1107
    %1121 = vrot.lane.b32.xlu0 %v1118, 96
    %v1122 = vpop.permute.xlu0 %1121
    %v1124 = vmul.f32 %v1119, %v1122
    %v1125 = vmul.f32 %v1107, %v1021
    %v1126 = vadd.f32 %v1124, %v1125
    %1128 = vset.pattern.permute.xlu0 0
    %1129 = vperm.xlu0 %1128, %v1023
    %v1130 = vpop.permute.xlu0 %1129
    %v1132 = vmul.f32 %v1130, %v1126
    %1134 = vrot.lane.b32.xlu0 %v1132, 96
    %v1135 = vpop.permute.xlu0 %1134
    %s1137 = scalar_lea.vmem [#allocation3], 12
    %1138 = vst.msk [vmem:[%s1137] sm:$0x3] %vm58, %v1135
    %v1139 = vsub.f32 1.0, %v1023
    %1141 = vset.pattern.permute.xlu0 0
    %1142 = vperm.xlu0 %1141, %v1139
    %v1143 = vpop.permute.xlu0 %1142
    %v1145 = vmul.f32 %v1143, %v1021
    %v1146 = vadd.f32 %v1132, %v1145
    %s1147 = scalar_lea.vmem %s1, 14
    %v1148 = vld [vmem:[%s1147] sm:$0x3]
    %s1149 = scalar_lea.vmem [#allocation4], 14
    %v1150 = vld [vmem:[%s1149] sm:$0x3]
    %1152 = vrot.lane.b32.xlu0 %v1146, 96
    %v1153 = vpop.permute.xlu0 %1152
    %v1154 = vsel %vm278, %v1153, 0
    %1156 = vmatprep.subr.mxu0 0.0
    %1157 = vmatpush1.msra.mxu0 %v75
    %1158 = vmatprep.subr.mxu0 0.0
    %1159 = vmatpush1.msra.mxu0 %v76
    %1160 = vmatprep.subr.mxu0 0.0
    %1161 = vmatpush1.msra.mxu0 %v77
    %1162 = vmatprep.subr.mxu0 0.0
    %1163 = vmatpush1.msra.mxu0 %v78
    %1164 = vmatprep.subr.mxu0 0.0
    %1165 = vmatpush1.msra.mxu0 0.0
    %1166 = vmatprep.subr.mxu0 0.0
    %1167 = vmatpush1.msra.mxu0 0.0
    %1168 = vmatprep.subr.mxu0 0.0
    %1169 = vmatpush1.msra.mxu0 0.0
    %1170 = vmatprep.subr.mxu0 0.0
    %1171 = vmatpush1.msra.mxu0 0.0
    %1172 = vmatprep.subr.mxu0 0.0
    %1173 = vmatpush1.msra.mxu0 0.0
    %1174 = vmatprep.subr.mxu0 0.0
    %1175 = vmatpush1.msra.mxu0 0.0
    %1176 = vmatprep.subr.mxu0 0.0
    %1177 = vmatpush1.msra.mxu0 0.0
    %1178 = vmatprep.subr.mxu0 0.0
    %1179 = vmatpush1.msra.mxu0 0.0
    %1180 = vmatprep.subr.mxu0 0.0
    %1181 = vmatpush1.msra.mxu0 0.0
    %1182 = vmatprep.subr.mxu0 0.0
    %1183 = vmatpush1.msra.mxu0 0.0
    %1184 = vmatprep.subr.mxu0 0.0
    %1185 = vmatpush1.msra.mxu0 0.0
    %1186 = vmatprep.subr.mxu0 0.0
    %1187 = vmatpush1.msra.mxu0 0.0
    %1188 = vmatprep.subr.mxu0 0.0
    %1189 = vmatpush1.msra.mxu0 0.0
    %1190 = vmatprep.subr.mxu0 0.0
    %1191 = vmatpush1.msra.mxu0 0.0
    %1192 = vmatprep.subr.mxu0 0.0
    %1193 = vmatpush1.msra.mxu0 0.0
    %1194 = vmatprep.subr.mxu0 0.0
    %1195 = vmatpush1.msra.mxu0 0.0
    %1196 = vmatprep.subr.mxu0 0.0
    %1197 = vmatpush1.msra.mxu0 0.0
    %1198 = vmatprep.subr.mxu0 0.0
    %1199 = vmatpush1.msra.mxu0 0.0
    %1200 = vmatprep.subr.mxu0 0.0
    %1201 = vmatpush1.msra.mxu0 0.0
    %1202 = vmatprep.subr.mxu0 0.0
    %1203 = vmatpush1.msra.mxu0 0.0
    %1204 = vmatprep.subr.mxu0 0.0
    %1205 = vmatpush1.msra.mxu0 0.0
    %1206 = vmatprep.subr.mxu0 0.0
    %1207 = vmatpush1.msra.mxu0 0.0
    %1208 = vmatprep.subr.mxu0 0.0
    %1209 = vmatpush1.msra.mxu0 0.0
    %1210 = vmatprep.subr.mxu0 0.0
    %1211 = vmatpush1.msra.mxu0 0.0
    %1212 = vmatprep.subr.mxu0 0.0
    %1213 = vmatpush1.msra.mxu0 0.0
    %1214 = vmatprep.subr.mxu0 0.0
    %1215 = vmatpush1.msra.mxu0 0.0
    %1216 = vmatprep.subr.mxu0 0.0
    %1217 = vmatpush1.msra.mxu0 0.0
    %1218 = vmatprep.subr.mxu0 0.0
    %1219 = vmatpush1.msra.mxu0 0.0
    %1220 = vmatprep.mubr.f32.mxu0 0.0
    %1221 = vmatmul.mubr.f32.gmra.mrb[0].mxu0 %v1154
    %v1222 = vpop.f32.mrb[0].mxu0
    %v1223 = vadd.f32 %v276, %v1222
    %v1224 = vpop.f32.mrb[0].mxu0
    %1225 = vdwg.mxu0
    %v1226 = vadd.f32 %v1150, %v1223
    %v1227 = vxor.u32 %v1226, 2147483648
    %v1228 = vmul.f32 %v1227, 1.442695
    %v1229 = vpow.pop %v1228
    %v1230 = vadd.f32 %v1229, 1.0
    %v1231 = vrcp.pop %v1230
    %v1232 = vmul.f32 1.0, %v1231
    %1234 = vrot.lane.b32.xlu0 %v1223, 64
    %v1235 = vpop.permute.xlu0 %1234
    %v1237 = vmul.f32 %v1232, %v1235
    %1239 = vrot.lane.b32.xlu0 %v1237, 64
    %v1240 = vpop.permute.xlu0 %1239
    %v1242 = vadd.f32 %v1150, %v1240
    %v1243 = vtanh.pop %v1242
    %v1244 = vsub.f32 1.0, %v1232
    %1246 = vrot.lane.b32.xlu0 %v1243, 96
    %v1247 = vpop.permute.xlu0 %1246
    %v1249 = vmul.f32 %v1244, %v1247
    %v1250 = vmul.f32 %v1232, %v1146
    %v1251 = vadd.f32 %v1249, %v1250
    %1253 = vset.pattern.permute.xlu0 0
    %1254 = vperm.xlu0 %1253, %v1148
    %v1255 = vpop.permute.xlu0 %1254
    %v1257 = vmul.f32 %v1255, %v1251
    %1259 = vrot.lane.b32.xlu0 %v1257, 96
    %v1260 = vpop.permute.xlu0 %1259
    %s1262 = scalar_lea.vmem [#allocation3], 14
    %1263 = vst.msk [vmem:[%s1262] sm:$0x3] %vm58, %v1260
    %v1264 = vsub.f32 1.0, %v1148
    %1266 = vset.pattern.permute.xlu0 0
    %1267 = vperm.xlu0 %1266, %v1264
    %v1268 = vpop.permute.xlu0 %1267
    %v1270 = vmul.f32 %v1268, %v1146
    %v1271 = vadd.f32 %v1257, %v1270
    %1273 = vrot.lane.b32.xlu0 %v1271, 96
    %v1274 = vpop.permute.xlu0 %1273
    %1276 = vst.msk [vmem:[#allocation9] sm:$0x3] %vm58, %v1274
    %s1277 = scalar_lea.vmem [#allocation5], 64
    %v1278 = vld [vmem:[%s1277] sm:$0xff]
    %v1279 = vld [vmem:[%s1277 + $0x8] sm:$0xff]
    %v1280 = vld [vmem:[%s1277 + $0x10] sm:$0xff]
    %v1281 = vld [vmem:[%s1277 + $0x18] sm:$0xff]
    %v1282 = vld [vmem:[%s1277 + $0x20] sm:$0xff]
    %v1283 = vld [vmem:[%s1277 + $0x28] sm:$0xff]
    %v1284 = vld [vmem:[%s1277 + $0x30] sm:$0xff]
    %v1285 = vld [vmem:[%s1277 + $0x38] sm:$0xff]
    %s1286 = scalar_lea.vmem %s3, 32
    %v1287 = vld [vmem:[%s1286] sm:$0xff]
    %v1288 = vld [vmem:[%s1286 + $0x8] sm:$0xff]
    %v1289 = vld [vmem:[%s1286 + $0x10] sm:$0xff]
    %v1290 = vld [vmem:[%s1286 + $0x18] sm:$0xff]
    %s1291 = scalar_lea.vmem %s4, 1
    %v1292 = vld [vmem:[%s1291] sm:$0x1]
    %s1293 = scalar_lea.vmem %s5, 1
    %v1294 = vld [vmem:[%s1293] sm:$0x1]
    %v1295 = vld [vmem:[#allocation2] sm:$0x3]
    %v1296 = vld [vmem:[#allocation2 + $0x2] sm:$0x3]
    %v1297 = vld [vmem:[#allocation2 + $0x4] sm:$0x3]
    %v1298 = vld [vmem:[#allocation2 + $0x6] sm:$0x3]
    %v1299 = vld [vmem:[#allocation2 + $0x8] sm:$0x3]
    %v1300 = vld [vmem:[#allocation2 + $0xa] sm:$0x3]
    %v1301 = vld [vmem:[#allocation2 + $0xc] sm:$0x3]
    %v1302 = vld [vmem:[#allocation2 + $0xe] sm:$0x3]
    %v1304 = vlaneseq
    %v1305 = vshrl.u32 %v1304, 7
    %v1306 = vsub.s32 0, %v1305
    %v1307 = vrot.slane %v1292, %v1306
    %v1317 = vcombine.low %v1295, %v1296
    %v1318 = vcombine.low %v1297, %v1298
    %v1320 = vunpack.c.l.s4 1983009808
    %v1321 = vunpack.c.0.s8 %v1320
    %v1322 = vlaneseq
    %v1323 = vshrl.u32 %v1322, 7
    %v1324 = vsub.s32 %v1321, %v1323
    %v1325 = vrot.slane %v1317, %v1324
    %v1327 = vunpack.c.l.s4 1983009808
    %v1328 = vunpack.c.0.s8 %v1327
    %v1329 = vlaneseq
    %v1330 = vshrl.u32 %v1329, 7
    %v1331 = vsub.s32 %v1328, %v1330
    %v1332 = vrot.slane %v1318, %v1331
    %v1333 = vcombine.low %v1325, %v1332
    %v1334 = vcombine.low %v1299, %v1300
    %v1335 = vcombine.low %v1301, %v1302
    %v1337 = vunpack.c.l.s4 1983009808
    %v1338 = vunpack.c.0.s8 %v1337
    %v1339 = vlaneseq
    %v1340 = vshrl.u32 %v1339, 7
    %v1341 = vsub.s32 %v1338, %v1340
    %v1342 = vrot.slane %v1334, %v1341
    %v1344 = vunpack.c.l.s4 1983009808
    %v1345 = vunpack.c.0.s8 %v1344
    %v1346 = vlaneseq
    %v1347 = vshrl.u32 %v1346, 7
    %v1348 = vsub.s32 %v1345, %v1347
    %v1349 = vrot.slane %v1335, %v1348
    %v1350 = vcombine.low %v1342, %v1349
    %v1351 = vsel %vm137, %v1333, 0
    %v1353 = vsel %vm137, %v1350, 0
    %1355 = vmatprep.subr.mxu0 0.0
    %1356 = vmatpush1.msra.mxu0 %v1278
    %1357 = vmatprep.subr.mxu0 0.0
    %1358 = vmatpush1.msra.mxu0 %v1279
    %1359 = vmatprep.subr.mxu0 0.0
    %1360 = vmatpush1.msra.mxu0 %v1280
    %1361 = vmatprep.subr.mxu0 0.0
    %1362 = vmatpush1.msra.mxu0 %v1281
    %1363 = vmatprep.subr.mxu0 0.0
    %1364 = vmatpush1.msra.mxu0 %v1282
    %1365 = vmatprep.subr.mxu0 0.0
    %1366 = vmatpush1.msra.mxu0 %v1283
    %1367 = vmatprep.subr.mxu0 0.0
    %1368 = vmatpush1.msra.mxu0 %v1284
    %1369 = vmatprep.subr.mxu0 0.0
    %1370 = vmatpush1.msra.mxu0 %v1285
    %1371 = vmatprep.subr.mxu0 0.0
    %1372 = vmatpush1.msra.mxu0 0.0
    %1373 = vmatprep.subr.mxu0 0.0
    %1374 = vmatpush1.msra.mxu0 0.0
    %1375 = vmatprep.subr.mxu0 0.0
    %1376 = vmatpush1.msra.mxu0 0.0
    %1377 = vmatprep.subr.mxu0 0.0
    %1378 = vmatpush1.msra.mxu0 0.0
    %1379 = vmatprep.subr.mxu0 0.0
    %1380 = vmatpush1.msra.mxu0 0.0
    %1381 = vmatprep.subr.mxu0 0.0
    %1382 = vmatpush1.msra.mxu0 0.0
    %1383 = vmatprep.subr.mxu0 0.0
    %1384 = vmatpush1.msra.mxu0 0.0
    %1385 = vmatprep.subr.mxu0 0.0
    %1386 = vmatpush1.msra.mxu0 0.0
    %1387 = vmatprep.subr.mxu0 0.0
    %1388 = vmatpush1.msra.mxu0 0.0
    %1389 = vmatprep.subr.mxu0 0.0
    %1390 = vmatpush1.msra.mxu0 0.0
    %1391 = vmatprep.subr.mxu0 0.0
    %1392 = vmatpush1.msra.mxu0 0.0
    %1393 = vmatprep.subr.mxu0 0.0
    %1394 = vmatpush1.msra.mxu0 0.0
    %1395 = vmatprep.subr.mxu0 0.0
    %1396 = vmatpush1.msra.mxu0 0.0
    %1397 = vmatprep.subr.mxu0 0.0
    %1398 = vmatpush1.msra.mxu0 0.0
    %1399 = vmatprep.subr.mxu0 0.0
    %1400 = vmatpush1.msra.mxu0 0.0
    %1401 = vmatprep.subr.mxu0 0.0
    %1402 = vmatpush1.msra.mxu0 0.0
    %1403 = vmatprep.subr.mxu0 0.0
    %1404 = vmatpush1.msra.mxu0 0.0
    %1405 = vmatprep.subr.mxu0 0.0
    %1406 = vmatpush1.msra.mxu0 0.0
    %1407 = vmatprep.subr.mxu0 0.0
    %1408 = vmatpush1.msra.mxu0 0.0
    %1409 = vmatprep.subr.mxu0 0.0
    %1410 = vmatpush1.msra.mxu0 0.0
    %1411 = vmatprep.subr.mxu0 0.0
    %1412 = vmatpush1.msra.mxu0 0.0
    %1413 = vmatprep.subr.mxu0 0.0
    %1414 = vmatpush1.msra.mxu0 0.0
    %1415 = vmatprep.subr.mxu0 0.0
    %1416 = vmatpush1.msra.mxu0 0.0
    %1417 = vmatprep.subr.mxu0 0.0
    %1418 = vmatpush1.msra.mxu0 0.0
    %1419 = vmatprep.mubr.f32.mxu0 0.0
    %1420 = vmatmul.mubr.f32.gmra.mrb[0].mxu0 %v1351
    %v1421 = vpop.f32.mrb[0].mxu0
    %v1422 = vadd.f32 %v1307, %v1421
    %v1423 = vpop.f32.mrb[0].mxu0
    %1424 = vmatprep.mubr.f32.mxu0 0.0
    %1425 = vmatmul.mubr.f32.gmra.mrb[0].mxu0 %v1353
    %v1426 = vpop.f32.mrb[0].mxu0
    %v1427 = vadd.f32 %v1307, %v1426
    %v1428 = vpop.f32.mrb[0].mxu0
    %1429 = vdwg.mxu0
    %v1432 = vcombine.high %v1422, %v1422
    %v1434 = vunpack.c.l.s4 1983009808
    %v1435 = vunpack.c.0.s8 %v1434
    %v1436 = vlaneseq
    %v1437 = vshrl.u32 %v1436, 7
    %v1438 = vsub.s32 %v1435, %v1437
    %v1439 = vrot.slane %v1422, %v1438
    %v1441 = vunpack.c.l.s4 1983009808
    %v1442 = vunpack.c.0.s8 %v1441
    %v1443 = vlaneseq
    %v1444 = vshrl.u32 %v1443, 7
    %v1445 = vsub.s32 %v1442, %v1444
    %v1446 = vrot.slane %v1432, %v1445
    %v1447 = vcombine.high %v1439, %v1439
    %v1448 = vcombine.high %v1446, %v1446
    %v1449 = vcombine.high %v1427, %v1427
    %v1451 = vunpack.c.l.s4 1983009808
    %v1452 = vunpack.c.0.s8 %v1451
    %v1453 = vlaneseq
    %v1454 = vshrl.u32 %v1453, 7
    %v1455 = vsub.s32 %v1452, %v1454
    %v1456 = vrot.slane %v1427, %v1455
    %v1458 = vunpack.c.l.s4 1983009808
    %v1459 = vunpack.c.0.s8 %v1458
    %v1460 = vlaneseq
    %v1461 = vshrl.u32 %v1460, 7
    %v1462 = vsub.s32 %v1459, %v1461
    %v1463 = vrot.slane %v1449, %v1462
    %v1464 = vcombine.high %v1456, %v1456
    %v1465 = vcombine.high %v1463, %v1463
    %1474 = vst.msk [vmem:[#allocation4] sm:$0x3] %vm261, %v1439
    %1475 = vst.msk [vmem:[#allocation4 + $0x2] sm:$0x3] %vm261, %v1447
    %1476 = vst.msk [vmem:[#allocation4 + $0x4] sm:$0x3] %vm261, %v1446
    %1477 = vst.msk [vmem:[#allocation4 + $0x6] sm:$0x3] %vm261, %v1448
    %1478 = vst.msk [vmem:[#allocation4 + $0x8] sm:$0x3] %vm261, %v1456
    %1479 = vst.msk [vmem:[#allocation4 + $0xa] sm:$0x3] %vm261, %v1464
    %1480 = vst.msk [vmem:[#allocation4 + $0xc] sm:$0x3] %vm261, %v1463
    %1481 = vst.msk [vmem:[#allocation4 + $0xe] sm:$0x3] %vm261, %v1465
    %v1482 = vld [vmem:[%s1147] sm:$0x3]
    %v1483 = vld [vmem:[%s1149] sm:$0x3]
    %v1485 = vlaneseq
    %v1486 = vshrl.u32 %v1485, 7
    %v1487 = vsub.s32 0, %v1486
    %v1488 = vrot.slane %v1294, %v1487
    %1490 = vmatprep.subr.mxu0 0.0
    %1491 = vmatpush1.msra.mxu0 %v1287
    %1492 = vmatprep.subr.mxu0 0.0
    %1493 = vmatpush1.msra.mxu0 %v1288
    %1494 = vmatprep.subr.mxu0 0.0
    %1495 = vmatpush1.msra.mxu0 %v1289
    %1496 = vmatprep.subr.mxu0 0.0
    %1497 = vmatpush1.msra.mxu0 %v1290
    %1498 = vmatprep.subr.mxu0 0.0
    %1499 = vmatpush1.msra.mxu0 0.0
    %1500 = vmatprep.subr.mxu0 0.0
    %1501 = vmatpush1.msra.mxu0 0.0
    %1502 = vmatprep.subr.mxu0 0.0
    %1503 = vmatpush1.msra.mxu0 0.0
    %1504 = vmatprep.subr.mxu0 0.0
    %1505 = vmatpush1.msra.mxu0 0.0
    %1506 = vmatprep.subr.mxu0 0.0
    %1507 = vmatpush1.msra.mxu0 0.0
    %1508 = vmatprep.subr.mxu0 0.0
    %1509 = vmatpush1.msra.mxu0 0.0
    %1510 = vmatprep.subr.mxu0 0.0
    %1511 = vmatpush1.msra.mxu0 0.0
    %1512 = vmatprep.subr.mxu0 0.0
    %1513 = vmatpush1.msra.mxu0 0.0
    %1514 = vmatprep.subr.mxu0 0.0
    %1515 = vmatpush1.msra.mxu0 0.0
    %1516 = vmatprep.subr.mxu0 0.0
    %1517 = vmatpush1.msra.mxu0 0.0
    %1518 = vmatprep.subr.mxu0 0.0
    %1519 = vmatpush1.msra.mxu0 0.0
    %1520 = vmatprep.subr.mxu0 0.0
    %1521 = vmatpush1.msra.mxu0 0.0
    %1522 = vmatprep.subr.mxu0 0.0
    %1523 = vmatpush1.msra.mxu0 0.0
    %1524 = vmatprep.subr.mxu0 0.0
    %1525 = vmatpush1.msra.mxu0 0.0
    %1526 = vmatprep.subr.mxu0 0.0
    %1527 = vmatpush1.msra.mxu0 0.0
    %1528 = vmatprep.subr.mxu0 0.0
    %1529 = vmatpush1.msra.mxu0 0.0
    %1530 = vmatprep.subr.mxu0 0.0
    %1531 = vmatpush1.msra.mxu0 0.0
    %1532 = vmatprep.subr.mxu0 0.0
    %1533 = vmatpush1.msra.mxu0 0.0
    %1534 = vmatprep.subr.mxu0 0.0
    %1535 = vmatpush1.msra.mxu0 0.0
    %1536 = vmatprep.subr.mxu0 0.0
    %1537 = vmatpush1.msra.mxu0 0.0
    %1538 = vmatprep.subr.mxu0 0.0
    %1539 = vmatpush1.msra.mxu0 0.0
    %1540 = vmatprep.subr.mxu0 0.0
    %1541 = vmatpush1.msra.mxu0 0.0
    %1542 = vmatprep.subr.mxu0 0.0
    %1543 = vmatpush1.msra.mxu0 0.0
    %1544 = vmatprep.subr.mxu0 0.0
    %1545 = vmatpush1.msra.mxu0 0.0
    %1546 = vmatprep.subr.mxu0 0.0
    %1547 = vmatpush1.msra.mxu0 0.0
    %1548 = vmatprep.subr.mxu0 0.0
    %1549 = vmatpush1.msra.mxu0 0.0
    %1550 = vmatprep.subr.mxu0 0.0
    %1551 = vmatpush1.msra.mxu0 0.0
    %1552 = vmatprep.subr.mxu0 0.0
    %1553 = vmatpush1.msra.mxu0 0.0
    %1554 = vmatprep.mubr.f32.mxu0 0.0
    %1555 = vmatmul.mubr.f32.gmra.mrb[0].mxu0 %v280
    %v1556 = vpop.f32.mrb[0].mxu0
    %v1557 = vadd.f32 %v1488, %v1556
    %v1558 = vpop.f32.mrb[0].mxu0
    %1559 = vdwg.mxu0
    %v1560 = vadd.f32 %v1483, %v1557
    %v1561 = vxor.u32 %v1560, 2147483648
    %v1562 = vmul.f32 %v1561, 1.442695
    %v1563 = vpow.pop %v1562
    %v1564 = vadd.f32 %v1563, 1.0
    %v1565 = vrcp.pop %v1564
    %v1566 = vmul.f32 1.0, %v1565
    %1568 = vrot.lane.b32.xlu0 %v1557, 64
    %v1569 = vpop.permute.xlu0 %1568
    %v1571 = vmul.f32 %v1566, %v1569
    %1573 = vrot.lane.b32.xlu0 %v1571, 64
    %v1574 = vpop.permute.xlu0 %1573
    %v1576 = vadd.f32 %v1483, %v1574
    %v1577 = vtanh.pop %v1576
    %v1578 = vsub.f32 1.0, %v1566
    %1580 = vrot.lane.b32.xlu0 %v1577, 96
    %v1581 = vpop.permute.xlu0 %1580
    %v1583 = vmul.f32 %v1578, %v1581
    %v1584 = vmul.f32 %v1566, 0.0
    %v1585 = vadd.f32 %v1583, %v1584
    %1587 = vset.pattern.permute.xlu0 0
    %1588 = vperm.xlu0 %1587, %v1482
    %v1589 = vpop.permute.xlu0 %1588
    %v1591 = vmul.f32 %v1589, %v1585
    %1592 = vst.msk [vmem:[%s1262] sm:$0x3] %vm41, %v1591
    %v1593 = vsub.f32 1.0, %v1482
    %1595 = vset.pattern.permute.xlu0 0
    %1596 = vperm.xlu0 %1595, %v1593
    %v1597 = vpop.permute.xlu0 %1596
    %v1599 = vmul.f32 %v1597, 0.0
    %v1600 = vadd.f32 %v1591, %v1599
    %v1601 = vld [vmem:[%s1022] sm:$0x3]
    %v1602 = vld [vmem:[%s1024] sm:$0x3]
    %1604 = vrot.lane.b32.xlu0 %v1600, 96
    %v1605 = vpop.permute.xlu0 %1604
    %v1606 = vsel %vm278, %v1605, 0
    %1608 = vmatprep.subr.mxu0 0.0
    %1609 = vmatpush1.msra.mxu0 %v1287
    %1610 = vmatprep.subr.mxu0 0.0
    %1611 = vmatpush1.msra.mxu0 %v1288
    %1612 = vmatprep.subr.mxu0 0.0
    %1613 = vmatpush1.msra.mxu0 %v1289
    %1614 = vmatprep.subr.mxu0 0.0
    %1615 = vmatpush1.msra.mxu0 %v1290
    %1616 = vmatprep.subr.mxu0 0.0
    %1617 = vmatpush1.msra.mxu0 0.0
    %1618 = vmatprep.subr.mxu0 0.0
    %1619 = vmatpush1.msra.mxu0 0.0
    %1620 = vmatprep.subr.mxu0 0.0
    %1621 = vmatpush1.msra.mxu0 0.0
    %1622 = vmatprep.subr.mxu0 0.0
    %1623 = vmatpush1.msra.mxu0 0.0
    %1624 = vmatprep.subr.mxu0 0.0
    %1625 = vmatpush1.msra.mxu0 0.0
    %1626 = vmatprep.subr.mxu0 0.0
    %1627 = vmatpush1.msra.mxu0 0.0
    %1628 = vmatprep.subr.mxu0 0.0
    %1629 = vmatpush1.msra.mxu0 0.0
    %1630 = vmatprep.subr.mxu0 0.0
    %1631 = vmatpush1.msra.mxu0 0.0
    %1632 = vmatprep.subr.mxu0 0.0
    %1633 = vmatpush1.msra.mxu0 0.0
    %1634 = vmatprep.subr.mxu0 0.0
    %1635 = vmatpush1.msra.mxu0 0.0
    %1636 = vmatprep.subr.mxu0 0.0
    %1637 = vmatpush1.msra.mxu0 0.0
    %1638 = vmatprep.subr.mxu0 0.0
    %1639 = vmatpush1.msra.mxu0 0.0
    %1640 = vmatprep.subr.mxu0 0.0
    %1641 = vmatpush1.msra.mxu0 0.0
    %1642 = vmatprep.subr.mxu0 0.0
    %1643 = vmatpush1.msra.mxu0 0.0
    %1644 = vmatprep.subr.mxu0 0.0
    %1645 = vmatpush1.msra.mxu0 0.0
    %1646 = vmatprep.subr.mxu0 0.0
    %1647 = vmatpush1.msra.mxu0 0.0
    %1648 = vmatprep.subr.mxu0 0.0
    %1649 = vmatpush1.msra.mxu0 0.0
    %1650 = vmatprep.subr.mxu0 0.0
    %1651 = vmatpush1.msra.mxu0 0.0
    %1652 = vmatprep.subr.mxu0 0.0
    %1653 = vmatpush1.msra.mxu0 0.0
    %1654 = vmatprep.subr.mxu0 0.0
    %1655 = vmatpush1.msra.mxu0 0.0
    %1656 = vmatprep.subr.mxu0 0.0
    %1657 = vmatpush1.msra.mxu0 0.0
    %1658 = vmatprep.subr.mxu0 0.0
    %1659 = vmatpush1.msra.mxu0 0.0
    %1660 = vmatprep.subr.mxu0 0.0
    %1661 = vmatpush1.msra.mxu0 0.0
    %1662 = vmatprep.subr.mxu0 0.0
    %1663 = vmatpush1.msra.mxu0 0.0
    %1664 = vmatprep.subr.mxu0 0.0
    %1665 = vmatpush1.msra.mxu0 0.0
    %1666 = vmatprep.subr.mxu0 0.0
    %1667 = vmatpush1.msra.mxu0 0.0
    %1668 = vmatprep.subr.mxu0 0.0
    %1669 = vmatpush1.msra.mxu0 0.0
    %1670 = vmatprep.subr.mxu0 0.0
    %1671 = vmatpush1.msra.mxu0 0.0
    %1672 = vmatprep.mubr.f32.mxu0 0.0
    %1673 = vmatmul.mubr.f32.gmra.mrb[0].mxu0 %v1606
    %v1674 = vpop.f32.mrb[0].mxu0
    %v1675 = vadd.f32 %v1488, %v1674
    %v1676 = vpop.f32.mrb[0].mxu0
    %1677 = vdwg.mxu0
    %v1678 = vadd.f32 %v1602, %v1675
    %v1679 = vxor.u32 %v1678, 2147483648
    %v1680 = vmul.f32 %v1679, 1.442695
    %v1681 = vpow.pop %v1680
    %v1682 = vadd.f32 %v1681, 1.0
    %v1683 = vrcp.pop %v1682
    %v1684 = vmul.f32 1.0, %v1683
    %1686 = vrot.lane.b32.xlu0 %v1675, 64
    %v1687 = vpop.permute.xlu0 %1686
    %v1689 = vmul.f32 %v1684, %v1687
    %1691 = vrot.lane.b32.xlu0 %v1689, 64
    %v1692 = vpop.permute.xlu0 %1691
    %v1694 = vadd.f32 %v1602, %v1692
    %v1695 = vtanh.pop %v1694
    %v1696 = vsub.f32 1.0, %v1684
    %1698 = vrot.lane.b32.xlu0 %v1695, 96
    %v1699 = vpop.permute.xlu0 %1698
    %v1701 = vmul.f32 %v1696, %v1699
    %v1702 = vmul.f32 %v1684, %v1600
    %v1703 = vadd.f32 %v1701, %v1702
    %1705 = vset.pattern.permute.xlu0 0
    %1706 = vperm.xlu0 %1705, %v1601
    %v1707 = vpop.permute.xlu0 %1706
    %v1709 = vmul.f32 %v1707, %v1703
    %1710 = vst.msk [vmem:[%s1137] sm:$0x3] %vm41, %v1709
    %v1711 = vsub.f32 1.0, %v1601
    %1713 = vset.pattern.permute.xlu0 0
    %1714 = vperm.xlu0 %1713, %v1711
    %v1715 = vpop.permute.xlu0 %1714
    %v1717 = vmul.f32 %v1715, %v1600
    %v1718 = vadd.f32 %v1709, %v1717
    %v1719 = vld [vmem:[%s897] sm:$0x3]
    %v1720 = vld [vmem:[%s899] sm:$0x3]
    %1722 = vrot.lane.b32.xlu0 %v1718, 96
    %v1723 = vpop.permute.xlu0 %1722
    %v1724 = vsel %vm278, %v1723, 0
    %1726 = vmatprep.subr.mxu0 0.0
    %1727 = vmatpush1.msra.mxu0 %v1287
    %1728 = vmatprep.subr.mxu0 0.0
    %1729 = vmatpush1.msra.mxu0 %v1288
    %1730 = vmatprep.subr.mxu0 0.0
    %1731 = vmatpush1.msra.mxu0 %v1289
    %1732 = vmatprep.subr.mxu0 0.0
    %1733 = vmatpush1.msra.mxu0 %v1290
    %1734 = vmatprep.subr.mxu0 0.0
    %1735 = vmatpush1.msra.mxu0 0.0
    %1736 = vmatprep.subr.mxu0 0.0
    %1737 = vmatpush1.msra.mxu0 0.0
    %1738 = vmatprep.subr.mxu0 0.0
    %1739 = vmatpush1.msra.mxu0 0.0
    %1740 = vmatprep.subr.mxu0 0.0
    %1741 = vmatpush1.msra.mxu0 0.0
    %1742 = vmatprep.subr.mxu0 0.0
    %1743 = vmatpush1.msra.mxu0 0.0
    %1744 = vmatprep.subr.mxu0 0.0
    %1745 = vmatpush1.msra.mxu0 0.0
    %1746 = vmatprep.subr.mxu0 0.0
    %1747 = vmatpush1.msra.mxu0 0.0
    %1748 = vmatprep.subr.mxu0 0.0
    %1749 = vmatpush1.msra.mxu0 0.0
    %1750 = vmatprep.subr.mxu0 0.0
    %1751 = vmatpush1.msra.mxu0 0.0
    %1752 = vmatprep.subr.mxu0 0.0
    %1753 = vmatpush1.msra.mxu0 0.0
    %1754 = vmatprep.subr.mxu0 0.0
    %1755 = vmatpush1.msra.mxu0 0.0
    %1756 = vmatprep.subr.mxu0 0.0
    %1757 = vmatpush1.msra.mxu0 0.0
    %1758 = vmatprep.subr.mxu0 0.0
    %1759 = vmatpush1.msra.mxu0 0.0
    %1760 = vmatprep.subr.mxu0 0.0
    %1761 = vmatpush1.msra.mxu0 0.0
    %1762 = vmatprep.subr.mxu0 0.0
    %1763 = vmatpush1.msra.mxu0 0.0
    %1764 = vmatprep.subr.mxu0 0.0
    %1765 = vmatpush1.msra.mxu0 0.0
    %1766 = vmatprep.subr.mxu0 0.0
    %1767 = vmatpush1.msra.mxu0 0.0
    %1768 = vmatprep.subr.mxu0 0.0
    %1769 = vmatpush1.msra.mxu0 0.0
    %1770 = vmatprep.subr.mxu0 0.0
    %1771 = vmatpush1.msra.mxu0 0.0
    %1772 = vmatprep.subr.mxu0 0.0
    %1773 = vmatpush1.msra.mxu0 0.0
    %1774 = vmatprep.subr.mxu0 0.0
    %1775 = vmatpush1.msra.mxu0 0.0
    %1776 = vmatprep.subr.mxu0 0.0
    %1777 = vmatpush1.msra.mxu0 0.0
    %1778 = vmatprep.subr.mxu0 0.0
    %1779 = vmatpush1.msra.mxu0 0.0
    %1780 = vmatprep.subr.mxu0 0.0
    %1781 = vmatpush1.msra.mxu0 0.0
    %1782 = vmatprep.subr.mxu0 0.0
    %1783 = vmatpush1.msra.mxu0 0.0
    %1784 = vmatprep.subr.mxu0 0.0
    %1785 = vmatpush1.msra.mxu0 0.0
    %1786 = vmatprep.subr.mxu0 0.0
    %1787 = vmatpush1.msra.mxu0 0.0
    %1788 = vmatprep.subr.mxu0 0.0
    %1789 = vmatpush1.msra.mxu0 0.0
    %1790 = vmatprep.mubr.f32.mxu0 0.0
    %1791 = vmatmul.mubr.f32.gmra.mrb[0].mxu0 %v1724
    %v1792 = vpop.f32.mrb[0].mxu0
    %v1793 = vadd.f32 %v1488, %v1792
    %v1794 = vpop.f32.mrb[0].mxu0
    %1795 = vdwg.mxu0
    %v1796 = vadd.f32 %v1720, %v1793
    %v1797 = vxor.u32 %v1796, 2147483648
    %v1798 = vmul.f32 %v1797, 1.442695
    %v1799 = vpow.pop %v1798
    %v1800 = vadd.f32 %v1799, 1.0
    %v1801 = vrcp.pop %v1800
    %v1802 = vmul.f32 1.0, %v1801
    %1804 = vrot.lane.b32.xlu0 %v1793, 64
    %v1805 = vpop.permute.xlu0 %1804
    %v1807 = vmul.f32 %v1802, %v1805
    %1809 = vrot.lane.b32.xlu0 %v1807, 64
    %v1810 = vpop.permute.xlu0 %1809
    %v1812 = vadd.f32 %v1720, %v1810
    %v1813 = vtanh.pop %v1812
    %v1814 = vsub.f32 1.0, %v1802
    %1816 = vrot.lane.b32.xlu0 %v1813, 96
    %v1817 = vpop.permute.xlu0 %1816
    %v1819 = vmul.f32 %v1814, %v1817
    %v1820 = vmul.f32 %v1802, %v1718
    %v1821 = vadd.f32 %v1819, %v1820
    %1823 = vset.pattern.permute.xlu0 0
    %1824 = vperm.xlu0 %1823, %v1719
    %v1825 = vpop.permute.xlu0 %1824
    %v1827 = vmul.f32 %v1825, %v1821
    %1828 = vst.msk [vmem:[%s1012] sm:$0x3] %vm41, %v1827
    %v1829 = vsub.f32 1.0, %v1719
    %1831 = vset.pattern.permute.xlu0 0
    %1832 = vperm.xlu0 %1831, %v1829
    %v1833 = vpop.permute.xlu0 %1832
    %v1835 = vmul.f32 %v1833, %v1718
    %v1836 = vadd.f32 %v1827, %v1835
    %v1837 = vld [vmem:[%s772] sm:$0x3]
    %v1838 = vld [vmem:[%s774] sm:$0x3]
    %1840 = vrot.lane.b32.xlu0 %v1836, 96
    %v1841 = vpop.permute.xlu0 %1840
    %v1842 = vsel %vm278, %v1841, 0
    %1844 = vmatprep.subr.mxu0 0.0
    %1845 = vmatpush1.msra.mxu0 %v1287
    %1846 = vmatprep.subr.mxu0 0.0
    %1847 = vmatpush1.msra.mxu0 %v1288
    %1848 = vmatprep.subr.mxu0 0.0
    %1849 = vmatpush1.msra.mxu0 %v1289
    %1850 = vmatprep.subr.mxu0 0.0
    %1851 = vmatpush1.msra.mxu0 %v1290
    %1852 = vmatprep.subr.mxu0 0.0
    %1853 = vmatpush1.msra.mxu0 0.0
    %1854 = vmatprep.subr.mxu0 0.0
    %1855 = vmatpush1.msra.mxu0 0.0
    %1856 = vmatprep.subr.mxu0 0.0
    %1857 = vmatpush1.msra.mxu0 0.0
    %1858 = vmatprep.subr.mxu0 0.0
    %1859 = vmatpush1.msra.mxu0 0.0
    %1860 = vmatprep.subr.mxu0 0.0
    %1861 = vmatpush1.msra.mxu0 0.0
    %1862 = vmatprep.subr.mxu0 0.0
    %1863 = vmatpush1.msra.mxu0 0.0
    %1864 = vmatprep.subr.mxu0 0.0
    %1865 = vmatpush1.msra.mxu0 0.0
    %1866 = vmatprep.subr.mxu0 0.0
    %1867 = vmatpush1.msra.mxu0 0.0
    %1868 = vmatprep.subr.mxu0 0.0
    %1869 = vmatpush1.msra.mxu0 0.0
    %1870 = vmatprep.subr.mxu0 0.0
    %1871 = vmatpush1.msra.mxu0 0.0
    %1872 = vmatprep.subr.mxu0 0.0
    %1873 = vmatpush1.msra.mxu0 0.0
    %1874 = vmatprep.subr.mxu0 0.0
    %1875 = vmatpush1.msra.mxu0 0.0
    %1876 = vmatprep.subr.mxu0 0.0
    %1877 = vmatpush1.msra.mxu0 0.0
    %1878 = vmatprep.subr.mxu0 0.0
    %1879 = vmatpush1.msra.mxu0 0.0
    %1880 = vmatprep.subr.mxu0 0.0
    %1881 = vmatpush1.msra.mxu0 0.0
    %1882 = vmatprep.subr.mxu0 0.0
    %1883 = vmatpush1.msra.mxu0 0.0
    %1884 = vmatprep.subr.mxu0 0.0
    %1885 = vmatpush1.msra.mxu0 0.0
    %1886 = vmatprep.subr.mxu0 0.0
    %1887 = vmatpush1.msra.mxu0 0.0
    %1888 = vmatprep.subr.mxu0 0.0
    %1889 = vmatpush1.msra.mxu0 0.0
    %1890 = vmatprep.subr.mxu0 0.0
    %1891 = vmatpush1.msra.mxu0 0.0
    %1892 = vmatprep.subr.mxu0 0.0
    %1893 = vmatpush1.msra.mxu0 0.0
    %1894 = vmatprep.subr.mxu0 0.0
    %1895 = vmatpush1.msra.mxu0 0.0
    %1896 = vmatprep.subr.mxu0 0.0
    %1897 = vmatpush1.msra.mxu0 0.0
    %1898 = vmatprep.subr.mxu0 0.0
    %1899 = vmatpush1.msra.mxu0 0.0
    %1900 = vmatprep.subr.mxu0 0.0
    %1901 = vmatpush1.msra.mxu0 0.0
    %1902 = vmatprep.subr.mxu0 0.0
    %1903 = vmatpush1.msra.mxu0 0.0
    %1904 = vmatprep.subr.mxu0 0.0
    %1905 = vmatpush1.msra.mxu0 0.0
    %1906 = vmatprep.subr.mxu0 0.0
    %1907 = vmatpush1.msra.mxu0 0.0
    %1908 = vmatprep.mubr.f32.mxu0 0.0
    %1909 = vmatmul.mubr.f32.gmra.mrb[0].mxu0 %v1842
    %v1910 = vpop.f32.mrb[0].mxu0
    %v1911 = vadd.f32 %v1488, %v1910
    %v1912 = vpop.f32.mrb[0].mxu0
    %1913 = vdwg.mxu0
    %v1914 = vadd.f32 %v1838, %v1911
    %v1915 = vxor.u32 %v1914, 2147483648
    %v1916 = vmul.f32 %v1915, 1.442695
    %v1917 = vpow.pop %v1916
    %v1918 = vadd.f32 %v1917, 1.0
    %v1919 = vrcp.pop %v1918
    %v1920 = vmul.f32 1.0, %v1919
    %1922 = vrot.lane.b32.xlu0 %v1911, 64
    %v1923 = vpop.permute.xlu0 %1922
    %v1925 = vmul.f32 %v1920, %v1923
    %1927 = vrot.lane.b32.xlu0 %v1925, 64
    %v1928 = vpop.permute.xlu0 %1927
    %v1930 = vadd.f32 %v1838, %v1928
    %v1931 = vtanh.pop %v1930
    %v1932 = vsub.f32 1.0, %v1920
    %1934 = vrot.lane.b32.xlu0 %v1931, 96
    %v1935 = vpop.permute.xlu0 %1934
    %v1937 = vmul.f32 %v1932, %v1935
    %v1938 = vmul.f32 %v1920, %v1836
    %v1939 = vadd.f32 %v1937, %v1938
    %1941 = vset.pattern.permute.xlu0 0
    %1942 = vperm.xlu0 %1941, %v1837
    %v1943 = vpop.permute.xlu0 %1942
    %v1945 = vmul.f32 %v1943, %v1939
    %1946 = vst.msk [vmem:[%s887] sm:$0x3] %vm41, %v1945
    %v1947 = vsub.f32 1.0, %v1837
    %1949 = vset.pattern.permute.xlu0 0
    %1950 = vperm.xlu0 %1949, %v1947
    %v1951 = vpop.permute.xlu0 %1950
    %v1953 = vmul.f32 %v1951, %v1836
    %v1954 = vadd.f32 %v1945, %v1953
    %v1955 = vld [vmem:[%s647] sm:$0x3]
    %v1956 = vld [vmem:[%s649] sm:$0x3]
    %1958 = vrot.lane.b32.xlu0 %v1954, 96
    %v1959 = vpop.permute.xlu0 %1958
    %v1960 = vsel %vm278, %v1959, 0
    %1962 = vmatprep.subr.mxu0 0.0
    %1963 = vmatpush1.msra.mxu0 %v1287
    %1964 = vmatprep.subr.mxu0 0.0
    %1965 = vmatpush1.msra.mxu0 %v1288
    %1966 = vmatprep.subr.mxu0 0.0
    %1967 = vmatpush1.msra.mxu0 %v1289
    %1968 = vmatprep.subr.mxu0 0.0
    %1969 = vmatpush1.msra.mxu0 %v1290
    %1970 = vmatprep.subr.mxu0 0.0
    %1971 = vmatpush1.msra.mxu0 0.0
    %1972 = vmatprep.subr.mxu0 0.0
    %1973 = vmatpush1.msra.mxu0 0.0
    %1974 = vmatprep.subr.mxu0 0.0
    %1975 = vmatpush1.msra.mxu0 0.0
    %1976 = vmatprep.subr.mxu0 0.0
    %1977 = vmatpush1.msra.mxu0 0.0
    %1978 = vmatprep.subr.mxu0 0.0
    %1979 = vmatpush1.msra.mxu0 0.0
    %1980 = vmatprep.subr.mxu0 0.0
    %1981 = vmatpush1.msra.mxu0 0.0
    %1982 = vmatprep.subr.mxu0 0.0
    %1983 = vmatpush1.msra.mxu0 0.0
    %1984 = vmatprep.subr.mxu0 0.0
    %1985 = vmatpush1.msra.mxu0 0.0
    %1986 = vmatprep.subr.mxu0 0.0
    %1987 = vmatpush1.msra.mxu0 0.0
    %1988 = vmatprep.subr.mxu0 0.0
    %1989 = vmatpush1.msra.mxu0 0.0
    %1990 = vmatprep.subr.mxu0 0.0
    %1991 = vmatpush1.msra.mxu0 0.0
    %1992 = vmatprep.subr.mxu0 0.0
    %1993 = vmatpush1.msra.mxu0 0.0
    %1994 = vmatprep.subr.mxu0 0.0
    %1995 = vmatpush1.msra.mxu0 0.0
    %1996 = vmatprep.subr.mxu0 0.0
    %1997 = vmatpush1.msra.mxu0 0.0
    %1998 = vmatprep.subr.mxu0 0.0
    %1999 = vmatpush1.msra.mxu0 0.0
    %2000 = vmatprep.subr.mxu0 0.0
    %2001 = vmatpush1.msra.mxu0 0.0
    %2002 = vmatprep.subr.mxu0 0.0
    %2003 = vmatpush1.msra.mxu0 0.0
    %2004 = vmatprep.subr.mxu0 0.0
    %2005 = vmatpush1.msra.mxu0 0.0
    %2006 = vmatprep.subr.mxu0 0.0
    %2007 = vmatpush1.msra.mxu0 0.0
    %2008 = vmatprep.subr.mxu0 0.0
    %2009 = vmatpush1.msra.mxu0 0.0
    %2010 = vmatprep.subr.mxu0 0.0
    %2011 = vmatpush1.msra.mxu0 0.0
    %2012 = vmatprep.subr.mxu0 0.0
    %2013 = vmatpush1.msra.mxu0 0.0
    %2014 = vmatprep.subr.mxu0 0.0
    %2015 = vmatpush1.msra.mxu0 0.0
    %2016 = vmatprep.subr.mxu0 0.0
    %2017 = vmatpush1.msra.mxu0 0.0
    %2018 = vmatprep.subr.mxu0 0.0
    %2019 = vmatpush1.msra.mxu0 0.0
    %2020 = vmatprep.subr.mxu0 0.0
    %2021 = vmatpush1.msra.mxu0 0.0
    %2022 = vmatprep.subr.mxu0 0.0
    %2023 = vmatpush1.msra.mxu0 0.0
    %2024 = vmatprep.subr.mxu0 0.0
    %2025 = vmatpush1.msra.mxu0 0.0
    %2026 = vmatprep.mubr.f32.mxu0 0.0
    %2027 = vmatmul.mubr.f32.gmra.mrb[0].mxu0 %v1960
    %v2028 = vpop.f32.mrb[0].mxu0
    %v2029 = vadd.f32 %v1488, %v2028
    %v2030 = vpop.f32.mrb[0].mxu0
    %2031 = vdwg.mxu0
    %v2032 = vadd.f32 %v1956, %v2029
    %v2033 = vxor.u32 %v2032, 2147483648
    %v2034 = vmul.f32 %v2033, 1.442695
    %v2035 = vpow.pop %v2034
    %v2036 = vadd.f32 %v2035, 1.0
    %v2037 = vrcp.pop %v2036
    %v2038 = vmul.f32 1.0, %v2037
    %2040 = vrot.lane.b32.xlu0 %v2029, 64
    %v2041 = vpop.permute.xlu0 %2040
    %v2043 = vmul.f32 %v2038, %v2041
    %2045 = vrot.lane.b32.xlu0 %v2043, 64
    %v2046 = vpop.permute.xlu0 %2045
    %v2048 = vadd.f32 %v1956, %v2046
    %v2049 = vtanh.pop %v2048
    %v2050 = vsub.f32 1.0, %v2038
    %2052 = vrot.lane.b32.xlu0 %v2049, 96
    %v2053 = vpop.permute.xlu0 %2052
    %v2055 = vmul.f32 %v2050, %v2053
    %v2056 = vmul.f32 %v2038, %v1954
    %v2057 = vadd.f32 %v2055, %v2056
    %2059 = vset.pattern.permute.xlu0 0
    %2060 = vperm.xlu0 %2059, %v1955
    %v2061 = vpop.permute.xlu0 %2060
    %v2063 = vmul.f32 %v2061, %v2057
    %2064 = vst.msk [vmem:[%s762] sm:$0x3] %vm41, %v2063
    %v2065 = vsub.f32 1.0, %v1955
    %2067 = vset.pattern.permute.xlu0 0
    %2068 = vperm.xlu0 %2067, %v2065
    %v2069 = vpop.permute.xlu0 %2068
    %v2071 = vmul.f32 %v2069, %v1954
    %v2072 = vadd.f32 %v2063, %v2071
    %v2073 = vld [vmem:[%s522] sm:$0x3]
    %v2074 = vld [vmem:[%s524] sm:$0x3]
    %2076 = vrot.lane.b32.xlu0 %v2072, 96
    %v2077 = vpop.permute.xlu0 %2076
    %v2078 = vsel %vm278, %v2077, 0
    %2080 = vmatprep.subr.mxu0 0.0
    %2081 = vmatpush1.msra.mxu0 %v1287
    %2082 = vmatprep.subr.mxu0 0.0
    %2083 = vmatpush1.msra.mxu0 %v1288
    %2084 = vmatprep.subr.mxu0 0.0
    %2085 = vmatpush1.msra.mxu0 %v1289
    %2086 = vmatprep.subr.mxu0 0.0
    %2087 = vmatpush1.msra.mxu0 %v1290
    %2088 = vmatprep.subr.mxu0 0.0
    %2089 = vmatpush1.msra.mxu0 0.0
    %2090 = vmatprep.subr.mxu0 0.0
    %2091 = vmatpush1.msra.mxu0 0.0
    %2092 = vmatprep.subr.mxu0 0.0
    %2093 = vmatpush1.msra.mxu0 0.0
    %2094 = vmatprep.subr.mxu0 0.0
    %2095 = vmatpush1.msra.mxu0 0.0
    %2096 = vmatprep.subr.mxu0 0.0
    %2097 = vmatpush1.msra.mxu0 0.0
    %2098 = vmatprep.subr.mxu0 0.0
    %2099 = vmatpush1.msra.mxu0 0.0
    %2100 = vmatprep.subr.mxu0 0.0
    %2101 = vmatpush1.msra.mxu0 0.0
    %2102 = vmatprep.subr.mxu0 0.0
    %2103 = vmatpush1.msra.mxu0 0.0
    %2104 = vmatprep.subr.mxu0 0.0
    %2105 = vmatpush1.msra.mxu0 0.0
    %2106 = vmatprep.subr.mxu0 0.0
    %2107 = vmatpush1.msra.mxu0 0.0
    %2108 = vmatprep.subr.mxu0 0.0
    %2109 = vmatpush1.msra.mxu0 0.0
    %2110 = vmatprep.subr.mxu0 0.0
    %2111 = vmatpush1.msra.mxu0 0.0
    %2112 = vmatprep.subr.mxu0 0.0
    %2113 = vmatpush1.msra.mxu0 0.0
    %2114 = vmatprep.subr.mxu0 0.0
    %2115 = vmatpush1.msra.mxu0 0.0
    %2116 = vmatprep.subr.mxu0 0.0
    %2117 = vmatpush1.msra.mxu0 0.0
    %2118 = vmatprep.subr.mxu0 0.0
    %2119 = vmatpush1.msra.mxu0 0.0
    %2120 = vmatprep.subr.mxu0 0.0
    %2121 = vmatpush1.msra.mxu0 0.0
    %2122 = vmatprep.subr.mxu0 0.0
    %2123 = vmatpush1.msra.mxu0 0.0
    %2124 = vmatprep.subr.mxu0 0.0
    %2125 = vmatpush1.msra.mxu0 0.0
    %2126 = vmatprep.subr.mxu0 0.0
    %2127 = vmatpush1.msra.mxu0 0.0
    %2128 = vmatprep.subr.mxu0 0.0
    %2129 = vmatpush1.msra.mxu0 0.0
    %2130 = vmatprep.subr.mxu0 0.0
    %2131 = vmatpush1.msra.mxu0 0.0
    %2132 = vmatprep.subr.mxu0 0.0
    %2133 = vmatpush1.msra.mxu0 0.0
    %2134 = vmatprep.subr.mxu0 0.0
    %2135 = vmatpush1.msra.mxu0 0.0
    %2136 = vmatprep.subr.mxu0 0.0
    %2137 = vmatpush1.msra.mxu0 0.0
    %2138 = vmatprep.subr.mxu0 0.0
    %2139 = vmatpush1.msra.mxu0 0.0
    %2140 = vmatprep.subr.mxu0 0.0
    %2141 = vmatpush1.msra.mxu0 0.0
    %2142 = vmatprep.subr.mxu0 0.0
    %2143 = vmatpush1.msra.mxu0 0.0
    %2144 = vmatprep.mubr.f32.mxu0 0.0
    %2145 = vmatmul.mubr.f32.gmra.mrb[0].mxu0 %v2078
    %v2146 = vpop.f32.mrb[0].mxu0
    %v2147 = vadd.f32 %v1488, %v2146
    %v2148 = vpop.f32.mrb[0].mxu0
    %2149 = vdwg.mxu0
    %v2150 = vadd.f32 %v2074, %v2147
    %v2151 = vxor.u32 %v2150, 2147483648
    %v2152 = vmul.f32 %v2151, 1.442695
    %v2153 = vpow.pop %v2152
    %v2154 = vadd.f32 %v2153, 1.0
    %v2155 = vrcp.pop %v2154
    %v2156 = vmul.f32 1.0, %v2155
    %2158 = vrot.lane.b32.xlu0 %v2147, 64
    %v2159 = vpop.permute.xlu0 %2158
    %v2161 = vmul.f32 %v2156, %v2159
    %2163 = vrot.lane.b32.xlu0 %v2161, 64
    %v2164 = vpop.permute.xlu0 %2163
    %v2166 = vadd.f32 %v2074, %v2164
    %v2167 = vtanh.pop %v2166
    %v2168 = vsub.f32 1.0, %v2156
    %2170 = vrot.lane.b32.xlu0 %v2167, 96
    %v2171 = vpop.permute.xlu0 %2170
    %v2173 = vmul.f32 %v2168, %v2171
    %v2174 = vmul.f32 %v2156, %v2072
    %v2175 = vadd.f32 %v2173, %v2174
    %2177 = vset.pattern.permute.xlu0 0
    %2178 = vperm.xlu0 %2177, %v2073
    %v2179 = vpop.permute.xlu0 %2178
    %v2181 = vmul.f32 %v2179, %v2175
    %2182 = vst.msk [vmem:[%s637] sm:$0x3] %vm41, %v2181
    %v2183 = vsub.f32 1.0, %v2073
    %2185 = vset.pattern.permute.xlu0 0
    %2186 = vperm.xlu0 %2185, %v2183
    %v2187 = vpop.permute.xlu0 %2186
    %v2189 = vmul.f32 %v2187, %v2072
    %v2190 = vadd.f32 %v2181, %v2189
    %v2191 = vld [vmem:[%s397] sm:$0x3]
    %v2192 = vld [vmem:[%s399] sm:$0x3]
    %2194 = vrot.lane.b32.xlu0 %v2190, 96
    %v2195 = vpop.permute.xlu0 %2194
    %v2196 = vsel %vm278, %v2195, 0
    %2198 = vmatprep.subr.mxu0 0.0
    %2199 = vmatpush1.msra.mxu0 %v1287
    %2200 = vmatprep.subr.mxu0 0.0
    %2201 = vmatpush1.msra.mxu0 %v1288
    %2202 = vmatprep.subr.mxu0 0.0
    %2203 = vmatpush1.msra.mxu0 %v1289
    %2204 = vmatprep.subr.mxu0 0.0
    %2205 = vmatpush1.msra.mxu0 %v1290
    %2206 = vmatprep.subr.mxu0 0.0
    %2207 = vmatpush1.msra.mxu0 0.0
    %2208 = vmatprep.subr.mxu0 0.0
    %2209 = vmatpush1.msra.mxu0 0.0
    %2210 = vmatprep.subr.mxu0 0.0
    %2211 = vmatpush1.msra.mxu0 0.0
    %2212 = vmatprep.subr.mxu0 0.0
    %2213 = vmatpush1.msra.mxu0 0.0
    %2214 = vmatprep.subr.mxu0 0.0
    %2215 = vmatpush1.msra.mxu0 0.0
    %2216 = vmatprep.subr.mxu0 0.0
    %2217 = vmatpush1.msra.mxu0 0.0
    %2218 = vmatprep.subr.mxu0 0.0
    %2219 = vmatpush1.msra.mxu0 0.0
    %2220 = vmatprep.subr.mxu0 0.0
    %2221 = vmatpush1.msra.mxu0 0.0
    %2222 = vmatprep.subr.mxu0 0.0
    %2223 = vmatpush1.msra.mxu0 0.0
    %2224 = vmatprep.subr.mxu0 0.0
    %2225 = vmatpush1.msra.mxu0 0.0
    %2226 = vmatprep.subr.mxu0 0.0
    %2227 = vmatpush1.msra.mxu0 0.0
    %2228 = vmatprep.subr.mxu0 0.0
    %2229 = vmatpush1.msra.mxu0 0.0
    %2230 = vmatprep.subr.mxu0 0.0
    %2231 = vmatpush1.msra.mxu0 0.0
    %2232 = vmatprep.subr.mxu0 0.0
    %2233 = vmatpush1.msra.mxu0 0.0
    %2234 = vmatprep.subr.mxu0 0.0
    %2235 = vmatpush1.msra.mxu0 0.0
    %2236 = vmatprep.subr.mxu0 0.0
    %2237 = vmatpush1.msra.mxu0 0.0
    %2238 = vmatprep.subr.mxu0 0.0
    %2239 = vmatpush1.msra.mxu0 0.0
    %2240 = vmatprep.subr.mxu0 0.0
    %2241 = vmatpush1.msra.mxu0 0.0
    %2242 = vmatprep.subr.mxu0 0.0
    %2243 = vmatpush1.msra.mxu0 0.0
    %2244 = vmatprep.subr.mxu0 0.0
    %2245 = vmatpush1.msra.mxu0 0.0
    %2246 = vmatprep.subr.mxu0 0.0
    %2247 = vmatpush1.msra.mxu0 0.0
    %2248 = vmatprep.subr.mxu0 0.0
    %2249 = vmatpush1.msra.mxu0 0.0
    %2250 = vmatprep.subr.mxu0 0.0
    %2251 = vmatpush1.msra.mxu0 0.0
    %2252 = vmatprep.subr.mxu0 0.0
    %2253 = vmatpush1.msra.mxu0 0.0
    %2254 = vmatprep.subr.mxu0 0.0
    %2255 = vmatpush1.msra.mxu0 0.0
    %2256 = vmatprep.subr.mxu0 0.0
    %2257 = vmatpush1.msra.mxu0 0.0
    %2258 = vmatprep.subr.mxu0 0.0
    %2259 = vmatpush1.msra.mxu0 0.0
    %2260 = vmatprep.subr.mxu0 0.0
    %2261 = vmatpush1.msra.mxu0 0.0
    %2262 = vmatprep.mubr.f32.mxu0 0.0
    %2263 = vmatmul.mubr.f32.gmra.mrb[0].mxu0 %v2196
    %v2264 = vpop.f32.mrb[0].mxu0
    %v2265 = vadd.f32 %v1488, %v2264
    %v2266 = vpop.f32.mrb[0].mxu0
    %2267 = vdwg.mxu0
    %v2268 = vadd.f32 %v2192, %v2265
    %v2269 = vxor.u32 %v2268, 2147483648
    %v2270 = vmul.f32 %v2269, 1.442695
    %v2271 = vpow.pop %v2270
    %v2272 = vadd.f32 %v2271, 1.0
    %v2273 = vrcp.pop %v2272
    %v2274 = vmul.f32 1.0, %v2273
    %2276 = vrot.lane.b32.xlu0 %v2265, 64
    %v2277 = vpop.permute.xlu0 %2276
    %v2279 = vmul.f32 %v2274, %v2277
    %2281 = vrot.lane.b32.xlu0 %v2279, 64
    %v2282 = vpop.permute.xlu0 %2281
    %v2284 = vadd.f32 %v2192, %v2282
    %v2285 = vtanh.pop %v2284
    %v2286 = vsub.f32 1.0, %v2274
    %2288 = vrot.lane.b32.xlu0 %v2285, 96
    %v2289 = vpop.permute.xlu0 %2288
    %v2291 = vmul.f32 %v2286, %v2289
    %v2292 = vmul.f32 %v2274, %v2190
    %v2293 = vadd.f32 %v2291, %v2292
    %2295 = vset.pattern.permute.xlu0 0
    %2296 = vperm.xlu0 %2295, %v2191
    %v2297 = vpop.permute.xlu0 %2296
    %v2299 = vmul.f32 %v2297, %v2293
    %2300 = vst.msk [vmem:[%s512] sm:$0x3] %vm41, %v2299
    %v2301 = vsub.f32 1.0, %v2191
    %2303 = vset.pattern.permute.xlu0 0
    %2304 = vperm.xlu0 %2303, %v2301
    %v2305 = vpop.permute.xlu0 %2304
    %v2307 = vmul.f32 %v2305, %v2190
    %v2308 = vadd.f32 %v2299, %v2307
    %v2309 = vld [vmem:[%s1] sm:$0x3]
    %v2310 = vld [vmem:[#allocation4] sm:$0x3]
    %2312 = vrot.lane.b32.xlu0 %v2308, 96
    %v2313 = vpop.permute.xlu0 %2312
    %v2314 = vsel %vm278, %v2313, 0
    %2316 = vmatprep.subr.mxu0 0.0
    %2317 = vmatpush1.msra.mxu0 %v1287
    %2318 = vmatprep.subr.mxu0 0.0
    %2319 = vmatpush1.msra.mxu0 %v1288
    %2320 = vmatprep.subr.mxu0 0.0
    %2321 = vmatpush1.msra.mxu0 %v1289
    %2322 = vmatprep.subr.mxu0 0.0
    %2323 = vmatpush1.msra.mxu0 %v1290
    %2324 = vmatprep.subr.mxu0 0.0
    %2325 = vmatpush1.msra.mxu0 0.0
    %2326 = vmatprep.subr.mxu0 0.0
    %2327 = vmatpush1.msra.mxu0 0.0
    %2328 = vmatprep.subr.mxu0 0.0
    %2329 = vmatpush1.msra.mxu0 0.0
    %2330 = vmatprep.subr.mxu0 0.0
    %2331 = vmatpush1.msra.mxu0 0.0
    %2332 = vmatprep.subr.mxu0 0.0
    %2333 = vmatpush1.msra.mxu0 0.0
    %2334 = vmatprep.subr.mxu0 0.0
    %2335 = vmatpush1.msra.mxu0 0.0
    %2336 = vmatprep.subr.mxu0 0.0
    %2337 = vmatpush1.msra.mxu0 0.0
    %2338 = vmatprep.subr.mxu0 0.0
    %2339 = vmatpush1.msra.mxu0 0.0
    %2340 = vmatprep.subr.mxu0 0.0
    %2341 = vmatpush1.msra.mxu0 0.0
    %2342 = vmatprep.subr.mxu0 0.0
    %2343 = vmatpush1.msra.mxu0 0.0
    %2344 = vmatprep.subr.mxu0 0.0
    %2345 = vmatpush1.msra.mxu0 0.0
    %2346 = vmatprep.subr.mxu0 0.0
    %2347 = vmatpush1.msra.mxu0 0.0
    %2348 = vmatprep.subr.mxu0 0.0
    %2349 = vmatpush1.msra.mxu0 0.0
    %2350 = vmatprep.subr.mxu0 0.0
    %2351 = vmatpush1.msra.mxu0 0.0
    %2352 = vmatprep.subr.mxu0 0.0
    %2353 = vmatpush1.msra.mxu0 0.0
    %2354 = vmatprep.subr.mxu0 0.0
    %2355 = vmatpush1.msra.mxu0 0.0
    %2356 = vmatprep.subr.mxu0 0.0
    %2357 = vmatpush1.msra.mxu0 0.0
    %2358 = vmatprep.subr.mxu0 0.0
    %2359 = vmatpush1.msra.mxu0 0.0
    %2360 = vmatprep.subr.mxu0 0.0
    %2361 = vmatpush1.msra.mxu0 0.0
    %2362 = vmatprep.subr.mxu0 0.0
    %2363 = vmatpush1.msra.mxu0 0.0
    %2364 = vmatprep.subr.mxu0 0.0
    %2365 = vmatpush1.msra.mxu0 0.0
    %2366 = vmatprep.subr.mxu0 0.0
    %2367 = vmatpush1.msra.mxu0 0.0
    %2368 = vmatprep.subr.mxu0 0.0
    %2369 = vmatpush1.msra.mxu0 0.0
    %2370 = vmatprep.subr.mxu0 0.0
    %2371 = vmatpush1.msra.mxu0 0.0
    %2372 = vmatprep.subr.mxu0 0.0
    %2373 = vmatpush1.msra.mxu0 0.0
    %2374 = vmatprep.subr.mxu0 0.0
    %2375 = vmatpush1.msra.mxu0 0.0
    %2376 = vmatprep.subr.mxu0 0.0
    %2377 = vmatpush1.msra.mxu0 0.0
    %2378 = vmatprep.subr.mxu0 0.0
    %2379 = vmatpush1.msra.mxu0 0.0
    %2380 = vmatprep.mubr.f32.mxu0 0.0
    %2381 = vmatmul.mubr.f32.gmra.mrb[0].mxu0 %v2314
    %v2382 = vpop.f32.mrb[0].mxu0
    %v2383 = vadd.f32 %v1488, %v2382
    %v2384 = vpop.f32.mrb[0].mxu0
    %2385 = vdwg.mxu0
    %v2386 = vadd.f32 %v2310, %v2383
    %v2387 = vxor.u32 %v2386, 2147483648
    %v2388 = vmul.f32 %v2387, 1.442695
    %v2389 = vpow.pop %v2388
    %v2390 = vadd.f32 %v2389, 1.0
    %v2391 = vrcp.pop %v2390
    %v2392 = vmul.f32 1.0, %v2391
    %2394 = vrot.lane.b32.xlu0 %v2383, 64
    %v2395 = vpop.permute.xlu0 %2394
    %v2397 = vmul.f32 %v2392, %v2395
    %2399 = vrot.lane.b32.xlu0 %v2397, 64
    %v2400 = vpop.permute.xlu0 %2399
    %v2402 = vadd.f32 %v2310, %v2400
    %v2403 = vtanh.pop %v2402
    %v2404 = vsub.f32 1.0, %v2392
    %2406 = vrot.lane.b32.xlu0 %v2403, 96
    %v2407 = vpop.permute.xlu0 %2406
    %v2409 = vmul.f32 %v2404, %v2407
    %v2410 = vmul.f32 %v2392, %v2308
    %v2411 = vadd.f32 %v2409, %v2410
    %2413 = vset.pattern.permute.xlu0 0
    %2414 = vperm.xlu0 %2413, %v2309
    %v2415 = vpop.permute.xlu0 %2414
    %v2417 = vmul.f32 %v2415, %v2411
    %2418 = vst.msk [vmem:[#allocation3] sm:$0x3] %vm41, %v2417
    %v2419 = vsub.f32 1.0, %v2309
    %2421 = vset.pattern.permute.xlu0 0
    %2422 = vperm.xlu0 %2421, %v2419
    %v2423 = vpop.permute.xlu0 %2422
    %v2425 = vmul.f32 %v2423, %v2308
    %v2426 = vadd.f32 %v2417, %v2425
    %2428 = vrot.lane.b32.xlu0 %v2426, 96
    %v2429 = vpop.permute.xlu0 %2428
    %s2431 = scalar_lea.vmem [#allocation9], 2
    %2432 = vst.msk [vmem:[%s2431] sm:$0x3] %vm58, %v2429
    %v2433 = vld [vmem:[#allocation3] sm:$0x3]
    %v2434 = vld [vmem:[#allocation3 + $0x2] sm:$0x3]
    %v2435 = vld [vmem:[#allocation3 + $0x4] sm:$0x3]
    %v2436 = vld [vmem:[#allocation3 + $0x6] sm:$0x3]
    %v2437 = vld [vmem:[#allocation3 + $0x8] sm:$0x3]
    %v2438 = vld [vmem:[#allocation3 + $0xa] sm:$0x3]
    %v2439 = vld [vmem:[#allocation3 + $0xc] sm:$0x3]
    %v2440 = vld [vmem:[#allocation3 + $0xe] sm:$0x3]
    %vm2441 = vcmask 517120
    %2442 = vst.msk [vmem:[#allocation2] sm:$0x3] %vm2441, %v2433
    %2443 = vst.msk [vmem:[#allocation2 + $0x2] sm:$0x3] %vm2441, %v2434
    %2444 = vst.msk [vmem:[#allocation2 + $0x4] sm:$0x3] %vm2441, %v2435
    %2445 = vst.msk [vmem:[#allocation2 + $0x6] sm:$0x3] %vm2441, %v2436
    %2446 = vst.msk [vmem:[#allocation2 + $0x8] sm:$0x3] %vm2441, %v2437
    %2447 = vst.msk [vmem:[#allocation2 + $0xa] sm:$0x3] %vm2441, %v2438
    %2448 = vst.msk [vmem:[#allocation2 + $0xc] sm:$0x3] %vm2441, %v2439
    %2449 = vst.msk [vmem:[#allocation2 + $0xe] sm:$0x3] %vm2441, %v2440
    %s2450 = scalar_lea.vmem [#allocation5], 128
    %v2451 = vld [vmem:[%s2450] sm:$0xff]
    %v2452 = vld [vmem:[%s2450 + $0x8] sm:$0xff]
    %v2453 = vld [vmem:[%s2450 + $0x10] sm:$0xff]
    %v2454 = vld [vmem:[%s2450 + $0x18] sm:$0xff]
    %v2455 = vld [vmem:[%s2450 + $0x20] sm:$0xff]
    %v2456 = vld [vmem:[%s2450 + $0x28] sm:$0xff]
    %v2457 = vld [vmem:[%s2450 + $0x30] sm:$0xff]
    %v2458 = vld [vmem:[%s2450 + $0x38] sm:$0xff]
    %s2459 = scalar_lea.vmem %s3, 64
    %v2460 = vld [vmem:[%s2459] sm:$0xff]
    %v2461 = vld [vmem:[%s2459 + $0x8] sm:$0xff]
    %v2462 = vld [vmem:[%s2459 + $0x10] sm:$0xff]
    %v2463 = vld [vmem:[%s2459 + $0x18] sm:$0xff]
    %s2464 = scalar_lea.vmem %s4, 2
    %v2465 = vld [vmem:[%s2464] sm:$0x1]
    %s2466 = scalar_lea.vmem %s5, 2
    %v2467 = vld [vmem:[%s2466] sm:$0x1]
    %v2468 = vld [vmem:[#allocation2] sm:$0x3]
    %v2469 = vld [vmem:[#allocation2 + $0x2] sm:$0x3]
    %v2470 = vld [vmem:[#allocation2 + $0x4] sm:$0x3]
    %v2471 = vld [vmem:[#allocation2 + $0x6] sm:$0x3]
    %v2472 = vld [vmem:[#allocation2 + $0x8] sm:$0x3]
    %v2473 = vld [vmem:[#allocation2 + $0xa] sm:$0x3]
    %v2474 = vld [vmem:[#allocation2 + $0xc] sm:$0x3]
    %v2475 = vld [vmem:[#allocation2 + $0xe] sm:$0x3]
    %v2477 = vlaneseq
    %v2478 = vshrl.u32 %v2477, 7
    %v2479 = vsub.s32 0, %v2478
    %v2480 = vrot.slane %v2465, %v2479
    %v2490 = vcombine.low %v2468, %v2469
    %v2491 = vcombine.low %v2470, %v2471
    %v2493 = vunpack.c.l.s4 1983009808
    %v2494 = vunpack.c.0.s8 %v2493
    %v2495 = vlaneseq
    %v2496 = vshrl.u32 %v2495, 7
    %v2497 = vsub.s32 %v2494, %v2496
    %v2498 = vrot.slane %v2490, %v2497
    %v2500 = vunpack.c.l.s4 1983009808
    %v2501 = vunpack.c.0.s8 %v2500
    %v2502 = vlaneseq
    %v2503 = vshrl.u32 %v2502, 7
    %v2504 = vsub.s32 %v2501, %v2503
    %v2505 = vrot.slane %v2491, %v2504
    %v2506 = vcombine.low %v2498, %v2505
    %v2507 = vcombine.low %v2472, %v2473
    %v2508 = vcombine.low %v2474, %v2475
    %v2510 = vunpack.c.l.s4 1983009808
    %v2511 = vunpack.c.0.s8 %v2510
    %v2512 = vlaneseq
    %v2513 = vshrl.u32 %v2512, 7
    %v2514 = vsub.s32 %v2511, %v2513
    %v2515 = vrot.slane %v2507, %v2514
    %v2517 = vunpack.c.l.s4 1983009808
    %v2518 = vunpack.c.0.s8 %v2517
    %v2519 = vlaneseq
    %v2520 = vshrl.u32 %v2519, 7
    %v2521 = vsub.s32 %v2518, %v2520
    %v2522 = vrot.slane %v2508, %v2521
    %v2523 = vcombine.low %v2515, %v2522
    %v2524 = vsel %vm137, %v2506, 0
    %v2526 = vsel %vm137, %v2523, 0
    %2528 = vmatprep.subr.mxu0 0.0
    %2529 = vmatpush1.msra.mxu0 %v2451
    %2530 = vmatprep.subr.mxu0 0.0
    %2531 = vmatpush1.msra.mxu0 %v2452
    %2532 = vmatprep.subr.mxu0 0.0
    %2533 = vmatpush1.msra.mxu0 %v2453
    %2534 = vmatprep.subr.mxu0 0.0
    %2535 = vmatpush1.msra.mxu0 %v2454
    %2536 = vmatprep.subr.mxu0 0.0
    %2537 = vmatpush1.msra.mxu0 %v2455
    %2538 = vmatprep.subr.mxu0 0.0
    %2539 = vmatpush1.msra.mxu0 %v2456
    %2540 = vmatprep.subr.mxu0 0.0
    %2541 = vmatpush1.msra.mxu0 %v2457
    %2542 = vmatprep.subr.mxu0 0.0
    %2543 = vmatpush1.msra.mxu0 %v2458
    %2544 = vmatprep.subr.mxu0 0.0
    %2545 = vmatpush1.msra.mxu0 0.0
    %2546 = vmatprep.subr.mxu0 0.0
    %2547 = vmatpush1.msra.mxu0 0.0
    %2548 = vmatprep.subr.mxu0 0.0
    %2549 = vmatpush1.msra.mxu0 0.0
    %2550 = vmatprep.subr.mxu0 0.0
    %2551 = vmatpush1.msra.mxu0 0.0
    %2552 = vmatprep.subr.mxu0 0.0
    %2553 = vmatpush1.msra.mxu0 0.0
    %2554 = vmatprep.subr.mxu0 0.0
    %2555 = vmatpush1.msra.mxu0 0.0
    %2556 = vmatprep.subr.mxu0 0.0
    %2557 = vmatpush1.msra.mxu0 0.0
    %2558 = vmatprep.subr.mxu0 0.0
    %2559 = vmatpush1.msra.mxu0 0.0
    %2560 = vmatprep.subr.mxu0 0.0
    %2561 = vmatpush1.msra.mxu0 0.0
    %2562 = vmatprep.subr.mxu0 0.0
    %2563 = vmatpush1.msra.mxu0 0.0
    %2564 = vmatprep.subr.mxu0 0.0
    %2565 = vmatpush1.msra.mxu0 0.0
    %2566 = vmatprep.subr.mxu0 0.0
    %2567 = vmatpush1.msra.mxu0 0.0
    %2568 = vmatprep.subr.mxu0 0.0
    %2569 = vmatpush1.msra.mxu0 0.0
    %2570 = vmatprep.subr.mxu0 0.0
    %2571 = vmatpush1.msra.mxu0 0.0
    %2572 = vmatprep.subr.mxu0 0.0
    %2573 = vmatpush1.msra.mxu0 0.0
    %2574 = vmatprep.subr.mxu0 0.0
    %2575 = vmatpush1.msra.mxu0 0.0
    %2576 = vmatprep.subr.mxu0 0.0
    %2577 = vmatpush1.msra.mxu0 0.0
    %2578 = vmatprep.subr.mxu0 0.0
    %2579 = vmatpush1.msra.mxu0 0.0
    %2580 = vmatprep.subr.mxu0 0.0
    %2581 = vmatpush1.msra.mxu0 0.0
    %2582 = vmatprep.subr.mxu0 0.0
    %2583 = vmatpush1.msra.mxu0 0.0
    %2584 = vmatprep.subr.mxu0 0.0
    %2585 = vmatpush1.msra.mxu0 0.0
    %2586 = vmatprep.subr.mxu0 0.0
    %2587 = vmatpush1.msra.mxu0 0.0
    %2588 = vmatprep.subr.mxu0 0.0
    %2589 = vmatpush1.msra.mxu0 0.0
    %2590 = vmatprep.subr.mxu0 0.0
    %2591 = vmatpush1.msra.mxu0 0.0
    %2592 = vmatprep.mubr.f32.mxu0 0.0
    %2593 = vmatmul.mubr.f32.gmra.mrb[0].mxu0 %v2524
    %v2594 = vpop.f32.mrb[0].mxu0
    %v2595 = vadd.f32 %v2480, %v2594
    %v2596 = vpop.f32.mrb[0].mxu0
    %2597 = vmatprep.mubr.f32.mxu0 0.0
    %2598 = vmatmul.mubr.f32.gmra.mrb[0].mxu0 %v2526
    %v2599 = vpop.f32.mrb[0].mxu0
    %v2600 = vadd.f32 %v2480, %v2599
    %v2601 = vpop.f32.mrb[0].mxu0
    %2602 = vdwg.mxu0
    %v2605 = vcombine.high %v2595, %v2595
    %v2607 = vunpack.c.l.s4 1983009808
    %v2608 = vunpack.c.0.s8 %v2607
    %v2609 = vlaneseq
    %v2610 = vshrl.u32 %v2609, 7
    %v2611 = vsub.s32 %v2608, %v2610
    %v2612 = vrot.slane %v2595, %v2611
    %v2614 = vunpack.c.l.s4 1983009808
    %v2615 = vunpack.c.0.s8 %v2614
    %v2616 = vlaneseq
    %v2617 = vshrl.u32 %v2616, 7
    %v2618 = vsub.s32 %v2615, %v2617
    %v2619 = vrot.slane %v2605, %v2618
    %v2620 = vcombine.high %v2612, %v2612
    %v2621 = vcombine.high %v2619, %v2619
    %v2622 = vcombine.high %v2600, %v2600
    %v2624 = vunpack.c.l.s4 1983009808
    %v2625 = vunpack.c.0.s8 %v2624
    %v2626 = vlaneseq
    %v2627 = vshrl.u32 %v2626, 7
    %v2628 = vsub.s32 %v2625, %v2627
    %v2629 = vrot.slane %v2600, %v2628
    %v2631 = vunpack.c.l.s4 1983009808
    %v2632 = vunpack.c.0.s8 %v2631
    %v2633 = vlaneseq
    %v2634 = vshrl.u32 %v2633, 7
    %v2635 = vsub.s32 %v2632, %v2634
    %v2636 = vrot.slane %v2622, %v2635
    %v2637 = vcombine.high %v2629, %v2629
    %v2638 = vcombine.high %v2636, %v2636
    %2647 = vst.msk [vmem:[#allocation4] sm:$0x3] %vm261, %v2612
    %2648 = vst.msk [vmem:[#allocation4 + $0x2] sm:$0x3] %vm261, %v2620
    %2649 = vst.msk [vmem:[#allocation4 + $0x4] sm:$0x3] %vm261, %v2619
    %2650 = vst.msk [vmem:[#allocation4 + $0x6] sm:$0x3] %vm261, %v2621
    %2651 = vst.msk [vmem:[#allocation4 + $0x8] sm:$0x3] %vm261, %v2629
    %2652 = vst.msk [vmem:[#allocation4 + $0xa] sm:$0x3] %vm261, %v2637
    %2653 = vst.msk [vmem:[#allocation4 + $0xc] sm:$0x3] %vm261, %v2636
    %2654 = vst.msk [vmem:[#allocation4 + $0xe] sm:$0x3] %vm261, %v2638
    %v2655 = vld [vmem:[%s1] sm:$0x3]
    %v2656 = vld [vmem:[#allocation4] sm:$0x3]
    %v2658 = vlaneseq
    %v2659 = vshrl.u32 %v2658, 7
    %v2660 = vsub.s32 0, %v2659
    %v2661 = vrot.slane %v2467, %v2660
    %2663 = vmatprep.subr.mxu0 0.0
    %2664 = vmatpush1.msra.mxu0 %v2460
    %2665 = vmatprep.subr.mxu0 0.0
    %2666 = vmatpush1.msra.mxu0 %v2461
    %2667 = vmatprep.subr.mxu0 0.0
    %2668 = vmatpush1.msra.mxu0 %v2462
    %2669 = vmatprep.subr.mxu0 0.0
    %2670 = vmatpush1.msra.mxu0 %v2463
    %2671 = vmatprep.subr.mxu0 0.0
    %2672 = vmatpush1.msra.mxu0 0.0
    %2673 = vmatprep.subr.mxu0 0.0
    %2674 = vmatpush1.msra.mxu0 0.0
    %2675 = vmatprep.subr.mxu0 0.0
    %2676 = vmatpush1.msra.mxu0 0.0
    %2677 = vmatprep.subr.mxu0 0.0
    %2678 = vmatpush1.msra.mxu0 0.0
    %2679 = vmatprep.subr.mxu0 0.0
    %2680 = vmatpush1.msra.mxu0 0.0
    %2681 = vmatprep.subr.mxu0 0.0
    %2682 = vmatpush1.msra.mxu0 0.0
    %2683 = vmatprep.subr.mxu0 0.0
    %2684 = vmatpush1.msra.mxu0 0.0
    %2685 = vmatprep.subr.mxu0 0.0
    %2686 = vmatpush1.msra.mxu0 0.0
    %2687 = vmatprep.subr.mxu0 0.0
    %2688 = vmatpush1.msra.mxu0 0.0
    %2689 = vmatprep.subr.mxu0 0.0
    %2690 = vmatpush1.msra.mxu0 0.0
    %2691 = vmatprep.subr.mxu0 0.0
    %2692 = vmatpush1.msra.mxu0 0.0
    %2693 = vmatprep.subr.mxu0 0.0
    %2694 = vmatpush1.msra.mxu0 0.0
    %2695 = vmatprep.subr.mxu0 0.0
    %2696 = vmatpush1.msra.mxu0 0.0
    %2697 = vmatprep.subr.mxu0 0.0
    %2698 = vmatpush1.msra.mxu0 0.0
    %2699 = vmatprep.subr.mxu0 0.0
    %2700 = vmatpush1.msra.mxu0 0.0
    %2701 = vmatprep.subr.mxu0 0.0
    %2702 = vmatpush1.msra.mxu0 0.0
    %2703 = vmatprep.subr.mxu0 0.0
    %2704 = vmatpush1.msra.mxu0 0.0
    %2705 = vmatprep.subr.mxu0 0.0
    %2706 = vmatpush1.msra.mxu0 0.0
    %2707 = vmatprep.subr.mxu0 0.0
    %2708 = vmatpush1.msra.mxu0 0.0
    %2709 = vmatprep.subr.mxu0 0.0
    %2710 = vmatpush1.msra.mxu0 0.0
    %2711 = vmatprep.subr.mxu0 0.0
    %2712 = vmatpush1.msra.mxu0 0.0
    %2713 = vmatprep.subr.mxu0 0.0
    %2714 = vmatpush1.msra.mxu0 0.0
    %2715 = vmatprep.subr.mxu0 0.0
    %2716 = vmatpush1.msra.mxu0 0.0
    %2717 = vmatprep.subr.mxu0 0.0
    %2718 = vmatpush1.msra.mxu0 0.0
    %2719 = vmatprep.subr.mxu0 0.0
    %2720 = vmatpush1.msra.mxu0 0.0
    %2721 = vmatprep.subr.mxu0 0.0
    %2722 = vmatpush1.msra.mxu0 0.0
    %2723 = vmatprep.subr.mxu0 0.0
    %2724 = vmatpush1.msra.mxu0 0.0
    %2725 = vmatprep.subr.mxu0 0.0
    %2726 = vmatpush1.msra.mxu0 0.0
    %2727 = vmatprep.mubr.f32.mxu0 0.0
    %2728 = vmatmul.mubr.f32.gmra.mrb[0].mxu0 %v280
    %v2729 = vpop.f32.mrb[0].mxu0
    %v2730 = vadd.f32 %v2661, %v2729
    %v2731 = vpop.f32.mrb[0].mxu0
    %2732 = vdwg.mxu0
    %v2733 = vadd.f32 %v2656, %v2730
    %v2734 = vxor.u32 %v2733, 2147483648
    %v2735 = vmul.f32 %v2734, 1.442695
    %v2736 = vpow.pop %v2735
    %v2737 = vadd.f32 %v2736, 1.0
    %v2738 = vrcp.pop %v2737
    %v2739 = vmul.f32 1.0, %v2738
    %2741 = vrot.lane.b32.xlu0 %v2730, 64
    %v2742 = vpop.permute.xlu0 %2741
    %v2744 = vmul.f32 %v2739, %v2742
    %2746 = vrot.lane.b32.xlu0 %v2744, 64
    %v2747 = vpop.permute.xlu0 %2746
    %v2749 = vadd.f32 %v2656, %v2747
    %v2750 = vtanh.pop %v2749
    %v2751 = vsub.f32 1.0, %v2739
    %2753 = vrot.lane.b32.xlu0 %v2750, 96
    %v2754 = vpop.permute.xlu0 %2753
    %v2756 = vmul.f32 %v2751, %v2754
    %v2757 = vmul.f32 %v2739, 0.0
    %v2758 = vadd.f32 %v2756, %v2757
    %2760 = vset.pattern.permute.xlu0 0
    %2761 = vperm.xlu0 %2760, %v2655
    %v2762 = vpop.permute.xlu0 %2761
    %v2764 = vmul.f32 %v2762, %v2758
    %2766 = vrot.lane.b32.xlu0 %v2764, 96
    %v2767 = vpop.permute.xlu0 %2766
    %2769 = vst.msk [vmem:[#allocation3] sm:$0x3] %vm58, %v2767
    %v2770 = vsub.f32 1.0, %v2655
    %2772 = vset.pattern.permute.xlu0 0
    %2773 = vperm.xlu0 %2772, %v2770
    %v2774 = vpop.permute.xlu0 %2773
    %v2776 = vmul.f32 %v2774, 0.0
    %v2777 = vadd.f32 %v2764, %v2776
    %v2778 = vld [vmem:[%s397] sm:$0x3]
    %v2779 = vld [vmem:[%s399] sm:$0x3]
    %2781 = vrot.lane.b32.xlu0 %v2777, 96
    %v2782 = vpop.permute.xlu0 %2781
    %v2783 = vsel %vm278, %v2782, 0
    %2785 = vmatprep.subr.mxu0 0.0
    %2786 = vmatpush1.msra.mxu0 %v2460
    %2787 = vmatprep.subr.mxu0 0.0
    %2788 = vmatpush1.msra.mxu0 %v2461
    %2789 = vmatprep.subr.mxu0 0.0
    %2790 = vmatpush1.msra.mxu0 %v2462
    %2791 = vmatprep.subr.mxu0 0.0
    %2792 = vmatpush1.msra.mxu0 %v2463
    %2793 = vmatprep.subr.mxu0 0.0
    %2794 = vmatpush1.msra.mxu0 0.0
    %2795 = vmatprep.subr.mxu0 0.0
    %2796 = vmatpush1.msra.mxu0 0.0
    %2797 = vmatprep.subr.mxu0 0.0
    %2798 = vmatpush1.msra.mxu0 0.0
    %2799 = vmatprep.subr.mxu0 0.0
    %2800 = vmatpush1.msra.mxu0 0.0
    %2801 = vmatprep.subr.mxu0 0.0
    %2802 = vmatpush1.msra.mxu0 0.0
    %2803 = vmatprep.subr.mxu0 0.0
    %2804 = vmatpush1.msra.mxu0 0.0
    %2805 = vmatprep.subr.mxu0 0.0
    %2806 = vmatpush1.msra.mxu0 0.0
    %2807 = vmatprep.subr.mxu0 0.0
    %2808 = vmatpush1.msra.mxu0 0.0
    %2809 = vmatprep.subr.mxu0 0.0
    %2810 = vmatpush1.msra.mxu0 0.0
    %2811 = vmatprep.subr.mxu0 0.0
    %2812 = vmatpush1.msra.mxu0 0.0
    %2813 = vmatprep.subr.mxu0 0.0
    %2814 = vmatpush1.msra.mxu0 0.0
    %2815 = vmatprep.subr.mxu0 0.0
    %2816 = vmatpush1.msra.mxu0 0.0
    %2817 = vmatprep.subr.mxu0 0.0
    %2818 = vmatpush1.msra.mxu0 0.0
    %2819 = vmatprep.subr.mxu0 0.0
    %2820 = vmatpush1.msra.mxu0 0.0
    %2821 = vmatprep.subr.mxu0 0.0
    %2822 = vmatpush1.msra.mxu0 0.0
    %2823 = vmatprep.subr.mxu0 0.0
    %2824 = vmatpush1.msra.mxu0 0.0
    %2825 = vmatprep.subr.mxu0 0.0
    %2826 = vmatpush1.msra.mxu0 0.0
    %2827 = vmatprep.subr.mxu0 0.0
    %2828 = vmatpush1.msra.mxu0 0.0
    %2829 = vmatprep.subr.mxu0 0.0
    %2830 = vmatpush1.msra.mxu0 0.0
    %2831 = vmatprep.subr.mxu0 0.0
    %2832 = vmatpush1.msra.mxu0 0.0
    %2833 = vmatprep.subr.mxu0 0.0
    %2834 = vmatpush1.msra.mxu0 0.0
    %2835 = vmatprep.subr.mxu0 0.0
    %2836 = vmatpush1.msra.mxu0 0.0
    %2837 = vmatprep.subr.mxu0 0.0
    %2838 = vmatpush1.msra.mxu0 0.0
    %2839 = vmatprep.subr.mxu0 0.0
    %2840 = vmatpush1.msra.mxu0 0.0
    %2841 = vmatprep.subr.mxu0 0.0
    %2842 = vmatpush1.msra.mxu0 0.0
    %2843 = vmatprep.subr.mxu0 0.0
    %2844 = vmatpush1.msra.mxu0 0.0
    %2845 = vmatprep.subr.mxu0 0.0
    %2846 = vmatpush1.msra.mxu0 0.0
    %2847 = vmatprep.subr.mxu0 0.0
    %2848 = vmatpush1.msra.mxu0 0.0
    %2849 = vmatprep.mubr.f32.mxu0 0.0
    %2850 = vmatmul.mubr.f32.gmra.mrb[0].mxu0 %v2783
    %v2851 = vpop.f32.mrb[0].mxu0
    %v2852 = vadd.f32 %v2661, %v2851
    %v2853 = vpop.f32.mrb[0].mxu0
    %2854 = vdwg.mxu0
    %v2855 = vadd.f32 %v2779, %v2852
    %v2856 = vxor.u32 %v2855, 2147483648
    %v2857 = vmul.f32 %v2856, 1.442695
    %v2858 = vpow.pop %v2857
    %v2859 = vadd.f32 %v2858, 1.0
    %v2860 = vrcp.pop %v2859
    %v2861 = vmul.f32 1.0, %v2860
    %2863 = vrot.lane.b32.xlu0 %v2852, 64
    %v2864 = vpop.permute.xlu0 %2863
    %v2866 = vmul.f32 %v2861, %v2864
    %2868 = vrot.lane.b32.xlu0 %v2866, 64
    %v2869 = vpop.permute.xlu0 %2868
    %v2871 = vadd.f32 %v2779, %v2869
    %v2872 = vtanh.pop %v2871
    %v2873 = vsub.f32 1.0, %v2861
    %2875 = vrot.lane.b32.xlu0 %v2872, 96
    %v2876 = vpop.permute.xlu0 %2875
    %v2878 = vmul.f32 %v2873, %v2876
    %v2879 = vmul.f32 %v2861, %v2777
    %v2880 = vadd.f32 %v2878, %v2879
    %2882 = vset.pattern.permute.xlu0 0
    %2883 = vperm.xlu0 %2882, %v2778
    %v2884 = vpop.permute.xlu0 %2883
    %v2886 = vmul.f32 %v2884, %v2880
    %2888 = vrot.lane.b32.xlu0 %v2886, 96
    %v2889 = vpop.permute.xlu0 %2888
    %2891 = vst.msk [vmem:[%s512] sm:$0x3] %vm58, %v2889
    %v2892 = vsub.f32 1.0, %v2778
    %2894 = vset.pattern.permute.xlu0 0
    %2895 = vperm.xlu0 %2894, %v2892
    %v2896 = vpop.permute.xlu0 %2895
    %v2898 = vmul.f32 %v2896, %v2777
    %v2899 = vadd.f32 %v2886, %v2898
    %v2900 = vld [vmem:[%s522] sm:$0x3]
    %v2901 = vld [vmem:[%s524] sm:$0x3]
    %2903 = vrot.lane.b32.xlu0 %v2899, 96
    %v2904 = vpop.permute.xlu0 %2903
    %v2905 = vsel %vm278, %v2904, 0
    %2907 = vmatprep.subr.mxu0 0.0
    %2908 = vmatpush1.msra.mxu0 %v2460
    %2909 = vmatprep.subr.mxu0 0.0
    %2910 = vmatpush1.msra.mxu0 %v2461
    %2911 = vmatprep.subr.mxu0 0.0
    %2912 = vmatpush1.msra.mxu0 %v2462
    %2913 = vmatprep.subr.mxu0 0.0
    %2914 = vmatpush1.msra.mxu0 %v2463
    %2915 = vmatprep.subr.mxu0 0.0
    %2916 = vmatpush1.msra.mxu0 0.0
    %2917 = vmatprep.subr.mxu0 0.0
    %2918 = vmatpush1.msra.mxu0 0.0
    %2919 = vmatprep.subr.mxu0 0.0
    %2920 = vmatpush1.msra.mxu0 0.0
    %2921 = vmatprep.subr.mxu0 0.0
    %2922 = vmatpush1.msra.mxu0 0.0
    %2923 = vmatprep.subr.mxu0 0.0
    %2924 = vmatpush1.msra.mxu0 0.0
    %2925 = vmatprep.subr.mxu0 0.0
    %2926 = vmatpush1.msra.mxu0 0.0
    %2927 = vmatprep.subr.mxu0 0.0
    %2928 = vmatpush1.msra.mxu0 0.0
    %2929 = vmatprep.subr.mxu0 0.0
    %2930 = vmatpush1.msra.mxu0 0.0
    %2931 = vmatprep.subr.mxu0 0.0
    %2932 = vmatpush1.msra.mxu0 0.0
    %2933 = vmatprep.subr.mxu0 0.0
    %2934 = vmatpush1.msra.mxu0 0.0
    %2935 = vmatprep.subr.mxu0 0.0
    %2936 = vmatpush1.msra.mxu0 0.0
    %2937 = vmatprep.subr.mxu0 0.0
    %2938 = vmatpush1.msra.mxu0 0.0
    %2939 = vmatprep.subr.mxu0 0.0
    %2940 = vmatpush1.msra.mxu0 0.0
    %2941 = vmatprep.subr.mxu0 0.0
    %2942 = vmatpush1.msra.mxu0 0.0
    %2943 = vmatprep.subr.mxu0 0.0
    %2944 = vmatpush1.msra.mxu0 0.0
    %2945 = vmatprep.subr.mxu0 0.0
    %2946 = vmatpush1.msra.mxu0 0.0
    %2947 = vmatprep.subr.mxu0 0.0
    %2948 = vmatpush1.msra.mxu0 0.0
    %2949 = vmatprep.subr.mxu0 0.0
    %2950 = vmatpush1.msra.mxu0 0.0
    %2951 = vmatprep.subr.mxu0 0.0
    %2952 = vmatpush1.msra.mxu0 0.0
    %2953 = vmatprep.subr.mxu0 0.0
    %2954 = vmatpush1.msra.mxu0 0.0
    %2955 = vmatprep.subr.mxu0 0.0
    %2956 = vmatpush1.msra.mxu0 0.0
    %2957 = vmatprep.subr.mxu0 0.0
    %2958 = vmatpush1.msra.mxu0 0.0
    %2959 = vmatprep.subr.mxu0 0.0
    %2960 = vmatpush1.msra.mxu0 0.0
    %2961 = vmatprep.subr.mxu0 0.0
    %2962 = vmatpush1.msra.mxu0 0.0
    %2963 = vmatprep.subr.mxu0 0.0
    %2964 = vmatpush1.msra.mxu0 0.0
    %2965 = vmatprep.subr.mxu0 0.0
    %2966 = vmatpush1.msra.mxu0 0.0
    %2967 = vmatprep.subr.mxu0 0.0
    %2968 = vmatpush1.msra.mxu0 0.0
    %2969 = vmatprep.subr.mxu0 0.0
    %2970 = vmatpush1.msra.mxu0 0.0
    %2971 = vmatprep.mubr.f32.mxu0 0.0
    %2972 = vmatmul.mubr.f32.gmra.mrb[0].mxu0 %v2905
    %v2973 = vpop.f32.mrb[0].mxu0
    %v2974 = vadd.f32 %v2661, %v2973
    %v2975 = vpop.f32.mrb[0].mxu0
    %2976 = vdwg.mxu0
    %v2977 = vadd.f32 %v2901, %v2974
    %v2978 = vxor.u32 %v2977, 2147483648
    %v2979 = vmul.f32 %v2978, 1.442695
    %v2980 = vpow.pop %v2979
    %v2981 = vadd.f32 %v2980, 1.0
    %v2982 = vrcp.pop %v2981
    %v2983 = vmul.f32 1.0, %v2982
    %2985 = vrot.lane.b32.xlu0 %v2974, 64
    %v2986 = vpop.permute.xlu0 %2985
    %v2988 = vmul.f32 %v2983, %v2986
    %2990 = vrot.lane.b32.xlu0 %v2988, 64
    %v2991 = vpop.permute.xlu0 %2990
    %v2993 = vadd.f32 %v2901, %v2991
    %v2994 = vtanh.pop %v2993
    %v2995 = vsub.f32 1.0, %v2983
    %2997 = vrot.lane.b32.xlu0 %v2994, 96
    %v2998 = vpop.permute.xlu0 %2997
    %v3000 = vmul.f32 %v2995, %v2998
    %v3001 = vmul.f32 %v2983, %v2899
    %v3002 = vadd.f32 %v3000, %v3001
    %3004 = vset.pattern.permute.xlu0 0
    %3005 = vperm.xlu0 %3004, %v2900
    %v3006 = vpop.permute.xlu0 %3005
    %v3008 = vmul.f32 %v3006, %v3002
    %3010 = vrot.lane.b32.xlu0 %v3008, 96
    %v3011 = vpop.permute.xlu0 %3010
    %3013 = vst.msk [vmem:[%s637] sm:$0x3] %vm58, %v3011
    %v3014 = vsub.f32 1.0, %v2900
    %3016 = vset.pattern.permute.xlu0 0
    %3017 = vperm.xlu0 %3016, %v3014
    %v3018 = vpop.permute.xlu0 %3017
    %v3020 = vmul.f32 %v3018, %v2899
    %v3021 = vadd.f32 %v3008, %v3020
    %v3022 = vld [vmem:[%s647] sm:$0x3]
    %v3023 = vld [vmem:[%s649] sm:$0x3]
    %3025 = vrot.lane.b32.xlu0 %v3021, 96
    %v3026 = vpop.permute.xlu0 %3025
    %v3027 = vsel %vm278, %v3026, 0
    %3029 = vmatprep.subr.mxu0 0.0
    %3030 = vmatpush1.msra.mxu0 %v2460
    %3031 = vmatprep.subr.mxu0 0.0
    %3032 = vmatpush1.msra.mxu0 %v2461
    %3033 = vmatprep.subr.mxu0 0.0
    %3034 = vmatpush1.msra.mxu0 %v2462
    %3035 = vmatprep.subr.mxu0 0.0
    %3036 = vmatpush1.msra.mxu0 %v2463
    %3037 = vmatprep.subr.mxu0 0.0
    %3038 = vmatpush1.msra.mxu0 0.0
    %3039 = vmatprep.subr.mxu0 0.0
    %3040 = vmatpush1.msra.mxu0 0.0
    %3041 = vmatprep.subr.mxu0 0.0
    %3042 = vmatpush1.msra.mxu0 0.0
    %3043 = vmatprep.subr.mxu0 0.0
    %3044 = vmatpush1.msra.mxu0 0.0
    %3045 = vmatprep.subr.mxu0 0.0
    %3046 = vmatpush1.msra.mxu0 0.0
    %3047 = vmatprep.subr.mxu0 0.0
    %3048 = vmatpush1.msra.mxu0 0.0
    %3049 = vmatprep.subr.mxu0 0.0
    %3050 = vmatpush1.msra.mxu0 0.0
    %3051 = vmatprep.subr.mxu0 0.0
    %3052 = vmatpush1.msra.mxu0 0.0
    %3053 = vmatprep.subr.mxu0 0.0
    %3054 = vmatpush1.msra.mxu0 0.0
    %3055 = vmatprep.subr.mxu0 0.0
    %3056 = vmatpush1.msra.mxu0 0.0
    %3057 = vmatprep.subr.mxu0 0.0
    %3058 = vmatpush1.msra.mxu0 0.0
    %3059 = vmatprep.subr.mxu0 0.0
    %3060 = vmatpush1.msra.mxu0 0.0
    %3061 = vmatprep.subr.mxu0 0.0
    %3062 = vmatpush1.msra.mxu0 0.0
    %3063 = vmatprep.subr.mxu0 0.0
    %3064 = vmatpush1.msra.mxu0 0.0
    %3065 = vmatprep.subr.mxu0 0.0
    %3066 = vmatpush1.msra.mxu0 0.0
    %3067 = vmatprep.subr.mxu0 0.0
    %3068 = vmatpush1.msra.mxu0 0.0
    %3069 = vmatprep.subr.mxu0 0.0
    %3070 = vmatpush1.msra.mxu0 0.0
    %3071 = vmatprep.subr.mxu0 0.0
    %3072 = vmatpush1.msra.mxu0 0.0
    %3073 = vmatprep.subr.mxu0 0.0
    %3074 = vmatpush1.msra.mxu0 0.0
    %3075 = vmatprep.subr.mxu0 0.0
    %3076 = vmatpush1.msra.mxu0 0.0
    %3077 = vmatprep.subr.mxu0 0.0
    %3078 = vmatpush1.msra.mxu0 0.0
    %3079 = vmatprep.subr.mxu0 0.0
    %3080 = vmatpush1.msra.mxu0 0.0
    %3081 = vmatprep.subr.mxu0 0.0
    %3082 = vmatpush1.msra.mxu0 0.0
    %3083 = vmatprep.subr.mxu0 0.0
    %3084 = vmatpush1.msra.mxu0 0.0
    %3085 = vmatprep.subr.mxu0 0.0
    %3086 = vmatpush1.msra.mxu0 0.0
    %3087 = vmatprep.subr.mxu0 0.0
    %3088 = vmatpush1.msra.mxu0 0.0
    %3089 = vmatprep.subr.mxu0 0.0
    %3090 = vmatpush1.msra.mxu0 0.0
    %3091 = vmatprep.subr.mxu0 0.0
    %3092 = vmatpush1.msra.mxu0 0.0
    %3093 = vmatprep.mubr.f32.mxu0 0.0
    %3094 = vmatmul.mubr.f32.gmra.mrb[0].mxu0 %v3027
    %v3095 = vpop.f32.mrb[0].mxu0
    %v3096 = vadd.f32 %v2661, %v3095
    %v3097 = vpop.f32.mrb[0].mxu0
    %3098 = vdwg.mxu0
    %v3099 = vadd.f32 %v3023, %v3096
    %v3100 = vxor.u32 %v3099, 2147483648
    %v3101 = vmul.f32 %v3100, 1.442695
    %v3102 = vpow.pop %v3101
    %v3103 = vadd.f32 %v3102, 1.0
    %v3104 = vrcp.pop %v3103
    %v3105 = vmul.f32 1.0, %v3104
    %3107 = vrot.lane.b32.xlu0 %v3096, 64
    %v3108 = vpop.permute.xlu0 %3107
    %v3110 = vmul.f32 %v3105, %v3108
    %3112 = vrot.lane.b32.xlu0 %v3110, 64
    %v3113 = vpop.permute.xlu0 %3112
    %v3115 = vadd.f32 %v3023, %v3113
    %v3116 = vtanh.pop %v3115
    %v3117 = vsub.f32 1.0, %v3105
    %3119 = vrot.lane.b32.xlu0 %v3116, 96
    %v3120 = vpop.permute.xlu0 %3119
    %v3122 = vmul.f32 %v3117, %v3120
    %v3123 = vmul.f32 %v3105, %v3021
    %v3124 = vadd.f32 %v3122, %v3123
    %3126 = vset.pattern.permute.xlu0 0
    %3127 = vperm.xlu0 %3126, %v3022
    %v3128 = vpop.permute.xlu0 %3127
    %v3130 = vmul.f32 %v3128, %v3124
    %3132 = vrot.lane.b32.xlu0 %v3130, 96
    %v3133 = vpop.permute.xlu0 %3132
    %3135 = vst.msk [vmem:[%s762] sm:$0x3] %vm58, %v3133
    %v3136 = vsub.f32 1.0, %v3022
    %3138 = vset.pattern.permute.xlu0 0
    %3139 = vperm.xlu0 %3138, %v3136
    %v3140 = vpop.permute.xlu0 %3139
    %v3142 = vmul.f32 %v3140, %v3021
    %v3143 = vadd.f32 %v3130, %v3142
    %v3144 = vld [vmem:[%s772] sm:$0x3]
    %v3145 = vld [vmem:[%s774] sm:$0x3]
    %3147 = vrot.lane.b32.xlu0 %v3143, 96
    %v3148 = vpop.permute.xlu0 %3147
    %v3149 = vsel %vm278, %v3148, 0
    %3151 = vmatprep.subr.mxu0 0.0
    %3152 = vmatpush1.msra.mxu0 %v2460
    %3153 = vmatprep.subr.mxu0 0.0
    %3154 = vmatpush1.msra.mxu0 %v2461
    %3155 = vmatprep.subr.mxu0 0.0
    %3156 = vmatpush1.msra.mxu0 %v2462
    %3157 = vmatprep.subr.mxu0 0.0
    %3158 = vmatpush1.msra.mxu0 %v2463
    %3159 = vmatprep.subr.mxu0 0.0
    %3160 = vmatpush1.msra.mxu0 0.0
    %3161 = vmatprep.subr.mxu0 0.0
    %3162 = vmatpush1.msra.mxu0 0.0
    %3163 = vmatprep.subr.mxu0 0.0
    %3164 = vmatpush1.msra.mxu0 0.0
    %3165 = vmatprep.subr.mxu0 0.0
    %3166 = vmatpush1.msra.mxu0 0.0
    %3167 = vmatprep.subr.mxu0 0.0
    %3168 = vmatpush1.msra.mxu0 0.0
    %3169 = vmatprep.subr.mxu0 0.0
    %3170 = vmatpush1.msra.mxu0 0.0
    %3171 = vmatprep.subr.mxu0 0.0
    %3172 = vmatpush1.msra.mxu0 0.0
    %3173 = vmatprep.subr.mxu0 0.0
    %3174 = vmatpush1.msra.mxu0 0.0
    %3175 = vmatprep.subr.mxu0 0.0
    %3176 = vmatpush1.msra.mxu0 0.0
    %3177 = vmatprep.subr.mxu0 0.0
    %3178 = vmatpush1.msra.mxu0 0.0
    %3179 = vmatprep.subr.mxu0 0.0
    %3180 = vmatpush1.msra.mxu0 0.0
    %3181 = vmatprep.subr.mxu0 0.0
    %3182 = vmatpush1.msra.mxu0 0.0
    %3183 = vmatprep.subr.mxu0 0.0
    %3184 = vmatpush1.msra.mxu0 0.0
    %3185 = vmatprep.subr.mxu0 0.0
    %3186 = vmatpush1.msra.mxu0 0.0
    %3187 = vmatprep.subr.mxu0 0.0
    %3188 = vmatpush1.msra.mxu0 0.0
    %3189 = vmatprep.subr.mxu0 0.0
    %3190 = vmatpush1.msra.mxu0 0.0
    %3191 = vmatprep.subr.mxu0 0.0
    %3192 = vmatpush1.msra.mxu0 0.0
    %3193 = vmatprep.subr.mxu0 0.0
    %3194 = vmatpush1.msra.mxu0 0.0
    %3195 = vmatprep.subr.mxu0 0.0
    %3196 = vmatpush1.msra.mxu0 0.0
    %3197 = vmatprep.subr.mxu0 0.0
    %3198 = vmatpush1.msra.mxu0 0.0
    %3199 = vmatprep.subr.mxu0 0.0
    %3200 = vmatpush1.msra.mxu0 0.0
    %3201 = vmatprep.subr.mxu0 0.0
    %3202 = vmatpush1.msra.mxu0 0.0
    %3203 = vmatprep.subr.mxu0 0.0
    %3204 = vmatpush1.msra.mxu0 0.0
    %3205 = vmatprep.subr.mxu0 0.0
    %3206 = vmatpush1.msra.mxu0 0.0
    %3207 = vmatprep.subr.mxu0 0.0
    %3208 = vmatpush1.msra.mxu0 0.0
    %3209 = vmatprep.subr.mxu0 0.0
    %3210 = vmatpush1.msra.mxu0 0.0
    %3211 = vmatprep.subr.mxu0 0.0
    %3212 = vmatpush1.msra.mxu0 0.0
    %3213 = vmatprep.subr.mxu0 0.0
    %3214 = vmatpush1.msra.mxu0 0.0
    %3215 = vmatprep.mubr.f32.mxu0 0.0
    %3216 = vmatmul.mubr.f32.gmra.mrb[0].mxu0 %v3149
    %v3217 = vpop.f32.mrb[0].mxu0
    %v3218 = vadd.f32 %v2661, %v3217
    %v3219 = vpop.f32.mrb[0].mxu0
    %3220 = vdwg.mxu0
    %v3221 = vadd.f32 %v3145, %v3218
    %v3222 = vxor.u32 %v3221, 2147483648
    %v3223 = vmul.f32 %v3222, 1.442695
    %v3224 = vpow.pop %v3223
    %v3225 = vadd.f32 %v3224, 1.0
    %v3226 = vrcp.pop %v3225
    %v3227 = vmul.f32 1.0, %v3226
    %3229 = vrot.lane.b32.xlu0 %v3218, 64
    %v3230 = vpop.permute.xlu0 %3229
    %v3232 = vmul.f32 %v3227, %v3230
    %3234 = vrot.lane.b32.xlu0 %v3232, 64
    %v3235 = vpop.permute.xlu0 %3234
    %v3237 = vadd.f32 %v3145, %v3235
    %v3238 = vtanh.pop %v3237
    %v3239 = vsub.f32 1.0, %v3227
    %3241 = vrot.lane.b32.xlu0 %v3238, 96
    %v3242 = vpop.permute.xlu0 %3241
    %v3244 = vmul.f32 %v3239, %v3242
    %v3245 = vmul.f32 %v3227, %v3143
    %v3246 = vadd.f32 %v3244, %v3245
    %3248 = vset.pattern.permute.xlu0 0
    %3249 = vperm.xlu0 %3248, %v3144
    %v3250 = vpop.permute.xlu0 %3249
    %v3252 = vmul.f32 %v3250, %v3246
    %3254 = vrot.lane.b32.xlu0 %v3252, 96
    %v3255 = vpop.permute.xlu0 %3254
    %3257 = vst.msk [vmem:[%s887] sm:$0x3] %vm58, %v3255
    %v3258 = vsub.f32 1.0, %v3144
    %3260 = vset.pattern.permute.xlu0 0
    %3261 = vperm.xlu0 %3260, %v3258
    %v3262 = vpop.permute.xlu0 %3261
    %v3264 = vmul.f32 %v3262, %v3143
    %v3265 = vadd.f32 %v3252, %v3264
    %v3266 = vld [vmem:[%s897] sm:$0x3]
    %v3267 = vld [vmem:[%s899] sm:$0x3]
    %3269 = vrot.lane.b32.xlu0 %v3265, 96
    %v3270 = vpop.permute.xlu0 %3269
    %v3271 = vsel %vm278, %v3270, 0
    %3273 = vmatprep.subr.mxu0 0.0
    %3274 = vmatpush1.msra.mxu0 %v2460
    %3275 = vmatprep.subr.mxu0 0.0
    %3276 = vmatpush1.msra.mxu0 %v2461
    %3277 = vmatprep.subr.mxu0 0.0
    %3278 = vmatpush1.msra.mxu0 %v2462
    %3279 = vmatprep.subr.mxu0 0.0
    %3280 = vmatpush1.msra.mxu0 %v2463
    %3281 = vmatprep.subr.mxu0 0.0
    %3282 = vmatpush1.msra.mxu0 0.0
    %3283 = vmatprep.subr.mxu0 0.0
    %3284 = vmatpush1.msra.mxu0 0.0
    %3285 = vmatprep.subr.mxu0 0.0
    %3286 = vmatpush1.msra.mxu0 0.0
    %3287 = vmatprep.subr.mxu0 0.0
    %3288 = vmatpush1.msra.mxu0 0.0
    %3289 = vmatprep.subr.mxu0 0.0
    %3290 = vmatpush1.msra.mxu0 0.0
    %3291 = vmatprep.subr.mxu0 0.0
    %3292 = vmatpush1.msra.mxu0 0.0
    %3293 = vmatprep.subr.mxu0 0.0
    %3294 = vmatpush1.msra.mxu0 0.0
    %3295 = vmatprep.subr.mxu0 0.0
    %3296 = vmatpush1.msra.mxu0 0.0
    %3297 = vmatprep.subr.mxu0 0.0
    %3298 = vmatpush1.msra.mxu0 0.0
    %3299 = vmatprep.subr.mxu0 0.0
    %3300 = vmatpush1.msra.mxu0 0.0
    %3301 = vmatprep.subr.mxu0 0.0
    %3302 = vmatpush1.msra.mxu0 0.0
    %3303 = vmatprep.subr.mxu0 0.0
    %3304 = vmatpush1.msra.mxu0 0.0
    %3305 = vmatprep.subr.mxu0 0.0
    %3306 = vmatpush1.msra.mxu0 0.0
    %3307 = vmatprep.subr.mxu0 0.0
    %3308 = vmatpush1.msra.mxu0 0.0
    %3309 = vmatprep.subr.mxu0 0.0
    %3310 = vmatpush1.msra.mxu0 0.0
    %3311 = vmatprep.subr.mxu0 0.0
    %3312 = vmatpush1.msra.mxu0 0.0
    %3313 = vmatprep.subr.mxu0 0.0
    %3314 = vmatpush1.msra.mxu0 0.0
    %3315 = vmatprep.subr.mxu0 0.0
    %3316 = vmatpush1.msra.mxu0 0.0
    %3317 = vmatprep.subr.mxu0 0.0
    %3318 = vmatpush1.msra.mxu0 0.0
    %3319 = vmatprep.subr.mxu0 0.0
    %3320 = vmatpush1.msra.mxu0 0.0
    %3321 = vmatprep.subr.mxu0 0.0
    %3322 = vmatpush1.msra.mxu0 0.0
    %3323 = vmatprep.subr.mxu0 0.0
    %3324 = vmatpush1.msra.mxu0 0.0
    %3325 = vmatprep.subr.mxu0 0.0
    %3326 = vmatpush1.msra.mxu0 0.0
    %3327 = vmatprep.subr.mxu0 0.0
    %3328 = vmatpush1.msra.mxu0 0.0
    %3329 = vmatprep.subr.mxu0 0.0
    %3330 = vmatpush1.msra.mxu0 0.0
    %3331 = vmatprep.subr.mxu0 0.0
    %3332 = vmatpush1.msra.mxu0 0.0
    %3333 = vmatprep.subr.mxu0 0.0
    %3334 = vmatpush1.msra.mxu0 0.0
    %3335 = vmatprep.subr.mxu0 0.0
    %3336 = vmatpush1.msra.mxu0 0.0
    %3337 = vmatprep.mubr.f32.mxu0 0.0
    %3338 = vmatmul.mubr.f32.gmra.mrb[0].mxu0 %v3271
    %v3339 = vpop.f32.mrb[0].mxu0
    %v3340 = vadd.f32 %v2661, %v3339
    %v3341 = vpop.f32.mrb[0].mxu0
    %3342 = vdwg.mxu0
    %v3343 = vadd.f32 %v3267, %v3340
    %v3344 = vxor.u32 %v3343, 2147483648
    %v3345 = vmul.f32 %v3344, 1.442695
    %v3346 = vpow.pop %v3345
    %v3347 = vadd.f32 %v3346, 1.0
    %v3348 = vrcp.pop %v3347
    %v3349 = vmul.f32 1.0, %v3348
    %3351 = vrot.lane.b32.xlu0 %v3340, 64
    %v3352 = vpop.permute.xlu0 %3351
    %v3354 = vmul.f32 %v3349, %v3352
    %3356 = vrot.lane.b32.xlu0 %v3354, 64
    %v3357 = vpop.permute.xlu0 %3356
    %v3359 = vadd.f32 %v3267, %v3357
    %v3360 = vtanh.pop %v3359
    %v3361 = vsub.f32 1.0, %v3349
    %3363 = vrot.lane.b32.xlu0 %v3360, 96
    %v3364 = vpop.permute.xlu0 %3363
    %v3366 = vmul.f32 %v3361, %v3364
    %v3367 = vmul.f32 %v3349, %v3265
    %v3368 = vadd.f32 %v3366, %v3367
    %3370 = vset.pattern.permute.xlu0 0
    %3371 = vperm.xlu0 %3370, %v3266
    %v3372 = vpop.permute.xlu0 %3371
    %v3374 = vmul.f32 %v3372, %v3368
    %3376 = vrot.lane.b32.xlu0 %v3374, 96
    %v3377 = vpop.permute.xlu0 %3376
    %3379 = vst.msk [vmem:[%s1012] sm:$0x3] %vm58, %v3377
    %v3380 = vsub.f32 1.0, %v3266
    %3382 = vset.pattern.permute.xlu0 0
    %3383 = vperm.xlu0 %3382, %v3380
    %v3384 = vpop.permute.xlu0 %3383
    %v3386 = vmul.f32 %v3384, %v3265
    %v3387 = vadd.f32 %v3374, %v3386
    %v3388 = vld [vmem:[%s1022] sm:$0x3]
    %v3389 = vld [vmem:[%s1024] sm:$0x3]
    %3391 = vrot.lane.b32.xlu0 %v3387, 96
    %v3392 = vpop.permute.xlu0 %3391
    %v3393 = vsel %vm278, %v3392, 0
    %3395 = vmatprep.subr.mxu0 0.0
    %3396 = vmatpush1.msra.mxu0 %v2460
    %3397 = vmatprep.subr.mxu0 0.0
    %3398 = vmatpush1.msra.mxu0 %v2461
    %3399 = vmatprep.subr.mxu0 0.0
    %3400 = vmatpush1.msra.mxu0 %v2462
    %3401 = vmatprep.subr.mxu0 0.0
    %3402 = vmatpush1.msra.mxu0 %v2463
    %3403 = vmatprep.subr.mxu0 0.0
    %3404 = vmatpush1.msra.mxu0 0.0
    %3405 = vmatprep.subr.mxu0 0.0
    %3406 = vmatpush1.msra.mxu0 0.0
    %3407 = vmatprep.subr.mxu0 0.0
    %3408 = vmatpush1.msra.mxu0 0.0
    %3409 = vmatprep.subr.mxu0 0.0
    %3410 = vmatpush1.msra.mxu0 0.0
    %3411 = vmatprep.subr.mxu0 0.0
    %3412 = vmatpush1.msra.mxu0 0.0
    %3413 = vmatprep.subr.mxu0 0.0
    %3414 = vmatpush1.msra.mxu0 0.0
    %3415 = vmatprep.subr.mxu0 0.0
    %3416 = vmatpush1.msra.mxu0 0.0
    %3417 = vmatprep.subr.mxu0 0.0
    %3418 = vmatpush1.msra.mxu0 0.0
    %3419 = vmatprep.subr.mxu0 0.0
    %3420 = vmatpush1.msra.mxu0 0.0
    %3421 = vmatprep.subr.mxu0 0.0
    %3422 = vmatpush1.msra.mxu0 0.0
    %3423 = vmatprep.subr.mxu0 0.0
    %3424 = vmatpush1.msra.mxu0 0.0
    %3425 = vmatprep.subr.mxu0 0.0
    %3426 = vmatpush1.msra.mxu0 0.0
    %3427 = vmatprep.subr.mxu0 0.0
    %3428 = vmatpush1.msra.mxu0 0.0
    %3429 = vmatprep.subr.mxu0 0.0
    %3430 = vmatpush1.msra.mxu0 0.0
    %3431 = vmatprep.subr.mxu0 0.0
    %3432 = vmatpush1.msra.mxu0 0.0
    %3433 = vmatprep.subr.mxu0 0.0
    %3434 = vmatpush1.msra.mxu0 0.0
    %3435 = vmatprep.subr.mxu0 0.0
    %3436 = vmatpush1.msra.mxu0 0.0
    %3437 = vmatprep.subr.mxu0 0.0
    %3438 = vmatpush1.msra.mxu0 0.0
    %3439 = vmatprep.subr.mxu0 0.0
    %3440 = vmatpush1.msra.mxu0 0.0
    %3441 = vmatprep.subr.mxu0 0.0
    %3442 = vmatpush1.msra.mxu0 0.0
    %3443 = vmatprep.subr.mxu0 0.0
    %3444 = vmatpush1.msra.mxu0 0.0
    %3445 = vmatprep.subr.mxu0 0.0
    %3446 = vmatpush1.msra.mxu0 0.0
    %3447 = vmatprep.subr.mxu0 0.0
    %3448 = vmatpush1.msra.mxu0 0.0
    %3449 = vmatprep.subr.mxu0 0.0
    %3450 = vmatpush1.msra.mxu0 0.0
    %3451 = vmatprep.subr.mxu0 0.0
    %3452 = vmatpush1.msra.mxu0 0.0
    %3453 = vmatprep.subr.mxu0 0.0
    %3454 = vmatpush1.msra.mxu0 0.0
    %3455 = vmatprep.subr.mxu0 0.0
    %3456 = vmatpush1.msra.mxu0 0.0
    %3457 = vmatprep.subr.mxu0 0.0
    %3458 = vmatpush1.msra.mxu0 0.0
    %3459 = vmatprep.mubr.f32.mxu0 0.0
    %3460 = vmatmul.mubr.f32.gmra.mrb[0].mxu0 %v3393
    %v3461 = vpop.f32.mrb[0].mxu0
    %v3462 = vadd.f32 %v2661, %v3461
    %v3463 = vpop.f32.mrb[0].mxu0
    %3464 = vdwg.mxu0
    %v3465 = vadd.f32 %v3389, %v3462
    %v3466 = vxor.u32 %v3465, 2147483648
    %v3467 = vmul.f32 %v3466, 1.442695
    %v3468 = vpow.pop %v3467
    %v3469 = vadd.f32 %v3468, 1.0
    %v3470 = vrcp.pop %v3469
    %v3471 = vmul.f32 1.0, %v3470
    %3473 = vrot.lane.b32.xlu0 %v3462, 64
    %v3474 = vpop.permute.xlu0 %3473
    %v3476 = vmul.f32 %v3471, %v3474
    %3478 = vrot.lane.b32.xlu0 %v3476, 64
    %v3479 = vpop.permute.xlu0 %3478
    %v3481 = vadd.f32 %v3389, %v3479
    %v3482 = vtanh.pop %v3481
    %v3483 = vsub.f32 1.0, %v3471
    %3485 = vrot.lane.b32.xlu0 %v3482, 96
    %v3486 = vpop.permute.xlu0 %3485
    %v3488 = vmul.f32 %v3483, %v3486
    %v3489 = vmul.f32 %v3471, %v3387
    %v3490 = vadd.f32 %v3488, %v3489
    %3492 = vset.pattern.permute.xlu0 0
    %3493 = vperm.xlu0 %3492, %v3388
    %v3494 = vpop.permute.xlu0 %3493
    %v3496 = vmul.f32 %v3494, %v3490
    %3498 = vrot.lane.b32.xlu0 %v3496, 96
    %v3499 = vpop.permute.xlu0 %3498
    %3501 = vst.msk [vmem:[%s1137] sm:$0x3] %vm58, %v3499
    %v3502 = vsub.f32 1.0, %v3388
    %3504 = vset.pattern.permute.xlu0 0
    %3505 = vperm.xlu0 %3504, %v3502
    %v3506 = vpop.permute.xlu0 %3505
    %v3508 = vmul.f32 %v3506, %v3387
    %v3509 = vadd.f32 %v3496, %v3508
    %v3510 = vld [vmem:[%s1147] sm:$0x3]
    %v3511 = vld [vmem:[%s1149] sm:$0x3]
    %3513 = vrot.lane.b32.xlu0 %v3509, 96
    %v3514 = vpop.permute.xlu0 %3513
    %v3515 = vsel %vm278, %v3514, 0
    %3517 = vmatprep.subr.mxu0 0.0
    %3518 = vmatpush1.msra.mxu0 %v2460
    %3519 = vmatprep.subr.mxu0 0.0
    %3520 = vmatpush1.msra.mxu0 %v2461
    %3521 = vmatprep.subr.mxu0 0.0
    %3522 = vmatpush1.msra.mxu0 %v2462
    %3523 = vmatprep.subr.mxu0 0.0
    %3524 = vmatpush1.msra.mxu0 %v2463
    %3525 = vmatprep.subr.mxu0 0.0
    %3526 = vmatpush1.msra.mxu0 0.0
    %3527 = vmatprep.subr.mxu0 0.0
    %3528 = vmatpush1.msra.mxu0 0.0
    %3529 = vmatprep.subr.mxu0 0.0
    %3530 = vmatpush1.msra.mxu0 0.0
    %3531 = vmatprep.subr.mxu0 0.0
    %3532 = vmatpush1.msra.mxu0 0.0
    %3533 = vmatprep.subr.mxu0 0.0
    %3534 = vmatpush1.msra.mxu0 0.0
    %3535 = vmatprep.subr.mxu0 0.0
    %3536 = vmatpush1.msra.mxu0 0.0
    %3537 = vmatprep.subr.mxu0 0.0
    %3538 = vmatpush1.msra.mxu0 0.0
    %3539 = vmatprep.subr.mxu0 0.0
    %3540 = vmatpush1.msra.mxu0 0.0
    %3541 = vmatprep.subr.mxu0 0.0
    %3542 = vmatpush1.msra.mxu0 0.0
    %3543 = vmatprep.subr.mxu0 0.0
    %3544 = vmatpush1.msra.mxu0 0.0
    %3545 = vmatprep.subr.mxu0 0.0
    %3546 = vmatpush1.msra.mxu0 0.0
    %3547 = vmatprep.subr.mxu0 0.0
    %3548 = vmatpush1.msra.mxu0 0.0
    %3549 = vmatprep.subr.mxu0 0.0
    %3550 = vmatpush1.msra.mxu0 0.0
    %3551 = vmatprep.subr.mxu0 0.0
    %3552 = vmatpush1.msra.mxu0 0.0
    %3553 = vmatprep.subr.mxu0 0.0
    %3554 = vmatpush1.msra.mxu0 0.0
    %3555 = vmatprep.subr.mxu0 0.0
    %3556 = vmatpush1.msra.mxu0 0.0
    %3557 = vmatprep.subr.mxu0 0.0
    %3558 = vmatpush1.msra.mxu0 0.0
    %3559 = vmatprep.subr.mxu0 0.0
    %3560 = vmatpush1.msra.mxu0 0.0
    %3561 = vmatprep.subr.mxu0 0.0
    %3562 = vmatpush1.msra.mxu0 0.0
    %3563 = vmatprep.subr.mxu0 0.0
    %3564 = vmatpush1.msra.mxu0 0.0
    %3565 = vmatprep.subr.mxu0 0.0
    %3566 = vmatpush1.msra.mxu0 0.0
    %3567 = vmatprep.subr.mxu0 0.0
    %3568 = vmatpush1.msra.mxu0 0.0
    %3569 = vmatprep.subr.mxu0 0.0
    %3570 = vmatpush1.msra.mxu0 0.0
    %3571 = vmatprep.subr.mxu0 0.0
    %3572 = vmatpush1.msra.mxu0 0.0
    %3573 = vmatprep.subr.mxu0 0.0
    %3574 = vmatpush1.msra.mxu0 0.0
    %3575 = vmatprep.subr.mxu0 0.0
    %3576 = vmatpush1.msra.mxu0 0.0
    %3577 = vmatprep.subr.mxu0 0.0
    %3578 = vmatpush1.msra.mxu0 0.0
    %3579 = vmatprep.subr.mxu0 0.0
    %3580 = vmatpush1.msra.mxu0 0.0
    %3581 = vmatprep.mubr.f32.mxu0 0.0
    %3582 = vmatmul.mubr.f32.gmra.mrb[0].mxu0 %v3515
    %v3583 = vpop.f32.mrb[0].mxu0
    %v3584 = vadd.f32 %v2661, %v3583
    %v3585 = vpop.f32.mrb[0].mxu0
    %3586 = vdwg.mxu0
    %v3587 = vadd.f32 %v3511, %v3584
    %v3588 = vxor.u32 %v3587, 2147483648
    %v3589 = vmul.f32 %v3588, 1.442695
    %v3590 = vpow.pop %v3589
    %v3591 = vadd.f32 %v3590, 1.0
    %v3592 = vrcp.pop %v3591
    %v3593 = vmul.f32 1.0, %v3592
    %3595 = vrot.lane.b32.xlu0 %v3584, 64
    %v3596 = vpop.permute.xlu0 %3595
    %v3598 = vmul.f32 %v3593, %v3596
    %3600 = vrot.lane.b32.xlu0 %v3598, 64
    %v3601 = vpop.permute.xlu0 %3600
    %v3603 = vadd.f32 %v3511, %v3601
    %v3604 = vtanh.pop %v3603
    %v3605 = vsub.f32 1.0, %v3593
    %3607 = vrot.lane.b32.xlu0 %v3604, 96
    %v3608 = vpop.permute.xlu0 %3607
    %v3610 = vmul.f32 %v3605, %v3608
    %v3611 = vmul.f32 %v3593, %v3509
    %v3612 = vadd.f32 %v3610, %v3611
    %3614 = vset.pattern.permute.xlu0 0
    %3615 = vperm.xlu0 %3614, %v3510
    %v3616 = vpop.permute.xlu0 %3615
    %v3618 = vmul.f32 %v3616, %v3612
    %3620 = vrot.lane.b32.xlu0 %v3618, 96
    %v3621 = vpop.permute.xlu0 %3620
    %3623 = vst.msk [vmem:[%s1262] sm:$0x3] %vm58, %v3621
    %v3624 = vsub.f32 1.0, %v3510
    %3626 = vset.pattern.permute.xlu0 0
    %3627 = vperm.xlu0 %3626, %v3624
    %v3628 = vpop.permute.xlu0 %3627
    %v3630 = vmul.f32 %v3628, %v3509
    %v3631 = vadd.f32 %v3618, %v3630
    %3633 = vrot.lane.b32.xlu0 %v3631, 96
    %v3634 = vpop.permute.xlu0 %3633
    %s3636 = scalar_lea.vmem [#allocation9], 4
    %3637 = vst.msk [vmem:[%s3636] sm:$0x3] %vm58, %v3634
    %s3638 = scalar_lea.vmem [#allocation5], 192
    %v3639 = vld [vmem:[%s3638] sm:$0xff]
    %v3640 = vld [vmem:[%s3638 + $0x8] sm:$0xff]
    %v3641 = vld [vmem:[%s3638 + $0x10] sm:$0xff]
    %v3642 = vld [vmem:[%s3638 + $0x18] sm:$0xff]
    %v3643 = vld [vmem:[%s3638 + $0x20] sm:$0xff]
    %v3644 = vld [vmem:[%s3638 + $0x28] sm:$0xff]
    %v3645 = vld [vmem:[%s3638 + $0x30] sm:$0xff]
    %v3646 = vld [vmem:[%s3638 + $0x38] sm:$0xff]
    %s3647 = scalar_lea.vmem %s3, 96
    %v3648 = vld [vmem:[%s3647] sm:$0xff]
    %v3649 = vld [vmem:[%s3647 + $0x8] sm:$0xff]
    %v3650 = vld [vmem:[%s3647 + $0x10] sm:$0xff]
    %v3651 = vld [vmem:[%s3647 + $0x18] sm:$0xff]
    %s3652 = scalar_lea.vmem %s4, 3
    %v3653 = vld [vmem:[%s3652] sm:$0x1]
    %s3654 = scalar_lea.vmem %s5, 3
    %v3655 = vld [vmem:[%s3654] sm:$0x1]
    %v3656 = vld [vmem:[#allocation2] sm:$0x3]
    %v3657 = vld [vmem:[#allocation2 + $0x2] sm:$0x3]
    %v3658 = vld [vmem:[#allocation2 + $0x4] sm:$0x3]
    %v3659 = vld [vmem:[#allocation2 + $0x6] sm:$0x3]
    %v3660 = vld [vmem:[#allocation2 + $0x8] sm:$0x3]
    %v3661 = vld [vmem:[#allocation2 + $0xa] sm:$0x3]
    %v3662 = vld [vmem:[#allocation2 + $0xc] sm:$0x3]
    %v3663 = vld [vmem:[#allocation2 + $0xe] sm:$0x3]
    %v3665 = vlaneseq
    %v3666 = vshrl.u32 %v3665, 7
    %v3667 = vsub.s32 0, %v3666
    %v3668 = vrot.slane %v3653, %v3667
    %v3678 = vcombine.low %v3656, %v3657
    %v3679 = vcombine.low %v3658, %v3659
    %v3681 = vunpack.c.l.s4 1983009808
    %v3682 = vunpack.c.0.s8 %v3681
    %v3683 = vlaneseq
    %v3684 = vshrl.u32 %v3683, 7
    %v3685 = vsub.s32 %v3682, %v3684
    %v3686 = vrot.slane %v3678, %v3685
    %v3688 = vunpack.c.l.s4 1983009808
    %v3689 = vunpack.c.0.s8 %v3688
    %v3690 = vlaneseq
    %v3691 = vshrl.u32 %v3690, 7
    %v3692 = vsub.s32 %v3689, %v3691
    %v3693 = vrot.slane %v3679, %v3692
    %v3694 = vcombine.low %v3686, %v3693
    %v3695 = vcombine.low %v3660, %v3661
    %v3696 = vcombine.low %v3662, %v3663
    %v3698 = vunpack.c.l.s4 1983009808
    %v3699 = vunpack.c.0.s8 %v3698
    %v3700 = vlaneseq
    %v3701 = vshrl.u32 %v3700, 7
    %v3702 = vsub.s32 %v3699, %v3701
    %v3703 = vrot.slane %v3695, %v3702
    %v3705 = vunpack.c.l.s4 1983009808
    %v3706 = vunpack.c.0.s8 %v3705
    %v3707 = vlaneseq
    %v3708 = vshrl.u32 %v3707, 7
    %v3709 = vsub.s32 %v3706, %v3708
    %v3710 = vrot.slane %v3696, %v3709
    %v3711 = vcombine.low %v3703, %v3710
    %v3712 = vsel %vm137, %v3694, 0
    %v3714 = vsel %vm137, %v3711, 0
    %3716 = vmatprep.subr.mxu0 0.0
    %3717 = vmatpush1.msra.mxu0 %v3639
    %3718 = vmatprep.subr.mxu0 0.0
    %3719 = vmatpush1.msra.mxu0 %v3640
    %3720 = vmatprep.subr.mxu0 0.0
    %3721 = vmatpush1.msra.mxu0 %v3641
    %3722 = vmatprep.subr.mxu0 0.0
    %3723 = vmatpush1.msra.mxu0 %v3642
    %3724 = vmatprep.subr.mxu0 0.0
    %3725 = vmatpush1.msra.mxu0 %v3643
    %3726 = vmatprep.subr.mxu0 0.0
    %3727 = vmatpush1.msra.mxu0 %v3644
    %3728 = vmatprep.subr.mxu0 0.0
    %3729 = vmatpush1.msra.mxu0 %v3645
    %3730 = vmatprep.subr.mxu0 0.0
    %3731 = vmatpush1.msra.mxu0 %v3646
    %3732 = vmatprep.subr.mxu0 0.0
    %3733 = vmatpush1.msra.mxu0 0.0
    %3734 = vmatprep.subr.mxu0 0.0
    %3735 = vmatpush1.msra.mxu0 0.0
    %3736 = vmatprep.subr.mxu0 0.0
    %3737 = vmatpush1.msra.mxu0 0.0
    %3738 = vmatprep.subr.mxu0 0.0
    %3739 = vmatpush1.msra.mxu0 0.0
    %3740 = vmatprep.subr.mxu0 0.0
    %3741 = vmatpush1.msra.mxu0 0.0
    %3742 = vmatprep.subr.mxu0 0.0
    %3743 = vmatpush1.msra.mxu0 0.0
    %3744 = vmatprep.subr.mxu0 0.0
    %3745 = vmatpush1.msra.mxu0 0.0
    %3746 = vmatprep.subr.mxu0 0.0
    %3747 = vmatpush1.msra.mxu0 0.0
    %3748 = vmatprep.subr.mxu0 0.0
    %3749 = vmatpush1.msra.mxu0 0.0
    %3750 = vmatprep.subr.mxu0 0.0
    %3751 = vmatpush1.msra.mxu0 0.0
    %3752 = vmatprep.subr.mxu0 0.0
    %3753 = vmatpush1.msra.mxu0 0.0
    %3754 = vmatprep.subr.mxu0 0.0
    %3755 = vmatpush1.msra.mxu0 0.0
    %3756 = vmatprep.subr.mxu0 0.0
    %3757 = vmatpush1.msra.mxu0 0.0
    %3758 = vmatprep.subr.mxu0 0.0
    %3759 = vmatpush1.msra.mxu0 0.0
    %3760 = vmatprep.subr.mxu0 0.0
    %3761 = vmatpush1.msra.mxu0 0.0
    %3762 = vmatprep.subr.mxu0 0.0
    %3763 = vmatpush1.msra.mxu0 0.0
    %3764 = vmatprep.subr.mxu0 0.0
    %3765 = vmatpush1.msra.mxu0 0.0
    %3766 = vmatprep.subr.mxu0 0.0
    %3767 = vmatpush1.msra.mxu0 0.0
    %3768 = vmatprep.subr.mxu0 0.0
    %3769 = vmatpush1.msra.mxu0 0.0
    %3770 = vmatprep.subr.mxu0 0.0
    %3771 = vmatpush1.msra.mxu0 0.0
    %3772 = vmatprep.subr.mxu0 0.0
    %3773 = vmatpush1.msra.mxu0 0.0
    %3774 = vmatprep.subr.mxu0 0.0
    %3775 = vmatpush1.msra.mxu0 0.0
    %3776 = vmatprep.subr.mxu0 0.0
    %3777 = vmatpush1.msra.mxu0 0.0
    %3778 = vmatprep.subr.mxu0 0.0
    %3779 = vmatpush1.msra.mxu0 0.0
    %3780 = vmatprep.mubr.f32.mxu0 0.0
    %3781 = vmatmul.mubr.f32.gmra.mrb[0].mxu0 %v3712
    %v3782 = vpop.f32.mrb[0].mxu0
    %v3783 = vadd.f32 %v3668, %v3782
    %v3784 = vpop.f32.mrb[0].mxu0
    %3785 = vmatprep.mubr.f32.mxu0 0.0
    %3786 = vmatmul.mubr.f32.gmra.mrb[0].mxu0 %v3714
    %v3787 = vpop.f32.mrb[0].mxu0
    %v3788 = vadd.f32 %v3668, %v3787
    %v3789 = vpop.f32.mrb[0].mxu0
    %3790 = vdwg.mxu0
    %v3793 = vcombine.high %v3783, %v3783
    %v3795 = vunpack.c.l.s4 1983009808
    %v3796 = vunpack.c.0.s8 %v3795
    %v3797 = vlaneseq
    %v3798 = vshrl.u32 %v3797, 7
    %v3799 = vsub.s32 %v3796, %v3798
    %v3800 = vrot.slane %v3783, %v3799
    %v3802 = vunpack.c.l.s4 1983009808
    %v3803 = vunpack.c.0.s8 %v3802
    %v3804 = vlaneseq
    %v3805 = vshrl.u32 %v3804, 7
    %v3806 = vsub.s32 %v3803, %v3805
    %v3807 = vrot.slane %v3793, %v3806
    %v3808 = vcombine.high %v3800, %v3800
    %v3809 = vcombine.high %v3807, %v3807
    %v3810 = vcombine.high %v3788, %v3788
    %v3812 = vunpack.c.l.s4 1983009808
    %v3813 = vunpack.c.0.s8 %v3812
    %v3814 = vlaneseq
    %v3815 = vshrl.u32 %v3814, 7
    %v3816 = vsub.s32 %v3813, %v3815
    %v3817 = vrot.slane %v3788, %v3816
    %v3819 = vunpack.c.l.s4 1983009808
    %v3820 = vunpack.c.0.s8 %v3819
    %v3821 = vlaneseq
    %v3822 = vshrl.u32 %v3821, 7
    %v3823 = vsub.s32 %v3820, %v3822
    %v3824 = vrot.slane %v3810, %v3823
    %v3825 = vcombine.high %v3817, %v3817
    %v3826 = vcombine.high %v3824, %v3824
    %3835 = vst.msk [vmem:[#allocation4] sm:$0x3] %vm261, %v3800
    %3836 = vst.msk [vmem:[#allocation4 + $0x2] sm:$0x3] %vm261, %v3808
    %3837 = vst.msk [vmem:[#allocation4 + $0x4] sm:$0x3] %vm261, %v3807
    %3838 = vst.msk [vmem:[#allocation4 + $0x6] sm:$0x3] %vm261, %v3809
    %3839 = vst.msk [vmem:[#allocation4 + $0x8] sm:$0x3] %vm261, %v3817
    %3840 = vst.msk [vmem:[#allocation4 + $0xa] sm:$0x3] %vm261, %v3825
    %3841 = vst.msk [vmem:[#allocation4 + $0xc] sm:$0x3] %vm261, %v3824
    %3842 = vst.msk [vmem:[#allocation4 + $0xe] sm:$0x3] %vm261, %v3826
    %v3843 = vld [vmem:[%s1147] sm:$0x3]
    %v3844 = vld [vmem:[%s1149] sm:$0x3]
    %v3846 = vlaneseq
    %v3847 = vshrl.u32 %v3846, 7
    %v3848 = vsub.s32 0, %v3847
    %v3849 = vrot.slane %v3655, %v3848
    %3851 = vmatprep.subr.mxu0 0.0
    %3852 = vmatpush1.msra.mxu0 %v3648
    %3853 = vmatprep.subr.mxu0 0.0
    %3854 = vmatpush1.msra.mxu0 %v3649
    %3855 = vmatprep.subr.mxu0 0.0
    %3856 = vmatpush1.msra.mxu0 %v3650
    %3857 = vmatprep.subr.mxu0 0.0
    %3858 = vmatpush1.msra.mxu0 %v3651
    %3859 = vmatprep.subr.mxu0 0.0
    %3860 = vmatpush1.msra.mxu0 0.0
    %3861 = vmatprep.subr.mxu0 0.0
    %3862 = vmatpush1.msra.mxu0 0.0
    %3863 = vmatprep.subr.mxu0 0.0
    %3864 = vmatpush1.msra.mxu0 0.0
    %3865 = vmatprep.subr.mxu0 0.0
    %3866 = vmatpush1.msra.mxu0 0.0
    %3867 = vmatprep.subr.mxu0 0.0
    %3868 = vmatpush1.msra.mxu0 0.0
    %3869 = vmatprep.subr.mxu0 0.0
    %3870 = vmatpush1.msra.mxu0 0.0
    %3871 = vmatprep.subr.mxu0 0.0
    %3872 = vmatpush1.msra.mxu0 0.0
    %3873 = vmatprep.subr.mxu0 0.0
    %3874 = vmatpush1.msra.mxu0 0.0
    %3875 = vmatprep.subr.mxu0 0.0
    %3876 = vmatpush1.msra.mxu0 0.0
    %3877 = vmatprep.subr.mxu0 0.0
    %3878 = vmatpush1.msra.mxu0 0.0
    %3879 = vmatprep.subr.mxu0 0.0
    %3880 = vmatpush1.msra.mxu0 0.0
    %3881 = vmatprep.subr.mxu0 0.0
    %3882 = vmatpush1.msra.mxu0 0.0
    %3883 = vmatprep.subr.mxu0 0.0
    %3884 = vmatpush1.msra.mxu0 0.0
    %3885 = vmatprep.subr.mxu0 0.0
    %3886 = vmatpush1.msra.mxu0 0.0
    %3887 = vmatprep.subr.mxu0 0.0
    %3888 = vmatpush1.msra.mxu0 0.0
    %3889 = vmatprep.subr.mxu0 0.0
    %3890 = vmatpush1.msra.mxu0 0.0
    %3891 = vmatprep.subr.mxu0 0.0
    %3892 = vmatpush1.msra.mxu0 0.0
    %3893 = vmatprep.subr.mxu0 0.0
    %3894 = vmatpush1.msra.mxu0 0.0
    %3895 = vmatprep.subr.mxu0 0.0
    %3896 = vmatpush1.msra.mxu0 0.0
    %3897 = vmatprep.subr.mxu0 0.0
    %3898 = vmatpush1.msra.mxu0 0.0
    %3899 = vmatprep.subr.mxu0 0.0
    %3900 = vmatpush1.msra.mxu0 0.0
    %3901 = vmatprep.subr.mxu0 0.0
    %3902 = vmatpush1.msra.mxu0 0.0
    %3903 = vmatprep.subr.mxu0 0.0
    %3904 = vmatpush1.msra.mxu0 0.0
    %3905 = vmatprep.subr.mxu0 0.0
    %3906 = vmatpush1.msra.mxu0 0.0
    %3907 = vmatprep.subr.mxu0 0.0
    %3908 = vmatpush1.msra.mxu0 0.0
    %3909 = vmatprep.subr.mxu0 0.0
    %3910 = vmatpush1.msra.mxu0 0.0
    %3911 = vmatprep.subr.mxu0 0.0
    %3912 = vmatpush1.msra.mxu0 0.0
    %3913 = vmatprep.subr.mxu0 0.0
    %3914 = vmatpush1.msra.mxu0 0.0
    %3915 = vmatprep.mubr.f32.mxu0 0.0
    %3916 = vmatmul.mubr.f32.gmra.mrb[0].mxu0 %v280
    %v3917 = vpop.f32.mrb[0].mxu0
    %v3918 = vadd.f32 %v3849, %v3917
    %v3919 = vpop.f32.mrb[0].mxu0
    %3920 = vdwg.mxu0
    %v3921 = vadd.f32 %v3844, %v3918
    %v3922 = vxor.u32 %v3921, 2147483648
    %v3923 = vmul.f32 %v3922, 1.442695
    %v3924 = vpow.pop %v3923
    %v3925 = vadd.f32 %v3924, 1.0
    %v3926 = vrcp.pop %v3925
    %v3927 = vmul.f32 1.0, %v3926
    %3929 = vrot.lane.b32.xlu0 %v3918, 64
    %v3930 = vpop.permute.xlu0 %3929
    %v3932 = vmul.f32 %v3927, %v3930
    %3934 = vrot.lane.b32.xlu0 %v3932, 64
    %v3935 = vpop.permute.xlu0 %3934
    %v3937 = vadd.f32 %v3844, %v3935
    %v3938 = vtanh.pop %v3937
    %v3939 = vsub.f32 1.0, %v3927
    %3941 = vrot.lane.b32.xlu0 %v3938, 96
    %v3942 = vpop.permute.xlu0 %3941
    %v3944 = vmul.f32 %v3939, %v3942
    %v3945 = vmul.f32 %v3927, 0.0
    %v3946 = vadd.f32 %v3944, %v3945
    %3948 = vset.pattern.permute.xlu0 0
    %3949 = vperm.xlu0 %3948, %v3843
    %v3950 = vpop.permute.xlu0 %3949
    %v3952 = vmul.f32 %v3950, %v3946
    %3953 = vst.msk [vmem:[%s1262] sm:$0x3] %vm41, %v3952
    %v3954 = vsub.f32 1.0, %v3843
    %3956 = vset.pattern.permute.xlu0 0
    %3957 = vperm.xlu0 %3956, %v3954
    %v3958 = vpop.permute.xlu0 %3957
    %v3960 = vmul.f32 %v3958, 0.0
    %v3961 = vadd.f32 %v3952, %v3960
    %v3962 = vld [vmem:[%s1022] sm:$0x3]
    %v3963 = vld [vmem:[%s1024] sm:$0x3]
    %3965 = vrot.lane.b32.xlu0 %v3961, 96
    %v3966 = vpop.permute.xlu0 %3965
    %v3967 = vsel %vm278, %v3966, 0
    %3969 = vmatprep.subr.mxu0 0.0
    %3970 = vmatpush1.msra.mxu0 %v3648
    %3971 = vmatprep.subr.mxu0 0.0
    %3972 = vmatpush1.msra.mxu0 %v3649
    %3973 = vmatprep.subr.mxu0 0.0
    %3974 = vmatpush1.msra.mxu0 %v3650
    %3975 = vmatprep.subr.mxu0 0.0
    %3976 = vmatpush1.msra.mxu0 %v3651
    %3977 = vmatprep.subr.mxu0 0.0
    %3978 = vmatpush1.msra.mxu0 0.0
    %3979 = vmatprep.subr.mxu0 0.0
    %3980 = vmatpush1.msra.mxu0 0.0
    %3981 = vmatprep.subr.mxu0 0.0
    %3982 = vmatpush1.msra.mxu0 0.0
    %3983 = vmatprep.subr.mxu0 0.0
    %3984 = vmatpush1.msra.mxu0 0.0
    %3985 = vmatprep.subr.mxu0 0.0
    %3986 = vmatpush1.msra.mxu0 0.0
    %3987 = vmatprep.subr.mxu0 0.0
    %3988 = vmatpush1.msra.mxu0 0.0
    %3989 = vmatprep.subr.mxu0 0.0
    %3990 = vmatpush1.msra.mxu0 0.0
    %3991 = vmatprep.subr.mxu0 0.0
    %3992 = vmatpush1.msra.mxu0 0.0
    %3993 = vmatprep.subr.mxu0 0.0
    %3994 = vmatpush1.msra.mxu0 0.0
    %3995 = vmatprep.subr.mxu0 0.0
    %3996 = vmatpush1.msra.mxu0 0.0
    %3997 = vmatprep.subr.mxu0 0.0
    %3998 = vmatpush1.msra.mxu0 0.0
    %3999 = vmatprep.subr.mxu0 0.0
    %4000 = vmatpush1.msra.mxu0 0.0
    %4001 = vmatprep.subr.mxu0 0.0
    %4002 = vmatpush1.msra.mxu0 0.0
    %4003 = vmatprep.subr.mxu0 0.0
    %4004 = vmatpush1.msra.mxu0 0.0
    %4005 = vmatprep.subr.mxu0 0.0
    %4006 = vmatpush1.msra.mxu0 0.0
    %4007 = vmatprep.subr.mxu0 0.0
    %4008 = vmatpush1.msra.mxu0 0.0
    %4009 = vmatprep.subr.mxu0 0.0
    %4010 = vmatpush1.msra.mxu0 0.0
    %4011 = vmatprep.subr.mxu0 0.0
    %4012 = vmatpush1.msra.mxu0 0.0
    %4013 = vmatprep.subr.mxu0 0.0
    %4014 = vmatpush1.msra.mxu0 0.0
    %4015 = vmatprep.subr.mxu0 0.0
    %4016 = vmatpush1.msra.mxu0 0.0
    %4017 = vmatprep.subr.mxu0 0.0
    %4018 = vmatpush1.msra.mxu0 0.0
    %4019 = vmatprep.subr.mxu0 0.0
    %4020 = vmatpush1.msra.mxu0 0.0
    %4021 = vmatprep.subr.mxu0 0.0
    %4022 = vmatpush1.msra.mxu0 0.0
    %4023 = vmatprep.subr.mxu0 0.0
    %4024 = vmatpush1.msra.mxu0 0.0
    %4025 = vmatprep.subr.mxu0 0.0
    %4026 = vmatpush1.msra.mxu0 0.0
    %4027 = vmatprep.subr.mxu0 0.0
    %4028 = vmatpush1.msra.mxu0 0.0
    %4029 = vmatprep.subr.mxu0 0.0
    %4030 = vmatpush1.msra.mxu0 0.0
    %4031 = vmatprep.subr.mxu0 0.0
    %4032 = vmatpush1.msra.mxu0 0.0
    %4033 = vmatprep.mubr.f32.mxu0 0.0
    %4034 = vmatmul.mubr.f32.gmra.mrb[0].mxu0 %v3967
    %v4035 = vpop.f32.mrb[0].mxu0
    %v4036 = vadd.f32 %v3849, %v4035
    %v4037 = vpop.f32.mrb[0].mxu0
    %4038 = vdwg.mxu0
    %v4039 = vadd.f32 %v3963, %v4036
    %v4040 = vxor.u32 %v4039, 2147483648
    %v4041 = vmul.f32 %v4040, 1.442695
    %v4042 = vpow.pop %v4041
    %v4043 = vadd.f32 %v4042, 1.0
    %v4044 = vrcp.pop %v4043
    %v4045 = vmul.f32 1.0, %v4044
    %4047 = vrot.lane.b32.xlu0 %v4036, 64
    %v4048 = vpop.permute.xlu0 %4047
    %v4050 = vmul.f32 %v4045, %v4048
    %4052 = vrot.lane.b32.xlu0 %v4050, 64
    %v4053 = vpop.permute.xlu0 %4052
    %v4055 = vadd.f32 %v3963, %v4053
    %v4056 = vtanh.pop %v4055
    %v4057 = vsub.f32 1.0, %v4045
    %4059 = vrot.lane.b32.xlu0 %v4056, 96
    %v4060 = vpop.permute.xlu0 %4059
    %v4062 = vmul.f32 %v4057, %v4060
    %v4063 = vmul.f32 %v4045, %v3961
    %v4064 = vadd.f32 %v4062, %v4063
    %4066 = vset.pattern.permute.xlu0 0
    %4067 = vperm.xlu0 %4066, %v3962
    %v4068 = vpop.permute.xlu0 %4067
    %v4070 = vmul.f32 %v4068, %v4064
    %4071 = vst.msk [vmem:[%s1137] sm:$0x3] %vm41, %v4070
    %v4072 = vsub.f32 1.0, %v3962
    %4074 = vset.pattern.permute.xlu0 0
    %4075 = vperm.xlu0 %4074, %v4072
    %v4076 = vpop.permute.xlu0 %4075
    %v4078 = vmul.f32 %v4076, %v3961
    %v4079 = vadd.f32 %v4070, %v4078
    %v4080 = vld [vmem:[%s897] sm:$0x3]
    %v4081 = vld [vmem:[%s899] sm:$0x3]
    %4083 = vrot.lane.b32.xlu0 %v4079, 96
    %v4084 = vpop.permute.xlu0 %4083
    %v4085 = vsel %vm278, %v4084, 0
    %4087 = vmatprep.subr.mxu0 0.0
    %4088 = vmatpush1.msra.mxu0 %v3648
    %4089 = vmatprep.subr.mxu0 0.0
    %4090 = vmatpush1.msra.mxu0 %v3649
    %4091 = vmatprep.subr.mxu0 0.0
    %4092 = vmatpush1.msra.mxu0 %v3650
    %4093 = vmatprep.subr.mxu0 0.0
    %4094 = vmatpush1.msra.mxu0 %v3651
    %4095 = vmatprep.subr.mxu0 0.0
    %4096 = vmatpush1.msra.mxu0 0.0
    %4097 = vmatprep.subr.mxu0 0.0
    %4098 = vmatpush1.msra.mxu0 0.0
    %4099 = vmatprep.subr.mxu0 0.0
    %4100 = vmatpush1.msra.mxu0 0.0
    %4101 = vmatprep.subr.mxu0 0.0
    %4102 = vmatpush1.msra.mxu0 0.0
    %4103 = vmatprep.subr.mxu0 0.0
    %4104 = vmatpush1.msra.mxu0 0.0
    %4105 = vmatprep.subr.mxu0 0.0
    %4106 = vmatpush1.msra.mxu0 0.0
    %4107 = vmatprep.subr.mxu0 0.0
    %4108 = vmatpush1.msra.mxu0 0.0
    %4109 = vmatprep.subr.mxu0 0.0
    %4110 = vmatpush1.msra.mxu0 0.0
    %4111 = vmatprep.subr.mxu0 0.0
    %4112 = vmatpush1.msra.mxu0 0.0
    %4113 = vmatprep.subr.mxu0 0.0
    %4114 = vmatpush1.msra.mxu0 0.0
    %4115 = vmatprep.subr.mxu0 0.0
    %4116 = vmatpush1.msra.mxu0 0.0
    %4117 = vmatprep.subr.mxu0 0.0
    %4118 = vmatpush1.msra.mxu0 0.0
    %4119 = vmatprep.subr.mxu0 0.0
    %4120 = vmatpush1.msra.mxu0 0.0
    %4121 = vmatprep.subr.mxu0 0.0
    %4122 = vmatpush1.msra.mxu0 0.0
    %4123 = vmatprep.subr.mxu0 0.0
    %4124 = vmatpush1.msra.mxu0 0.0
    %4125 = vmatprep.subr.mxu0 0.0
    %4126 = vmatpush1.msra.mxu0 0.0
    %4127 = vmatprep.subr.mxu0 0.0
    %4128 = vmatpush1.msra.mxu0 0.0
    %4129 = vmatprep.subr.mxu0 0.0
    %4130 = vmatpush1.msra.mxu0 0.0
    %4131 = vmatprep.subr.mxu0 0.0
    %4132 = vmatpush1.msra.mxu0 0.0
    %4133 = vmatprep.subr.mxu0 0.0
    %4134 = vmatpush1.msra.mxu0 0.0
    %4135 = vmatprep.subr.mxu0 0.0
    %4136 = vmatpush1.msra.mxu0 0.0
    %4137 = vmatprep.subr.mxu0 0.0
    %4138 = vmatpush1.msra.mxu0 0.0
    %4139 = vmatprep.subr.mxu0 0.0
    %4140 = vmatpush1.msra.mxu0 0.0
    %4141 = vmatprep.subr.mxu0 0.0
    %4142 = vmatpush1.msra.mxu0 0.0
    %4143 = vmatprep.subr.mxu0 0.0
    %4144 = vmatpush1.msra.mxu0 0.0
    %4145 = vmatprep.subr.mxu0 0.0
    %4146 = vmatpush1.msra.mxu0 0.0
    %4147 = vmatprep.subr.mxu0 0.0
    %4148 = vmatpush1.msra.mxu0 0.0
    %4149 = vmatprep.subr.mxu0 0.0
    %4150 = vmatpush1.msra.mxu0 0.0
    %4151 = vmatprep.mubr.f32.mxu0 0.0
    %4152 = vmatmul.mubr.f32.gmra.mrb[0].mxu0 %v4085
    %v4153 = vpop.f32.mrb[0].mxu0
    %v4154 = vadd.f32 %v3849, %v4153
    %v4155 = vpop.f32.mrb[0].mxu0
    %4156 = vdwg.mxu0
    %v4157 = vadd.f32 %v4081, %v4154
    %v4158 = vxor.u32 %v4157, 2147483648
    %v4159 = vmul.f32 %v4158, 1.442695
    %v4160 = vpow.pop %v4159
    %v4161 = vadd.f32 %v4160, 1.0
    %v4162 = vrcp.pop %v4161
    %v4163 = vmul.f32 1.0, %v4162
    %4165 = vrot.lane.b32.xlu0 %v4154, 64
    %v4166 = vpop.permute.xlu0 %4165
    %v4168 = vmul.f32 %v4163, %v4166
    %4170 = vrot.lane.b32.xlu0 %v4168, 64
    %v4171 = vpop.permute.xlu0 %4170
    %v4173 = vadd.f32 %v4081, %v4171
    %v4174 = vtanh.pop %v4173
    %v4175 = vsub.f32 1.0, %v4163
    %4177 = vrot.lane.b32.xlu0 %v4174, 96
    %v4178 = vpop.permute.xlu0 %4177
    %v4180 = vmul.f32 %v4175, %v4178
    %v4181 = vmul.f32 %v4163, %v4079
    %v4182 = vadd.f32 %v4180, %v4181
    %4184 = vset.pattern.permute.xlu0 0
    %4185 = vperm.xlu0 %4184, %v4080
    %v4186 = vpop.permute.xlu0 %4185
    %v4188 = vmul.f32 %v4186, %v4182
    %4189 = vst.msk [vmem:[%s1012] sm:$0x3] %vm41, %v4188
    %v4190 = vsub.f32 1.0, %v4080
    %4192 = vset.pattern.permute.xlu0 0
    %4193 = vperm.xlu0 %4192, %v4190
    %v4194 = vpop.permute.xlu0 %4193
    %v4196 = vmul.f32 %v4194, %v4079
    %v4197 = vadd.f32 %v4188, %v4196
    %v4198 = vld [vmem:[%s772] sm:$0x3]
    %v4199 = vld [vmem:[%s774] sm:$0x3]
    %4201 = vrot.lane.b32.xlu0 %v4197, 96
    %v4202 = vpop.permute.xlu0 %4201
    %v4203 = vsel %vm278, %v4202, 0
    %4205 = vmatprep.subr.mxu0 0.0
    %4206 = vmatpush1.msra.mxu0 %v3648
    %4207 = vmatprep.subr.mxu0 0.0
    %4208 = vmatpush1.msra.mxu0 %v3649
    %4209 = vmatprep.subr.mxu0 0.0
    %4210 = vmatpush1.msra.mxu0 %v3650
    %4211 = vmatprep.subr.mxu0 0.0
    %4212 = vmatpush1.msra.mxu0 %v3651
    %4213 = vmatprep.subr.mxu0 0.0
    %4214 = vmatpush1.msra.mxu0 0.0
    %4215 = vmatprep.subr.mxu0 0.0
    %4216 = vmatpush1.msra.mxu0 0.0
    %4217 = vmatprep.subr.mxu0 0.0
    %4218 = vmatpush1.msra.mxu0 0.0
    %4219 = vmatprep.subr.mxu0 0.0
    %4220 = vmatpush1.msra.mxu0 0.0
    %4221 = vmatprep.subr.mxu0 0.0
    %4222 = vmatpush1.msra.mxu0 0.0
    %4223 = vmatprep.subr.mxu0 0.0
    %4224 = vmatpush1.msra.mxu0 0.0
    %4225 = vmatprep.subr.mxu0 0.0
    %4226 = vmatpush1.msra.mxu0 0.0
    %4227 = vmatprep.subr.mxu0 0.0
    %4228 = vmatpush1.msra.mxu0 0.0
    %4229 = vmatprep.subr.mxu0 0.0
    %4230 = vmatpush1.msra.mxu0 0.0
    %4231 = vmatprep.subr.mxu0 0.0
    %4232 = vmatpush1.msra.mxu0 0.0
    %4233 = vmatprep.subr.mxu0 0.0
    %4234 = vmatpush1.msra.mxu0 0.0
    %4235 = vmatprep.subr.mxu0 0.0
    %4236 = vmatpush1.msra.mxu0 0.0
    %4237 = vmatprep.subr.mxu0 0.0
    %4238 = vmatpush1.msra.mxu0 0.0
    %4239 = vmatprep.subr.mxu0 0.0
    %4240 = vmatpush1.msra.mxu0 0.0
    %4241 = vmatprep.subr.mxu0 0.0
    %4242 = vmatpush1.msra.mxu0 0.0
    %4243 = vmatprep.subr.mxu0 0.0
    %4244 = vmatpush1.msra.mxu0 0.0
    %4245 = vmatprep.subr.mxu0 0.0
    %4246 = vmatpush1.msra.mxu0 0.0
    %4247 = vmatprep.subr.mxu0 0.0
    %4248 = vmatpush1.msra.mxu0 0.0
    %4249 = vmatprep.subr.mxu0 0.0
    %4250 = vmatpush1.msra.mxu0 0.0
    %4251 = vmatprep.subr.mxu0 0.0
    %4252 = vmatpush1.msra.mxu0 0.0
    %4253 = vmatprep.subr.mxu0 0.0
    %4254 = vmatpush1.msra.mxu0 0.0
    %4255 = vmatprep.subr.mxu0 0.0
    %4256 = vmatpush1.msra.mxu0 0.0
    %4257 = vmatprep.subr.mxu0 0.0
    %4258 = vmatpush1.msra.mxu0 0.0
    %4259 = vmatprep.subr.mxu0 0.0
    %4260 = vmatpush1.msra.mxu0 0.0
    %4261 = vmatprep.subr.mxu0 0.0
    %4262 = vmatpush1.msra.mxu0 0.0
    %4263 = vmatprep.subr.mxu0 0.0
    %4264 = vmatpush1.msra.mxu0 0.0
    %4265 = vmatprep.subr.mxu0 0.0
    %4266 = vmatpush1.msra.mxu0 0.0
    %4267 = vmatprep.subr.mxu0 0.0
    %4268 = vmatpush1.msra.mxu0 0.0
    %4269 = vmatprep.mubr.f32.mxu0 0.0
    %4270 = vmatmul.mubr.f32.gmra.mrb[0].mxu0 %v4203
    %v4271 = vpop.f32.mrb[0].mxu0
    %v4272 = vadd.f32 %v3849, %v4271
    %v4273 = vpop.f32.mrb[0].mxu0
    %4274 = vdwg.mxu0
    %v4275 = vadd.f32 %v4199, %v4272
    %v4276 = vxor.u32 %v4275, 2147483648
    %v4277 = vmul.f32 %v4276, 1.442695
    %v4278 = vpow.pop %v4277
    %v4279 = vadd.f32 %v4278, 1.0
    %v4280 = vrcp.pop %v4279
    %v4281 = vmul.f32 1.0, %v4280
    %4283 = vrot.lane.b32.xlu0 %v4272, 64
    %v4284 = vpop.permute.xlu0 %4283
    %v4286 = vmul.f32 %v4281, %v4284
    %4288 = vrot.lane.b32.xlu0 %v4286, 64
    %v4289 = vpop.permute.xlu0 %4288
    %v4291 = vadd.f32 %v4199, %v4289
    %v4292 = vtanh.pop %v4291
    %v4293 = vsub.f32 1.0, %v4281
    %4295 = vrot.lane.b32.xlu0 %v4292, 96
    %v4296 = vpop.permute.xlu0 %4295
    %v4298 = vmul.f32 %v4293, %v4296
    %v4299 = vmul.f32 %v4281, %v4197
    %v4300 = vadd.f32 %v4298, %v4299
    %4302 = vset.pattern.permute.xlu0 0
    %4303 = vperm.xlu0 %4302, %v4198
    %v4304 = vpop.permute.xlu0 %4303
    %v4306 = vmul.f32 %v4304, %v4300
    %4307 = vst.msk [vmem:[%s887] sm:$0x3] %vm41, %v4306
    %v4308 = vsub.f32 1.0, %v4198
    %4310 = vset.pattern.permute.xlu0 0
    %4311 = vperm.xlu0 %4310, %v4308
    %v4312 = vpop.permute.xlu0 %4311
    %v4314 = vmul.f32 %v4312, %v4197
    %v4315 = vadd.f32 %v4306, %v4314
    %v4316 = vld [vmem:[%s647] sm:$0x3]
    %v4317 = vld [vmem:[%s649] sm:$0x3]
    %4319 = vrot.lane.b32.xlu0 %v4315, 96
    %v4320 = vpop.permute.xlu0 %4319
    %v4321 = vsel %vm278, %v4320, 0
    %4323 = vmatprep.subr.mxu0 0.0
    %4324 = vmatpush1.msra.mxu0 %v3648
    %4325 = vmatprep.subr.mxu0 0.0
    %4326 = vmatpush1.msra.mxu0 %v3649
    %4327 = vmatprep.subr.mxu0 0.0
    %4328 = vmatpush1.msra.mxu0 %v3650
    %4329 = vmatprep.subr.mxu0 0.0
    %4330 = vmatpush1.msra.mxu0 %v3651
    %4331 = vmatprep.subr.mxu0 0.0
    %4332 = vmatpush1.msra.mxu0 0.0
    %4333 = vmatprep.subr.mxu0 0.0
    %4334 = vmatpush1.msra.mxu0 0.0
    %4335 = vmatprep.subr.mxu0 0.0
    %4336 = vmatpush1.msra.mxu0 0.0
    %4337 = vmatprep.subr.mxu0 0.0
    %4338 = vmatpush1.msra.mxu0 0.0
    %4339 = vmatprep.subr.mxu0 0.0
    %4340 = vmatpush1.msra.mxu0 0.0
    %4341 = vmatprep.subr.mxu0 0.0
    %4342 = vmatpush1.msra.mxu0 0.0
    %4343 = vmatprep.subr.mxu0 0.0
    %4344 = vmatpush1.msra.mxu0 0.0
    %4345 = vmatprep.subr.mxu0 0.0
    %4346 = vmatpush1.msra.mxu0 0.0
    %4347 = vmatprep.subr.mxu0 0.0
    %4348 = vmatpush1.msra.mxu0 0.0
    %4349 = vmatprep.subr.mxu0 0.0
    %4350 = vmatpush1.msra.mxu0 0.0
    %4351 = vmatprep.subr.mxu0 0.0
    %4352 = vmatpush1.msra.mxu0 0.0
    %4353 = vmatprep.subr.mxu0 0.0
    %4354 = vmatpush1.msra.mxu0 0.0
    %4355 = vmatprep.subr.mxu0 0.0
    %4356 = vmatpush1.msra.mxu0 0.0
    %4357 = vmatprep.subr.mxu0 0.0
    %4358 = vmatpush1.msra.mxu0 0.0
    %4359 = vmatprep.subr.mxu0 0.0
    %4360 = vmatpush1.msra.mxu0 0.0
    %4361 = vmatprep.subr.mxu0 0.0
    %4362 = vmatpush1.msra.mxu0 0.0
    %4363 = vmatprep.subr.mxu0 0.0
    %4364 = vmatpush1.msra.mxu0 0.0
    %4365 = vmatprep.subr.mxu0 0.0
    %4366 = vmatpush1.msra.mxu0 0.0
    %4367 = vmatprep.subr.mxu0 0.0
    %4368 = vmatpush1.msra.mxu0 0.0
    %4369 = vmatprep.subr.mxu0 0.0
    %4370 = vmatpush1.msra.mxu0 0.0
    %4371 = vmatprep.subr.mxu0 0.0
    %4372 = vmatpush1.msra.mxu0 0.0
    %4373 = vmatprep.subr.mxu0 0.0
    %4374 = vmatpush1.msra.mxu0 0.0
    %4375 = vmatprep.subr.mxu0 0.0
    %4376 = vmatpush1.msra.mxu0 0.0
    %4377 = vmatprep.subr.mxu0 0.0
    %4378 = vmatpush1.msra.mxu0 0.0
    %4379 = vmatprep.subr.mxu0 0.0
    %4380 = vmatpush1.msra.mxu0 0.0
    %4381 = vmatprep.subr.mxu0 0.0
    %4382 = vmatpush1.msra.mxu0 0.0
    %4383 = vmatprep.subr.mxu0 0.0
    %4384 = vmatpush1.msra.mxu0 0.0
    %4385 = vmatprep.subr.mxu0 0.0
    %4386 = vmatpush1.msra.mxu0 0.0
    %4387 = vmatprep.mubr.f32.mxu0 0.0
    %4388 = vmatmul.mubr.f32.gmra.mrb[0].mxu0 %v4321
    %v4389 = vpop.f32.mrb[0].mxu0
    %v4390 = vadd.f32 %v3849, %v4389
    %v4391 = vpop.f32.mrb[0].mxu0
    %4392 = vdwg.mxu0
    %v4393 = vadd.f32 %v4317, %v4390
    %v4394 = vxor.u32 %v4393, 2147483648
    %v4395 = vmul.f32 %v4394, 1.442695
    %v4396 = vpow.pop %v4395
    %v4397 = vadd.f32 %v4396, 1.0
    %v4398 = vrcp.pop %v4397
    %v4399 = vmul.f32 1.0, %v4398
    %4401 = vrot.lane.b32.xlu0 %v4390, 64
    %v4402 = vpop.permute.xlu0 %4401
    %v4404 = vmul.f32 %v4399, %v4402
    %4406 = vrot.lane.b32.xlu0 %v4404, 64
    %v4407 = vpop.permute.xlu0 %4406
    %v4409 = vadd.f32 %v4317, %v4407
    %v4410 = vtanh.pop %v4409
    %v4411 = vsub.f32 1.0, %v4399
    %4413 = vrot.lane.b32.xlu0 %v4410, 96
    %v4414 = vpop.permute.xlu0 %4413
    %v4416 = vmul.f32 %v4411, %v4414
    %v4417 = vmul.f32 %v4399, %v4315
    %v4418 = vadd.f32 %v4416, %v4417
    %4420 = vset.pattern.permute.xlu0 0
    %4421 = vperm.xlu0 %4420, %v4316
    %v4422 = vpop.permute.xlu0 %4421
    %v4424 = vmul.f32 %v4422, %v4418
    %4425 = vst.msk [vmem:[%s762] sm:$0x3] %vm41, %v4424
    %v4426 = vsub.f32 1.0, %v4316
    %4428 = vset.pattern.permute.xlu0 0
    %4429 = vperm.xlu0 %4428, %v4426
    %v4430 = vpop.permute.xlu0 %4429
    %v4432 = vmul.f32 %v4430, %v4315
    %v4433 = vadd.f32 %v4424, %v4432
    %v4434 = vld [vmem:[%s522] sm:$0x3]
    %v4435 = vld [vmem:[%s524] sm:$0x3]
    %4437 = vrot.lane.b32.xlu0 %v4433, 96
    %v4438 = vpop.permute.xlu0 %4437
    %v4439 = vsel %vm278, %v4438, 0
    %4441 = vmatprep.subr.mxu0 0.0
    %4442 = vmatpush1.msra.mxu0 %v3648
    %4443 = vmatprep.subr.mxu0 0.0
    %4444 = vmatpush1.msra.mxu0 %v3649
    %4445 = vmatprep.subr.mxu0 0.0
    %4446 = vmatpush1.msra.mxu0 %v3650
    %4447 = vmatprep.subr.mxu0 0.0
    %4448 = vmatpush1.msra.mxu0 %v3651
    %4449 = vmatprep.subr.mxu0 0.0
    %4450 = vmatpush1.msra.mxu0 0.0
    %4451 = vmatprep.subr.mxu0 0.0
    %4452 = vmatpush1.msra.mxu0 0.0
    %4453 = vmatprep.subr.mxu0 0.0
    %4454 = vmatpush1.msra.mxu0 0.0
    %4455 = vmatprep.subr.mxu0 0.0
    %4456 = vmatpush1.msra.mxu0 0.0
    %4457 = vmatprep.subr.mxu0 0.0
    %4458 = vmatpush1.msra.mxu0 0.0
    %4459 = vmatprep.subr.mxu0 0.0
    %4460 = vmatpush1.msra.mxu0 0.0
    %4461 = vmatprep.subr.mxu0 0.0
    %4462 = vmatpush1.msra.mxu0 0.0
    %4463 = vmatprep.subr.mxu0 0.0
    %4464 = vmatpush1.msra.mxu0 0.0
    %4465 = vmatprep.subr.mxu0 0.0
    %4466 = vmatpush1.msra.mxu0 0.0
    %4467 = vmatprep.subr.mxu0 0.0
    %4468 = vmatpush1.msra.mxu0 0.0
    %4469 = vmatprep.subr.mxu0 0.0
    %4470 = vmatpush1.msra.mxu0 0.0
    %4471 = vmatprep.subr.mxu0 0.0
    %4472 = vmatpush1.msra.mxu0 0.0
    %4473 = vmatprep.subr.mxu0 0.0
    %4474 = vmatpush1.msra.mxu0 0.0
    %4475 = vmatprep.subr.mxu0 0.0
    %4476 = vmatpush1.msra.mxu0 0.0
    %4477 = vmatprep.subr.mxu0 0.0
    %4478 = vmatpush1.msra.mxu0 0.0
    %4479 = vmatprep.subr.mxu0 0.0
    %4480 = vmatpush1.msra.mxu0 0.0
    %4481 = vmatprep.subr.mxu0 0.0
    %4482 = vmatpush1.msra.mxu0 0.0
    %4483 = vmatprep.subr.mxu0 0.0
    %4484 = vmatpush1.msra.mxu0 0.0
    %4485 = vmatprep.subr.mxu0 0.0
    %4486 = vmatpush1.msra.mxu0 0.0
    %4487 = vmatprep.subr.mxu0 0.0
    %4488 = vmatpush1.msra.mxu0 0.0
    %4489 = vmatprep.subr.mxu0 0.0
    %4490 = vmatpush1.msra.mxu0 0.0
    %4491 = vmatprep.subr.mxu0 0.0
    %4492 = vmatpush1.msra.mxu0 0.0
    %4493 = vmatprep.subr.mxu0 0.0
    %4494 = vmatpush1.msra.mxu0 0.0
    %4495 = vmatprep.subr.mxu0 0.0
    %4496 = vmatpush1.msra.mxu0 0.0
    %4497 = vmatprep.subr.mxu0 0.0
    %4498 = vmatpush1.msra.mxu0 0.0
    %4499 = vmatprep.subr.mxu0 0.0
    %4500 = vmatpush1.msra.mxu0 0.0
    %4501 = vmatprep.subr.mxu0 0.0
    %4502 = vmatpush1.msra.mxu0 0.0
    %4503 = vmatprep.subr.mxu0 0.0
    %4504 = vmatpush1.msra.mxu0 0.0
    %4505 = vmatprep.mubr.f32.mxu0 0.0
    %4506 = vmatmul.mubr.f32.gmra.mrb[0].mxu0 %v4439
    %v4507 = vpop.f32.mrb[0].mxu0
    %v4508 = vadd.f32 %v3849, %v4507
    %v4509 = vpop.f32.mrb[0].mxu0
    %4510 = vdwg.mxu0
    %v4511 = vadd.f32 %v4435, %v4508
    %v4512 = vxor.u32 %v4511, 2147483648
    %v4513 = vmul.f32 %v4512, 1.442695
    %v4514 = vpow.pop %v4513
    %v4515 = vadd.f32 %v4514, 1.0
    %v4516 = vrcp.pop %v4515
    %v4517 = vmul.f32 1.0, %v4516
    %4519 = vrot.lane.b32.xlu0 %v4508, 64
    %v4520 = vpop.permute.xlu0 %4519
    %v4522 = vmul.f32 %v4517, %v4520
    %4524 = vrot.lane.b32.xlu0 %v4522, 64
    %v4525 = vpop.permute.xlu0 %4524
    %v4527 = vadd.f32 %v4435, %v4525
    %v4528 = vtanh.pop %v4527
    %v4529 = vsub.f32 1.0, %v4517
    %4531 = vrot.lane.b32.xlu0 %v4528, 96
    %v4532 = vpop.permute.xlu0 %4531
    %v4534 = vmul.f32 %v4529, %v4532
    %v4535 = vmul.f32 %v4517, %v4433
    %v4536 = vadd.f32 %v4534, %v4535
    %4538 = vset.pattern.permute.xlu0 0
    %4539 = vperm.xlu0 %4538, %v4434
    %v4540 = vpop.permute.xlu0 %4539
    %v4542 = vmul.f32 %v4540, %v4536
    %4543 = vst.msk [vmem:[%s637] sm:$0x3] %vm41, %v4542
    %v4544 = vsub.f32 1.0, %v4434
    %4546 = vset.pattern.permute.xlu0 0
    %4547 = vperm.xlu0 %4546, %v4544
    %v4548 = vpop.permute.xlu0 %4547
    %v4550 = vmul.f32 %v4548, %v4433
    %v4551 = vadd.f32 %v4542, %v4550
    %v4552 = vld [vmem:[%s397] sm:$0x3]
    %v4553 = vld [vmem:[%s399] sm:$0x3]
    %4555 = vrot.lane.b32.xlu0 %v4551, 96
    %v4556 = vpop.permute.xlu0 %4555
    %v4557 = vsel %vm278, %v4556, 0
    %4559 = vmatprep.subr.mxu0 0.0
    %4560 = vmatpush1.msra.mxu0 %v3648
    %4561 = vmatprep.subr.mxu0 0.0
    %4562 = vmatpush1.msra.mxu0 %v3649
    %4563 = vmatprep.subr.mxu0 0.0
    %4564 = vmatpush1.msra.mxu0 %v3650
    %4565 = vmatprep.subr.mxu0 0.0
    %4566 = vmatpush1.msra.mxu0 %v3651
    %4567 = vmatprep.subr.mxu0 0.0
    %4568 = vmatpush1.msra.mxu0 0.0
    %4569 = vmatprep.subr.mxu0 0.0
    %4570 = vmatpush1.msra.mxu0 0.0
    %4571 = vmatprep.subr.mxu0 0.0
    %4572 = vmatpush1.msra.mxu0 0.0
    %4573 = vmatprep.subr.mxu0 0.0
    %4574 = vmatpush1.msra.mxu0 0.0
    %4575 = vmatprep.subr.mxu0 0.0
    %4576 = vmatpush1.msra.mxu0 0.0
    %4577 = vmatprep.subr.mxu0 0.0
    %4578 = vmatpush1.msra.mxu0 0.0
    %4579 = vmatprep.subr.mxu0 0.0
    %4580 = vmatpush1.msra.mxu0 0.0
    %4581 = vmatprep.subr.mxu0 0.0
    %4582 = vmatpush1.msra.mxu0 0.0
    %4583 = vmatprep.subr.mxu0 0.0
    %4584 = vmatpush1.msra.mxu0 0.0
    %4585 = vmatprep.subr.mxu0 0.0
    %4586 = vmatpush1.msra.mxu0 0.0
    %4587 = vmatprep.subr.mxu0 0.0
    %4588 = vmatpush1.msra.mxu0 0.0
    %4589 = vmatprep.subr.mxu0 0.0
    %4590 = vmatpush1.msra.mxu0 0.0
    %4591 = vmatprep.subr.mxu0 0.0
    %4592 = vmatpush1.msra.mxu0 0.0
    %4593 = vmatprep.subr.mxu0 0.0
    %4594 = vmatpush1.msra.mxu0 0.0
    %4595 = vmatprep.subr.mxu0 0.0
    %4596 = vmatpush1.msra.mxu0 0.0
    %4597 = vmatprep.subr.mxu0 0.0
    %4598 = vmatpush1.msra.mxu0 0.0
    %4599 = vmatprep.subr.mxu0 0.0
    %4600 = vmatpush1.msra.mxu0 0.0
    %4601 = vmatprep.subr.mxu0 0.0
    %4602 = vmatpush1.msra.mxu0 0.0
    %4603 = vmatprep.subr.mxu0 0.0
    %4604 = vmatpush1.msra.mxu0 0.0
    %4605 = vmatprep.subr.mxu0 0.0
    %4606 = vmatpush1.msra.mxu0 0.0
    %4607 = vmatprep.subr.mxu0 0.0
    %4608 = vmatpush1.msra.mxu0 0.0
    %4609 = vmatprep.subr.mxu0 0.0
    %4610 = vmatpush1.msra.mxu0 0.0
    %4611 = vmatprep.subr.mxu0 0.0
    %4612 = vmatpush1.msra.mxu0 0.0
    %4613 = vmatprep.subr.mxu0 0.0
    %4614 = vmatpush1.msra.mxu0 0.0
    %4615 = vmatprep.subr.mxu0 0.0
    %4616 = vmatpush1.msra.mxu0 0.0
    %4617 = vmatprep.subr.mxu0 0.0
    %4618 = vmatpush1.msra.mxu0 0.0
    %4619 = vmatprep.subr.mxu0 0.0
    %4620 = vmatpush1.msra.mxu0 0.0
    %4621 = vmatprep.subr.mxu0 0.0
    %4622 = vmatpush1.msra.mxu0 0.0
    %4623 = vmatprep.mubr.f32.mxu0 0.0
    %4624 = vmatmul.mubr.f32.gmra.mrb[0].mxu0 %v4557
    %v4625 = vpop.f32.mrb[0].mxu0
    %v4626 = vadd.f32 %v3849, %v4625
    %v4627 = vpop.f32.mrb[0].mxu0
    %4628 = vdwg.mxu0
    %v4629 = vadd.f32 %v4553, %v4626
    %v4630 = vxor.u32 %v4629, 2147483648
    %v4631 = vmul.f32 %v4630, 1.442695
    %v4632 = vpow.pop %v4631
    %v4633 = vadd.f32 %v4632, 1.0
    %v4634 = vrcp.pop %v4633
    %v4635 = vmul.f32 1.0, %v4634
    %4637 = vrot.lane.b32.xlu0 %v4626, 64
    %v4638 = vpop.permute.xlu0 %4637
    %v4640 = vmul.f32 %v4635, %v4638
    %4642 = vrot.lane.b32.xlu0 %v4640, 64
    %v4643 = vpop.permute.xlu0 %4642
    %v4645 = vadd.f32 %v4553, %v4643
    %v4646 = vtanh.pop %v4645
    %v4647 = vsub.f32 1.0, %v4635
    %4649 = vrot.lane.b32.xlu0 %v4646, 96
    %v4650 = vpop.permute.xlu0 %4649
    %v4652 = vmul.f32 %v4647, %v4650
    %v4653 = vmul.f32 %v4635, %v4551
    %v4654 = vadd.f32 %v4652, %v4653
    %4656 = vset.pattern.permute.xlu0 0
    %4657 = vperm.xlu0 %4656, %v4552
    %v4658 = vpop.permute.xlu0 %4657
    %v4660 = vmul.f32 %v4658, %v4654
    %4661 = vst.msk [vmem:[%s512] sm:$0x3] %vm41, %v4660
    %v4662 = vsub.f32 1.0, %v4552
    %4664 = vset.pattern.permute.xlu0 0
    %4665 = vperm.xlu0 %4664, %v4662
    %v4666 = vpop.permute.xlu0 %4665
    %v4668 = vmul.f32 %v4666, %v4551
    %v4669 = vadd.f32 %v4660, %v4668
    %v4670 = vld [vmem:[%s1] sm:$0x3]
    %v4671 = vld [vmem:[#allocation4] sm:$0x3]
    %4673 = vrot.lane.b32.xlu0 %v4669, 96
    %v4674 = vpop.permute.xlu0 %4673
    %v4675 = vsel %vm278, %v4674, 0
    %4677 = vmatprep.subr.mxu0 0.0
    %4678 = vmatpush1.msra.mxu0 %v3648
    %4679 = vmatprep.subr.mxu0 0.0
    %4680 = vmatpush1.msra.mxu0 %v3649
    %4681 = vmatprep.subr.mxu0 0.0
    %4682 = vmatpush1.msra.mxu0 %v3650
    %4683 = vmatprep.subr.mxu0 0.0
    %4684 = vmatpush1.msra.mxu0 %v3651
    %4685 = vmatprep.subr.mxu0 0.0
    %4686 = vmatpush1.msra.mxu0 0.0
    %4687 = vmatprep.subr.mxu0 0.0
    %4688 = vmatpush1.msra.mxu0 0.0
    %4689 = vmatprep.subr.mxu0 0.0
    %4690 = vmatpush1.msra.mxu0 0.0
    %4691 = vmatprep.subr.mxu0 0.0
    %4692 = vmatpush1.msra.mxu0 0.0
    %4693 = vmatprep.subr.mxu0 0.0
    %4694 = vmatpush1.msra.mxu0 0.0
    %4695 = vmatprep.subr.mxu0 0.0
    %4696 = vmatpush1.msra.mxu0 0.0
    %4697 = vmatprep.subr.mxu0 0.0
    %4698 = vmatpush1.msra.mxu0 0.0
    %4699 = vmatprep.subr.mxu0 0.0
    %4700 = vmatpush1.msra.mxu0 0.0
    %4701 = vmatprep.subr.mxu0 0.0
    %4702 = vmatpush1.msra.mxu0 0.0
    %4703 = vmatprep.subr.mxu0 0.0
    %4704 = vmatpush1.msra.mxu0 0.0
    %4705 = vmatprep.subr.mxu0 0.0
    %4706 = vmatpush1.msra.mxu0 0.0
    %4707 = vmatprep.subr.mxu0 0.0
    %4708 = vmatpush1.msra.mxu0 0.0
    %4709 = vmatprep.subr.mxu0 0.0
    %4710 = vmatpush1.msra.mxu0 0.0
    %4711 = vmatprep.subr.mxu0 0.0
    %4712 = vmatpush1.msra.mxu0 0.0
    %4713 = vmatprep.subr.mxu0 0.0
    %4714 = vmatpush1.msra.mxu0 0.0
    %4715 = vmatprep.subr.mxu0 0.0
    %4716 = vmatpush1.msra.mxu0 0.0
    %4717 = vmatprep.subr.mxu0 0.0
    %4718 = vmatpush1.msra.mxu0 0.0
    %4719 = vmatprep.subr.mxu0 0.0
    %4720 = vmatpush1.msra.mxu0 0.0
    %4721 = vmatprep.subr.mxu0 0.0
    %4722 = vmatpush1.msra.mxu0 0.0
    %4723 = vmatprep.subr.mxu0 0.0
    %4724 = vmatpush1.msra.mxu0 0.0
    %4725 = vmatprep.subr.mxu0 0.0
    %4726 = vmatpush1.msra.mxu0 0.0
    %4727 = vmatprep.subr.mxu0 0.0
    %4728 = vmatpush1.msra.mxu0 0.0
    %4729 = vmatprep.subr.mxu0 0.0
    %4730 = vmatpush1.msra.mxu0 0.0
    %4731 = vmatprep.subr.mxu0 0.0
    %4732 = vmatpush1.msra.mxu0 0.0
    %4733 = vmatprep.subr.mxu0 0.0
    %4734 = vmatpush1.msra.mxu0 0.0
    %4735 = vmatprep.subr.mxu0 0.0
    %4736 = vmatpush1.msra.mxu0 0.0
    %4737 = vmatprep.subr.mxu0 0.0
    %4738 = vmatpush1.msra.mxu0 0.0
    %4739 = vmatprep.subr.mxu0 0.0
    %4740 = vmatpush1.msra.mxu0 0.0
    %4741 = vmatprep.mubr.f32.mxu0 0.0
    %4742 = vmatmul.mubr.f32.gmra.mrb[0].mxu0 %v4675
    %v4743 = vpop.f32.mrb[0].mxu0
    %v4744 = vadd.f32 %v3849, %v4743
    %v4745 = vpop.f32.mrb[0].mxu0
    %4746 = vdwg.mxu0
    %v4747 = vadd.f32 %v4671, %v4744
    %v4748 = vxor.u32 %v4747, 2147483648
    %v4749 = vmul.f32 %v4748, 1.442695
    %v4750 = vpow.pop %v4749
    %v4751 = vadd.f32 %v4750, 1.0
    %v4752 = vrcp.pop %v4751
    %v4753 = vmul.f32 1.0, %v4752
    %4755 = vrot.lane.b32.xlu0 %v4744, 64
    %v4756 = vpop.permute.xlu0 %4755
    %v4758 = vmul.f32 %v4753, %v4756
    %4760 = vrot.lane.b32.xlu0 %v4758, 64
    %v4761 = vpop.permute.xlu0 %4760
    %v4763 = vadd.f32 %v4671, %v4761
    %v4764 = vtanh.pop %v4763
    %v4765 = vsub.f32 1.0, %v4753
    %4767 = vrot.lane.b32.xlu0 %v4764, 96
    %v4768 = vpop.permute.xlu0 %4767
    %v4770 = vmul.f32 %v4765, %v4768
    %v4771 = vmul.f32 %v4753, %v4669
    %v4772 = vadd.f32 %v4770, %v4771
    %4774 = vset.pattern.permute.xlu0 0
    %4775 = vperm.xlu0 %4774, %v4670
    %v4776 = vpop.permute.xlu0 %4775
    %v4778 = vmul.f32 %v4776, %v4772
    %4779 = vst.msk [vmem:[#allocation3] sm:$0x3] %vm41, %v4778
    %v4780 = vsub.f32 1.0, %v4670
    %4782 = vset.pattern.permute.xlu0 0
    %4783 = vperm.xlu0 %4782, %v4780
    %v4784 = vpop.permute.xlu0 %4783
    %v4786 = vmul.f32 %v4784, %v4669
    %v4787 = vadd.f32 %v4778, %v4786
    %4789 = vrot.lane.b32.xlu0 %v4787, 96
    %v4790 = vpop.permute.xlu0 %4789
    %s4792 = scalar_lea.vmem [#allocation9], 6
    %4793 = vst.msk [vmem:[%s4792] sm:$0x3] %vm58, %v4790
    %v4794 = vld [vmem:[#allocation3] sm:$0x3]
    %v4795 = vld [vmem:[#allocation3 + $0x2] sm:$0x3]
    %v4796 = vld [vmem:[#allocation3 + $0x4] sm:$0x3]
    %v4797 = vld [vmem:[#allocation3 + $0x6] sm:$0x3]
    %v4798 = vld [vmem:[#allocation3 + $0x8] sm:$0x3]
    %v4799 = vld [vmem:[#allocation3 + $0xa] sm:$0x3]
    %v4800 = vld [vmem:[#allocation3 + $0xc] sm:$0x3]
    %v4801 = vld [vmem:[#allocation3 + $0xe] sm:$0x3]
    %4810 = vrot.lane.b32.xlu0 %v4794, 96
    %v4811 = vpop.permute.xlu0 %4810
    %4812 = vrot.lane.b32.xlu0 %v4795, 96
    %v4813 = vpop.permute.xlu0 %4812
    %4814 = vrot.lane.b32.xlu0 %v4796, 96
    %v4815 = vpop.permute.xlu0 %4814
    %4816 = vrot.lane.b32.xlu0 %v4797, 96
    %v4817 = vpop.permute.xlu0 %4816
    %4818 = vrot.lane.b32.xlu0 %v4798, 96
    %v4819 = vpop.permute.xlu0 %4818
    %4820 = vrot.lane.b32.xlu0 %v4799, 96
    %v4821 = vpop.permute.xlu0 %4820
    %4822 = vrot.lane.b32.xlu0 %v4800, 96
    %v4823 = vpop.permute.xlu0 %4822
    %4824 = vrot.lane.b32.xlu0 %v4801, 96
    %v4825 = vpop.permute.xlu0 %4824
    %v4834 = vadd.f32 %v4794, %v4811
    %v4835 = vadd.f32 %v4795, %v4813
    %v4836 = vadd.f32 %v4796, %v4815
    %v4837 = vadd.f32 %v4797, %v4817
    %v4838 = vadd.f32 %v4798, %v4819
    %v4839 = vadd.f32 %v4799, %v4821
    %v4840 = vadd.f32 %v4800, %v4823
    %v4841 = vadd.f32 %v4801, %v4825
    %4842 = vst.msk [vmem:[#allocation8] sm:$0x3] %vm58, %v4834
    %4843 = vst.msk [vmem:[#allocation8 + $0x2] sm:$0x3] %vm58, %v4835
    %4844 = vst.msk [vmem:[#allocation8 + $0x4] sm:$0x3] %vm58, %v4836
    %4845 = vst.msk [vmem:[#allocation8 + $0x6] sm:$0x3] %vm58, %v4837
    %4846 = vst.msk [vmem:[#allocation8 + $0x8] sm:$0x3] %vm58, %v4838
    %4847 = vst.msk [vmem:[#allocation8 + $0xa] sm:$0x3] %vm58, %v4839
    %4848 = vst.msk [vmem:[#allocation8 + $0xc] sm:$0x3] %vm58, %v4840
    %4849 = vst.msk [vmem:[#allocation8 + $0xe] sm:$0x3] %vm58, %v4841
    // Predicated region
    $region30: #{encoder_rnn_forward.1} parent=1 // pred_check
      _
    $region31: #{encoder_rnn_forward.1} parent=1 // pred_check_branch
      %4851 = sbr.rel (0) target = $region33
    $region32: #{encoder_rnn_forward.1} parent=1 // pred_region
      %s4853 = ssub.s32 256, 256
      %4854 = vsyncadd [#allocation7], %s4853
      %s4855 = sshll.u32 [#allocation8], 4
      %s4856 = int_to_ptr.vmem [resolvable:$true] %s4855
      %4861 = dma.vmem_to_hbm [thread:$0]  %s4856, 256, %s6, [#allocation7], 32, 32, 2
    $region33: #{encoder_rnn_forward.1} parent=1 // pred_fallthru
      _
    // Predicated region
    $region34: #{encoder_rnn_forward.1} parent=1 // pred_check
      _
    $region35: #{encoder_rnn_forward.1} parent=1 // pred_check_branch
      %4863 = sbr.rel (0) target = $region37
    $region36: #{encoder_rnn_forward.1} parent=1 // pred_region
      %s4865 = ssub.s32 128, 128
      %4866 = vsyncadd [#allocation10], %s4865
      %s4867 = sshll.u32 [#allocation9], 4
      %s4868 = int_to_ptr.vmem [resolvable:$true] %s4867
      %4873 = dma.vmem_to_hbm [thread:$0]  %s4868, 128, %s7, [#allocation10], 32, 32, 2
    $region37: #{encoder_rnn_forward.1} parent=1 // pred_fallthru
      _
    // Predicated region
    $region38: #{encoder_rnn_forward.1} parent=1 // pred_check
      _
    $region39: #{encoder_rnn_forward.1} parent=1 // pred_check_branch
      %4875 = sbr.rel (0) target = $region41
    $region40: #{encoder_rnn_forward.1} parent=1 // pred_region
      %4876 = dma.done [#allocation7], 256
    $region41: #{encoder_rnn_forward.1} parent=1 // pred_fallthru
      _
    // Predicated region
    $region42: #{encoder_rnn_forward.1} parent=1 // pred_check
      _
    $region43: #{encoder_rnn_forward.1} parent=1 // pred_check_branch
      %4878 = sbr.rel (0) target = $region45
    $region44: #{encoder_rnn_forward.1} parent=1 // pred_region
      %4879 = dma.done [#allocation10], 128
    $region45: #{encoder_rnn_forward.1} parent=1 // pred_fallthru
      _
    %4880 = vsyncpa [#allocation6], 1
    %4881 = vsyncpa [#allocation7], 1
    %4882 = vsyncpa [#allocation10], 1

</llo_original>
